<compile_context>
chip_gen: v7x
topology: tpu7x:2x2x1
jax: 0.10.0
libtpu: 0.0.40
codegen_flags: <defaults>
</compile_context>

<pallas_src>
import functools

import jax
import jax.numpy as jnp
from jax.experimental import pallas as pl
from jax.experimental.pallas import tpu as pltpu


def _sigmoid(x):
    # Explicit form used identically in kernel and reference.
    return 1.0 / (1.0 + jnp.exp(-x))


# ---------------------------------------------------------------------------
# Fused kernel: 2-layer GRU step + Luong "general" attention + masked softmax
#               + context + concat/tanh + output projection, Bt rows per step.
# ---------------------------------------------------------------------------
def _luong_decoder_step_kernel(x_ref, h_ref, e_ref,
                               wih0_ref, gw_ref, gb_ref,
                               attw_ref, attb_ref, wot_ref, bo_ref,
                               hnew_ref, out_ref, attn_ref, *, approx_recip):
    f32 = jnp.float32
    x = x_ref[...]            # (Bt, E)   embedded token
    h0 = h_ref[0]             # (Bt, H)   layer-0 hidden
    h1 = h_ref[1]             # (Bt, H)   layer-1 hidden
    gb = gb_ref[...]          # (8, H)    [r,z,b_in,b_hn] x 2 layers (r/z pre-folded)

    def gru_cell(xin, h, wxr, wxz, wxn, whr, whz, whn, b_r, b_z, b_xn, b_hn):
        # Per-gate dense dots -> no 32-lane slicing of a 96-wide gate tensor.
        r = _sigmoid(jnp.dot(xin, wxr, preferred_element_type=f32)
                     + jnp.dot(h, whr, preferred_element_type=f32) + b_r)
        z = _sigmoid(jnp.dot(xin, wxz, preferred_element_type=f32)
                     + jnp.dot(h, whz, preferred_element_type=f32) + b_z)
        n = jnp.tanh(jnp.dot(xin, wxn, preferred_element_type=f32) + b_xn
                     + r * (jnp.dot(h, whn, preferred_element_type=f32) + b_hn))
        return (1.0 - z) * n + z * h

    h0n = gru_cell(x, h0,
                   wih0_ref[0], wih0_ref[1], wih0_ref[2],
                   gw_ref[0], gw_ref[1], gw_ref[2],
                   gb[0:1], gb[1:2], gb[2:3], gb[3:4])
    h1n = gru_cell(h0n, h1,
                   gw_ref[3], gw_ref[4], gw_ref[5],
                   gw_ref[6], gw_ref[7], gw_ref[8],
                   gb[4:5], gb[5:6], gb[6:7], gb[7:8])
    hnew_ref[0] = h0n
    hnew_ref[1] = h1n

    # --- Luong "general" attention, directly on the (Tk, Bt, H) layout -------
    # PyTorch: grid = q @ (e W_a^T + b_a)^T.  Algebraically identical and much
    # cheaper for Tq == 1:   grid = (q @ W_a) . e  +  q . b_a
    q = h1n                                                # (Bt, H)
    e = e_ref[...]                                         # (Tk, Bt, H)
    attb = attb_ref[...]                                   # (2, H): [b_a, b_c]

    qp = jnp.dot(q, attw_ref[0], preferred_element_type=f32)        # (Bt, H)
    qb = jnp.sum(q * attb[0:1, :], axis=-1, keepdims=True)          # (Bt, 1) VPU

    s_kb = jnp.sum(e * qp[None, :, :], axis=-1)            # (Tk, Bt) lane reduce
    scores = s_kb.T + qb                                   # (Bt, Tk)

    # mask = (grid != 0), exactly as in the PyTorch module.
    mask = (scores != 0.0).astype(f32)

    # Folded masked softmax:  softmax(s)*m / sum(softmax(s)*m)
    #                      == exp(s-max)*m / sum(exp(s-max)*m)
    m = jnp.max(scores, axis=-1, keepdims=True)
    aw = jnp.exp(scores - m) * mask
    denom = jnp.sum(aw, axis=-1, keepdims=True)
    aw = aw * pl.reciprocal(denom, approx=approx_recip)    # (Bt, Tk)
    attn_ref[...] = aw

    # context[b,h] = sum_k aw[b,k] * e[k,b,h]  (same form as the PyTorch code:
    # encoder_outputs * attn.permute(2,0,1) summed over the time axis).
    ctx = jnp.sum(e * aw.T[:, :, None], axis=0)            # (Bt, H)

    # tanh([ctx, q] @ W_c^T + b_c) split into two halves -> no lane concat.
    co = jnp.tanh(jnp.dot(ctx, attw_ref[1], preferred_element_type=f32)
                  + jnp.dot(q, attw_ref[2], preferred_element_type=f32)
                  + attb[1:2, :])                          # (Bt, H)
    out_ref[...] = jnp.dot(co, wot_ref[...], preferred_element_type=f32) + bo_ref[...]


# ---------------------------------------------------------------------------
# Wrapper
# ---------------------------------------------------------------------------
def _tc_per_chip():
    # v7x has 2 TensorCores per chip; v5e / v6e have 1 (grid = serial loop).
    try:
        kind = jax.devices()[0].device_kind.lower()
    except Exception:
        return 1
    return 2 if "v7" in kind else 1


def _pick_batch_tile(B, Tk, H, E, O, budget_bytes=24 * 1024 * 1024):
    """Batch rows per grid step, sized from the real f32 block footprint."""
    # Per-row block bytes (encoder + x + hidden in/out + logits + attn), double
    # buffered by the BlockSpec pipeline; weights are grid-invariant.
    per_row = (Tk * H + E + 4 * H + O + Tk) * 4 * 2
    cap = max(8, (budget_bytes // per_row) // 8 * 8)       # VMEM-limited rows/step
    n_tc = _tc_per_chip()
    if B <= cap and (n_tc == 1 or B < 16):
        # One grid step: on 1-TC chips splitting is pure per-step overhead, and
        # tiny batches are not worth sharding across v7x's two cores.
        return B
    target = -(-B // n_tc)                                 # ~one big step per TC
    bt = min(cap, -(-target // 8) * 8)                     # multiple of 8 when split
    return max(8, bt)


def luong_decoder_forward(params, tokens, hidden, encoder_outputs, *,
                          approx_recip=False, alias_hidden=False):
    """Single-step forward of Luong_Decoder (GRU, score='general').

    tokens:          (B,)       int32 token ids
    hidden:          (2, B, H)  GRU hidden state
    encoder_outputs: (Tk, B, H)
    Returns (out (B, O), new_hidden (2, B, H), attn_weights (B, 1, Tk)).
    """
    B = tokens.shape[0]
    Tk = encoder_outputs.shape[0]
    H = hidden.shape[-1]
    E = params["embedding"].shape[-1]
    O = params["wo_eff"].shape[0]

    # ---- glue (XLA): embedding gather + weight packing (packing is tiny and
    # loop-invariant; hoist it out of the decode loop in real use). -----------
    emb = params["embedding"][tokens]                               # (B, E)
    # TODO(synk): nn.Dropout(p=0.1) treated as identity (inference mode).

    wih0_g = params["wih0"].reshape(3, H, E).transpose(0, 2, 1)     # (3, E, H)
    gw = jnp.concatenate(
        [params["whh0"].reshape(3, H, H).transpose(0, 2, 1),
         params["wih1"].reshape(3, H, H).transpose(0, 2, 1),
         params["whh1"].reshape(3, H, H).transpose(0, 2, 1)], axis=0)  # (9, H, H)
    gb = jnp.stack(
        [params["bih0"][:H] + params["bhh0"][:H],           # layer 0: r (folded)
         params["bih0"][H:2 * H] + params["bhh0"][H:2 * H], # layer 0: z (folded)
         params["bih0"][2 * H:], params["bhh0"][2 * H:],    # layer 0: b_in, b_hn
         params["bih1"][:H] + params["bhh1"][:H],
         params["bih1"][H:2 * H] + params["bhh1"][H:2 * H],
         params["bih1"][2 * H:], params["bhh1"][2 * H:]], axis=0)      # (8, H)
    attw = jnp.stack([params["wa_eff"],                     # used as q @ W_a
                      params["wc_eff"][:, :H].T,            # concat: context half
                      params["wc_eff"][:, H:].T], axis=0)   # concat: rnn-out half
    attb = jnp.stack([params["ba"], params["bc"]], axis=0)  # (2, H)
    wo_t = params["wo_eff"].T                                # (H, O)
    bo2 = params["bo"][None, :]                              # (1, O)

    Bt = _pick_batch_tile(B, Tk, H, E, O)
    nb = pl.cdiv(B, Bt)
    B_pad = nb * Bt

    def padb(x, axis):
        # Only taken when the batch is actually split and B % Bt != 0.
        if B_pad == B:
            return x
        pads = [(0, 0)] * x.ndim
        pads[axis] = (0, B_pad - B)
        return jnp.pad(x, pads)

    x2 = padb(emb, 0)                    # (B_pad, E)
    h3 = padb(hidden, 1)                 # (2, B_pad, H)
    e3 = padb(encoder_outputs, 1)        # (Tk, B_pad, H) -- original layout, no transpose

    grid_spec = pltpu.PrefetchScalarGridSpec(
        num_scalar_prefetch=0,
        grid=(nb,),
        in_specs=[
            pl.BlockSpec((Bt, E), lambda b: (b, 0)),             # embedded token
            pl.BlockSpec((2, Bt, H), lambda b: (0, b, 0)),       # hidden (2 layers)
            pl.BlockSpec((Tk, Bt, H), lambda b: (0, b, 0)),      # encoder outputs
            pl.BlockSpec((3, E, H), lambda b: (0, 0, 0)),        # W_ih layer 0, per gate
            pl.BlockSpec((9, H, H), lambda b: (0, 0, 0)),        # W_hh0|W_ih1|W_hh1
            pl.BlockSpec((8, H), lambda b: (0, 0)),              # GRU biases
            pl.BlockSpec((3, H, H), lambda b: (0, 0, 0)),        # W_a | Wc_ctx^T | Wc_q^T
            pl.BlockSpec((2, H), lambda b: (0, 0)),              # b_a | b_c
            pl.BlockSpec((H, O), lambda b: (0, 0)),              # W_o^T
            pl.BlockSpec((1, O), lambda b: (0, 0)),              # b_o
        ],
        out_specs=[
            pl.BlockSpec((2, Bt, H), lambda b: (0, b, 0)),       # new hidden
            pl.BlockSpec((Bt, O), lambda b: (b, 0)),             # logits
            pl.BlockSpec((Bt, Tk), lambda b: (b, 0)),            # attention weights
        ],
    )

    hnew, logits, attn = pl.pallas_call(
        functools.partial(_luong_decoder_step_kernel, approx_recip=approx_recip),
        out_shape=(jax.ShapeDtypeStruct((2, B_pad, H), jnp.float32),
                   jax.ShapeDtypeStruct((B_pad, O), jnp.float32),
                   jax.ShapeDtypeStruct((B_pad, Tk), jnp.float32)),
        grid_spec=grid_spec,
        compiler_params=pltpu.CompilerParams(
            dimension_semantics=("parallel",),
            vmem_limit_bytes=32 * 1024 * 1024),
        # Alias hidden -> new_hidden only when the caller can donate it (e.g.
        # loop-carried state inside a jitted decode loop).
        input_output_aliases=({1: 0} if alias_hidden else {}),
    )(x2, h3, e3, wih0_g, gw, gb, attw, attb, wo_t, bo2)

    out = logits[:B]                                   # (B, O)
    new_hidden = hnew[:, :B, :]                        # (2, B, H)
    attn_weights = attn[:B, None, :]                   # (B, 1, Tk)
    return out, new_hidden, attn_weights


# ---------------------------------------------------------------------------
# Pure-JAX reference (literal translation of the PyTorch module)
# ---------------------------------------------------------------------------
def _reference_forward(params, tokens, hidden, encoder_outputs):
    H = hidden.shape[-1]
    x = params["embedding"][tokens]                           # (B, E); dropout = id
    new_h = []
    for layer in range(2):
        wih, whh = params[f"wih{layer}"], params[f"whh{layer}"]
        bih, bhh = params[f"bih{layer}"], params[f"bhh{layer}"]
        gi = x @ wih.T + bih
        gh = hidden[layer] @ whh.T + bhh
        r = _sigmoid(gi[:, :H] + gh[:, :H])
        z = _sigmoid(gi[:, H:2 * H] + gh[:, H:2 * H])
        n = jnp.tanh(gi[:, 2 * H:] + r * gh[:, 2 * H:])
        hn = (1.0 - z) * n + z * hidden[layer]
        new_h.append(hn)
        x = hn
    rnn_out = x                                               # (B, H)

    q = rnn_out[:, None, :]                                   # (B, 1, H)
    e = jnp.transpose(encoder_outputs, (1, 0, 2))             # (B, Tk, H)
    proj = jnp.einsum("bkh,oh->bko", e, params["wa_eff"]) + params["ba"]
    scores = jnp.einsum("bqh,bkh->bqk", q, proj)              # (B, 1, Tk)
    mask = (scores != 0.0).astype(jnp.float32)
    aw = jax.nn.softmax(scores, axis=2) * mask
    aw = aw / jnp.sum(aw, axis=2, keepdims=True)

    ctx = jnp.einsum("bqk,bkh->bqh", aw, e)[:, 0, :]          # (B, H)
    cc = jnp.concatenate([ctx, rnn_out], axis=1)              # (B, 2H)
    co = jnp.tanh(cc @ params["wc_eff"].T + params["bc"])
    out = co @ params["wo_eff"].T + params["bo"]
    return out, jnp.stack(new_h, axis=0), aw


def _weight_norm(v, g):
    # PyTorch nn.utils.weight_norm (default dim=0) on a Linear weight (out, in):
    # W = g * v / ||v||_2 computed per output row.
    return g * v / jnp.linalg.norm(v, axis=1, keepdims=True)


if __name__ == "__main__":
    jax.config.update("jax_default_matmul_precision", "highest")

    key = jax.random.PRNGKey(0)
    ks = jax.random.split(key, 21)

    B, Tk, H, E, O = 2, 8, 32, 48, 64

    tokens = jax.random.randint(ks[0], (B,), 0, O, dtype=jnp.int32)
    hidden = jax.random.normal(ks[1], (2, B, H), dtype=jnp.float32)
    encoder_outputs = jax.random.normal(ks[2], (Tk, B, H), dtype=jnp.float32)

    def lin(k, shape, scale=0.1):
        return jax.random.normal(k, shape, dtype=jnp.float32) * scale

    params = {
        "embedding": jax.random.normal(ks[3], (O, E), dtype=jnp.float32),
        # GRU layer 0 (input E) / layer 1 (input H); gate order [r|z|n].
        "wih0": lin(ks[4], (3 * H, E)), "whh0": lin(ks[5], (3 * H, H)),
        "bih0": lin(ks[6], (3 * H,)),   "bhh0": lin(ks[7], (3 * H,)),
        "wih1": lin(ks[8], (3 * H, H)), "whh1": lin(ks[9], (3 * H, H)),
        "bih1": lin(ks[10], (3 * H,)),  "bhh1": lin(ks[11], (3 * H,)),
        # weight-normed linears: attn (H->H), concat (2H->H), out (H->O)
        "wa_eff": _weight_norm(lin(ks[12], (H, H)),
                               jax.random.uniform(ks[13], (H, 1), minval=0.5, maxval=1.5)),
        "ba": lin(ks[14], (H,)),
        "wc_eff": _weight_norm(lin(ks[15], (H, 2 * H)),
                               jax.random.uniform(ks[16], (H, 1), minval=0.5, maxval=1.5)),
        "bc": lin(ks[17], (H,)),
        "wo_eff": _weight_norm(lin(ks[18], (O, H)),
                               jax.random.uniform(ks[19], (O, 1), minval=0.5, maxval=1.5)),
        "bo": lin(ks[20], (O,)),
    }

    # Exact-reciprocal path: parity check against the pure-JAX reference.
    out, new_hidden, attn_w = luong_decoder_forward(
        params, tokens, hidden, encoder_outputs, approx_recip=False)
    out, new_hidden, attn_w = jax.block_until_ready((out, new_hidden, attn_w))

    ref_out, ref_hidden, ref_attn = _reference_forward(
        params, tokens, hidden, encoder_outputs)

    assert out.shape == (B, O)
    assert new_hidden.shape == (2, B, H)
    assert attn_w.shape == (B, 1, Tk)
    assert jnp.allclose(new_hidden, ref_hidden, atol=2e-3, rtol=2e-3)
    assert jnp.allclose(attn_w, ref_attn, atol=2e-3, rtol=2e-3)
    assert jnp.allclose(out, ref_out, atol=2e-3, rtol=2e-3)

    # EUP approximate-reciprocal path (perf variant) — loose sanity check only.
    out_a, _, attn_a = jax.block_until_ready(
        luong_decoder_forward(params, tokens, hidden, encoder_outputs,
                              approx_recip=True))
    assert bool(jnp.all(jnp.isfinite(out_a)))
    assert jnp.allclose(attn_a, ref_attn, atol=5e-2, rtol=5e-2)

    print("KERNEL_OK")
</pallas_src>

<mosaic_0001>
module attributes {stable_mosaic.version = 11 : i64} {
  func.func @_luong_decoder_step_kernel(%arg0: i32, %arg1: memref<2x48xf32, #tpu.memory_space<vmem>>, %arg2: memref<2x2x32xf32, #tpu.memory_space<vmem>>, %arg3: memref<8x2x32xf32, #tpu.memory_space<vmem>>, %arg4: memref<3x48x32xf32, #tpu.memory_space<vmem>>, %arg5: memref<9x32x32xf32, #tpu.memory_space<vmem>>, %arg6: memref<8x32xf32, #tpu.memory_space<vmem>>, %arg7: memref<3x32x32xf32, #tpu.memory_space<vmem>>, %arg8: memref<2x32xf32, #tpu.memory_space<vmem>>, %arg9: memref<32x64xf32, #tpu.memory_space<vmem>>, %arg10: memref<1x64xf32, #tpu.memory_space<vmem>>, %arg11: memref<2x2x32xf32, #tpu.memory_space<vmem>>, %arg12: memref<2x64xf32, #tpu.memory_space<vmem>>, %arg13: memref<2x8xf32, #tpu.memory_space<vmem>>) attributes {dimension_semantics = [#tpu.dimension_semantics<parallel>], iteration_bounds = array<i64: 1>, scalar_prefetch = 0 : i64, scratch_operands = 0 : i64, tpu.core_type = #tpu.core_type<tc>, window_params = [{transform_indices = @transform_0, window_bounds = array<i64: 2, 48>}, {transform_indices = @transform_1, window_bounds = array<i64: 2, 2, 32>}, {transform_indices = @transform_2, window_bounds = array<i64: 8, 2, 32>}, {pipeline_mode = #tpu.pipeline_mode<synchronous>, transform_indices = @transform_3, window_bounds = array<i64: 3, 48, 32>}, {pipeline_mode = #tpu.pipeline_mode<synchronous>, transform_indices = @transform_4, window_bounds = array<i64: 9, 32, 32>}, {pipeline_mode = #tpu.pipeline_mode<synchronous>, transform_indices = @transform_5, window_bounds = array<i64: 8, 32>}, {pipeline_mode = #tpu.pipeline_mode<synchronous>, transform_indices = @transform_6, window_bounds = array<i64: 3, 32, 32>}, {pipeline_mode = #tpu.pipeline_mode<synchronous>, transform_indices = @transform_7, window_bounds = array<i64: 2, 32>}, {pipeline_mode = #tpu.pipeline_mode<synchronous>, transform_indices = @transform_8, window_bounds = array<i64: 32, 64>}, {pipeline_mode = #tpu.pipeline_mode<synchronous>, transform_indices = @transform_9, window_bounds = array<i64: 1, 64>}, {transform_indices = @transform_10, window_bounds = array<i64: 2, 2, 32>}, {transform_indices = @transform_11, window_bounds = array<i64: 2, 64>}, {transform_indices = @transform_12, window_bounds = array<i64: 2, 8>}]} {
    %c0 = arith.constant 0 : index
    %c0_0 = arith.constant 0 : index
    %0 = vector.load %arg1[%c0, %c0_0] : memref<2x48xf32, #tpu.memory_space<vmem>>, vector<2x48xf32>
    %c0_1 = arith.constant 0 : index
    %c0_2 = arith.constant 0 : index
    %c0_3 = arith.constant 0 : index
    %1 = vector.load %arg2[%c0_1, %c0_2, %c0_3] : memref<2x2x32xf32, #tpu.memory_space<vmem>>, vector<1x2x32xf32>
    %2 = vector.shape_cast %1 : vector<1x2x32xf32> to vector<2x32xf32>
    %c1 = arith.constant 1 : index
    %c0_4 = arith.constant 0 : index
    %c0_5 = arith.constant 0 : index
    %3 = vector.load %arg2[%c1, %c0_4, %c0_5] : memref<2x2x32xf32, #tpu.memory_space<vmem>>, vector<1x2x32xf32>
    %4 = vector.shape_cast %3 : vector<1x2x32xf32> to vector<2x32xf32>
    %c0_6 = arith.constant 0 : index
    %c0_7 = arith.constant 0 : index
    %5 = vector.load %arg6[%c0_6, %c0_7] : memref<8x32xf32, #tpu.memory_space<vmem>>, vector<8x32xf32>
    %c0_8 = arith.constant 0 : index
    %c0_9 = arith.constant 0 : index
    %c0_10 = arith.constant 0 : index
    %6 = vector.load %arg4[%c0_8, %c0_9, %c0_10] : memref<3x48x32xf32, #tpu.memory_space<vmem>>, vector<1x48x32xf32>
    %7 = vector.shape_cast %6 : vector<1x48x32xf32> to vector<48x32xf32>
    %c1_11 = arith.constant 1 : index
    %c0_12 = arith.constant 0 : index
    %c0_13 = arith.constant 0 : index
    %8 = vector.load %arg4[%c1_11, %c0_12, %c0_13] : memref<3x48x32xf32, #tpu.memory_space<vmem>>, vector<1x48x32xf32>
    %9 = vector.shape_cast %8 : vector<1x48x32xf32> to vector<48x32xf32>
    %c2 = arith.constant 2 : index
    %c0_14 = arith.constant 0 : index
    %c0_15 = arith.constant 0 : index
    %10 = vector.load %arg4[%c2, %c0_14, %c0_15] : memref<3x48x32xf32, #tpu.memory_space<vmem>>, vector<1x48x32xf32>
    %11 = vector.shape_cast %10 : vector<1x48x32xf32> to vector<48x32xf32>
    %c0_16 = arith.constant 0 : index
    %c0_17 = arith.constant 0 : index
    %c0_18 = arith.constant 0 : index
    %12 = vector.load %arg5[%c0_16, %c0_17, %c0_18] : memref<9x32x32xf32, #tpu.memory_space<vmem>>, vector<1x32x32xf32>
    %13 = vector.shape_cast %12 : vector<1x32x32xf32> to vector<32x32xf32>
    %c1_19 = arith.constant 1 : index
    %c0_20 = arith.constant 0 : index
    %c0_21 = arith.constant 0 : index
    %14 = vector.load %arg5[%c1_19, %c0_20, %c0_21] : memref<9x32x32xf32, #tpu.memory_space<vmem>>, vector<1x32x32xf32>
    %15 = vector.shape_cast %14 : vector<1x32x32xf32> to vector<32x32xf32>
    %c2_22 = arith.constant 2 : index
    %c0_23 = arith.constant 0 : index
    %c0_24 = arith.constant 0 : index
    %16 = vector.load %arg5[%c2_22, %c0_23, %c0_24] : memref<9x32x32xf32, #tpu.memory_space<vmem>>, vector<1x32x32xf32>
    %17 = vector.shape_cast %16 : vector<1x32x32xf32> to vector<32x32xf32>
    %18 = vector.extract_strided_slice %5 {offsets = [0, 0], sizes = [1, 32], strides = [1, 1]} : vector<8x32xf32> to vector<1x32xf32>
    %19 = vector.extract_strided_slice %5 {offsets = [1, 0], sizes = [1, 32], strides = [1, 1]} : vector<8x32xf32> to vector<1x32xf32>
    %20 = vector.extract_strided_slice %5 {offsets = [2, 0], sizes = [1, 32], strides = [1, 1]} : vector<8x32xf32> to vector<1x32xf32>
    %21 = vector.extract_strided_slice %5 {offsets = [3, 0], sizes = [1, 32], strides = [1, 1]} : vector<8x32xf32> to vector<1x32xf32>
    %cst = arith.constant dense<0.000000e+00> : vector<2x32xf32>
    %22 = tpu.matmul %0, %7, %cst {dimension_numbers = #tpu.dot_dimension_numbers<[1], [0], [0], [1], [0, 0, 1, 1], [], []>, precision = #tpu.contract_precision<fp32>} : vector<2x48xf32>, vector<48x32xf32>, vector<2x32xf32> -> vector<2x32xf32>
    %cst_25 = arith.constant dense<0.000000e+00> : vector<2x32xf32>
    %23 = tpu.matmul %2, %13, %cst_25 {dimension_numbers = #tpu.dot_dimension_numbers<[1], [0], [0], [1], [0, 0, 1, 1], [], []>, precision = #tpu.contract_precision<fp32>} : vector<2x32xf32>, vector<32x32xf32>, vector<2x32xf32> -> vector<2x32xf32>
    %24 = arith.addf %22, %23 : vector<2x32xf32>
    %25 = vector.broadcast %18 : vector<1x32xf32> to vector<2x32xf32>
    %26 = arith.addf %24, %25 : vector<2x32xf32>
    %cst_26 = arith.constant 0.000000e+00 : f32
    %27 = vector.broadcast %cst_26 : f32 to vector<2x32xf32>
    %28 = arith.subf %27, %26 : vector<2x32xf32>
    %29 = math.exp %28 : vector<2x32xf32>
    %cst_27 = arith.constant 1.000000e+00 : f32
    %30 = vector.broadcast %cst_27 : f32 to vector<2x32xf32>
    %31 = arith.addf %30, %29 : vector<2x32xf32>
    %cst_28 = arith.constant 1.000000e+00 : f32
    %32 = vector.broadcast %cst_28 : f32 to vector<2x32xf32>
    %33 = arith.divf %32, %31 : vector<2x32xf32>
    %cst_29 = arith.constant dense<0.000000e+00> : vector<2x32xf32>
    %34 = tpu.matmul %0, %9, %cst_29 {dimension_numbers = #tpu.dot_dimension_numbers<[1], [0], [0], [1], [0, 0, 1, 1], [], []>, precision = #tpu.contract_precision<fp32>} : vector<2x48xf32>, vector<48x32xf32>, vector<2x32xf32> -> vector<2x32xf32>
    %cst_30 = arith.constant dense<0.000000e+00> : vector<2x32xf32>
    %35 = tpu.matmul %2, %15, %cst_30 {dimension_numbers = #tpu.dot_dimension_numbers<[1], [0], [0], [1], [0, 0, 1, 1], [], []>, precision = #tpu.contract_precision<fp32>} : vector<2x32xf32>, vector<32x32xf32>, vector<2x32xf32> -> vector<2x32xf32>
    %36 = arith.addf %34, %35 : vector<2x32xf32>
    %37 = vector.broadcast %19 : vector<1x32xf32> to vector<2x32xf32>
    %38 = arith.addf %36, %37 : vector<2x32xf32>
    %cst_31 = arith.constant 0.000000e+00 : f32
    %39 = vector.broadcast %cst_31 : f32 to vector<2x32xf32>
    %40 = arith.subf %39, %38 : vector<2x32xf32>
    %41 = math.exp %40 : vector<2x32xf32>
    %cst_32 = arith.constant 1.000000e+00 : f32
    %42 = vector.broadcast %cst_32 : f32 to vector<2x32xf32>
    %43 = arith.addf %42, %41 : vector<2x32xf32>
    %cst_33 = arith.constant 1.000000e+00 : f32
    %44 = vector.broadcast %cst_33 : f32 to vector<2x32xf32>
    %45 = arith.divf %44, %43 : vector<2x32xf32>
    %cst_34 = arith.constant dense<0.000000e+00> : vector<2x32xf32>
    %46 = tpu.matmul %0, %11, %cst_34 {dimension_numbers = #tpu.dot_dimension_numbers<[1], [0], [0], [1], [0, 0, 1, 1], [], []>, precision = #tpu.contract_precision<fp32>} : vector<2x48xf32>, vector<48x32xf32>, vector<2x32xf32> -> vector<2x32xf32>
    %47 = vector.broadcast %20 : vector<1x32xf32> to vector<2x32xf32>
    %48 = arith.addf %46, %47 : vector<2x32xf32>
    %cst_35 = arith.constant dense<0.000000e+00> : vector<2x32xf32>
    %49 = tpu.matmul %2, %17, %cst_35 {dimension_numbers = #tpu.dot_dimension_numbers<[1], [0], [0], [1], [0, 0, 1, 1], [], []>, precision = #tpu.contract_precision<fp32>} : vector<2x32xf32>, vector<32x32xf32>, vector<2x32xf32> -> vector<2x32xf32>
    %50 = vector.broadcast %21 : vector<1x32xf32> to vector<2x32xf32>
    %51 = arith.addf %49, %50 : vector<2x32xf32>
    %52 = arith.mulf %33, %51 : vector<2x32xf32>
    %53 = arith.addf %48, %52 : vector<2x32xf32>
    %54 = math.tanh %53 : vector<2x32xf32>
    %cst_36 = arith.constant 1.000000e+00 : f32
    %55 = vector.broadcast %cst_36 : f32 to vector<2x32xf32>
    %56 = arith.subf %55, %45 : vector<2x32xf32>
    %57 = arith.mulf %56, %54 : vector<2x32xf32>
    %58 = arith.mulf %45, %2 : vector<2x32xf32>
    %59 = arith.addf %57, %58 : vector<2x32xf32>
    %c3 = arith.constant 3 : index
    %c0_37 = arith.constant 0 : index
    %c0_38 = arith.constant 0 : index
    %60 = vector.load %arg5[%c3, %c0_37, %c0_38] : memref<9x32x32xf32, #tpu.memory_space<vmem>>, vector<1x32x32xf32>
    %61 = vector.shape_cast %60 : vector<1x32x32xf32> to vector<32x32xf32>
    %c4 = arith.constant 4 : index
    %c0_39 = arith.constant 0 : index
    %c0_40 = arith.constant 0 : index
    %62 = vector.load %arg5[%c4, %c0_39, %c0_40] : memref<9x32x32xf32, #tpu.memory_space<vmem>>, vector<1x32x32xf32>
    %63 = vector.shape_cast %62 : vector<1x32x32xf32> to vector<32x32xf32>
    %c5 = arith.constant 5 : index
    %c0_41 = arith.constant 0 : index
    %c0_42 = arith.constant 0 : index
    %64 = vector.load %arg5[%c5, %c0_41, %c0_42] : memref<9x32x32xf32, #tpu.memory_space<vmem>>, vector<1x32x32xf32>
    %65 = vector.shape_cast %64 : vector<1x32x32xf32> to vector<32x32xf32>
    %c6 = arith.constant 6 : index
    %c0_43 = arith.constant 0 : index
    %c0_44 = arith.constant 0 : index
    %66 = vector.load %arg5[%c6, %c0_43, %c0_44] : memref<9x32x32xf32, #tpu.memory_space<vmem>>, vector<1x32x32xf32>
    %67 = vector.shape_cast %66 : vector<1x32x32xf32> to vector<32x32xf32>
    %c7 = arith.constant 7 : index
    %c0_45 = arith.constant 0 : index
    %c0_46 = arith.constant 0 : index
    %68 = vector.load %arg5[%c7, %c0_45, %c0_46] : memref<9x32x32xf32, #tpu.memory_space<vmem>>, vector<1x32x32xf32>
    %69 = vector.shape_cast %68 : vector<1x32x32xf32> to vector<32x32xf32>
    %c8 = arith.constant 8 : index
    %c0_47 = arith.constant 0 : index
    %c0_48 = arith.constant 0 : index
    %70 = vector.load %arg5[%c8, %c0_47, %c0_48] : memref<9x32x32xf32, #tpu.memory_space<vmem>>, vector<1x32x32xf32>
    %71 = vector.shape_cast %70 : vector<1x32x32xf32> to vector<32x32xf32>
    %72 = vector.extract_strided_slice %5 {offsets = [4, 0], sizes = [1, 32], strides = [1, 1]} : vector<8x32xf32> to vector<1x32xf32>
    %73 = vector.extract_strided_slice %5 {offsets = [5, 0], sizes = [1, 32], strides = [1, 1]} : vector<8x32xf32> to vector<1x32xf32>
    %74 = vector.extract_strided_slice %5 {offsets = [6, 0], sizes = [1, 32], strides = [1, 1]} : vector<8x32xf32> to vector<1x32xf32>
    %75 = vector.extract_strided_slice %5 {offsets = [7, 0], sizes = [1, 32], strides = [1, 1]} : vector<8x32xf32> to vector<1x32xf32>
    %cst_49 = arith.constant dense<0.000000e+00> : vector<2x32xf32>
    %76 = tpu.matmul %59, %61, %cst_49 {dimension_numbers = #tpu.dot_dimension_numbers<[1], [0], [0], [1], [0, 0, 1, 1], [], []>, precision = #tpu.contract_precision<fp32>} : vector<2x32xf32>, vector<32x32xf32>, vector<2x32xf32> -> vector<2x32xf32>
    %cst_50 = arith.constant dense<0.000000e+00> : vector<2x32xf32>
    %77 = tpu.matmul %4, %67, %cst_50 {dimension_numbers = #tpu.dot_dimension_numbers<[1], [0], [0], [1], [0, 0, 1, 1], [], []>, precision = #tpu.contract_precision<fp32>} : vector<2x32xf32>, vector<32x32xf32>, vector<2x32xf32> -> vector<2x32xf32>
    %78 = arith.addf %76, %77 : vector<2x32xf32>
    %79 = vector.broadcast %72 : vector<1x32xf32> to vector<2x32xf32>
    %80 = arith.addf %78, %79 : vector<2x32xf32>
    %cst_51 = arith.constant 0.000000e+00 : f32
    %81 = vector.broadcast %cst_51 : f32 to vector<2x32xf32>
    %82 = arith.subf %81, %80 : vector<2x32xf32>
    %83 = math.exp %82 : vector<2x32xf32>
    %cst_52 = arith.constant 1.000000e+00 : f32
    %84 = vector.broadcast %cst_52 : f32 to vector<2x32xf32>
    %85 = arith.addf %84, %83 : vector<2x32xf32>
    %cst_53 = arith.constant 1.000000e+00 : f32
    %86 = vector.broadcast %cst_53 : f32 to vector<2x32xf32>
    %87 = arith.divf %86, %85 : vector<2x32xf32>
    %cst_54 = arith.constant dense<0.000000e+00> : vector<2x32xf32>
    %88 = tpu.matmul %59, %63, %cst_54 {dimension_numbers = #tpu.dot_dimension_numbers<[1], [0], [0], [1], [0, 0, 1, 1], [], []>, precision = #tpu.contract_precision<fp32>} : vector<2x32xf32>, vector<32x32xf32>, vector<2x32xf32> -> vector<2x32xf32>
    %cst_55 = arith.constant dense<0.000000e+00> : vector<2x32xf32>
    %89 = tpu.matmul %4, %69, %cst_55 {dimension_numbers = #tpu.dot_dimension_numbers<[1], [0], [0], [1], [0, 0, 1, 1], [], []>, precision = #tpu.contract_precision<fp32>} : vector<2x32xf32>, vector<32x32xf32>, vector<2x32xf32> -> vector<2x32xf32>
    %90 = arith.addf %88, %89 : vector<2x32xf32>
    %91 = vector.broadcast %73 : vector<1x32xf32> to vector<2x32xf32>
    %92 = arith.addf %90, %91 : vector<2x32xf32>
    %cst_56 = arith.constant 0.000000e+00 : f32
    %93 = vector.broadcast %cst_56 : f32 to vector<2x32xf32>
    %94 = arith.subf %93, %92 : vector<2x32xf32>
    %95 = math.exp %94 : vector<2x32xf32>
    %cst_57 = arith.constant 1.000000e+00 : f32
    %96 = vector.broadcast %cst_57 : f32 to vector<2x32xf32>
    %97 = arith.addf %96, %95 : vector<2x32xf32>
    %cst_58 = arith.constant 1.000000e+00 : f32
    %98 = vector.broadcast %cst_58 : f32 to vector<2x32xf32>
    %99 = arith.divf %98, %97 : vector<2x32xf32>
    %cst_59 = arith.constant dense<0.000000e+00> : vector<2x32xf32>
    %100 = tpu.matmul %59, %65, %cst_59 {dimension_numbers = #tpu.dot_dimension_numbers<[1], [0], [0], [1], [0, 0, 1, 1], [], []>, precision = #tpu.contract_precision<fp32>} : vector<2x32xf32>, vector<32x32xf32>, vector<2x32xf32> -> vector<2x32xf32>
    %101 = vector.broadcast %74 : vector<1x32xf32> to vector<2x32xf32>
    %102 = arith.addf %100, %101 : vector<2x32xf32>
    %cst_60 = arith.constant dense<0.000000e+00> : vector<2x32xf32>
    %103 = tpu.matmul %4, %71, %cst_60 {dimension_numbers = #tpu.dot_dimension_numbers<[1], [0], [0], [1], [0, 0, 1, 1], [], []>, precision = #tpu.contract_precision<fp32>} : vector<2x32xf32>, vector<32x32xf32>, vector<2x32xf32> -> vector<2x32xf32>
    %104 = vector.broadcast %75 : vector<1x32xf32> to vector<2x32xf32>
    %105 = arith.addf %103, %104 : vector<2x32xf32>
    %106 = arith.mulf %87, %105 : vector<2x32xf32>
    %107 = arith.addf %102, %106 : vector<2x32xf32>
    %108 = math.tanh %107 : vector<2x32xf32>
    %cst_61 = arith.constant 1.000000e+00 : f32
    %109 = vector.broadcast %cst_61 : f32 to vector<2x32xf32>
    %110 = arith.subf %109, %99 : vector<2x32xf32>
    %111 = arith.mulf %110, %108 : vector<2x32xf32>
    %112 = arith.mulf %99, %4 : vector<2x32xf32>
    %113 = arith.addf %111, %112 : vector<2x32xf32>
    %c0_62 = arith.constant 0 : index
    %c0_63 = arith.constant 0 : index
    %c0_64 = arith.constant 0 : index
    %114 = vector.load %arg11[%c0_62, %c0_63, %c0_64] : memref<2x2x32xf32, #tpu.memory_space<vmem>>, vector<1x2x32xf32>
    %115 = vector.shape_cast %114 : vector<1x2x32xf32> to vector<2x32xf32>
    %116 = vector.shape_cast %59 : vector<2x32xf32> to vector<1x2x32xf32>
    tpu.vector_store %arg11[%c0_62, %c0_63, %c0_64], %116 {strides = array<i32>} : memref<2x2x32xf32, #tpu.memory_space<vmem>>, vector<1x2x32xf32>,
    %c1_65 = arith.constant 1 : index
    %c0_66 = arith.constant 0 : index
    %c0_67 = arith.constant 0 : index
    %117 = vector.load %arg11[%c1_65, %c0_66, %c0_67] : memref<2x2x32xf32, #tpu.memory_space<vmem>>, vector<1x2x32xf32>
    %118 = vector.shape_cast %117 : vector<1x2x32xf32> to vector<2x32xf32>
    %119 = vector.shape_cast %113 : vector<2x32xf32> to vector<1x2x32xf32>
    tpu.vector_store %arg11[%c1_65, %c0_66, %c0_67], %119 {strides = array<i32>} : memref<2x2x32xf32, #tpu.memory_space<vmem>>, vector<1x2x32xf32>,
    %c0_68 = arith.constant 0 : index
    %c0_69 = arith.constant 0 : index
    %c0_70 = arith.constant 0 : index
    %120 = vector.load %arg3[%c0_68, %c0_69, %c0_70] : memref<8x2x32xf32, #tpu.memory_space<vmem>>, vector<8x2x32xf32>
    %c0_71 = arith.constant 0 : index
    %c0_72 = arith.constant 0 : index
    %121 = vector.load %arg8[%c0_71, %c0_72] : memref<2x32xf32, #tpu.memory_space<vmem>>, vector<2x32xf32>
    %c0_73 = arith.constant 0 : index
    %c0_74 = arith.constant 0 : index
    %c0_75 = arith.constant 0 : index
    %122 = vector.load %arg7[%c0_73, %c0_74, %c0_75] : memref<3x32x32xf32, #tpu.memory_space<vmem>>, vector<1x32x32xf32>
    %123 = vector.shape_cast %122 : vector<1x32x32xf32> to vector<32x32xf32>
    %cst_76 = arith.constant dense<0.000000e+00> : vector<2x32xf32>
    %124 = tpu.matmul %113, %123, %cst_76 {dimension_numbers = #tpu.dot_dimension_numbers<[1], [0], [0], [1], [0, 0, 1, 1], [], []>, precision = #tpu.contract_precision<fp32>} : vector<2x32xf32>, vector<32x32xf32>, vector<2x32xf32> -> vector<2x32xf32>
    %125 = vector.extract_strided_slice %121 {offsets = [0, 0], sizes = [1, 32], strides = [1, 1]} : vector<2x32xf32> to vector<1x32xf32>
    %126 = vector.broadcast %125 : vector<1x32xf32> to vector<2x32xf32>
    %127 = arith.mulf %113, %126 : vector<2x32xf32>
    %cst_77 = arith.constant dense<0.000000e+00> : vector<2xf32>
    %128 = vector.multi_reduction <add>, %127, %cst_77 [1] : vector<2x32xf32> to vector<2xf32>
    %129 = vector.shape_cast %128 : vector<2xf32> to vector<2x1xf32>
    %130 = vector.shape_cast %124 : vector<2x32xf32> to vector<1x2x32xf32>
    %131 = vector.broadcast %130 : vector<1x2x32xf32> to vector<8x2x32xf32>
    %132 = arith.mulf %120, %131 : vector<8x2x32xf32>
    %cst_78 = arith.constant dense<0.000000e+00> : vector<8x2xf32>
    %133 = vector.multi_reduction <add>, %132, %cst_78 [2] : vector<8x2x32xf32> to vector<8x2xf32>
    %134 = tpu.transpose %133, [1, 0] : vector<8x2xf32> -> vector<2x8xf32>
    %135 = vector.broadcast %129 : vector<2x1xf32> to vector<2x8xf32>
    %136 = arith.addf %134, %135 : vector<2x8xf32>
    %cst_79 = arith.constant 0.000000e+00 : f32
    %137 = vector.broadcast %cst_79 : f32 to vector<2x8xf32>
    %138 = arith.cmpf one, %136, %137 : vector<2x8xf32>
    %139 = arith.extui %138 : vector<2x8xi1> to vector<2x8xi32>
    %140 = arith.sitofp %139 : vector<2x8xi32> to vector<2x8xf32>
    %cst_80 = arith.constant dense<0xFF800000> : vector<2xf32>
    %141 = vector.multi_reduction <maximumf>, %136, %cst_80 [1] : vector<2x8xf32> to vector<2xf32>
    %142 = vector.shape_cast %141 : vector<2xf32> to vector<2x1xf32>
    %143 = vector.broadcast %142 : vector<2x1xf32> to vector<2x8xf32>
    %144 = arith.subf %136, %143 : vector<2x8xf32>
    %145 = math.exp %144 : vector<2x8xf32>
    %146 = arith.mulf %145, %140 : vector<2x8xf32>
    %cst_81 = arith.constant dense<0.000000e+00> : vector<2xf32>
    %147 = vector.multi_reduction <add>, %146, %cst_81 [1] : vector<2x8xf32> to vector<2xf32>
    %148 = vector.shape_cast %147 : vector<2xf32> to vector<2x1xf32>
    %149 = tpu.reciprocal %148 : vector<2x1xf32> -> vector<2x1xf32>
    %150 = vector.broadcast %149 : vector<2x1xf32> to vector<2x8xf32>
    %151 = arith.mulf %146, %150 : vector<2x8xf32>
    %c0_82 = arith.constant 0 : index
    %c0_83 = arith.constant 0 : index
    %152 = vector.load %arg13[%c0_82, %c0_83] : memref<2x8xf32, #tpu.memory_space<vmem>>, vector<2x8xf32>
    tpu.vector_store %arg13[%c0_82, %c0_83], %151 {strides = array<i32>} : memref<2x8xf32, #tpu.memory_space<vmem>>, vector<2x8xf32>,
    %153 = tpu.transpose %151, [1, 0] : vector<2x8xf32> -> vector<8x2xf32>
    %154 = vector.shape_cast %153 : vector<8x2xf32> to vector<8x2x1xf32>
    %155 = vector.broadcast %154 : vector<8x2x1xf32> to vector<8x2x32xf32>
    %156 = arith.mulf %120, %155 : vector<8x2x32xf32>
    %cst_84 = arith.constant dense<0.000000e+00> : vector<2x32xf32>
    %157 = vector.multi_reduction <add>, %156, %cst_84 [0] : vector<8x2x32xf32> to vector<2x32xf32>
    %c1_85 = arith.constant 1 : index
    %c0_86 = arith.constant 0 : index
    %c0_87 = arith.constant 0 : index
    %158 = vector.load %arg7[%c1_85, %c0_86, %c0_87] : memref<3x32x32xf32, #tpu.memory_space<vmem>>, vector<1x32x32xf32>
    %159 = vector.shape_cast %158 : vector<1x32x32xf32> to vector<32x32xf32>
    %cst_88 = arith.constant dense<0.000000e+00> : vector<2x32xf32>
    %160 = tpu.matmul %157, %159, %cst_88 {dimension_numbers = #tpu.dot_dimension_numbers<[1], [0], [0], [1], [0, 0, 1, 1], [], []>, precision = #tpu.contract_precision<fp32>} : vector<2x32xf32>, vector<32x32xf32>, vector<2x32xf32> -> vector<2x32xf32>
    %c2_89 = arith.constant 2 : index
    %c0_90 = arith.constant 0 : index
    %c0_91 = arith.constant 0 : index
    %161 = vector.load %arg7[%c2_89, %c0_90, %c0_91] : memref<3x32x32xf32, #tpu.memory_space<vmem>>, vector<1x32x32xf32>
    %162 = vector.shape_cast %161 : vector<1x32x32xf32> to vector<32x32xf32>
    %cst_92 = arith.constant dense<0.000000e+00> : vector<2x32xf32>
    %163 = tpu.matmul %113, %162, %cst_92 {dimension_numbers = #tpu.dot_dimension_numbers<[1], [0], [0], [1], [0, 0, 1, 1], [], []>, precision = #tpu.contract_precision<fp32>} : vector<2x32xf32>, vector<32x32xf32>, vector<2x32xf32> -> vector<2x32xf32>
    %164 = arith.addf %160, %163 : vector<2x32xf32>
    %165 = vector.extract_strided_slice %121 {offsets = [1, 0], sizes = [1, 32], strides = [1, 1]} : vector<2x32xf32> to vector<1x32xf32>
    %166 = vector.broadcast %165 : vector<1x32xf32> to vector<2x32xf32>
    %167 = arith.addf %164, %166 : vector<2x32xf32>
    %168 = math.tanh %167 : vector<2x32xf32>
    %c0_93 = arith.constant 0 : index
    %c0_94 = arith.constant 0 : index
    %169 = vector.load %arg9[%c0_93, %c0_94] : memref<32x64xf32, #tpu.memory_space<vmem>>, vector<32x64xf32>
    %cst_95 = arith.constant dense<0.000000e+00> : vector<2x64xf32>
    %170 = tpu.matmul %168, %169, %cst_95 {dimension_numbers = #tpu.dot_dimension_numbers<[1], [0], [0], [1], [0, 0, 1, 1], [], []>, precision = #tpu.contract_precision<fp32>} : vector<2x32xf32>, vector<32x64xf32>, vector<2x64xf32> -> vector<2x64xf32>
    %c0_96 = arith.constant 0 : index
    %c0_97 = arith.constant 0 : index
    %171 = vector.load %arg10[%c0_96, %c0_97] : memref<1x64xf32, #tpu.memory_space<vmem>>, vector<1x64xf32>
    %172 = vector.broadcast %171 : vector<1x64xf32> to vector<2x64xf32>
    %173 = arith.addf %170, %172 : vector<2x64xf32>
    %c0_98 = arith.constant 0 : index
    %c0_99 = arith.constant 0 : index
    %174 = vector.load %arg12[%c0_98, %c0_99] : memref<2x64xf32, #tpu.memory_space<vmem>>, vector<2x64xf32>
    tpu.vector_store %arg12[%c0_98, %c0_99], %173 {strides = array<i32>} : memref<2x64xf32, #tpu.memory_space<vmem>>, vector<2x64xf32>,
    return
  }
  func.func @transform_0(%arg0: i32) -> (i32, i32) {
    %c0_i32 = arith.constant 0 : i32
    %c0_i32_0 = arith.constant 0 : i32
    return %arg0, %c0_i32 : i32, i32
  }
  func.func @transform_1(%arg0: i32) -> (i32, i32, i32) {
    %c0_i32 = arith.constant 0 : i32
    %c0_i32_0 = arith.constant 0 : i32
    %c0_i32_1 = arith.constant 0 : i32
    return %c0_i32, %arg0, %c0_i32_0 : i32, i32, i32
  }
  func.func @transform_2(%arg0: i32) -> (i32, i32, i32) {
    %c0_i32 = arith.constant 0 : i32
    %c0_i32_0 = arith.constant 0 : i32
    %c0_i32_1 = arith.constant 0 : i32
    return %c0_i32, %arg0, %c0_i32_0 : i32, i32, i32
  }
  func.func @transform_3(%arg0: i32) -> (i32, i32, i32) {
    %c0_i32 = arith.constant 0 : i32
    %c0_i32_0 = arith.constant 0 : i32
    %c0_i32_1 = arith.constant 0 : i32
    %c0_i32_2 = arith.constant 0 : i32
    return %c0_i32, %c0_i32_0, %c0_i32_1 : i32, i32, i32
  }
  func.func @transform_4(%arg0: i32) -> (i32, i32, i32) {
    %c0_i32 = arith.constant 0 : i32
    %c0_i32_0 = arith.constant 0 : i32
    %c0_i32_1 = arith.constant 0 : i32
    %c0_i32_2 = arith.constant 0 : i32
    return %c0_i32, %c0_i32_0, %c0_i32_1 : i32, i32, i32
  }
  func.func @transform_5(%arg0: i32) -> (i32, i32) {
    %c0_i32 = arith.constant 0 : i32
    %c0_i32_0 = arith.constant 0 : i32
    %c0_i32_1 = arith.constant 0 : i32
    return %c0_i32, %c0_i32_0 : i32, i32
  }
  func.func @transform_6(%arg0: i32) -> (i32, i32, i32) {
    %c0_i32 = arith.constant 0 : i32
    %c0_i32_0 = arith.constant 0 : i32
    %c0_i32_1 = arith.constant 0 : i32
    %c0_i32_2 = arith.constant 0 : i32
    return %c0_i32, %c0_i32_0, %c0_i32_1 : i32, i32, i32
  }
  func.func @transform_7(%arg0: i32) -> (i32, i32) {
    %c0_i32 = arith.constant 0 : i32
    %c0_i32_0 = arith.constant 0 : i32
    %c0_i32_1 = arith.constant 0 : i32
    return %c0_i32, %c0_i32_0 : i32, i32
  }
  func.func @transform_8(%arg0: i32) -> (i32, i32) {
    %c0_i32 = arith.constant 0 : i32
    %c0_i32_0 = arith.constant 0 : i32
    %c0_i32_1 = arith.constant 0 : i32
    return %c0_i32, %c0_i32_0 : i32, i32
  }
  func.func @transform_9(%arg0: i32) -> (i32, i32) {
    %c0_i32 = arith.constant 0 : i32
    %c0_i32_0 = arith.constant 0 : i32
    %c0_i32_1 = arith.constant 0 : i32
    return %c0_i32, %c0_i32_0 : i32, i32
  }
  func.func @transform_10(%arg0: i32) -> (i32, i32, i32) {
    %c0_i32 = arith.constant 0 : i32
    %c0_i32_0 = arith.constant 0 : i32
    %c0_i32_1 = arith.constant 0 : i32
    return %c0_i32, %arg0, %c0_i32_0 : i32, i32, i32
  }
  func.func @transform_11(%arg0: i32) -> (i32, i32) {
    %c0_i32 = arith.constant 0 : i32
    %c0_i32_0 = arith.constant 0 : i32
    return %arg0, %c0_i32 : i32, i32
  }
  func.func @transform_12(%arg0: i32) -> (i32, i32) {
    %c0_i32 = arith.constant 0 : i32
    %c0_i32_0 = arith.constant 0 : i32
    return %arg0, %c0_i32 : i32, i32
  }
}

</mosaic_0001>

<llo_original>
// kernel: tpu_custom_call.1
$region0: #{tpu_custom_call.1}
  #allocation0 [shape = 'u32[]', space=smem, size = 0x4, offset = 0x4, fixed_abs, tag = 'smem constant byte address 0x4 - core index']
  #allocation1 [shape = 'u32[144,128]{1,0:T(1,128)}', space=vmem, size = 0x12000, scoped, tag = 'internal scratch']
  %s0 = inlined_call_operand.vmem [shape: f32[2,48], index: 0, kind: input, shape index: {}]
  %s1 = inlined_call_operand.vmem [shape: f32[2,2,32], index: 1, kind: input, shape index: {}]
  %s2 = inlined_call_operand.vmem [shape: f32[8,2,32], index: 2, kind: input, shape index: {}]
  %s3 = inlined_call_operand.vmem [shape: f32[3,48,32], index: 3, kind: input, shape index: {}]
  %s4 = inlined_call_operand.hbm [shape: f32[9,32,32], index: 4, kind: input, shape index: {}]
  %s5 = inlined_call_operand.vmem [shape: f32[8,32], index: 5, kind: input, shape index: {}]
  %s6 = inlined_call_operand.vmem [shape: f32[3,32,32], index: 6, kind: input, shape index: {}]
  %s7 = inlined_call_operand.vmem [shape: f32[2,32], index: 7, kind: input, shape index: {}]
  %s8 = inlined_call_operand.vmem [shape: f32[32,64], index: 8, kind: input, shape index: {}]
  %s9 = inlined_call_operand.vmem [shape: f32[1,64], index: 9, kind: input, shape index: {}]
  %s10 = inlined_call_operand.hbm [shape: f32[2,2,32], index: 10, kind: output, shape index: {0}]
  %s11 = inlined_call_operand.hbm [shape: f32[2,64], index: 11, kind: output, shape index: {1}]
  %s12 = inlined_call_operand.hbm [shape: f32[2,8], index: 12, kind: output, shape index: {2}]
  %13 = xla_tuple %s10, %s11, %s12
  %s14 = sld [smem:[#allocation0]]
  $region70: #{tpu_custom_call.1} parent=0
    _
  %s16 = ssub.s32 1, %s14
  %s17 = scalar_select 0, %s16, %s14
  $region1: #{tpu_custom_call.1} parent=0
    #allocation2 [shape = 'u8[147456]{0}', space=vmem, size = 0x24000, scoped, tag = 'input window, operand 4, single buffered']
    #allocation3 [shape = 's32[1]{0}', space=sflag, size = 0x4, scoped, tag = 'scoped memory for tpu_custom_call.1']
    #allocation4 [shape = 's32[1]{0}', space=sflag, size = 0x4, scoped, tag = 'scoped memory for tpu_custom_call.1']
    #allocation5 [shape = 'u8[2048]{0}', space=vmem, size = 0x800, scoped, tag = 'output window, operand 0, single buffered']
    #allocation6 [shape = 'u8[1024]{0}', space=vmem, size = 0x400, scoped, tag = 'output window, operand 1, single buffered']
    #allocation7 [shape = 's32[1]{0}', space=sflag, size = 0x4, scoped, tag = 'scoped memory for tpu_custom_call.1']
    #allocation8 [shape = 'u8[1024]{0}', space=vmem, size = 0x400, scoped, tag = 'output window, operand 2, single buffered']
    %18 = vsyncpa [#allocation3], 0
    %19 = vsyncpa [#allocation4], 0
    %20 = vsyncpa [#allocation7], 0
    // Predicated region
    $region2: #{tpu_custom_call.1} parent=1 // pred_check
      _
    $region3: #{tpu_custom_call.1} parent=1 // pred_check_branch
      %22 = sbr.rel (0) target = $region5
    $region4: #{tpu_custom_call.1} parent=1 // pred_region
      _
    $region5: #{tpu_custom_call.1} parent=1 // pred_fallthru
      _
    // Predicated region
    $region6: #{tpu_custom_call.1} parent=1 // pred_check
      _
    $region7: #{tpu_custom_call.1} parent=1 // pred_check_branch
      %24 = sbr.rel (0) target = $region9
    $region8: #{tpu_custom_call.1} parent=1 // pred_region
      _
    $region9: #{tpu_custom_call.1} parent=1 // pred_fallthru
      _
    // Predicated region
    $region10: #{tpu_custom_call.1} parent=1 // pred_check
      _
    $region11: #{tpu_custom_call.1} parent=1 // pred_check_branch
      %26 = sbr.rel (0) target = $region13
    $region12: #{tpu_custom_call.1} parent=1 // pred_region
      _
    $region13: #{tpu_custom_call.1} parent=1 // pred_fallthru
      _
    // Predicated region
    $region14: #{tpu_custom_call.1} parent=1 // pred_check
      _
    $region15: #{tpu_custom_call.1} parent=1 // pred_check_branch
      %28 = sbr.rel (0) target = $region17
    $region16: #{tpu_custom_call.1} parent=1 // pred_region
      _
    $region17: #{tpu_custom_call.1} parent=1 // pred_fallthru
      _
    // Predicated region
    $region18: #{tpu_custom_call.1} parent=1 // pred_check
      _
    $region19: #{tpu_custom_call.1} parent=1 // pred_check_branch
      %30 = sbr.rel (0) target = $region21
    $region20: #{tpu_custom_call.1} parent=1 // pred_region
      %s32 = ssub.s32 4608, 4608
      %33 = vsyncadd [#allocation3], %s32
      %s34 = sshll.u32 [#allocation2], 4
      %s35 = int_to_ptr.vmem [resolvable:$true] %s34
      %40 = dma.hbm_to_vmem [thread:$0]  %s4, 4608, %s35, [#allocation3], 128, 128, 8
    $region21: #{tpu_custom_call.1} parent=1 // pred_fallthru
      _
    // Predicated region
    $region22: #{tpu_custom_call.1} parent=1 // pred_check
      _
    $region23: #{tpu_custom_call.1} parent=1 // pred_check_branch
      %42 = sbr.rel (0) target = $region25
    $region24: #{tpu_custom_call.1} parent=1 // pred_region
      _
    $region25: #{tpu_custom_call.1} parent=1 // pred_fallthru
      _
    // Predicated region
    $region26: #{tpu_custom_call.1} parent=1 // pred_check
      _
    $region27: #{tpu_custom_call.1} parent=1 // pred_check_branch
      %44 = sbr.rel (0) target = $region29
    $region28: #{tpu_custom_call.1} parent=1 // pred_region
      _
    $region29: #{tpu_custom_call.1} parent=1 // pred_fallthru
      _
    // Predicated region
    $region30: #{tpu_custom_call.1} parent=1 // pred_check
      _
    $region31: #{tpu_custom_call.1} parent=1 // pred_check_branch
      %46 = sbr.rel (0) target = $region33
    $region32: #{tpu_custom_call.1} parent=1 // pred_region
      _
    $region33: #{tpu_custom_call.1} parent=1 // pred_fallthru
      _
    // Predicated region
    $region34: #{tpu_custom_call.1} parent=1 // pred_check
      _
    $region35: #{tpu_custom_call.1} parent=1 // pred_check_branch
      %48 = sbr.rel (0) target = $region37
    $region36: #{tpu_custom_call.1} parent=1 // pred_region
      _
    $region37: #{tpu_custom_call.1} parent=1 // pred_fallthru
      _
    // Predicated region
    $region38: #{tpu_custom_call.1} parent=1 // pred_check
      _
    $region39: #{tpu_custom_call.1} parent=1 // pred_check_branch
      %50 = sbr.rel (0) target = $region41
    $region40: #{tpu_custom_call.1} parent=1 // pred_region
      _
    $region41: #{tpu_custom_call.1} parent=1 // pred_fallthru
      _
    // Predicated region
    $region42: #{tpu_custom_call.1} parent=1 // pred_check
      _
    $region43: #{tpu_custom_call.1} parent=1 // pred_check_branch
      %52 = sbr.rel (0) target = $region45
    $region44: #{tpu_custom_call.1} parent=1 // pred_region
      %53 = dma.done [#allocation3], 4608
    $region45: #{tpu_custom_call.1} parent=1 // pred_fallthru
      _
    %v54 = vld [vmem:[%s0] sm:$0x3]
    %v55 = vld [vmem:[%s1] sm:$0x3]
    %s56 = scalar_lea.vmem %s1, 2
    %v57 = vld [vmem:[%s56] sm:$0x3]
    %v58 = vld [vmem:[%s5] sm:$0xff]
    %v59 = vld [vmem:[%s3] sm:$0xff]
    %v60 = vld [vmem:[%s3 + $0x8] sm:$0xff]
    %v61 = vld [vmem:[%s3 + $0x10] sm:$0xff]
    %v62 = vld [vmem:[%s3 + $0x18] sm:$0xff]
    %v63 = vld [vmem:[%s3 + $0x20] sm:$0xff]
    %v64 = vld [vmem:[%s3 + $0x28] sm:$0xff]
    %s65 = scalar_lea.vmem %s3, 48
    %v66 = vld [vmem:[%s65] sm:$0xff]
    %v67 = vld [vmem:[%s65 + $0x8] sm:$0xff]
    %v68 = vld [vmem:[%s65 + $0x10] sm:$0xff]
    %v69 = vld [vmem:[%s65 + $0x18] sm:$0xff]
    %v70 = vld [vmem:[%s65 + $0x20] sm:$0xff]
    %v71 = vld [vmem:[%s65 + $0x28] sm:$0xff]
    %s72 = scalar_lea.vmem %s3, 96
    %v73 = vld [vmem:[%s72] sm:$0xff]
    %v74 = vld [vmem:[%s72 + $0x8] sm:$0xff]
    %v75 = vld [vmem:[%s72 + $0x10] sm:$0xff]
    %v76 = vld [vmem:[%s72 + $0x18] sm:$0xff]
    %v77 = vld [vmem:[%s72 + $0x20] sm:$0xff]
    %v78 = vld [vmem:[%s72 + $0x28] sm:$0xff]
    %v79 = vld [vmem:[#allocation2] sm:$0xff]
    %v80 = vld [vmem:[#allocation2 + $0x8] sm:$0xff]
    %v81 = vld [vmem:[#allocation2 + $0x10] sm:$0xff]
    %v82 = vld [vmem:[#allocation2 + $0x18] sm:$0xff]
    %s83 = scalar_lea.vmem [#allocation2], 32
    %v84 = vld [vmem:[%s83] sm:$0xff]
    %v85 = vld [vmem:[%s83 + $0x8] sm:$0xff]
    %v86 = vld [vmem:[%s83 + $0x10] sm:$0xff]
    %v87 = vld [vmem:[%s83 + $0x18] sm:$0xff]
    %s88 = scalar_lea.vmem [#allocation2], 64
    %v89 = vld [vmem:[%s88] sm:$0xff]
    %v90 = vld [vmem:[%s88 + $0x8] sm:$0xff]
    %v91 = vld [vmem:[%s88 + $0x10] sm:$0xff]
    %v92 = vld [vmem:[%s88 + $0x18] sm:$0xff]
    %vm93 = vcmask 261120
    %v95 = vsel %vm93, %v55, 0
    %97 = vmatprep.subr.mxu0 0.0
    %v98 = vand.u32 %v79, 4294901760
    %99 = vmatpush1.msra.mxu0 %v98
    %100 = vmatprep.subr.mxu0 0.0
    %v101 = vand.u32 %v80, 4294901760
    %102 = vmatpush1.msra.mxu0 %v101
    %103 = vmatprep.subr.mxu0 0.0
    %v104 = vand.u32 %v81, 4294901760
    %105 = vmatpush1.msra.mxu0 %v104
    %106 = vmatprep.subr.mxu0 0.0
    %v107 = vand.u32 %v82, 4294901760
    %108 = vmatpush1.msra.mxu0 %v107
    %109 = vmatprep.subr.mxu0 0.0
    %110 = vmatpush1.msra.mxu0 0.0
    %111 = vmatprep.subr.mxu0 0.0
    %112 = vmatpush1.msra.mxu0 0.0
    %113 = vmatprep.subr.mxu0 0.0
    %114 = vmatpush1.msra.mxu0 0.0
    %115 = vmatprep.subr.mxu0 0.0
    %116 = vmatpush1.msra.mxu0 0.0
    %117 = vmatprep.subr.mxu0 0.0
    %118 = vmatpush1.msra.mxu0 0.0
    %119 = vmatprep.subr.mxu0 0.0
    %120 = vmatpush1.msra.mxu0 0.0
    %121 = vmatprep.subr.mxu0 0.0
    %122 = vmatpush1.msra.mxu0 0.0
    %123 = vmatprep.subr.mxu0 0.0
    %124 = vmatpush1.msra.mxu0 0.0
    %125 = vmatprep.subr.mxu0 0.0
    %126 = vmatpush1.msra.mxu0 0.0
    %127 = vmatprep.subr.mxu0 0.0
    %128 = vmatpush1.msra.mxu0 0.0
    %129 = vmatprep.subr.mxu0 0.0
    %130 = vmatpush1.msra.mxu0 0.0
    %131 = vmatprep.subr.mxu0 0.0
    %132 = vmatpush1.msra.mxu0 0.0
    %133 = vmatprep.subr.mxu0 0.0
    %134 = vmatpush1.msra.mxu0 0.0
    %135 = vmatprep.subr.mxu0 0.0
    %136 = vmatpush1.msra.mxu0 0.0
    %137 = vmatprep.subr.mxu0 0.0
    %138 = vmatpush1.msra.mxu0 0.0
    %139 = vmatprep.subr.mxu0 0.0
    %140 = vmatpush1.msra.mxu0 0.0
    %141 = vmatprep.subr.mxu0 0.0
    %142 = vmatpush1.msra.mxu0 0.0
    %143 = vmatprep.subr.mxu0 0.0
    %144 = vmatpush1.msra.mxu0 0.0
    %145 = vmatprep.subr.mxu0 0.0
    %146 = vmatpush1.msra.mxu0 0.0
    %147 = vmatprep.subr.mxu0 0.0
    %148 = vmatpush1.msra.mxu0 0.0
    %149 = vmatprep.subr.mxu0 0.0
    %150 = vmatpush1.msra.mxu0 0.0
    %151 = vmatprep.subr.mxu0 0.0
    %152 = vmatpush1.msra.mxu0 0.0
    %153 = vmatprep.subr.mxu0 0.0
    %154 = vmatpush1.msra.mxu0 0.0
    %155 = vmatprep.subr.mxu0 0.0
    %156 = vmatpush1.msra.mxu0 0.0
    %157 = vmatprep.subr.mxu0 0.0
    %158 = vmatpush1.msra.mxu0 0.0
    %159 = vmatprep.subr.mxu0 0.0
    %160 = vmatpush1.msra.mxu0 0.0
    %161 = vmatprep.subr.mxu0 0.0
    %162 = vmatpush1.msra.mxu0 0.0
    %163 = vmatprep.subr.mxu0 0.0
    %164 = vmatpush1.msra.mxu0 0.0
    %165 = vmatprep.mubr.f32.mxu0 0.0
    %v166 = vand.u32 %v95, 4294901760
    %v167 = vsub.f32 %v95, %v166
    %v168 = vand.u32 %v167, 4294901760
    %v169 = vsub.f32 %v167, %v168
    %v170 = vand.u32 %v169, 4294901760
    %171 = vmatmul.mubr.f32.gmra.mrb[0].mxu0 %v170
    %v172 = vpop.f32.mrb[0].mxu0
    %v173 = vadd.f32 0.0, %v172
    %v174 = vpop.f32.mrb[0].mxu0
    %175 = vdwg.mxu0
    %176 = vmatprep.subr.mxu0 0.0
    %v177 = vand.u32 %v79, 4294901760
    %v178 = vsub.f32 %v79, %v177
    %v179 = vand.u32 %v178, 4294901760
    %v180 = vsub.f32 %v178, %v179
    %v181 = vand.u32 %v180, 4294901760
    %182 = vmatpush1.msra.mxu0 %v181
    %183 = vmatprep.subr.mxu0 0.0
    %v184 = vand.u32 %v80, 4294901760
    %v185 = vsub.f32 %v80, %v184
    %v186 = vand.u32 %v185, 4294901760
    %v187 = vsub.f32 %v185, %v186
    %v188 = vand.u32 %v187, 4294901760
    %189 = vmatpush1.msra.mxu0 %v188
    %190 = vmatprep.subr.mxu0 0.0
    %v191 = vand.u32 %v81, 4294901760
    %v192 = vsub.f32 %v81, %v191
    %v193 = vand.u32 %v192, 4294901760
    %v194 = vsub.f32 %v192, %v193
    %v195 = vand.u32 %v194, 4294901760
    %196 = vmatpush1.msra.mxu0 %v195
    %197 = vmatprep.subr.mxu0 0.0
    %v198 = vand.u32 %v82, 4294901760
    %v199 = vsub.f32 %v82, %v198
    %v200 = vand.u32 %v199, 4294901760
    %v201 = vsub.f32 %v199, %v200
    %v202 = vand.u32 %v201, 4294901760
    %203 = vmatpush1.msra.mxu0 %v202
    %204 = vmatprep.subr.mxu0 0.0
    %205 = vmatpush1.msra.mxu0 0.0
    %206 = vmatprep.subr.mxu0 0.0
    %207 = vmatpush1.msra.mxu0 0.0
    %208 = vmatprep.subr.mxu0 0.0
    %209 = vmatpush1.msra.mxu0 0.0
    %210 = vmatprep.subr.mxu0 0.0
    %211 = vmatpush1.msra.mxu0 0.0
    %212 = vmatprep.subr.mxu0 0.0
    %213 = vmatpush1.msra.mxu0 0.0
    %214 = vmatprep.subr.mxu0 0.0
    %215 = vmatpush1.msra.mxu0 0.0
    %216 = vmatprep.subr.mxu0 0.0
    %217 = vmatpush1.msra.mxu0 0.0
    %218 = vmatprep.subr.mxu0 0.0
    %219 = vmatpush1.msra.mxu0 0.0
    %220 = vmatprep.subr.mxu0 0.0
    %221 = vmatpush1.msra.mxu0 0.0
    %222 = vmatprep.subr.mxu0 0.0
    %223 = vmatpush1.msra.mxu0 0.0
    %224 = vmatprep.subr.mxu0 0.0
    %225 = vmatpush1.msra.mxu0 0.0
    %226 = vmatprep.subr.mxu0 0.0
    %227 = vmatpush1.msra.mxu0 0.0
    %228 = vmatprep.subr.mxu0 0.0
    %229 = vmatpush1.msra.mxu0 0.0
    %230 = vmatprep.subr.mxu0 0.0
    %231 = vmatpush1.msra.mxu0 0.0
    %232 = vmatprep.subr.mxu0 0.0
    %233 = vmatpush1.msra.mxu0 0.0
    %234 = vmatprep.subr.mxu0 0.0
    %235 = vmatpush1.msra.mxu0 0.0
    %236 = vmatprep.subr.mxu0 0.0
    %237 = vmatpush1.msra.mxu0 0.0
    %238 = vmatprep.subr.mxu0 0.0
    %239 = vmatpush1.msra.mxu0 0.0
    %240 = vmatprep.subr.mxu0 0.0
    %241 = vmatpush1.msra.mxu0 0.0
    %242 = vmatprep.subr.mxu0 0.0
    %243 = vmatpush1.msra.mxu0 0.0
    %244 = vmatprep.subr.mxu0 0.0
    %245 = vmatpush1.msra.mxu0 0.0
    %246 = vmatprep.subr.mxu0 0.0
    %247 = vmatpush1.msra.mxu0 0.0
    %248 = vmatprep.subr.mxu0 0.0
    %249 = vmatpush1.msra.mxu0 0.0
    %250 = vmatprep.subr.mxu0 0.0
    %251 = vmatpush1.msra.mxu0 0.0
    %252 = vmatprep.subr.mxu0 0.0
    %253 = vmatpush1.msra.mxu0 0.0
    %254 = vmatprep.subr.mxu0 0.0
    %255 = vmatpush1.msra.mxu0 0.0
    %256 = vmatprep.subr.mxu0 0.0
    %257 = vmatpush1.msra.mxu0 0.0
    %258 = vmatprep.subr.mxu0 0.0
    %259 = vmatpush1.msra.mxu0 0.0
    %260 = vmatprep.mubr.f32.mxu0 0.0
    %v261 = vand.u32 %v95, 4294901760
    %262 = vmatmul.mubr.f32.gmra.mrb[0].mxu0 %v261
    %v263 = vpop.f32.mrb[0].mxu0
    %v264 = vadd.f32 %v173, %v263
    %v265 = vpop.f32.mrb[0].mxu0
    %266 = vdwg.mxu0
    %267 = vmatprep.subr.mxu0 0.0
    %v268 = vand.u32 %v79, 4294901760
    %v269 = vsub.f32 %v79, %v268
    %270 = vmatpush1.msra.mxu0 %v269
    %271 = vmatprep.subr.mxu0 0.0
    %v272 = vand.u32 %v80, 4294901760
    %v273 = vsub.f32 %v80, %v272
    %274 = vmatpush1.msra.mxu0 %v273
    %275 = vmatprep.subr.mxu0 0.0
    %v276 = vand.u32 %v81, 4294901760
    %v277 = vsub.f32 %v81, %v276
    %278 = vmatpush1.msra.mxu0 %v277
    %279 = vmatprep.subr.mxu0 0.0
    %v280 = vand.u32 %v82, 4294901760
    %v281 = vsub.f32 %v82, %v280
    %282 = vmatpush1.msra.mxu0 %v281
    %283 = vmatprep.subr.mxu0 0.0
    %284 = vmatpush1.msra.mxu0 0.0
    %285 = vmatprep.subr.mxu0 0.0
    %286 = vmatpush1.msra.mxu0 0.0
    %287 = vmatprep.subr.mxu0 0.0
    %288 = vmatpush1.msra.mxu0 0.0
    %289 = vmatprep.subr.mxu0 0.0
    %290 = vmatpush1.msra.mxu0 0.0
    %291 = vmatprep.subr.mxu0 0.0
    %292 = vmatpush1.msra.mxu0 0.0
    %293 = vmatprep.subr.mxu0 0.0
    %294 = vmatpush1.msra.mxu0 0.0
    %295 = vmatprep.subr.mxu0 0.0
    %296 = vmatpush1.msra.mxu0 0.0
    %297 = vmatprep.subr.mxu0 0.0
    %298 = vmatpush1.msra.mxu0 0.0
    %299 = vmatprep.subr.mxu0 0.0
    %300 = vmatpush1.msra.mxu0 0.0
    %301 = vmatprep.subr.mxu0 0.0
    %302 = vmatpush1.msra.mxu0 0.0
    %303 = vmatprep.subr.mxu0 0.0
    %304 = vmatpush1.msra.mxu0 0.0
    %305 = vmatprep.subr.mxu0 0.0
    %306 = vmatpush1.msra.mxu0 0.0
    %307 = vmatprep.subr.mxu0 0.0
    %308 = vmatpush1.msra.mxu0 0.0
    %309 = vmatprep.subr.mxu0 0.0
    %310 = vmatpush1.msra.mxu0 0.0
    %311 = vmatprep.subr.mxu0 0.0
    %312 = vmatpush1.msra.mxu0 0.0
    %313 = vmatprep.subr.mxu0 0.0
    %314 = vmatpush1.msra.mxu0 0.0
    %315 = vmatprep.subr.mxu0 0.0
    %316 = vmatpush1.msra.mxu0 0.0
    %317 = vmatprep.subr.mxu0 0.0
    %318 = vmatpush1.msra.mxu0 0.0
    %319 = vmatprep.subr.mxu0 0.0
    %320 = vmatpush1.msra.mxu0 0.0
    %321 = vmatprep.subr.mxu0 0.0
    %322 = vmatpush1.msra.mxu0 0.0
    %323 = vmatprep.subr.mxu0 0.0
    %324 = vmatpush1.msra.mxu0 0.0
    %325 = vmatprep.subr.mxu0 0.0
    %326 = vmatpush1.msra.mxu0 0.0
    %327 = vmatprep.subr.mxu0 0.0
    %328 = vmatpush1.msra.mxu0 0.0
    %329 = vmatprep.subr.mxu0 0.0
    %330 = vmatpush1.msra.mxu0 0.0
    %331 = vmatprep.subr.mxu0 0.0
    %332 = vmatpush1.msra.mxu0 0.0
    %333 = vmatprep.subr.mxu0 0.0
    %334 = vmatpush1.msra.mxu0 0.0
    %335 = vmatprep.subr.mxu0 0.0
    %336 = vmatpush1.msra.mxu0 0.0
    %337 = vmatprep.subr.mxu0 0.0
    %338 = vmatpush1.msra.mxu0 0.0
    %339 = vmatprep.mubr.f32.mxu0 0.0
    %v340 = vand.u32 %v95, 4294901760
    %v341 = vsub.f32 %v95, %v340
    %342 = vmatmul.mubr.f32.gmra.mrb[0].mxu0 %v341
    %v343 = vpop.f32.mrb[0].mxu0
    %v344 = vadd.f32 %v264, %v343
    %v345 = vpop.f32.mrb[0].mxu0
    %346 = vdwg.mxu0
    %347 = vmatprep.subr.mxu0 0.0
    %v348 = vand.u32 %v79, 4294901760
    %349 = vmatpush1.msra.mxu0 %v348
    %350 = vmatprep.subr.mxu0 0.0
    %v351 = vand.u32 %v80, 4294901760
    %352 = vmatpush1.msra.mxu0 %v351
    %353 = vmatprep.subr.mxu0 0.0
    %v354 = vand.u32 %v81, 4294901760
    %355 = vmatpush1.msra.mxu0 %v354
    %356 = vmatprep.subr.mxu0 0.0
    %v357 = vand.u32 %v82, 4294901760
    %358 = vmatpush1.msra.mxu0 %v357
    %359 = vmatprep.subr.mxu0 0.0
    %360 = vmatpush1.msra.mxu0 0.0
    %361 = vmatprep.subr.mxu0 0.0
    %362 = vmatpush1.msra.mxu0 0.0
    %363 = vmatprep.subr.mxu0 0.0
    %364 = vmatpush1.msra.mxu0 0.0
    %365 = vmatprep.subr.mxu0 0.0
    %366 = vmatpush1.msra.mxu0 0.0
    %367 = vmatprep.subr.mxu0 0.0
    %368 = vmatpush1.msra.mxu0 0.0
    %369 = vmatprep.subr.mxu0 0.0
    %370 = vmatpush1.msra.mxu0 0.0
    %371 = vmatprep.subr.mxu0 0.0
    %372 = vmatpush1.msra.mxu0 0.0
    %373 = vmatprep.subr.mxu0 0.0
    %374 = vmatpush1.msra.mxu0 0.0
    %375 = vmatprep.subr.mxu0 0.0
    %376 = vmatpush1.msra.mxu0 0.0
    %377 = vmatprep.subr.mxu0 0.0
    %378 = vmatpush1.msra.mxu0 0.0
    %379 = vmatprep.subr.mxu0 0.0
    %380 = vmatpush1.msra.mxu0 0.0
    %381 = vmatprep.subr.mxu0 0.0
    %382 = vmatpush1.msra.mxu0 0.0
    %383 = vmatprep.subr.mxu0 0.0
    %384 = vmatpush1.msra.mxu0 0.0
    %385 = vmatprep.subr.mxu0 0.0
    %386 = vmatpush1.msra.mxu0 0.0
    %387 = vmatprep.subr.mxu0 0.0
    %388 = vmatpush1.msra.mxu0 0.0
    %389 = vmatprep.subr.mxu0 0.0
    %390 = vmatpush1.msra.mxu0 0.0
    %391 = vmatprep.subr.mxu0 0.0
    %392 = vmatpush1.msra.mxu0 0.0
    %393 = vmatprep.subr.mxu0 0.0
    %394 = vmatpush1.msra.mxu0 0.0
    %395 = vmatprep.subr.mxu0 0.0
    %396 = vmatpush1.msra.mxu0 0.0
    %397 = vmatprep.subr.mxu0 0.0
    %398 = vmatpush1.msra.mxu0 0.0
    %399 = vmatprep.subr.mxu0 0.0
    %400 = vmatpush1.msra.mxu0 0.0
    %401 = vmatprep.subr.mxu0 0.0
    %402 = vmatpush1.msra.mxu0 0.0
    %403 = vmatprep.subr.mxu0 0.0
    %404 = vmatpush1.msra.mxu0 0.0
    %405 = vmatprep.subr.mxu0 0.0
    %406 = vmatpush1.msra.mxu0 0.0
    %407 = vmatprep.subr.mxu0 0.0
    %408 = vmatpush1.msra.mxu0 0.0
    %409 = vmatprep.subr.mxu0 0.0
    %410 = vmatpush1.msra.mxu0 0.0
    %411 = vmatprep.subr.mxu0 0.0
    %412 = vmatpush1.msra.mxu0 0.0
    %413 = vmatprep.subr.mxu0 0.0
    %414 = vmatpush1.msra.mxu0 0.0
    %415 = vmatprep.mubr.f32.mxu0 0.0
    %v416 = vand.u32 %v95, 4294901760
    %v417 = vsub.f32 %v95, %v416
    %v418 = vand.u32 %v417, 4294901760
    %419 = vmatmul.mubr.f32.gmra.mrb[0].mxu0 %v418
    %v420 = vpop.f32.mrb[0].mxu0
    %v421 = vadd.f32 %v344, %v420
    %v422 = vpop.f32.mrb[0].mxu0
    %423 = vdwg.mxu0
    %424 = vmatprep.subr.mxu0 0.0
    %v425 = vand.u32 %v79, 4294901760
    %v426 = vsub.f32 %v79, %v425
    %v427 = vand.u32 %v426, 4294901760
    %428 = vmatpush1.msra.mxu0 %v427
    %429 = vmatprep.subr.mxu0 0.0
    %v430 = vand.u32 %v80, 4294901760
    %v431 = vsub.f32 %v80, %v430
    %v432 = vand.u32 %v431, 4294901760
    %433 = vmatpush1.msra.mxu0 %v432
    %434 = vmatprep.subr.mxu0 0.0
    %v435 = vand.u32 %v81, 4294901760
    %v436 = vsub.f32 %v81, %v435
    %v437 = vand.u32 %v436, 4294901760
    %438 = vmatpush1.msra.mxu0 %v437
    %439 = vmatprep.subr.mxu0 0.0
    %v440 = vand.u32 %v82, 4294901760
    %v441 = vsub.f32 %v82, %v440
    %v442 = vand.u32 %v441, 4294901760
    %443 = vmatpush1.msra.mxu0 %v442
    %444 = vmatprep.subr.mxu0 0.0
    %445 = vmatpush1.msra.mxu0 0.0
    %446 = vmatprep.subr.mxu0 0.0
    %447 = vmatpush1.msra.mxu0 0.0
    %448 = vmatprep.subr.mxu0 0.0
    %449 = vmatpush1.msra.mxu0 0.0
    %450 = vmatprep.subr.mxu0 0.0
    %451 = vmatpush1.msra.mxu0 0.0
    %452 = vmatprep.subr.mxu0 0.0
    %453 = vmatpush1.msra.mxu0 0.0
    %454 = vmatprep.subr.mxu0 0.0
    %455 = vmatpush1.msra.mxu0 0.0
    %456 = vmatprep.subr.mxu0 0.0
    %457 = vmatpush1.msra.mxu0 0.0
    %458 = vmatprep.subr.mxu0 0.0
    %459 = vmatpush1.msra.mxu0 0.0
    %460 = vmatprep.subr.mxu0 0.0
    %461 = vmatpush1.msra.mxu0 0.0
    %462 = vmatprep.subr.mxu0 0.0
    %463 = vmatpush1.msra.mxu0 0.0
    %464 = vmatprep.subr.mxu0 0.0
    %465 = vmatpush1.msra.mxu0 0.0
    %466 = vmatprep.subr.mxu0 0.0
    %467 = vmatpush1.msra.mxu0 0.0
    %468 = vmatprep.subr.mxu0 0.0
    %469 = vmatpush1.msra.mxu0 0.0
    %470 = vmatprep.subr.mxu0 0.0
    %471 = vmatpush1.msra.mxu0 0.0
    %472 = vmatprep.subr.mxu0 0.0
    %473 = vmatpush1.msra.mxu0 0.0
    %474 = vmatprep.subr.mxu0 0.0
    %475 = vmatpush1.msra.mxu0 0.0
    %476 = vmatprep.subr.mxu0 0.0
    %477 = vmatpush1.msra.mxu0 0.0
    %478 = vmatprep.subr.mxu0 0.0
    %479 = vmatpush1.msra.mxu0 0.0
    %480 = vmatprep.subr.mxu0 0.0
    %481 = vmatpush1.msra.mxu0 0.0
    %482 = vmatprep.subr.mxu0 0.0
    %483 = vmatpush1.msra.mxu0 0.0
    %484 = vmatprep.subr.mxu0 0.0
    %485 = vmatpush1.msra.mxu0 0.0
    %486 = vmatprep.subr.mxu0 0.0
    %487 = vmatpush1.msra.mxu0 0.0
    %488 = vmatprep.subr.mxu0 0.0
    %489 = vmatpush1.msra.mxu0 0.0
    %490 = vmatprep.subr.mxu0 0.0
    %491 = vmatpush1.msra.mxu0 0.0
    %492 = vmatprep.subr.mxu0 0.0
    %493 = vmatpush1.msra.mxu0 0.0
    %494 = vmatprep.subr.mxu0 0.0
    %495 = vmatpush1.msra.mxu0 0.0
    %496 = vmatprep.subr.mxu0 0.0
    %497 = vmatpush1.msra.mxu0 0.0
    %498 = vmatprep.subr.mxu0 0.0
    %499 = vmatpush1.msra.mxu0 0.0
    %500 = vmatprep.mubr.f32.mxu0 0.0
    %v501 = vand.u32 %v95, 4294901760
    %502 = vmatmul.mubr.f32.gmra.mrb[0].mxu0 %v501
    %v503 = vpop.f32.mrb[0].mxu0
    %v504 = vadd.f32 %v421, %v503
    %v505 = vpop.f32.mrb[0].mxu0
    %506 = vdwg.mxu0
    %507 = vmatprep.subr.mxu0 0.0
    %v508 = vand.u32 %v79, 4294901760
    %509 = vmatpush1.msra.mxu0 %v508
    %510 = vmatprep.subr.mxu0 0.0
    %v511 = vand.u32 %v80, 4294901760
    %512 = vmatpush1.msra.mxu0 %v511
    %513 = vmatprep.subr.mxu0 0.0
    %v514 = vand.u32 %v81, 4294901760
    %515 = vmatpush1.msra.mxu0 %v514
    %516 = vmatprep.subr.mxu0 0.0
    %v517 = vand.u32 %v82, 4294901760
    %518 = vmatpush1.msra.mxu0 %v517
    %519 = vmatprep.subr.mxu0 0.0
    %520 = vmatpush1.msra.mxu0 0.0
    %521 = vmatprep.subr.mxu0 0.0
    %522 = vmatpush1.msra.mxu0 0.0
    %523 = vmatprep.subr.mxu0 0.0
    %524 = vmatpush1.msra.mxu0 0.0
    %525 = vmatprep.subr.mxu0 0.0
    %526 = vmatpush1.msra.mxu0 0.0
    %527 = vmatprep.subr.mxu0 0.0
    %528 = vmatpush1.msra.mxu0 0.0
    %529 = vmatprep.subr.mxu0 0.0
    %530 = vmatpush1.msra.mxu0 0.0
    %531 = vmatprep.subr.mxu0 0.0
    %532 = vmatpush1.msra.mxu0 0.0
    %533 = vmatprep.subr.mxu0 0.0
    %534 = vmatpush1.msra.mxu0 0.0
    %535 = vmatprep.subr.mxu0 0.0
    %536 = vmatpush1.msra.mxu0 0.0
    %537 = vmatprep.subr.mxu0 0.0
    %538 = vmatpush1.msra.mxu0 0.0
    %539 = vmatprep.subr.mxu0 0.0
    %540 = vmatpush1.msra.mxu0 0.0
    %541 = vmatprep.subr.mxu0 0.0
    %542 = vmatpush1.msra.mxu0 0.0
    %543 = vmatprep.subr.mxu0 0.0
    %544 = vmatpush1.msra.mxu0 0.0
    %545 = vmatprep.subr.mxu0 0.0
    %546 = vmatpush1.msra.mxu0 0.0
    %547 = vmatprep.subr.mxu0 0.0
    %548 = vmatpush1.msra.mxu0 0.0
    %549 = vmatprep.subr.mxu0 0.0
    %550 = vmatpush1.msra.mxu0 0.0
    %551 = vmatprep.subr.mxu0 0.0
    %552 = vmatpush1.msra.mxu0 0.0
    %553 = vmatprep.subr.mxu0 0.0
    %554 = vmatpush1.msra.mxu0 0.0
    %555 = vmatprep.subr.mxu0 0.0
    %556 = vmatpush1.msra.mxu0 0.0
    %557 = vmatprep.subr.mxu0 0.0
    %558 = vmatpush1.msra.mxu0 0.0
    %559 = vmatprep.subr.mxu0 0.0
    %560 = vmatpush1.msra.mxu0 0.0
    %561 = vmatprep.subr.mxu0 0.0
    %562 = vmatpush1.msra.mxu0 0.0
    %563 = vmatprep.subr.mxu0 0.0
    %564 = vmatpush1.msra.mxu0 0.0
    %565 = vmatprep.subr.mxu0 0.0
    %566 = vmatpush1.msra.mxu0 0.0
    %567 = vmatprep.subr.mxu0 0.0
    %568 = vmatpush1.msra.mxu0 0.0
    %569 = vmatprep.subr.mxu0 0.0
    %570 = vmatpush1.msra.mxu0 0.0
    %571 = vmatprep.subr.mxu0 0.0
    %572 = vmatpush1.msra.mxu0 0.0
    %573 = vmatprep.subr.mxu0 0.0
    %574 = vmatpush1.msra.mxu0 0.0
    %575 = vmatprep.mubr.f32.mxu0 0.0
    %v576 = vand.u32 %v95, 4294901760
    %577 = vmatmul.mubr.f32.gmra.mrb[0].mxu0 %v576
    %v578 = vpop.f32.mrb[0].mxu0
    %v579 = vadd.f32 %v504, %v578
    %v580 = vpop.f32.mrb[0].mxu0
    %581 = vdwg.mxu0
    %vm582 = vcmask 392192
    %v584 = vsel %vm582, %v54, 0
    %586 = vmatprep.subr.mxu0 0.0
    %v587 = vand.u32 %v59, 4294901760
    %588 = vmatpush1.msra.mxu0 %v587
    %589 = vmatprep.subr.mxu0 0.0
    %v590 = vand.u32 %v60, 4294901760
    %591 = vmatpush1.msra.mxu0 %v590
    %592 = vmatprep.subr.mxu0 0.0
    %v593 = vand.u32 %v61, 4294901760
    %594 = vmatpush1.msra.mxu0 %v593
    %595 = vmatprep.subr.mxu0 0.0
    %v596 = vand.u32 %v62, 4294901760
    %597 = vmatpush1.msra.mxu0 %v596
    %598 = vmatprep.subr.mxu0 0.0
    %v599 = vand.u32 %v63, 4294901760
    %600 = vmatpush1.msra.mxu0 %v599
    %601 = vmatprep.subr.mxu0 0.0
    %v602 = vand.u32 %v64, 4294901760
    %603 = vmatpush1.msra.mxu0 %v602
    %604 = vmatprep.subr.mxu0 0.0
    %605 = vmatpush1.msra.mxu0 0.0
    %606 = vmatprep.subr.mxu0 0.0
    %607 = vmatpush1.msra.mxu0 0.0
    %608 = vmatprep.subr.mxu0 0.0
    %609 = vmatpush1.msra.mxu0 0.0
    %610 = vmatprep.subr.mxu0 0.0
    %611 = vmatpush1.msra.mxu0 0.0
    %612 = vmatprep.subr.mxu0 0.0
    %613 = vmatpush1.msra.mxu0 0.0
    %614 = vmatprep.subr.mxu0 0.0
    %615 = vmatpush1.msra.mxu0 0.0
    %616 = vmatprep.subr.mxu0 0.0
    %617 = vmatpush1.msra.mxu0 0.0
    %618 = vmatprep.subr.mxu0 0.0
    %619 = vmatpush1.msra.mxu0 0.0
    %620 = vmatprep.subr.mxu0 0.0
    %621 = vmatpush1.msra.mxu0 0.0
    %622 = vmatprep.subr.mxu0 0.0
    %623 = vmatpush1.msra.mxu0 0.0
    %624 = vmatprep.subr.mxu0 0.0
    %625 = vmatpush1.msra.mxu0 0.0
    %626 = vmatprep.subr.mxu0 0.0
    %627 = vmatpush1.msra.mxu0 0.0
    %628 = vmatprep.subr.mxu0 0.0
    %629 = vmatpush1.msra.mxu0 0.0
    %630 = vmatprep.subr.mxu0 0.0
    %631 = vmatpush1.msra.mxu0 0.0
    %632 = vmatprep.subr.mxu0 0.0
    %633 = vmatpush1.msra.mxu0 0.0
    %634 = vmatprep.subr.mxu0 0.0
    %635 = vmatpush1.msra.mxu0 0.0
    %636 = vmatprep.subr.mxu0 0.0
    %637 = vmatpush1.msra.mxu0 0.0
    %638 = vmatprep.subr.mxu0 0.0
    %639 = vmatpush1.msra.mxu0 0.0
    %640 = vmatprep.subr.mxu0 0.0
    %641 = vmatpush1.msra.mxu0 0.0
    %642 = vmatprep.subr.mxu0 0.0
    %643 = vmatpush1.msra.mxu0 0.0
    %644 = vmatprep.subr.mxu0 0.0
    %645 = vmatpush1.msra.mxu0 0.0
    %646 = vmatprep.subr.mxu0 0.0
    %647 = vmatpush1.msra.mxu0 0.0
    %648 = vmatprep.subr.mxu0 0.0
    %649 = vmatpush1.msra.mxu0 0.0
    %650 = vmatprep.subr.mxu0 0.0
    %651 = vmatpush1.msra.mxu0 0.0
    %652 = vmatprep.subr.mxu0 0.0
    %653 = vmatpush1.msra.mxu0 0.0
    %654 = vmatprep.subr.mxu0 0.0
    %655 = vmatpush1.msra.mxu0 0.0
    %656 = vmatprep.mubr.f32.mxu0 0.0
    %v657 = vand.u32 %v584, 4294901760
    %v658 = vsub.f32 %v584, %v657
    %v659 = vand.u32 %v658, 4294901760
    %v660 = vsub.f32 %v658, %v659
    %v661 = vand.u32 %v660, 4294901760
    %662 = vmatmul.mubr.f32.gmra.mrb[0].mxu0 %v661
    %v663 = vpop.f32.mrb[0].mxu0
    %v664 = vadd.f32 %v579, %v663
    %v665 = vpop.f32.mrb[0].mxu0
    %666 = vdwg.mxu0
    %667 = vmatprep.subr.mxu0 0.0
    %v668 = vand.u32 %v59, 4294901760
    %v669 = vsub.f32 %v59, %v668
    %v670 = vand.u32 %v669, 4294901760
    %v671 = vsub.f32 %v669, %v670
    %v672 = vand.u32 %v671, 4294901760
    %673 = vmatpush1.msra.mxu0 %v672
    %674 = vmatprep.subr.mxu0 0.0
    %v675 = vand.u32 %v60, 4294901760
    %v676 = vsub.f32 %v60, %v675
    %v677 = vand.u32 %v676, 4294901760
    %v678 = vsub.f32 %v676, %v677
    %v679 = vand.u32 %v678, 4294901760
    %680 = vmatpush1.msra.mxu0 %v679
    %681 = vmatprep.subr.mxu0 0.0
    %v682 = vand.u32 %v61, 4294901760
    %v683 = vsub.f32 %v61, %v682
    %v684 = vand.u32 %v683, 4294901760
    %v685 = vsub.f32 %v683, %v684
    %v686 = vand.u32 %v685, 4294901760
    %687 = vmatpush1.msra.mxu0 %v686
    %688 = vmatprep.subr.mxu0 0.0
    %v689 = vand.u32 %v62, 4294901760
    %v690 = vsub.f32 %v62, %v689
    %v691 = vand.u32 %v690, 4294901760
    %v692 = vsub.f32 %v690, %v691
    %v693 = vand.u32 %v692, 4294901760
    %694 = vmatpush1.msra.mxu0 %v693
    %695 = vmatprep.subr.mxu0 0.0
    %v696 = vand.u32 %v63, 4294901760
    %v697 = vsub.f32 %v63, %v696
    %v698 = vand.u32 %v697, 4294901760
    %v699 = vsub.f32 %v697, %v698
    %v700 = vand.u32 %v699, 4294901760
    %701 = vmatpush1.msra.mxu0 %v700
    %702 = vmatprep.subr.mxu0 0.0
    %v703 = vand.u32 %v64, 4294901760
    %v704 = vsub.f32 %v64, %v703
    %v705 = vand.u32 %v704, 4294901760
    %v706 = vsub.f32 %v704, %v705
    %v707 = vand.u32 %v706, 4294901760
    %708 = vmatpush1.msra.mxu0 %v707
    %709 = vmatprep.subr.mxu0 0.0
    %710 = vmatpush1.msra.mxu0 0.0
    %711 = vmatprep.subr.mxu0 0.0
    %712 = vmatpush1.msra.mxu0 0.0
    %713 = vmatprep.subr.mxu0 0.0
    %714 = vmatpush1.msra.mxu0 0.0
    %715 = vmatprep.subr.mxu0 0.0
    %716 = vmatpush1.msra.mxu0 0.0
    %717 = vmatprep.subr.mxu0 0.0
    %718 = vmatpush1.msra.mxu0 0.0
    %719 = vmatprep.subr.mxu0 0.0
    %720 = vmatpush1.msra.mxu0 0.0
    %721 = vmatprep.subr.mxu0 0.0
    %722 = vmatpush1.msra.mxu0 0.0
    %723 = vmatprep.subr.mxu0 0.0
    %724 = vmatpush1.msra.mxu0 0.0
    %725 = vmatprep.subr.mxu0 0.0
    %726 = vmatpush1.msra.mxu0 0.0
    %727 = vmatprep.subr.mxu0 0.0
    %728 = vmatpush1.msra.mxu0 0.0
    %729 = vmatprep.subr.mxu0 0.0
    %730 = vmatpush1.msra.mxu0 0.0
    %731 = vmatprep.subr.mxu0 0.0
    %732 = vmatpush1.msra.mxu0 0.0
    %733 = vmatprep.subr.mxu0 0.0
    %734 = vmatpush1.msra.mxu0 0.0
    %735 = vmatprep.subr.mxu0 0.0
    %736 = vmatpush1.msra.mxu0 0.0
    %737 = vmatprep.subr.mxu0 0.0
    %738 = vmatpush1.msra.mxu0 0.0
    %739 = vmatprep.subr.mxu0 0.0
    %740 = vmatpush1.msra.mxu0 0.0
    %741 = vmatprep.subr.mxu0 0.0
    %742 = vmatpush1.msra.mxu0 0.0
    %743 = vmatprep.subr.mxu0 0.0
    %744 = vmatpush1.msra.mxu0 0.0
    %745 = vmatprep.subr.mxu0 0.0
    %746 = vmatpush1.msra.mxu0 0.0
    %747 = vmatprep.subr.mxu0 0.0
    %748 = vmatpush1.msra.mxu0 0.0
    %749 = vmatprep.subr.mxu0 0.0
    %750 = vmatpush1.msra.mxu0 0.0
    %751 = vmatprep.subr.mxu0 0.0
    %752 = vmatpush1.msra.mxu0 0.0
    %753 = vmatprep.subr.mxu0 0.0
    %754 = vmatpush1.msra.mxu0 0.0
    %755 = vmatprep.subr.mxu0 0.0
    %756 = vmatpush1.msra.mxu0 0.0
    %757 = vmatprep.subr.mxu0 0.0
    %758 = vmatpush1.msra.mxu0 0.0
    %759 = vmatprep.subr.mxu0 0.0
    %760 = vmatpush1.msra.mxu0 0.0
    %761 = vmatprep.mubr.f32.mxu0 0.0
    %v762 = vand.u32 %v584, 4294901760
    %763 = vmatmul.mubr.f32.gmra.mrb[0].mxu0 %v762
    %v764 = vpop.f32.mrb[0].mxu0
    %v765 = vadd.f32 %v664, %v764
    %v766 = vpop.f32.mrb[0].mxu0
    %767 = vdwg.mxu0
    %768 = vmatprep.subr.mxu0 0.0
    %v769 = vand.u32 %v59, 4294901760
    %v770 = vsub.f32 %v59, %v769
    %771 = vmatpush1.msra.mxu0 %v770
    %772 = vmatprep.subr.mxu0 0.0
    %v773 = vand.u32 %v60, 4294901760
    %v774 = vsub.f32 %v60, %v773
    %775 = vmatpush1.msra.mxu0 %v774
    %776 = vmatprep.subr.mxu0 0.0
    %v777 = vand.u32 %v61, 4294901760
    %v778 = vsub.f32 %v61, %v777
    %779 = vmatpush1.msra.mxu0 %v778
    %780 = vmatprep.subr.mxu0 0.0
    %v781 = vand.u32 %v62, 4294901760
    %v782 = vsub.f32 %v62, %v781
    %783 = vmatpush1.msra.mxu0 %v782
    %784 = vmatprep.subr.mxu0 0.0
    %v785 = vand.u32 %v63, 4294901760
    %v786 = vsub.f32 %v63, %v785
    %787 = vmatpush1.msra.mxu0 %v786
    %788 = vmatprep.subr.mxu0 0.0
    %v789 = vand.u32 %v64, 4294901760
    %v790 = vsub.f32 %v64, %v789
    %791 = vmatpush1.msra.mxu0 %v790
    %792 = vmatprep.subr.mxu0 0.0
    %793 = vmatpush1.msra.mxu0 0.0
    %794 = vmatprep.subr.mxu0 0.0
    %795 = vmatpush1.msra.mxu0 0.0
    %796 = vmatprep.subr.mxu0 0.0
    %797 = vmatpush1.msra.mxu0 0.0
    %798 = vmatprep.subr.mxu0 0.0
    %799 = vmatpush1.msra.mxu0 0.0
    %800 = vmatprep.subr.mxu0 0.0
    %801 = vmatpush1.msra.mxu0 0.0
    %802 = vmatprep.subr.mxu0 0.0
    %803 = vmatpush1.msra.mxu0 0.0
    %804 = vmatprep.subr.mxu0 0.0
    %805 = vmatpush1.msra.mxu0 0.0
    %806 = vmatprep.subr.mxu0 0.0
    %807 = vmatpush1.msra.mxu0 0.0
    %808 = vmatprep.subr.mxu0 0.0
    %809 = vmatpush1.msra.mxu0 0.0
    %810 = vmatprep.subr.mxu0 0.0
    %811 = vmatpush1.msra.mxu0 0.0
    %812 = vmatprep.subr.mxu0 0.0
    %813 = vmatpush1.msra.mxu0 0.0
    %814 = vmatprep.subr.mxu0 0.0
    %815 = vmatpush1.msra.mxu0 0.0
    %816 = vmatprep.subr.mxu0 0.0
    %817 = vmatpush1.msra.mxu0 0.0
    %818 = vmatprep.subr.mxu0 0.0
    %819 = vmatpush1.msra.mxu0 0.0
    %820 = vmatprep.subr.mxu0 0.0
    %821 = vmatpush1.msra.mxu0 0.0
    %822 = vmatprep.subr.mxu0 0.0
    %823 = vmatpush1.msra.mxu0 0.0
    %824 = vmatprep.subr.mxu0 0.0
    %825 = vmatpush1.msra.mxu0 0.0
    %826 = vmatprep.subr.mxu0 0.0
    %827 = vmatpush1.msra.mxu0 0.0
    %828 = vmatprep.subr.mxu0 0.0
    %829 = vmatpush1.msra.mxu0 0.0
    %830 = vmatprep.subr.mxu0 0.0
    %831 = vmatpush1.msra.mxu0 0.0
    %832 = vmatprep.subr.mxu0 0.0
    %833 = vmatpush1.msra.mxu0 0.0
    %834 = vmatprep.subr.mxu0 0.0
    %835 = vmatpush1.msra.mxu0 0.0
    %836 = vmatprep.subr.mxu0 0.0
    %837 = vmatpush1.msra.mxu0 0.0
    %838 = vmatprep.subr.mxu0 0.0
    %839 = vmatpush1.msra.mxu0 0.0
    %840 = vmatprep.subr.mxu0 0.0
    %841 = vmatpush1.msra.mxu0 0.0
    %842 = vmatprep.subr.mxu0 0.0
    %843 = vmatpush1.msra.mxu0 0.0
    %844 = vmatprep.mubr.f32.mxu0 0.0
    %v845 = vand.u32 %v584, 4294901760
    %v846 = vsub.f32 %v584, %v845
    %847 = vmatmul.mubr.f32.gmra.mrb[0].mxu0 %v846
    %v848 = vpop.f32.mrb[0].mxu0
    %v849 = vadd.f32 %v765, %v848
    %v850 = vpop.f32.mrb[0].mxu0
    %851 = vdwg.mxu0
    %852 = vmatprep.subr.mxu0 0.0
    %v853 = vand.u32 %v59, 4294901760
    %854 = vmatpush1.msra.mxu0 %v853
    %855 = vmatprep.subr.mxu0 0.0
    %v856 = vand.u32 %v60, 4294901760
    %857 = vmatpush1.msra.mxu0 %v856
    %858 = vmatprep.subr.mxu0 0.0
    %v859 = vand.u32 %v61, 4294901760
    %860 = vmatpush1.msra.mxu0 %v859
    %861 = vmatprep.subr.mxu0 0.0
    %v862 = vand.u32 %v62, 4294901760
    %863 = vmatpush1.msra.mxu0 %v862
    %864 = vmatprep.subr.mxu0 0.0
    %v865 = vand.u32 %v63, 4294901760
    %866 = vmatpush1.msra.mxu0 %v865
    %867 = vmatprep.subr.mxu0 0.0
    %v868 = vand.u32 %v64, 4294901760
    %869 = vmatpush1.msra.mxu0 %v868
    %870 = vmatprep.subr.mxu0 0.0
    %871 = vmatpush1.msra.mxu0 0.0
    %872 = vmatprep.subr.mxu0 0.0
    %873 = vmatpush1.msra.mxu0 0.0
    %874 = vmatprep.subr.mxu0 0.0
    %875 = vmatpush1.msra.mxu0 0.0
    %876 = vmatprep.subr.mxu0 0.0
    %877 = vmatpush1.msra.mxu0 0.0
    %878 = vmatprep.subr.mxu0 0.0
    %879 = vmatpush1.msra.mxu0 0.0
    %880 = vmatprep.subr.mxu0 0.0
    %881 = vmatpush1.msra.mxu0 0.0
    %882 = vmatprep.subr.mxu0 0.0
    %883 = vmatpush1.msra.mxu0 0.0
    %884 = vmatprep.subr.mxu0 0.0
    %885 = vmatpush1.msra.mxu0 0.0
    %886 = vmatprep.subr.mxu0 0.0
    %887 = vmatpush1.msra.mxu0 0.0
    %888 = vmatprep.subr.mxu0 0.0
    %889 = vmatpush1.msra.mxu0 0.0
    %890 = vmatprep.subr.mxu0 0.0
    %891 = vmatpush1.msra.mxu0 0.0
    %892 = vmatprep.subr.mxu0 0.0
    %893 = vmatpush1.msra.mxu0 0.0
    %894 = vmatprep.subr.mxu0 0.0
    %895 = vmatpush1.msra.mxu0 0.0
    %896 = vmatprep.subr.mxu0 0.0
    %897 = vmatpush1.msra.mxu0 0.0
    %898 = vmatprep.subr.mxu0 0.0
    %899 = vmatpush1.msra.mxu0 0.0
    %900 = vmatprep.subr.mxu0 0.0
    %901 = vmatpush1.msra.mxu0 0.0
    %902 = vmatprep.subr.mxu0 0.0
    %903 = vmatpush1.msra.mxu0 0.0
    %904 = vmatprep.subr.mxu0 0.0
    %905 = vmatpush1.msra.mxu0 0.0
    %906 = vmatprep.subr.mxu0 0.0
    %907 = vmatpush1.msra.mxu0 0.0
    %908 = vmatprep.subr.mxu0 0.0
    %909 = vmatpush1.msra.mxu0 0.0
    %910 = vmatprep.subr.mxu0 0.0
    %911 = vmatpush1.msra.mxu0 0.0
    %912 = vmatprep.subr.mxu0 0.0
    %913 = vmatpush1.msra.mxu0 0.0
    %914 = vmatprep.subr.mxu0 0.0
    %915 = vmatpush1.msra.mxu0 0.0
    %916 = vmatprep.subr.mxu0 0.0
    %917 = vmatpush1.msra.mxu0 0.0
    %918 = vmatprep.subr.mxu0 0.0
    %919 = vmatpush1.msra.mxu0 0.0
    %920 = vmatprep.subr.mxu0 0.0
    %921 = vmatpush1.msra.mxu0 0.0
    %922 = vmatprep.mubr.f32.mxu0 0.0
    %v923 = vand.u32 %v584, 4294901760
    %v924 = vsub.f32 %v584, %v923
    %v925 = vand.u32 %v924, 4294901760
    %926 = vmatmul.mubr.f32.gmra.mrb[0].mxu0 %v925
    %v927 = vpop.f32.mrb[0].mxu0
    %v928 = vadd.f32 %v849, %v927
    %v929 = vpop.f32.mrb[0].mxu0
    %930 = vdwg.mxu0
    %931 = vmatprep.subr.mxu0 0.0
    %v932 = vand.u32 %v59, 4294901760
    %v933 = vsub.f32 %v59, %v932
    %v934 = vand.u32 %v933, 4294901760
    %935 = vmatpush1.msra.mxu0 %v934
    %936 = vmatprep.subr.mxu0 0.0
    %v937 = vand.u32 %v60, 4294901760
    %v938 = vsub.f32 %v60, %v937
    %v939 = vand.u32 %v938, 4294901760
    %940 = vmatpush1.msra.mxu0 %v939
    %941 = vmatprep.subr.mxu0 0.0
    %v942 = vand.u32 %v61, 4294901760
    %v943 = vsub.f32 %v61, %v942
    %v944 = vand.u32 %v943, 4294901760
    %945 = vmatpush1.msra.mxu0 %v944
    %946 = vmatprep.subr.mxu0 0.0
    %v947 = vand.u32 %v62, 4294901760
    %v948 = vsub.f32 %v62, %v947
    %v949 = vand.u32 %v948, 4294901760
    %950 = vmatpush1.msra.mxu0 %v949
    %951 = vmatprep.subr.mxu0 0.0
    %v952 = vand.u32 %v63, 4294901760
    %v953 = vsub.f32 %v63, %v952
    %v954 = vand.u32 %v953, 4294901760
    %955 = vmatpush1.msra.mxu0 %v954
    %956 = vmatprep.subr.mxu0 0.0
    %v957 = vand.u32 %v64, 4294901760
    %v958 = vsub.f32 %v64, %v957
    %v959 = vand.u32 %v958, 4294901760
    %960 = vmatpush1.msra.mxu0 %v959
    %961 = vmatprep.subr.mxu0 0.0
    %962 = vmatpush1.msra.mxu0 0.0
    %963 = vmatprep.subr.mxu0 0.0
    %964 = vmatpush1.msra.mxu0 0.0
    %965 = vmatprep.subr.mxu0 0.0
    %966 = vmatpush1.msra.mxu0 0.0
    %967 = vmatprep.subr.mxu0 0.0
    %968 = vmatpush1.msra.mxu0 0.0
    %969 = vmatprep.subr.mxu0 0.0
    %970 = vmatpush1.msra.mxu0 0.0
    %971 = vmatprep.subr.mxu0 0.0
    %972 = vmatpush1.msra.mxu0 0.0
    %973 = vmatprep.subr.mxu0 0.0
    %974 = vmatpush1.msra.mxu0 0.0
    %975 = vmatprep.subr.mxu0 0.0
    %976 = vmatpush1.msra.mxu0 0.0
    %977 = vmatprep.subr.mxu0 0.0
    %978 = vmatpush1.msra.mxu0 0.0
    %979 = vmatprep.subr.mxu0 0.0
    %980 = vmatpush1.msra.mxu0 0.0
    %981 = vmatprep.subr.mxu0 0.0
    %982 = vmatpush1.msra.mxu0 0.0
    %983 = vmatprep.subr.mxu0 0.0
    %984 = vmatpush1.msra.mxu0 0.0
    %985 = vmatprep.subr.mxu0 0.0
    %986 = vmatpush1.msra.mxu0 0.0
    %987 = vmatprep.subr.mxu0 0.0
    %988 = vmatpush1.msra.mxu0 0.0
    %989 = vmatprep.subr.mxu0 0.0
    %990 = vmatpush1.msra.mxu0 0.0
    %991 = vmatprep.subr.mxu0 0.0
    %992 = vmatpush1.msra.mxu0 0.0
    %993 = vmatprep.subr.mxu0 0.0
    %994 = vmatpush1.msra.mxu0 0.0
    %995 = vmatprep.subr.mxu0 0.0
    %996 = vmatpush1.msra.mxu0 0.0
    %997 = vmatprep.subr.mxu0 0.0
    %998 = vmatpush1.msra.mxu0 0.0
    %999 = vmatprep.subr.mxu0 0.0
    %1000 = vmatpush1.msra.mxu0 0.0
    %1001 = vmatprep.subr.mxu0 0.0
    %1002 = vmatpush1.msra.mxu0 0.0
    %1003 = vmatprep.subr.mxu0 0.0
    %1004 = vmatpush1.msra.mxu0 0.0
    %1005 = vmatprep.subr.mxu0 0.0
    %1006 = vmatpush1.msra.mxu0 0.0
    %1007 = vmatprep.subr.mxu0 0.0
    %1008 = vmatpush1.msra.mxu0 0.0
    %1009 = vmatprep.subr.mxu0 0.0
    %1010 = vmatpush1.msra.mxu0 0.0
    %1011 = vmatprep.subr.mxu0 0.0
    %1012 = vmatpush1.msra.mxu0 0.0
    %1013 = vmatprep.mubr.f32.mxu0 0.0
    %v1014 = vand.u32 %v584, 4294901760
    %1015 = vmatmul.mubr.f32.gmra.mrb[0].mxu0 %v1014
    %v1016 = vpop.f32.mrb[0].mxu0
    %v1017 = vadd.f32 %v928, %v1016
    %v1018 = vpop.f32.mrb[0].mxu0
    %1019 = vdwg.mxu0
    %1020 = vmatprep.subr.mxu0 0.0
    %v1021 = vand.u32 %v59, 4294901760
    %1022 = vmatpush1.msra.mxu0 %v1021
    %1023 = vmatprep.subr.mxu0 0.0
    %v1024 = vand.u32 %v60, 4294901760
    %1025 = vmatpush1.msra.mxu0 %v1024
    %1026 = vmatprep.subr.mxu0 0.0
    %v1027 = vand.u32 %v61, 4294901760
    %1028 = vmatpush1.msra.mxu0 %v1027
    %1029 = vmatprep.subr.mxu0 0.0
    %v1030 = vand.u32 %v62, 4294901760
    %1031 = vmatpush1.msra.mxu0 %v1030
    %1032 = vmatprep.subr.mxu0 0.0
    %v1033 = vand.u32 %v63, 4294901760
    %1034 = vmatpush1.msra.mxu0 %v1033
    %1035 = vmatprep.subr.mxu0 0.0
    %v1036 = vand.u32 %v64, 4294901760
    %1037 = vmatpush1.msra.mxu0 %v1036
    %1038 = vmatprep.subr.mxu0 0.0
    %1039 = vmatpush1.msra.mxu0 0.0
    %1040 = vmatprep.subr.mxu0 0.0
    %1041 = vmatpush1.msra.mxu0 0.0
    %1042 = vmatprep.subr.mxu0 0.0
    %1043 = vmatpush1.msra.mxu0 0.0
    %1044 = vmatprep.subr.mxu0 0.0
    %1045 = vmatpush1.msra.mxu0 0.0
    %1046 = vmatprep.subr.mxu0 0.0
    %1047 = vmatpush1.msra.mxu0 0.0
    %1048 = vmatprep.subr.mxu0 0.0
    %1049 = vmatpush1.msra.mxu0 0.0
    %1050 = vmatprep.subr.mxu0 0.0
    %1051 = vmatpush1.msra.mxu0 0.0
    %1052 = vmatprep.subr.mxu0 0.0
    %1053 = vmatpush1.msra.mxu0 0.0
    %1054 = vmatprep.subr.mxu0 0.0
    %1055 = vmatpush1.msra.mxu0 0.0
    %1056 = vmatprep.subr.mxu0 0.0
    %1057 = vmatpush1.msra.mxu0 0.0
    %1058 = vmatprep.subr.mxu0 0.0
    %1059 = vmatpush1.msra.mxu0 0.0
    %1060 = vmatprep.subr.mxu0 0.0
    %1061 = vmatpush1.msra.mxu0 0.0
    %1062 = vmatprep.subr.mxu0 0.0
    %1063 = vmatpush1.msra.mxu0 0.0
    %1064 = vmatprep.subr.mxu0 0.0
    %1065 = vmatpush1.msra.mxu0 0.0
    %1066 = vmatprep.subr.mxu0 0.0
    %1067 = vmatpush1.msra.mxu0 0.0
    %1068 = vmatprep.subr.mxu0 0.0
    %1069 = vmatpush1.msra.mxu0 0.0
    %1070 = vmatprep.subr.mxu0 0.0
    %1071 = vmatpush1.msra.mxu0 0.0
    %1072 = vmatprep.subr.mxu0 0.0
    %1073 = vmatpush1.msra.mxu0 0.0
    %1074 = vmatprep.subr.mxu0 0.0
    %1075 = vmatpush1.msra.mxu0 0.0
    %1076 = vmatprep.subr.mxu0 0.0
    %1077 = vmatpush1.msra.mxu0 0.0
    %1078 = vmatprep.subr.mxu0 0.0
    %1079 = vmatpush1.msra.mxu0 0.0
    %1080 = vmatprep.subr.mxu0 0.0
    %1081 = vmatpush1.msra.mxu0 0.0
    %1082 = vmatprep.subr.mxu0 0.0
    %1083 = vmatpush1.msra.mxu0 0.0
    %1084 = vmatprep.subr.mxu0 0.0
    %1085 = vmatpush1.msra.mxu0 0.0
    %1086 = vmatprep.subr.mxu0 0.0
    %1087 = vmatpush1.msra.mxu0 0.0
    %1088 = vmatprep.subr.mxu0 0.0
    %1089 = vmatpush1.msra.mxu0 0.0
    %1090 = vmatprep.mubr.f32.mxu0 0.0
    %v1091 = vand.u32 %v584, 4294901760
    %1092 = vmatmul.mubr.f32.gmra.mrb[0].mxu0 %v1091
    %v1093 = vpop.f32.mrb[0].mxu0
    %v1094 = vadd.f32 %v1017, %v1093
    %v1095 = vpop.f32.mrb[0].mxu0
    %1096 = vdwg.mxu0
    %v1097 = vlaneseq
    %v1098 = vshrl.u32 %v1097, 7
    %v1099 = vsub.s32 0, %v1098
    %v1100 = vrot.slane %v58, %v1099
    %v1101 = vadd.f32 %v1094, %v1100
    %v1102 = vsub.f32 0.0, %v1101
    %v1103 = vmul.f32 %v1102, 1.442695
    %v1104 = vpow.pop %v1103
    %v1105 = vadd.f32 %v1104, 1.0
    %v1106 = vrcp.pop %v1105
    %v1107 = vmul.f32 1.0, %v1106
    %1108 = vmatprep.subr.mxu0 0.0
    %v1109 = vand.u32 %v84, 4294901760
    %1110 = vmatpush1.msra.mxu0 %v1109
    %1111 = vmatprep.subr.mxu0 0.0
    %v1112 = vand.u32 %v85, 4294901760
    %1113 = vmatpush1.msra.mxu0 %v1112
    %1114 = vmatprep.subr.mxu0 0.0
    %v1115 = vand.u32 %v86, 4294901760
    %1116 = vmatpush1.msra.mxu0 %v1115
    %1117 = vmatprep.subr.mxu0 0.0
    %v1118 = vand.u32 %v87, 4294901760
    %1119 = vmatpush1.msra.mxu0 %v1118
    %1120 = vmatprep.subr.mxu0 0.0
    %1121 = vmatpush1.msra.mxu0 0.0
    %1122 = vmatprep.subr.mxu0 0.0
    %1123 = vmatpush1.msra.mxu0 0.0
    %1124 = vmatprep.subr.mxu0 0.0
    %1125 = vmatpush1.msra.mxu0 0.0
    %1126 = vmatprep.subr.mxu0 0.0
    %1127 = vmatpush1.msra.mxu0 0.0
    %1128 = vmatprep.subr.mxu0 0.0
    %1129 = vmatpush1.msra.mxu0 0.0
    %1130 = vmatprep.subr.mxu0 0.0
    %1131 = vmatpush1.msra.mxu0 0.0
    %1132 = vmatprep.subr.mxu0 0.0
    %1133 = vmatpush1.msra.mxu0 0.0
    %1134 = vmatprep.subr.mxu0 0.0
    %1135 = vmatpush1.msra.mxu0 0.0
    %1136 = vmatprep.subr.mxu0 0.0
    %1137 = vmatpush1.msra.mxu0 0.0
    %1138 = vmatprep.subr.mxu0 0.0
    %1139 = vmatpush1.msra.mxu0 0.0
    %1140 = vmatprep.subr.mxu0 0.0
    %1141 = vmatpush1.msra.mxu0 0.0
    %1142 = vmatprep.subr.mxu0 0.0
    %1143 = vmatpush1.msra.mxu0 0.0
    %1144 = vmatprep.subr.mxu0 0.0
    %1145 = vmatpush1.msra.mxu0 0.0
    %1146 = vmatprep.subr.mxu0 0.0
    %1147 = vmatpush1.msra.mxu0 0.0
    %1148 = vmatprep.subr.mxu0 0.0
    %1149 = vmatpush1.msra.mxu0 0.0
    %1150 = vmatprep.subr.mxu0 0.0
    %1151 = vmatpush1.msra.mxu0 0.0
    %1152 = vmatprep.subr.mxu0 0.0
    %1153 = vmatpush1.msra.mxu0 0.0
    %1154 = vmatprep.subr.mxu0 0.0
    %1155 = vmatpush1.msra.mxu0 0.0
    %1156 = vmatprep.subr.mxu0 0.0
    %1157 = vmatpush1.msra.mxu0 0.0
    %1158 = vmatprep.subr.mxu0 0.0
    %1159 = vmatpush1.msra.mxu0 0.0
    %1160 = vmatprep.subr.mxu0 0.0
    %1161 = vmatpush1.msra.mxu0 0.0
    %1162 = vmatprep.subr.mxu0 0.0
    %1163 = vmatpush1.msra.mxu0 0.0
    %1164 = vmatprep.subr.mxu0 0.0
    %1165 = vmatpush1.msra.mxu0 0.0
    %1166 = vmatprep.subr.mxu0 0.0
    %1167 = vmatpush1.msra.mxu0 0.0
    %1168 = vmatprep.subr.mxu0 0.0
    %1169 = vmatpush1.msra.mxu0 0.0
    %1170 = vmatprep.subr.mxu0 0.0
    %1171 = vmatpush1.msra.mxu0 0.0
    %1172 = vmatprep.subr.mxu0 0.0
    %1173 = vmatpush1.msra.mxu0 0.0
    %1174 = vmatprep.subr.mxu0 0.0
    %1175 = vmatpush1.msra.mxu0 0.0
    %1176 = vmatprep.mubr.f32.mxu0 0.0
    %v1177 = vand.u32 %v95, 4294901760
    %v1178 = vsub.f32 %v95, %v1177
    %v1179 = vand.u32 %v1178, 4294901760
    %v1180 = vsub.f32 %v1178, %v1179
    %v1181 = vand.u32 %v1180, 4294901760
    %1182 = vmatmul.mubr.f32.gmra.mrb[0].mxu0 %v1181
    %v1183 = vpop.f32.mrb[0].mxu0
    %v1184 = vadd.f32 0.0, %v1183
    %v1185 = vpop.f32.mrb[0].mxu0
    %1186 = vdwg.mxu0
    %1187 = vmatprep.subr.mxu0 0.0
    %v1188 = vand.u32 %v84, 4294901760
    %v1189 = vsub.f32 %v84, %v1188
    %v1190 = vand.u32 %v1189, 4294901760
    %v1191 = vsub.f32 %v1189, %v1190
    %v1192 = vand.u32 %v1191, 4294901760
    %1193 = vmatpush1.msra.mxu0 %v1192
    %1194 = vmatprep.subr.mxu0 0.0
    %v1195 = vand.u32 %v85, 4294901760
    %v1196 = vsub.f32 %v85, %v1195
    %v1197 = vand.u32 %v1196, 4294901760
    %v1198 = vsub.f32 %v1196, %v1197
    %v1199 = vand.u32 %v1198, 4294901760
    %1200 = vmatpush1.msra.mxu0 %v1199
    %1201 = vmatprep.subr.mxu0 0.0
    %v1202 = vand.u32 %v86, 4294901760
    %v1203 = vsub.f32 %v86, %v1202
    %v1204 = vand.u32 %v1203, 4294901760
    %v1205 = vsub.f32 %v1203, %v1204
    %v1206 = vand.u32 %v1205, 4294901760
    %1207 = vmatpush1.msra.mxu0 %v1206
    %1208 = vmatprep.subr.mxu0 0.0
    %v1209 = vand.u32 %v87, 4294901760
    %v1210 = vsub.f32 %v87, %v1209
    %v1211 = vand.u32 %v1210, 4294901760
    %v1212 = vsub.f32 %v1210, %v1211
    %v1213 = vand.u32 %v1212, 4294901760
    %1214 = vmatpush1.msra.mxu0 %v1213
    %1215 = vmatprep.subr.mxu0 0.0
    %1216 = vmatpush1.msra.mxu0 0.0
    %1217 = vmatprep.subr.mxu0 0.0
    %1218 = vmatpush1.msra.mxu0 0.0
    %1219 = vmatprep.subr.mxu0 0.0
    %1220 = vmatpush1.msra.mxu0 0.0
    %1221 = vmatprep.subr.mxu0 0.0
    %1222 = vmatpush1.msra.mxu0 0.0
    %1223 = vmatprep.subr.mxu0 0.0
    %1224 = vmatpush1.msra.mxu0 0.0
    %1225 = vmatprep.subr.mxu0 0.0
    %1226 = vmatpush1.msra.mxu0 0.0
    %1227 = vmatprep.subr.mxu0 0.0
    %1228 = vmatpush1.msra.mxu0 0.0
    %1229 = vmatprep.subr.mxu0 0.0
    %1230 = vmatpush1.msra.mxu0 0.0
    %1231 = vmatprep.subr.mxu0 0.0
    %1232 = vmatpush1.msra.mxu0 0.0
    %1233 = vmatprep.subr.mxu0 0.0
    %1234 = vmatpush1.msra.mxu0 0.0
    %1235 = vmatprep.subr.mxu0 0.0
    %1236 = vmatpush1.msra.mxu0 0.0
    %1237 = vmatprep.subr.mxu0 0.0
    %1238 = vmatpush1.msra.mxu0 0.0
    %1239 = vmatprep.subr.mxu0 0.0
    %1240 = vmatpush1.msra.mxu0 0.0
    %1241 = vmatprep.subr.mxu0 0.0
    %1242 = vmatpush1.msra.mxu0 0.0
    %1243 = vmatprep.subr.mxu0 0.0
    %1244 = vmatpush1.msra.mxu0 0.0
    %1245 = vmatprep.subr.mxu0 0.0
    %1246 = vmatpush1.msra.mxu0 0.0
    %1247 = vmatprep.subr.mxu0 0.0
    %1248 = vmatpush1.msra.mxu0 0.0
    %1249 = vmatprep.subr.mxu0 0.0
    %1250 = vmatpush1.msra.mxu0 0.0
    %1251 = vmatprep.subr.mxu0 0.0
    %1252 = vmatpush1.msra.mxu0 0.0
    %1253 = vmatprep.subr.mxu0 0.0
    %1254 = vmatpush1.msra.mxu0 0.0
    %1255 = vmatprep.subr.mxu0 0.0
    %1256 = vmatpush1.msra.mxu0 0.0
    %1257 = vmatprep.subr.mxu0 0.0
    %1258 = vmatpush1.msra.mxu0 0.0
    %1259 = vmatprep.subr.mxu0 0.0
    %1260 = vmatpush1.msra.mxu0 0.0
    %1261 = vmatprep.subr.mxu0 0.0
    %1262 = vmatpush1.msra.mxu0 0.0
    %1263 = vmatprep.subr.mxu0 0.0
    %1264 = vmatpush1.msra.mxu0 0.0
    %1265 = vmatprep.subr.mxu0 0.0
    %1266 = vmatpush1.msra.mxu0 0.0
    %1267 = vmatprep.subr.mxu0 0.0
    %1268 = vmatpush1.msra.mxu0 0.0
    %1269 = vmatprep.subr.mxu0 0.0
    %1270 = vmatpush1.msra.mxu0 0.0
    %1271 = vmatprep.mubr.f32.mxu0 0.0
    %v1272 = vand.u32 %v95, 4294901760
    %1273 = vmatmul.mubr.f32.gmra.mrb[0].mxu0 %v1272
    %v1274 = vpop.f32.mrb[0].mxu0
    %v1275 = vadd.f32 %v1184, %v1274
    %v1276 = vpop.f32.mrb[0].mxu0
    %1277 = vdwg.mxu0
    %1278 = vmatprep.subr.mxu0 0.0
    %v1279 = vand.u32 %v84, 4294901760
    %v1280 = vsub.f32 %v84, %v1279
    %1281 = vmatpush1.msra.mxu0 %v1280
    %1282 = vmatprep.subr.mxu0 0.0
    %v1283 = vand.u32 %v85, 4294901760
    %v1284 = vsub.f32 %v85, %v1283
    %1285 = vmatpush1.msra.mxu0 %v1284
    %1286 = vmatprep.subr.mxu0 0.0
    %v1287 = vand.u32 %v86, 4294901760
    %v1288 = vsub.f32 %v86, %v1287
    %1289 = vmatpush1.msra.mxu0 %v1288
    %1290 = vmatprep.subr.mxu0 0.0
    %v1291 = vand.u32 %v87, 4294901760
    %v1292 = vsub.f32 %v87, %v1291
    %1293 = vmatpush1.msra.mxu0 %v1292
    %1294 = vmatprep.subr.mxu0 0.0
    %1295 = vmatpush1.msra.mxu0 0.0
    %1296 = vmatprep.subr.mxu0 0.0
    %1297 = vmatpush1.msra.mxu0 0.0
    %1298 = vmatprep.subr.mxu0 0.0
    %1299 = vmatpush1.msra.mxu0 0.0
    %1300 = vmatprep.subr.mxu0 0.0
    %1301 = vmatpush1.msra.mxu0 0.0
    %1302 = vmatprep.subr.mxu0 0.0
    %1303 = vmatpush1.msra.mxu0 0.0
    %1304 = vmatprep.subr.mxu0 0.0
    %1305 = vmatpush1.msra.mxu0 0.0
    %1306 = vmatprep.subr.mxu0 0.0
    %1307 = vmatpush1.msra.mxu0 0.0
    %1308 = vmatprep.subr.mxu0 0.0
    %1309 = vmatpush1.msra.mxu0 0.0
    %1310 = vmatprep.subr.mxu0 0.0
    %1311 = vmatpush1.msra.mxu0 0.0
    %1312 = vmatprep.subr.mxu0 0.0
    %1313 = vmatpush1.msra.mxu0 0.0
    %1314 = vmatprep.subr.mxu0 0.0
    %1315 = vmatpush1.msra.mxu0 0.0
    %1316 = vmatprep.subr.mxu0 0.0
    %1317 = vmatpush1.msra.mxu0 0.0
    %1318 = vmatprep.subr.mxu0 0.0
    %1319 = vmatpush1.msra.mxu0 0.0
    %1320 = vmatprep.subr.mxu0 0.0
    %1321 = vmatpush1.msra.mxu0 0.0
    %1322 = vmatprep.subr.mxu0 0.0
    %1323 = vmatpush1.msra.mxu0 0.0
    %1324 = vmatprep.subr.mxu0 0.0
    %1325 = vmatpush1.msra.mxu0 0.0
    %1326 = vmatprep.subr.mxu0 0.0
    %1327 = vmatpush1.msra.mxu0 0.0
    %1328 = vmatprep.subr.mxu0 0.0
    %1329 = vmatpush1.msra.mxu0 0.0
    %1330 = vmatprep.subr.mxu0 0.0
    %1331 = vmatpush1.msra.mxu0 0.0
    %1332 = vmatprep.subr.mxu0 0.0
    %1333 = vmatpush1.msra.mxu0 0.0
    %1334 = vmatprep.subr.mxu0 0.0
    %1335 = vmatpush1.msra.mxu0 0.0
    %1336 = vmatprep.subr.mxu0 0.0
    %1337 = vmatpush1.msra.mxu0 0.0
    %1338 = vmatprep.subr.mxu0 0.0
    %1339 = vmatpush1.msra.mxu0 0.0
    %1340 = vmatprep.subr.mxu0 0.0
    %1341 = vmatpush1.msra.mxu0 0.0
    %1342 = vmatprep.subr.mxu0 0.0
    %1343 = vmatpush1.msra.mxu0 0.0
    %1344 = vmatprep.subr.mxu0 0.0
    %1345 = vmatpush1.msra.mxu0 0.0
    %1346 = vmatprep.subr.mxu0 0.0
    %1347 = vmatpush1.msra.mxu0 0.0
    %1348 = vmatprep.subr.mxu0 0.0
    %1349 = vmatpush1.msra.mxu0 0.0
    %1350 = vmatprep.mubr.f32.mxu0 0.0
    %v1351 = vand.u32 %v95, 4294901760
    %v1352 = vsub.f32 %v95, %v1351
    %1353 = vmatmul.mubr.f32.gmra.mrb[0].mxu0 %v1352
    %v1354 = vpop.f32.mrb[0].mxu0
    %v1355 = vadd.f32 %v1275, %v1354
    %v1356 = vpop.f32.mrb[0].mxu0
    %1357 = vdwg.mxu0
    %1358 = vmatprep.subr.mxu0 0.0
    %v1359 = vand.u32 %v84, 4294901760
    %1360 = vmatpush1.msra.mxu0 %v1359
    %1361 = vmatprep.subr.mxu0 0.0
    %v1362 = vand.u32 %v85, 4294901760
    %1363 = vmatpush1.msra.mxu0 %v1362
    %1364 = vmatprep.subr.mxu0 0.0
    %v1365 = vand.u32 %v86, 4294901760
    %1366 = vmatpush1.msra.mxu0 %v1365
    %1367 = vmatprep.subr.mxu0 0.0
    %v1368 = vand.u32 %v87, 4294901760
    %1369 = vmatpush1.msra.mxu0 %v1368
    %1370 = vmatprep.subr.mxu0 0.0
    %1371 = vmatpush1.msra.mxu0 0.0
    %1372 = vmatprep.subr.mxu0 0.0
    %1373 = vmatpush1.msra.mxu0 0.0
    %1374 = vmatprep.subr.mxu0 0.0
    %1375 = vmatpush1.msra.mxu0 0.0
    %1376 = vmatprep.subr.mxu0 0.0
    %1377 = vmatpush1.msra.mxu0 0.0
    %1378 = vmatprep.subr.mxu0 0.0
    %1379 = vmatpush1.msra.mxu0 0.0
    %1380 = vmatprep.subr.mxu0 0.0
    %1381 = vmatpush1.msra.mxu0 0.0
    %1382 = vmatprep.subr.mxu0 0.0
    %1383 = vmatpush1.msra.mxu0 0.0
    %1384 = vmatprep.subr.mxu0 0.0
    %1385 = vmatpush1.msra.mxu0 0.0
    %1386 = vmatprep.subr.mxu0 0.0
    %1387 = vmatpush1.msra.mxu0 0.0
    %1388 = vmatprep.subr.mxu0 0.0
    %1389 = vmatpush1.msra.mxu0 0.0
    %1390 = vmatprep.subr.mxu0 0.0
    %1391 = vmatpush1.msra.mxu0 0.0
    %1392 = vmatprep.subr.mxu0 0.0
    %1393 = vmatpush1.msra.mxu0 0.0
    %1394 = vmatprep.subr.mxu0 0.0
    %1395 = vmatpush1.msra.mxu0 0.0
    %1396 = vmatprep.subr.mxu0 0.0
    %1397 = vmatpush1.msra.mxu0 0.0
    %1398 = vmatprep.subr.mxu0 0.0
    %1399 = vmatpush1.msra.mxu0 0.0
    %1400 = vmatprep.subr.mxu0 0.0
    %1401 = vmatpush1.msra.mxu0 0.0
    %1402 = vmatprep.subr.mxu0 0.0
    %1403 = vmatpush1.msra.mxu0 0.0
    %1404 = vmatprep.subr.mxu0 0.0
    %1405 = vmatpush1.msra.mxu0 0.0
    %1406 = vmatprep.subr.mxu0 0.0
    %1407 = vmatpush1.msra.mxu0 0.0
    %1408 = vmatprep.subr.mxu0 0.0
    %1409 = vmatpush1.msra.mxu0 0.0
    %1410 = vmatprep.subr.mxu0 0.0
    %1411 = vmatpush1.msra.mxu0 0.0
    %1412 = vmatprep.subr.mxu0 0.0
    %1413 = vmatpush1.msra.mxu0 0.0
    %1414 = vmatprep.subr.mxu0 0.0
    %1415 = vmatpush1.msra.mxu0 0.0
    %1416 = vmatprep.subr.mxu0 0.0
    %1417 = vmatpush1.msra.mxu0 0.0
    %1418 = vmatprep.subr.mxu0 0.0
    %1419 = vmatpush1.msra.mxu0 0.0
    %1420 = vmatprep.subr.mxu0 0.0
    %1421 = vmatpush1.msra.mxu0 0.0
    %1422 = vmatprep.subr.mxu0 0.0
    %1423 = vmatpush1.msra.mxu0 0.0
    %1424 = vmatprep.subr.mxu0 0.0
    %1425 = vmatpush1.msra.mxu0 0.0
    %1426 = vmatprep.mubr.f32.mxu0 0.0
    %v1427 = vand.u32 %v95, 4294901760
    %v1428 = vsub.f32 %v95, %v1427
    %v1429 = vand.u32 %v1428, 4294901760
    %1430 = vmatmul.mubr.f32.gmra.mrb[0].mxu0 %v1429
    %v1431 = vpop.f32.mrb[0].mxu0
    %v1432 = vadd.f32 %v1355, %v1431
    %v1433 = vpop.f32.mrb[0].mxu0
    %1434 = vdwg.mxu0
    %1435 = vmatprep.subr.mxu0 0.0
    %v1436 = vand.u32 %v84, 4294901760
    %v1437 = vsub.f32 %v84, %v1436
    %v1438 = vand.u32 %v1437, 4294901760
    %1439 = vmatpush1.msra.mxu0 %v1438
    %1440 = vmatprep.subr.mxu0 0.0
    %v1441 = vand.u32 %v85, 4294901760
    %v1442 = vsub.f32 %v85, %v1441
    %v1443 = vand.u32 %v1442, 4294901760
    %1444 = vmatpush1.msra.mxu0 %v1443
    %1445 = vmatprep.subr.mxu0 0.0
    %v1446 = vand.u32 %v86, 4294901760
    %v1447 = vsub.f32 %v86, %v1446
    %v1448 = vand.u32 %v1447, 4294901760
    %1449 = vmatpush1.msra.mxu0 %v1448
    %1450 = vmatprep.subr.mxu0 0.0
    %v1451 = vand.u32 %v87, 4294901760
    %v1452 = vsub.f32 %v87, %v1451
    %v1453 = vand.u32 %v1452, 4294901760
    %1454 = vmatpush1.msra.mxu0 %v1453
    %1455 = vmatprep.subr.mxu0 0.0
    %1456 = vmatpush1.msra.mxu0 0.0
    %1457 = vmatprep.subr.mxu0 0.0
    %1458 = vmatpush1.msra.mxu0 0.0
    %1459 = vmatprep.subr.mxu0 0.0
    %1460 = vmatpush1.msra.mxu0 0.0
    %1461 = vmatprep.subr.mxu0 0.0
    %1462 = vmatpush1.msra.mxu0 0.0
    %1463 = vmatprep.subr.mxu0 0.0
    %1464 = vmatpush1.msra.mxu0 0.0
    %1465 = vmatprep.subr.mxu0 0.0
    %1466 = vmatpush1.msra.mxu0 0.0
    %1467 = vmatprep.subr.mxu0 0.0
    %1468 = vmatpush1.msra.mxu0 0.0
    %1469 = vmatprep.subr.mxu0 0.0
    %1470 = vmatpush1.msra.mxu0 0.0
    %1471 = vmatprep.subr.mxu0 0.0
    %1472 = vmatpush1.msra.mxu0 0.0
    %1473 = vmatprep.subr.mxu0 0.0
    %1474 = vmatpush1.msra.mxu0 0.0
    %1475 = vmatprep.subr.mxu0 0.0
    %1476 = vmatpush1.msra.mxu0 0.0
    %1477 = vmatprep.subr.mxu0 0.0
    %1478 = vmatpush1.msra.mxu0 0.0
    %1479 = vmatprep.subr.mxu0 0.0
    %1480 = vmatpush1.msra.mxu0 0.0
    %1481 = vmatprep.subr.mxu0 0.0
    %1482 = vmatpush1.msra.mxu0 0.0
    %1483 = vmatprep.subr.mxu0 0.0
    %1484 = vmatpush1.msra.mxu0 0.0
    %1485 = vmatprep.subr.mxu0 0.0
    %1486 = vmatpush1.msra.mxu0 0.0
    %1487 = vmatprep.subr.mxu0 0.0
    %1488 = vmatpush1.msra.mxu0 0.0
    %1489 = vmatprep.subr.mxu0 0.0
    %1490 = vmatpush1.msra.mxu0 0.0
    %1491 = vmatprep.subr.mxu0 0.0
    %1492 = vmatpush1.msra.mxu0 0.0
    %1493 = vmatprep.subr.mxu0 0.0
    %1494 = vmatpush1.msra.mxu0 0.0
    %1495 = vmatprep.subr.mxu0 0.0
    %1496 = vmatpush1.msra.mxu0 0.0
    %1497 = vmatprep.subr.mxu0 0.0
    %1498 = vmatpush1.msra.mxu0 0.0
    %1499 = vmatprep.subr.mxu0 0.0
    %1500 = vmatpush1.msra.mxu0 0.0
    %1501 = vmatprep.subr.mxu0 0.0
    %1502 = vmatpush1.msra.mxu0 0.0
    %1503 = vmatprep.subr.mxu0 0.0
    %1504 = vmatpush1.msra.mxu0 0.0
    %1505 = vmatprep.subr.mxu0 0.0
    %1506 = vmatpush1.msra.mxu0 0.0
    %1507 = vmatprep.subr.mxu0 0.0
    %1508 = vmatpush1.msra.mxu0 0.0
    %1509 = vmatprep.subr.mxu0 0.0
    %1510 = vmatpush1.msra.mxu0 0.0
    %1511 = vmatprep.mubr.f32.mxu0 0.0
    %v1512 = vand.u32 %v95, 4294901760
    %1513 = vmatmul.mubr.f32.gmra.mrb[0].mxu0 %v1512
    %v1514 = vpop.f32.mrb[0].mxu0
    %v1515 = vadd.f32 %v1432, %v1514
    %v1516 = vpop.f32.mrb[0].mxu0
    %1517 = vdwg.mxu0
    %1518 = vmatprep.subr.mxu0 0.0
    %v1519 = vand.u32 %v84, 4294901760
    %1520 = vmatpush1.msra.mxu0 %v1519
    %1521 = vmatprep.subr.mxu0 0.0
    %v1522 = vand.u32 %v85, 4294901760
    %1523 = vmatpush1.msra.mxu0 %v1522
    %1524 = vmatprep.subr.mxu0 0.0
    %v1525 = vand.u32 %v86, 4294901760
    %1526 = vmatpush1.msra.mxu0 %v1525
    %1527 = vmatprep.subr.mxu0 0.0
    %v1528 = vand.u32 %v87, 4294901760
    %1529 = vmatpush1.msra.mxu0 %v1528
    %1530 = vmatprep.subr.mxu0 0.0
    %1531 = vmatpush1.msra.mxu0 0.0
    %1532 = vmatprep.subr.mxu0 0.0
    %1533 = vmatpush1.msra.mxu0 0.0
    %1534 = vmatprep.subr.mxu0 0.0
    %1535 = vmatpush1.msra.mxu0 0.0
    %1536 = vmatprep.subr.mxu0 0.0
    %1537 = vmatpush1.msra.mxu0 0.0
    %1538 = vmatprep.subr.mxu0 0.0
    %1539 = vmatpush1.msra.mxu0 0.0
    %1540 = vmatprep.subr.mxu0 0.0
    %1541 = vmatpush1.msra.mxu0 0.0
    %1542 = vmatprep.subr.mxu0 0.0
    %1543 = vmatpush1.msra.mxu0 0.0
    %1544 = vmatprep.subr.mxu0 0.0
    %1545 = vmatpush1.msra.mxu0 0.0
    %1546 = vmatprep.subr.mxu0 0.0
    %1547 = vmatpush1.msra.mxu0 0.0
    %1548 = vmatprep.subr.mxu0 0.0
    %1549 = vmatpush1.msra.mxu0 0.0
    %1550 = vmatprep.subr.mxu0 0.0
    %1551 = vmatpush1.msra.mxu0 0.0
    %1552 = vmatprep.subr.mxu0 0.0
    %1553 = vmatpush1.msra.mxu0 0.0
    %1554 = vmatprep.subr.mxu0 0.0
    %1555 = vmatpush1.msra.mxu0 0.0
    %1556 = vmatprep.subr.mxu0 0.0
    %1557 = vmatpush1.msra.mxu0 0.0
    %1558 = vmatprep.subr.mxu0 0.0
    %1559 = vmatpush1.msra.mxu0 0.0
    %1560 = vmatprep.subr.mxu0 0.0
    %1561 = vmatpush1.msra.mxu0 0.0
    %1562 = vmatprep.subr.mxu0 0.0
    %1563 = vmatpush1.msra.mxu0 0.0
    %1564 = vmatprep.subr.mxu0 0.0
    %1565 = vmatpush1.msra.mxu0 0.0
    %1566 = vmatprep.subr.mxu0 0.0
    %1567 = vmatpush1.msra.mxu0 0.0
    %1568 = vmatprep.subr.mxu0 0.0
    %1569 = vmatpush1.msra.mxu0 0.0
    %1570 = vmatprep.subr.mxu0 0.0
    %1571 = vmatpush1.msra.mxu0 0.0
    %1572 = vmatprep.subr.mxu0 0.0
    %1573 = vmatpush1.msra.mxu0 0.0
    %1574 = vmatprep.subr.mxu0 0.0
    %1575 = vmatpush1.msra.mxu0 0.0
    %1576 = vmatprep.subr.mxu0 0.0
    %1577 = vmatpush1.msra.mxu0 0.0
    %1578 = vmatprep.subr.mxu0 0.0
    %1579 = vmatpush1.msra.mxu0 0.0
    %1580 = vmatprep.subr.mxu0 0.0
    %1581 = vmatpush1.msra.mxu0 0.0
    %1582 = vmatprep.subr.mxu0 0.0
    %1583 = vmatpush1.msra.mxu0 0.0
    %1584 = vmatprep.subr.mxu0 0.0
    %1585 = vmatpush1.msra.mxu0 0.0
    %1586 = vmatprep.mubr.f32.mxu0 0.0
    %v1587 = vand.u32 %v95, 4294901760
    %1588 = vmatmul.mubr.f32.gmra.mrb[0].mxu0 %v1587
    %v1589 = vpop.f32.mrb[0].mxu0
    %v1590 = vadd.f32 %v1515, %v1589
    %v1591 = vpop.f32.mrb[0].mxu0
    %1592 = vdwg.mxu0
    %1593 = vmatprep.subr.mxu0 0.0
    %v1594 = vand.u32 %v66, 4294901760
    %1595 = vmatpush1.msra.mxu0 %v1594
    %1596 = vmatprep.subr.mxu0 0.0
    %v1597 = vand.u32 %v67, 4294901760
    %1598 = vmatpush1.msra.mxu0 %v1597
    %1599 = vmatprep.subr.mxu0 0.0
    %v1600 = vand.u32 %v68, 4294901760
    %1601 = vmatpush1.msra.mxu0 %v1600
    %1602 = vmatprep.subr.mxu0 0.0
    %v1603 = vand.u32 %v69, 4294901760
    %1604 = vmatpush1.msra.mxu0 %v1603
    %1605 = vmatprep.subr.mxu0 0.0
    %v1606 = vand.u32 %v70, 4294901760
    %1607 = vmatpush1.msra.mxu0 %v1606
    %1608 = vmatprep.subr.mxu0 0.0
    %v1609 = vand.u32 %v71, 4294901760
    %1610 = vmatpush1.msra.mxu0 %v1609
    %1611 = vmatprep.subr.mxu0 0.0
    %1612 = vmatpush1.msra.mxu0 0.0
    %1613 = vmatprep.subr.mxu0 0.0
    %1614 = vmatpush1.msra.mxu0 0.0
    %1615 = vmatprep.subr.mxu0 0.0
    %1616 = vmatpush1.msra.mxu0 0.0
    %1617 = vmatprep.subr.mxu0 0.0
    %1618 = vmatpush1.msra.mxu0 0.0
    %1619 = vmatprep.subr.mxu0 0.0
    %1620 = vmatpush1.msra.mxu0 0.0
    %1621 = vmatprep.subr.mxu0 0.0
    %1622 = vmatpush1.msra.mxu0 0.0
    %1623 = vmatprep.subr.mxu0 0.0
    %1624 = vmatpush1.msra.mxu0 0.0
    %1625 = vmatprep.subr.mxu0 0.0
    %1626 = vmatpush1.msra.mxu0 0.0
    %1627 = vmatprep.subr.mxu0 0.0
    %1628 = vmatpush1.msra.mxu0 0.0
    %1629 = vmatprep.subr.mxu0 0.0
    %1630 = vmatpush1.msra.mxu0 0.0
    %1631 = vmatprep.subr.mxu0 0.0
    %1632 = vmatpush1.msra.mxu0 0.0
    %1633 = vmatprep.subr.mxu0 0.0
    %1634 = vmatpush1.msra.mxu0 0.0
    %1635 = vmatprep.subr.mxu0 0.0
    %1636 = vmatpush1.msra.mxu0 0.0
    %1637 = vmatprep.subr.mxu0 0.0
    %1638 = vmatpush1.msra.mxu0 0.0
    %1639 = vmatprep.subr.mxu0 0.0
    %1640 = vmatpush1.msra.mxu0 0.0
    %1641 = vmatprep.subr.mxu0 0.0
    %1642 = vmatpush1.msra.mxu0 0.0
    %1643 = vmatprep.subr.mxu0 0.0
    %1644 = vmatpush1.msra.mxu0 0.0
    %1645 = vmatprep.subr.mxu0 0.0
    %1646 = vmatpush1.msra.mxu0 0.0
    %1647 = vmatprep.subr.mxu0 0.0
    %1648 = vmatpush1.msra.mxu0 0.0
    %1649 = vmatprep.subr.mxu0 0.0
    %1650 = vmatpush1.msra.mxu0 0.0
    %1651 = vmatprep.subr.mxu0 0.0
    %1652 = vmatpush1.msra.mxu0 0.0
    %1653 = vmatprep.subr.mxu0 0.0
    %1654 = vmatpush1.msra.mxu0 0.0
    %1655 = vmatprep.subr.mxu0 0.0
    %1656 = vmatpush1.msra.mxu0 0.0
    %1657 = vmatprep.subr.mxu0 0.0
    %1658 = vmatpush1.msra.mxu0 0.0
    %1659 = vmatprep.subr.mxu0 0.0
    %1660 = vmatpush1.msra.mxu0 0.0
    %1661 = vmatprep.subr.mxu0 0.0
    %1662 = vmatpush1.msra.mxu0 0.0
    %1663 = vmatprep.mubr.f32.mxu0 0.0
    %v1664 = vand.u32 %v584, 4294901760
    %v1665 = vsub.f32 %v584, %v1664
    %v1666 = vand.u32 %v1665, 4294901760
    %v1667 = vsub.f32 %v1665, %v1666
    %v1668 = vand.u32 %v1667, 4294901760
    %1669 = vmatmul.mubr.f32.gmra.mrb[0].mxu0 %v1668
    %v1670 = vpop.f32.mrb[0].mxu0
    %v1671 = vadd.f32 %v1590, %v1670
    %v1672 = vpop.f32.mrb[0].mxu0
    %1673 = vdwg.mxu0
    %1674 = vmatprep.subr.mxu0 0.0
    %v1675 = vand.u32 %v66, 4294901760
    %v1676 = vsub.f32 %v66, %v1675
    %v1677 = vand.u32 %v1676, 4294901760
    %v1678 = vsub.f32 %v1676, %v1677
    %v1679 = vand.u32 %v1678, 4294901760
    %1680 = vmatpush1.msra.mxu0 %v1679
    %1681 = vmatprep.subr.mxu0 0.0
    %v1682 = vand.u32 %v67, 4294901760
    %v1683 = vsub.f32 %v67, %v1682
    %v1684 = vand.u32 %v1683, 4294901760
    %v1685 = vsub.f32 %v1683, %v1684
    %v1686 = vand.u32 %v1685, 4294901760
    %1687 = vmatpush1.msra.mxu0 %v1686
    %1688 = vmatprep.subr.mxu0 0.0
    %v1689 = vand.u32 %v68, 4294901760
    %v1690 = vsub.f32 %v68, %v1689
    %v1691 = vand.u32 %v1690, 4294901760
    %v1692 = vsub.f32 %v1690, %v1691
    %v1693 = vand.u32 %v1692, 4294901760
    %1694 = vmatpush1.msra.mxu0 %v1693
    %1695 = vmatprep.subr.mxu0 0.0
    %v1696 = vand.u32 %v69, 4294901760
    %v1697 = vsub.f32 %v69, %v1696
    %v1698 = vand.u32 %v1697, 4294901760
    %v1699 = vsub.f32 %v1697, %v1698
    %v1700 = vand.u32 %v1699, 4294901760
    %1701 = vmatpush1.msra.mxu0 %v1700
    %1702 = vmatprep.subr.mxu0 0.0
    %v1703 = vand.u32 %v70, 4294901760
    %v1704 = vsub.f32 %v70, %v1703
    %v1705 = vand.u32 %v1704, 4294901760
    %v1706 = vsub.f32 %v1704, %v1705
    %v1707 = vand.u32 %v1706, 4294901760
    %1708 = vmatpush1.msra.mxu0 %v1707
    %1709 = vmatprep.subr.mxu0 0.0
    %v1710 = vand.u32 %v71, 4294901760
    %v1711 = vsub.f32 %v71, %v1710
    %v1712 = vand.u32 %v1711, 4294901760
    %v1713 = vsub.f32 %v1711, %v1712
    %v1714 = vand.u32 %v1713, 4294901760
    %1715 = vmatpush1.msra.mxu0 %v1714
    %1716 = vmatprep.subr.mxu0 0.0
    %1717 = vmatpush1.msra.mxu0 0.0
    %1718 = vmatprep.subr.mxu0 0.0
    %1719 = vmatpush1.msra.mxu0 0.0
    %1720 = vmatprep.subr.mxu0 0.0
    %1721 = vmatpush1.msra.mxu0 0.0
    %1722 = vmatprep.subr.mxu0 0.0
    %1723 = vmatpush1.msra.mxu0 0.0
    %1724 = vmatprep.subr.mxu0 0.0
    %1725 = vmatpush1.msra.mxu0 0.0
    %1726 = vmatprep.subr.mxu0 0.0
    %1727 = vmatpush1.msra.mxu0 0.0
    %1728 = vmatprep.subr.mxu0 0.0
    %1729 = vmatpush1.msra.mxu0 0.0
    %1730 = vmatprep.subr.mxu0 0.0
    %1731 = vmatpush1.msra.mxu0 0.0
    %1732 = vmatprep.subr.mxu0 0.0
    %1733 = vmatpush1.msra.mxu0 0.0
    %1734 = vmatprep.subr.mxu0 0.0
    %1735 = vmatpush1.msra.mxu0 0.0
    %1736 = vmatprep.subr.mxu0 0.0
    %1737 = vmatpush1.msra.mxu0 0.0
    %1738 = vmatprep.subr.mxu0 0.0
    %1739 = vmatpush1.msra.mxu0 0.0
    %1740 = vmatprep.subr.mxu0 0.0
    %1741 = vmatpush1.msra.mxu0 0.0
    %1742 = vmatprep.subr.mxu0 0.0
    %1743 = vmatpush1.msra.mxu0 0.0
    %1744 = vmatprep.subr.mxu0 0.0
    %1745 = vmatpush1.msra.mxu0 0.0
    %1746 = vmatprep.subr.mxu0 0.0
    %1747 = vmatpush1.msra.mxu0 0.0
    %1748 = vmatprep.subr.mxu0 0.0
    %1749 = vmatpush1.msra.mxu0 0.0
    %1750 = vmatprep.subr.mxu0 0.0
    %1751 = vmatpush1.msra.mxu0 0.0
    %1752 = vmatprep.subr.mxu0 0.0
    %1753 = vmatpush1.msra.mxu0 0.0
    %1754 = vmatprep.subr.mxu0 0.0
    %1755 = vmatpush1.msra.mxu0 0.0
    %1756 = vmatprep.subr.mxu0 0.0
    %1757 = vmatpush1.msra.mxu0 0.0
    %1758 = vmatprep.subr.mxu0 0.0
    %1759 = vmatpush1.msra.mxu0 0.0
    %1760 = vmatprep.subr.mxu0 0.0
    %1761 = vmatpush1.msra.mxu0 0.0
    %1762 = vmatprep.subr.mxu0 0.0
    %1763 = vmatpush1.msra.mxu0 0.0
    %1764 = vmatprep.subr.mxu0 0.0
    %1765 = vmatpush1.msra.mxu0 0.0
    %1766 = vmatprep.subr.mxu0 0.0
    %1767 = vmatpush1.msra.mxu0 0.0
    %1768 = vmatprep.mubr.f32.mxu0 0.0
    %v1769 = vand.u32 %v584, 4294901760
    %1770 = vmatmul.mubr.f32.gmra.mrb[0].mxu0 %v1769
    %v1771 = vpop.f32.mrb[0].mxu0
    %v1772 = vadd.f32 %v1671, %v1771
    %v1773 = vpop.f32.mrb[0].mxu0
    %1774 = vdwg.mxu0
    %1775 = vmatprep.subr.mxu0 0.0
    %v1776 = vand.u32 %v66, 4294901760
    %v1777 = vsub.f32 %v66, %v1776
    %1778 = vmatpush1.msra.mxu0 %v1777
    %1779 = vmatprep.subr.mxu0 0.0
    %v1780 = vand.u32 %v67, 4294901760
    %v1781 = vsub.f32 %v67, %v1780
    %1782 = vmatpush1.msra.mxu0 %v1781
    %1783 = vmatprep.subr.mxu0 0.0
    %v1784 = vand.u32 %v68, 4294901760
    %v1785 = vsub.f32 %v68, %v1784
    %1786 = vmatpush1.msra.mxu0 %v1785
    %1787 = vmatprep.subr.mxu0 0.0
    %v1788 = vand.u32 %v69, 4294901760
    %v1789 = vsub.f32 %v69, %v1788
    %1790 = vmatpush1.msra.mxu0 %v1789
    %1791 = vmatprep.subr.mxu0 0.0
    %v1792 = vand.u32 %v70, 4294901760
    %v1793 = vsub.f32 %v70, %v1792
    %1794 = vmatpush1.msra.mxu0 %v1793
    %1795 = vmatprep.subr.mxu0 0.0
    %v1796 = vand.u32 %v71, 4294901760
    %v1797 = vsub.f32 %v71, %v1796
    %1798 = vmatpush1.msra.mxu0 %v1797
    %1799 = vmatprep.subr.mxu0 0.0
    %1800 = vmatpush1.msra.mxu0 0.0
    %1801 = vmatprep.subr.mxu0 0.0
    %1802 = vmatpush1.msra.mxu0 0.0
    %1803 = vmatprep.subr.mxu0 0.0
    %1804 = vmatpush1.msra.mxu0 0.0
    %1805 = vmatprep.subr.mxu0 0.0
    %1806 = vmatpush1.msra.mxu0 0.0
    %1807 = vmatprep.subr.mxu0 0.0
    %1808 = vmatpush1.msra.mxu0 0.0
    %1809 = vmatprep.subr.mxu0 0.0
    %1810 = vmatpush1.msra.mxu0 0.0
    %1811 = vmatprep.subr.mxu0 0.0
    %1812 = vmatpush1.msra.mxu0 0.0
    %1813 = vmatprep.subr.mxu0 0.0
    %1814 = vmatpush1.msra.mxu0 0.0
    %1815 = vmatprep.subr.mxu0 0.0
    %1816 = vmatpush1.msra.mxu0 0.0
    %1817 = vmatprep.subr.mxu0 0.0
    %1818 = vmatpush1.msra.mxu0 0.0
    %1819 = vmatprep.subr.mxu0 0.0
    %1820 = vmatpush1.msra.mxu0 0.0
    %1821 = vmatprep.subr.mxu0 0.0
    %1822 = vmatpush1.msra.mxu0 0.0
    %1823 = vmatprep.subr.mxu0 0.0
    %1824 = vmatpush1.msra.mxu0 0.0
    %1825 = vmatprep.subr.mxu0 0.0
    %1826 = vmatpush1.msra.mxu0 0.0
    %1827 = vmatprep.subr.mxu0 0.0
    %1828 = vmatpush1.msra.mxu0 0.0
    %1829 = vmatprep.subr.mxu0 0.0
    %1830 = vmatpush1.msra.mxu0 0.0
    %1831 = vmatprep.subr.mxu0 0.0
    %1832 = vmatpush1.msra.mxu0 0.0
    %1833 = vmatprep.subr.mxu0 0.0
    %1834 = vmatpush1.msra.mxu0 0.0
    %1835 = vmatprep.subr.mxu0 0.0
    %1836 = vmatpush1.msra.mxu0 0.0
    %1837 = vmatprep.subr.mxu0 0.0
    %1838 = vmatpush1.msra.mxu0 0.0
    %1839 = vmatprep.subr.mxu0 0.0
    %1840 = vmatpush1.msra.mxu0 0.0
    %1841 = vmatprep.subr.mxu0 0.0
    %1842 = vmatpush1.msra.mxu0 0.0
    %1843 = vmatprep.subr.mxu0 0.0
    %1844 = vmatpush1.msra.mxu0 0.0
    %1845 = vmatprep.subr.mxu0 0.0
    %1846 = vmatpush1.msra.mxu0 0.0
    %1847 = vmatprep.subr.mxu0 0.0
    %1848 = vmatpush1.msra.mxu0 0.0
    %1849 = vmatprep.subr.mxu0 0.0
    %1850 = vmatpush1.msra.mxu0 0.0
    %1851 = vmatprep.mubr.f32.mxu0 0.0
    %v1852 = vand.u32 %v584, 4294901760
    %v1853 = vsub.f32 %v584, %v1852
    %1854 = vmatmul.mubr.f32.gmra.mrb[0].mxu0 %v1853
    %v1855 = vpop.f32.mrb[0].mxu0
    %v1856 = vadd.f32 %v1772, %v1855
    %v1857 = vpop.f32.mrb[0].mxu0
    %1858 = vdwg.mxu0
    %1859 = vmatprep.subr.mxu0 0.0
    %v1860 = vand.u32 %v66, 4294901760
    %1861 = vmatpush1.msra.mxu0 %v1860
    %1862 = vmatprep.subr.mxu0 0.0
    %v1863 = vand.u32 %v67, 4294901760
    %1864 = vmatpush1.msra.mxu0 %v1863
    %1865 = vmatprep.subr.mxu0 0.0
    %v1866 = vand.u32 %v68, 4294901760
    %1867 = vmatpush1.msra.mxu0 %v1866
    %1868 = vmatprep.subr.mxu0 0.0
    %v1869 = vand.u32 %v69, 4294901760
    %1870 = vmatpush1.msra.mxu0 %v1869
    %1871 = vmatprep.subr.mxu0 0.0
    %v1872 = vand.u32 %v70, 4294901760
    %1873 = vmatpush1.msra.mxu0 %v1872
    %1874 = vmatprep.subr.mxu0 0.0
    %v1875 = vand.u32 %v71, 4294901760
    %1876 = vmatpush1.msra.mxu0 %v1875
    %1877 = vmatprep.subr.mxu0 0.0
    %1878 = vmatpush1.msra.mxu0 0.0
    %1879 = vmatprep.subr.mxu0 0.0
    %1880 = vmatpush1.msra.mxu0 0.0
    %1881 = vmatprep.subr.mxu0 0.0
    %1882 = vmatpush1.msra.mxu0 0.0
    %1883 = vmatprep.subr.mxu0 0.0
    %1884 = vmatpush1.msra.mxu0 0.0
    %1885 = vmatprep.subr.mxu0 0.0
    %1886 = vmatpush1.msra.mxu0 0.0
    %1887 = vmatprep.subr.mxu0 0.0
    %1888 = vmatpush1.msra.mxu0 0.0
    %1889 = vmatprep.subr.mxu0 0.0
    %1890 = vmatpush1.msra.mxu0 0.0
    %1891 = vmatprep.subr.mxu0 0.0
    %1892 = vmatpush1.msra.mxu0 0.0
    %1893 = vmatprep.subr.mxu0 0.0
    %1894 = vmatpush1.msra.mxu0 0.0
    %1895 = vmatprep.subr.mxu0 0.0
    %1896 = vmatpush1.msra.mxu0 0.0
    %1897 = vmatprep.subr.mxu0 0.0
    %1898 = vmatpush1.msra.mxu0 0.0
    %1899 = vmatprep.subr.mxu0 0.0
    %1900 = vmatpush1.msra.mxu0 0.0
    %1901 = vmatprep.subr.mxu0 0.0
    %1902 = vmatpush1.msra.mxu0 0.0
    %1903 = vmatprep.subr.mxu0 0.0
    %1904 = vmatpush1.msra.mxu0 0.0
    %1905 = vmatprep.subr.mxu0 0.0
    %1906 = vmatpush1.msra.mxu0 0.0
    %1907 = vmatprep.subr.mxu0 0.0
    %1908 = vmatpush1.msra.mxu0 0.0
    %1909 = vmatprep.subr.mxu0 0.0
    %1910 = vmatpush1.msra.mxu0 0.0
    %1911 = vmatprep.subr.mxu0 0.0
    %1912 = vmatpush1.msra.mxu0 0.0
    %1913 = vmatprep.subr.mxu0 0.0
    %1914 = vmatpush1.msra.mxu0 0.0
    %1915 = vmatprep.subr.mxu0 0.0
    %1916 = vmatpush1.msra.mxu0 0.0
    %1917 = vmatprep.subr.mxu0 0.0
    %1918 = vmatpush1.msra.mxu0 0.0
    %1919 = vmatprep.subr.mxu0 0.0
    %1920 = vmatpush1.msra.mxu0 0.0
    %1921 = vmatprep.subr.mxu0 0.0
    %1922 = vmatpush1.msra.mxu0 0.0
    %1923 = vmatprep.subr.mxu0 0.0
    %1924 = vmatpush1.msra.mxu0 0.0
    %1925 = vmatprep.subr.mxu0 0.0
    %1926 = vmatpush1.msra.mxu0 0.0
    %1927 = vmatprep.subr.mxu0 0.0
    %1928 = vmatpush1.msra.mxu0 0.0
    %1929 = vmatprep.mubr.f32.mxu0 0.0
    %v1930 = vand.u32 %v584, 4294901760
    %v1931 = vsub.f32 %v584, %v1930
    %v1932 = vand.u32 %v1931, 4294901760
    %1933 = vmatmul.mubr.f32.gmra.mrb[0].mxu0 %v1932
    %v1934 = vpop.f32.mrb[0].mxu0
    %v1935 = vadd.f32 %v1856, %v1934
    %v1936 = vpop.f32.mrb[0].mxu0
    %1937 = vdwg.mxu0
    %1938 = vmatprep.subr.mxu0 0.0
    %v1939 = vand.u32 %v66, 4294901760
    %v1940 = vsub.f32 %v66, %v1939
    %v1941 = vand.u32 %v1940, 4294901760
    %1942 = vmatpush1.msra.mxu0 %v1941
    %1943 = vmatprep.subr.mxu0 0.0
    %v1944 = vand.u32 %v67, 4294901760
    %v1945 = vsub.f32 %v67, %v1944
    %v1946 = vand.u32 %v1945, 4294901760
    %1947 = vmatpush1.msra.mxu0 %v1946
    %1948 = vmatprep.subr.mxu0 0.0
    %v1949 = vand.u32 %v68, 4294901760
    %v1950 = vsub.f32 %v68, %v1949
    %v1951 = vand.u32 %v1950, 4294901760
    %1952 = vmatpush1.msra.mxu0 %v1951
    %1953 = vmatprep.subr.mxu0 0.0
    %v1954 = vand.u32 %v69, 4294901760
    %v1955 = vsub.f32 %v69, %v1954
    %v1956 = vand.u32 %v1955, 4294901760
    %1957 = vmatpush1.msra.mxu0 %v1956
    %1958 = vmatprep.subr.mxu0 0.0
    %v1959 = vand.u32 %v70, 4294901760
    %v1960 = vsub.f32 %v70, %v1959
    %v1961 = vand.u32 %v1960, 4294901760
    %1962 = vmatpush1.msra.mxu0 %v1961
    %1963 = vmatprep.subr.mxu0 0.0
    %v1964 = vand.u32 %v71, 4294901760
    %v1965 = vsub.f32 %v71, %v1964
    %v1966 = vand.u32 %v1965, 4294901760
    %1967 = vmatpush1.msra.mxu0 %v1966
    %1968 = vmatprep.subr.mxu0 0.0
    %1969 = vmatpush1.msra.mxu0 0.0
    %1970 = vmatprep.subr.mxu0 0.0
    %1971 = vmatpush1.msra.mxu0 0.0
    %1972 = vmatprep.subr.mxu0 0.0
    %1973 = vmatpush1.msra.mxu0 0.0
    %1974 = vmatprep.subr.mxu0 0.0
    %1975 = vmatpush1.msra.mxu0 0.0
    %1976 = vmatprep.subr.mxu0 0.0
    %1977 = vmatpush1.msra.mxu0 0.0
    %1978 = vmatprep.subr.mxu0 0.0
    %1979 = vmatpush1.msra.mxu0 0.0
    %1980 = vmatprep.subr.mxu0 0.0
    %1981 = vmatpush1.msra.mxu0 0.0
    %1982 = vmatprep.subr.mxu0 0.0
    %1983 = vmatpush1.msra.mxu0 0.0
    %1984 = vmatprep.subr.mxu0 0.0
    %1985 = vmatpush1.msra.mxu0 0.0
    %1986 = vmatprep.subr.mxu0 0.0
    %1987 = vmatpush1.msra.mxu0 0.0
    %1988 = vmatprep.subr.mxu0 0.0
    %1989 = vmatpush1.msra.mxu0 0.0
    %1990 = vmatprep.subr.mxu0 0.0
    %1991 = vmatpush1.msra.mxu0 0.0
    %1992 = vmatprep.subr.mxu0 0.0
    %1993 = vmatpush1.msra.mxu0 0.0
    %1994 = vmatprep.subr.mxu0 0.0
    %1995 = vmatpush1.msra.mxu0 0.0
    %1996 = vmatprep.subr.mxu0 0.0
    %1997 = vmatpush1.msra.mxu0 0.0
    %1998 = vmatprep.subr.mxu0 0.0
    %1999 = vmatpush1.msra.mxu0 0.0
    %2000 = vmatprep.subr.mxu0 0.0
    %2001 = vmatpush1.msra.mxu0 0.0
    %2002 = vmatprep.subr.mxu0 0.0
    %2003 = vmatpush1.msra.mxu0 0.0
    %2004 = vmatprep.subr.mxu0 0.0
    %2005 = vmatpush1.msra.mxu0 0.0
    %2006 = vmatprep.subr.mxu0 0.0
    %2007 = vmatpush1.msra.mxu0 0.0
    %2008 = vmatprep.subr.mxu0 0.0
    %2009 = vmatpush1.msra.mxu0 0.0
    %2010 = vmatprep.subr.mxu0 0.0
    %2011 = vmatpush1.msra.mxu0 0.0
    %2012 = vmatprep.subr.mxu0 0.0
    %2013 = vmatpush1.msra.mxu0 0.0
    %2014 = vmatprep.subr.mxu0 0.0
    %2015 = vmatpush1.msra.mxu0 0.0
    %2016 = vmatprep.subr.mxu0 0.0
    %2017 = vmatpush1.msra.mxu0 0.0
    %2018 = vmatprep.subr.mxu0 0.0
    %2019 = vmatpush1.msra.mxu0 0.0
    %2020 = vmatprep.mubr.f32.mxu0 0.0
    %v2021 = vand.u32 %v584, 4294901760
    %2022 = vmatmul.mubr.f32.gmra.mrb[0].mxu0 %v2021
    %v2023 = vpop.f32.mrb[0].mxu0
    %v2024 = vadd.f32 %v1935, %v2023
    %v2025 = vpop.f32.mrb[0].mxu0
    %2026 = vdwg.mxu0
    %2027 = vmatprep.subr.mxu0 0.0
    %v2028 = vand.u32 %v66, 4294901760
    %2029 = vmatpush1.msra.mxu0 %v2028
    %2030 = vmatprep.subr.mxu0 0.0
    %v2031 = vand.u32 %v67, 4294901760
    %2032 = vmatpush1.msra.mxu0 %v2031
    %2033 = vmatprep.subr.mxu0 0.0
    %v2034 = vand.u32 %v68, 4294901760
    %2035 = vmatpush1.msra.mxu0 %v2034
    %2036 = vmatprep.subr.mxu0 0.0
    %v2037 = vand.u32 %v69, 4294901760
    %2038 = vmatpush1.msra.mxu0 %v2037
    %2039 = vmatprep.subr.mxu0 0.0
    %v2040 = vand.u32 %v70, 4294901760
    %2041 = vmatpush1.msra.mxu0 %v2040
    %2042 = vmatprep.subr.mxu0 0.0
    %v2043 = vand.u32 %v71, 4294901760
    %2044 = vmatpush1.msra.mxu0 %v2043
    %2045 = vmatprep.subr.mxu0 0.0
    %2046 = vmatpush1.msra.mxu0 0.0
    %2047 = vmatprep.subr.mxu0 0.0
    %2048 = vmatpush1.msra.mxu0 0.0
    %2049 = vmatprep.subr.mxu0 0.0
    %2050 = vmatpush1.msra.mxu0 0.0
    %2051 = vmatprep.subr.mxu0 0.0
    %2052 = vmatpush1.msra.mxu0 0.0
    %2053 = vmatprep.subr.mxu0 0.0
    %2054 = vmatpush1.msra.mxu0 0.0
    %2055 = vmatprep.subr.mxu0 0.0
    %2056 = vmatpush1.msra.mxu0 0.0
    %2057 = vmatprep.subr.mxu0 0.0
    %2058 = vmatpush1.msra.mxu0 0.0
    %2059 = vmatprep.subr.mxu0 0.0
    %2060 = vmatpush1.msra.mxu0 0.0
    %2061 = vmatprep.subr.mxu0 0.0
    %2062 = vmatpush1.msra.mxu0 0.0
    %2063 = vmatprep.subr.mxu0 0.0
    %2064 = vmatpush1.msra.mxu0 0.0
    %2065 = vmatprep.subr.mxu0 0.0
    %2066 = vmatpush1.msra.mxu0 0.0
    %2067 = vmatprep.subr.mxu0 0.0
    %2068 = vmatpush1.msra.mxu0 0.0
    %2069 = vmatprep.subr.mxu0 0.0
    %2070 = vmatpush1.msra.mxu0 0.0
    %2071 = vmatprep.subr.mxu0 0.0
    %2072 = vmatpush1.msra.mxu0 0.0
    %2073 = vmatprep.subr.mxu0 0.0
    %2074 = vmatpush1.msra.mxu0 0.0
    %2075 = vmatprep.subr.mxu0 0.0
    %2076 = vmatpush1.msra.mxu0 0.0
    %2077 = vmatprep.subr.mxu0 0.0
    %2078 = vmatpush1.msra.mxu0 0.0
    %2079 = vmatprep.subr.mxu0 0.0
    %2080 = vmatpush1.msra.mxu0 0.0
    %2081 = vmatprep.subr.mxu0 0.0
    %2082 = vmatpush1.msra.mxu0 0.0
    %2083 = vmatprep.subr.mxu0 0.0
    %2084 = vmatpush1.msra.mxu0 0.0
    %2085 = vmatprep.subr.mxu0 0.0
    %2086 = vmatpush1.msra.mxu0 0.0
    %2087 = vmatprep.subr.mxu0 0.0
    %2088 = vmatpush1.msra.mxu0 0.0
    %2089 = vmatprep.subr.mxu0 0.0
    %2090 = vmatpush1.msra.mxu0 0.0
    %2091 = vmatprep.subr.mxu0 0.0
    %2092 = vmatpush1.msra.mxu0 0.0
    %2093 = vmatprep.subr.mxu0 0.0
    %2094 = vmatpush1.msra.mxu0 0.0
    %2095 = vmatprep.subr.mxu0 0.0
    %2096 = vmatpush1.msra.mxu0 0.0
    %2097 = vmatprep.mubr.f32.mxu0 0.0
    %v2098 = vand.u32 %v584, 4294901760
    %2099 = vmatmul.mubr.f32.gmra.mrb[0].mxu0 %v2098
    %v2100 = vpop.f32.mrb[0].mxu0
    %v2101 = vadd.f32 %v2024, %v2100
    %v2102 = vpop.f32.mrb[0].mxu0
    %2103 = vdwg.mxu0
    %v2104 = vlaneseq
    %v2105 = vshrl.u32 %v2104, 7
    %v2106 = vsub.s32 1, %v2105
    %v2107 = vrot.slane %v58, %v2106
    %v2108 = vadd.f32 %v2101, %v2107
    %v2109 = vsub.f32 0.0, %v2108
    %v2110 = vmul.f32 %v2109, 1.442695
    %v2111 = vpow.pop %v2110
    %v2112 = vadd.f32 %v2111, 1.0
    %v2113 = vrcp.pop %v2112
    %v2114 = vmul.f32 1.0, %v2113
    %v2115 = vlaneseq
    %v2116 = vshrl.u32 %v2115, 7
    %v2117 = vsub.s32 2, %v2116
    %v2118 = vrot.slane %v58, %v2117
    %2119 = vmatprep.subr.mxu0 0.0
    %v2120 = vand.u32 %v73, 4294901760
    %2121 = vmatpush1.msra.mxu0 %v2120
    %2122 = vmatprep.subr.mxu0 0.0
    %v2123 = vand.u32 %v74, 4294901760
    %2124 = vmatpush1.msra.mxu0 %v2123
    %2125 = vmatprep.subr.mxu0 0.0
    %v2126 = vand.u32 %v75, 4294901760
    %2127 = vmatpush1.msra.mxu0 %v2126
    %2128 = vmatprep.subr.mxu0 0.0
    %v2129 = vand.u32 %v76, 4294901760
    %2130 = vmatpush1.msra.mxu0 %v2129
    %2131 = vmatprep.subr.mxu0 0.0
    %v2132 = vand.u32 %v77, 4294901760
    %2133 = vmatpush1.msra.mxu0 %v2132
    %2134 = vmatprep.subr.mxu0 0.0
    %v2135 = vand.u32 %v78, 4294901760
    %2136 = vmatpush1.msra.mxu0 %v2135
    %2137 = vmatprep.subr.mxu0 0.0
    %2138 = vmatpush1.msra.mxu0 0.0
    %2139 = vmatprep.subr.mxu0 0.0
    %2140 = vmatpush1.msra.mxu0 0.0
    %2141 = vmatprep.subr.mxu0 0.0
    %2142 = vmatpush1.msra.mxu0 0.0
    %2143 = vmatprep.subr.mxu0 0.0
    %2144 = vmatpush1.msra.mxu0 0.0
    %2145 = vmatprep.subr.mxu0 0.0
    %2146 = vmatpush1.msra.mxu0 0.0
    %2147 = vmatprep.subr.mxu0 0.0
    %2148 = vmatpush1.msra.mxu0 0.0
    %2149 = vmatprep.subr.mxu0 0.0
    %2150 = vmatpush1.msra.mxu0 0.0
    %2151 = vmatprep.subr.mxu0 0.0
    %2152 = vmatpush1.msra.mxu0 0.0
    %2153 = vmatprep.subr.mxu0 0.0
    %2154 = vmatpush1.msra.mxu0 0.0
    %2155 = vmatprep.subr.mxu0 0.0
    %2156 = vmatpush1.msra.mxu0 0.0
    %2157 = vmatprep.subr.mxu0 0.0
    %2158 = vmatpush1.msra.mxu0 0.0
    %2159 = vmatprep.subr.mxu0 0.0
    %2160 = vmatpush1.msra.mxu0 0.0
    %2161 = vmatprep.subr.mxu0 0.0
    %2162 = vmatpush1.msra.mxu0 0.0
    %2163 = vmatprep.subr.mxu0 0.0
    %2164 = vmatpush1.msra.mxu0 0.0
    %2165 = vmatprep.subr.mxu0 0.0
    %2166 = vmatpush1.msra.mxu0 0.0
    %2167 = vmatprep.subr.mxu0 0.0
    %2168 = vmatpush1.msra.mxu0 0.0
    %2169 = vmatprep.subr.mxu0 0.0
    %2170 = vmatpush1.msra.mxu0 0.0
    %2171 = vmatprep.subr.mxu0 0.0
    %2172 = vmatpush1.msra.mxu0 0.0
    %2173 = vmatprep.subr.mxu0 0.0
    %2174 = vmatpush1.msra.mxu0 0.0
    %2175 = vmatprep.subr.mxu0 0.0
    %2176 = vmatpush1.msra.mxu0 0.0
    %2177 = vmatprep.subr.mxu0 0.0
    %2178 = vmatpush1.msra.mxu0 0.0
    %2179 = vmatprep.subr.mxu0 0.0
    %2180 = vmatpush1.msra.mxu0 0.0
    %2181 = vmatprep.subr.mxu0 0.0
    %2182 = vmatpush1.msra.mxu0 0.0
    %2183 = vmatprep.subr.mxu0 0.0
    %2184 = vmatpush1.msra.mxu0 0.0
    %2185 = vmatprep.subr.mxu0 0.0
    %2186 = vmatpush1.msra.mxu0 0.0
    %2187 = vmatprep.subr.mxu0 0.0
    %2188 = vmatpush1.msra.mxu0 0.0
    %2189 = vmatprep.mubr.f32.mxu0 0.0
    %v2190 = vand.u32 %v584, 4294901760
    %v2191 = vsub.f32 %v584, %v2190
    %v2192 = vand.u32 %v2191, 4294901760
    %v2193 = vsub.f32 %v2191, %v2192
    %v2194 = vand.u32 %v2193, 4294901760
    %2195 = vmatmul.mubr.f32.gmra.mrb[0].mxu0 %v2194
    %v2196 = vpop.f32.mrb[0].mxu0
    %v2197 = vadd.f32 %v2118, %v2196
    %v2198 = vpop.f32.mrb[0].mxu0
    %2199 = vdwg.mxu0
    %2200 = vmatprep.subr.mxu0 0.0
    %v2201 = vand.u32 %v73, 4294901760
    %v2202 = vsub.f32 %v73, %v2201
    %v2203 = vand.u32 %v2202, 4294901760
    %v2204 = vsub.f32 %v2202, %v2203
    %v2205 = vand.u32 %v2204, 4294901760
    %2206 = vmatpush1.msra.mxu0 %v2205
    %2207 = vmatprep.subr.mxu0 0.0
    %v2208 = vand.u32 %v74, 4294901760
    %v2209 = vsub.f32 %v74, %v2208
    %v2210 = vand.u32 %v2209, 4294901760
    %v2211 = vsub.f32 %v2209, %v2210
    %v2212 = vand.u32 %v2211, 4294901760
    %2213 = vmatpush1.msra.mxu0 %v2212
    %2214 = vmatprep.subr.mxu0 0.0
    %v2215 = vand.u32 %v75, 4294901760
    %v2216 = vsub.f32 %v75, %v2215
    %v2217 = vand.u32 %v2216, 4294901760
    %v2218 = vsub.f32 %v2216, %v2217
    %v2219 = vand.u32 %v2218, 4294901760
    %2220 = vmatpush1.msra.mxu0 %v2219
    %2221 = vmatprep.subr.mxu0 0.0
    %v2222 = vand.u32 %v76, 4294901760
    %v2223 = vsub.f32 %v76, %v2222
    %v2224 = vand.u32 %v2223, 4294901760
    %v2225 = vsub.f32 %v2223, %v2224
    %v2226 = vand.u32 %v2225, 4294901760
    %2227 = vmatpush1.msra.mxu0 %v2226
    %2228 = vmatprep.subr.mxu0 0.0
    %v2229 = vand.u32 %v77, 4294901760
    %v2230 = vsub.f32 %v77, %v2229
    %v2231 = vand.u32 %v2230, 4294901760
    %v2232 = vsub.f32 %v2230, %v2231
    %v2233 = vand.u32 %v2232, 4294901760
    %2234 = vmatpush1.msra.mxu0 %v2233
    %2235 = vmatprep.subr.mxu0 0.0
    %v2236 = vand.u32 %v78, 4294901760
    %v2237 = vsub.f32 %v78, %v2236
    %v2238 = vand.u32 %v2237, 4294901760
    %v2239 = vsub.f32 %v2237, %v2238
    %v2240 = vand.u32 %v2239, 4294901760
    %2241 = vmatpush1.msra.mxu0 %v2240
    %2242 = vmatprep.subr.mxu0 0.0
    %2243 = vmatpush1.msra.mxu0 0.0
    %2244 = vmatprep.subr.mxu0 0.0
    %2245 = vmatpush1.msra.mxu0 0.0
    %2246 = vmatprep.subr.mxu0 0.0
    %2247 = vmatpush1.msra.mxu0 0.0
    %2248 = vmatprep.subr.mxu0 0.0
    %2249 = vmatpush1.msra.mxu0 0.0
    %2250 = vmatprep.subr.mxu0 0.0
    %2251 = vmatpush1.msra.mxu0 0.0
    %2252 = vmatprep.subr.mxu0 0.0
    %2253 = vmatpush1.msra.mxu0 0.0
    %2254 = vmatprep.subr.mxu0 0.0
    %2255 = vmatpush1.msra.mxu0 0.0
    %2256 = vmatprep.subr.mxu0 0.0
    %2257 = vmatpush1.msra.mxu0 0.0
    %2258 = vmatprep.subr.mxu0 0.0
    %2259 = vmatpush1.msra.mxu0 0.0
    %2260 = vmatprep.subr.mxu0 0.0
    %2261 = vmatpush1.msra.mxu0 0.0
    %2262 = vmatprep.subr.mxu0 0.0
    %2263 = vmatpush1.msra.mxu0 0.0
    %2264 = vmatprep.subr.mxu0 0.0
    %2265 = vmatpush1.msra.mxu0 0.0
    %2266 = vmatprep.subr.mxu0 0.0
    %2267 = vmatpush1.msra.mxu0 0.0
    %2268 = vmatprep.subr.mxu0 0.0
    %2269 = vmatpush1.msra.mxu0 0.0
    %2270 = vmatprep.subr.mxu0 0.0
    %2271 = vmatpush1.msra.mxu0 0.0
    %2272 = vmatprep.subr.mxu0 0.0
    %2273 = vmatpush1.msra.mxu0 0.0
    %2274 = vmatprep.subr.mxu0 0.0
    %2275 = vmatpush1.msra.mxu0 0.0
    %2276 = vmatprep.subr.mxu0 0.0
    %2277 = vmatpush1.msra.mxu0 0.0
    %2278 = vmatprep.subr.mxu0 0.0
    %2279 = vmatpush1.msra.mxu0 0.0
    %2280 = vmatprep.subr.mxu0 0.0
    %2281 = vmatpush1.msra.mxu0 0.0
    %2282 = vmatprep.subr.mxu0 0.0
    %2283 = vmatpush1.msra.mxu0 0.0
    %2284 = vmatprep.subr.mxu0 0.0
    %2285 = vmatpush1.msra.mxu0 0.0
    %2286 = vmatprep.subr.mxu0 0.0
    %2287 = vmatpush1.msra.mxu0 0.0
    %2288 = vmatprep.subr.mxu0 0.0
    %2289 = vmatpush1.msra.mxu0 0.0
    %2290 = vmatprep.subr.mxu0 0.0
    %2291 = vmatpush1.msra.mxu0 0.0
    %2292 = vmatprep.subr.mxu0 0.0
    %2293 = vmatpush1.msra.mxu0 0.0
    %2294 = vmatprep.mubr.f32.mxu0 0.0
    %v2295 = vand.u32 %v584, 4294901760
    %2296 = vmatmul.mubr.f32.gmra.mrb[0].mxu0 %v2295
    %v2297 = vpop.f32.mrb[0].mxu0
    %v2298 = vadd.f32 %v2197, %v2297
    %v2299 = vpop.f32.mrb[0].mxu0
    %2300 = vdwg.mxu0
    %2301 = vmatprep.subr.mxu0 0.0
    %v2302 = vand.u32 %v73, 4294901760
    %v2303 = vsub.f32 %v73, %v2302
    %2304 = vmatpush1.msra.mxu0 %v2303
    %2305 = vmatprep.subr.mxu0 0.0
    %v2306 = vand.u32 %v74, 4294901760
    %v2307 = vsub.f32 %v74, %v2306
    %2308 = vmatpush1.msra.mxu0 %v2307
    %2309 = vmatprep.subr.mxu0 0.0
    %v2310 = vand.u32 %v75, 4294901760
    %v2311 = vsub.f32 %v75, %v2310
    %2312 = vmatpush1.msra.mxu0 %v2311
    %2313 = vmatprep.subr.mxu0 0.0
    %v2314 = vand.u32 %v76, 4294901760
    %v2315 = vsub.f32 %v76, %v2314
    %2316 = vmatpush1.msra.mxu0 %v2315
    %2317 = vmatprep.subr.mxu0 0.0
    %v2318 = vand.u32 %v77, 4294901760
    %v2319 = vsub.f32 %v77, %v2318
    %2320 = vmatpush1.msra.mxu0 %v2319
    %2321 = vmatprep.subr.mxu0 0.0
    %v2322 = vand.u32 %v78, 4294901760
    %v2323 = vsub.f32 %v78, %v2322
    %2324 = vmatpush1.msra.mxu0 %v2323
    %2325 = vmatprep.subr.mxu0 0.0
    %2326 = vmatpush1.msra.mxu0 0.0
    %2327 = vmatprep.subr.mxu0 0.0
    %2328 = vmatpush1.msra.mxu0 0.0
    %2329 = vmatprep.subr.mxu0 0.0
    %2330 = vmatpush1.msra.mxu0 0.0
    %2331 = vmatprep.subr.mxu0 0.0
    %2332 = vmatpush1.msra.mxu0 0.0
    %2333 = vmatprep.subr.mxu0 0.0
    %2334 = vmatpush1.msra.mxu0 0.0
    %2335 = vmatprep.subr.mxu0 0.0
    %2336 = vmatpush1.msra.mxu0 0.0
    %2337 = vmatprep.subr.mxu0 0.0
    %2338 = vmatpush1.msra.mxu0 0.0
    %2339 = vmatprep.subr.mxu0 0.0
    %2340 = vmatpush1.msra.mxu0 0.0
    %2341 = vmatprep.subr.mxu0 0.0
    %2342 = vmatpush1.msra.mxu0 0.0
    %2343 = vmatprep.subr.mxu0 0.0
    %2344 = vmatpush1.msra.mxu0 0.0
    %2345 = vmatprep.subr.mxu0 0.0
    %2346 = vmatpush1.msra.mxu0 0.0
    %2347 = vmatprep.subr.mxu0 0.0
    %2348 = vmatpush1.msra.mxu0 0.0
    %2349 = vmatprep.subr.mxu0 0.0
    %2350 = vmatpush1.msra.mxu0 0.0
    %2351 = vmatprep.subr.mxu0 0.0
    %2352 = vmatpush1.msra.mxu0 0.0
    %2353 = vmatprep.subr.mxu0 0.0
    %2354 = vmatpush1.msra.mxu0 0.0
    %2355 = vmatprep.subr.mxu0 0.0
    %2356 = vmatpush1.msra.mxu0 0.0
    %2357 = vmatprep.subr.mxu0 0.0
    %2358 = vmatpush1.msra.mxu0 0.0
    %2359 = vmatprep.subr.mxu0 0.0
    %2360 = vmatpush1.msra.mxu0 0.0
    %2361 = vmatprep.subr.mxu0 0.0
    %2362 = vmatpush1.msra.mxu0 0.0
    %2363 = vmatprep.subr.mxu0 0.0
    %2364 = vmatpush1.msra.mxu0 0.0
    %2365 = vmatprep.subr.mxu0 0.0
    %2366 = vmatpush1.msra.mxu0 0.0
    %2367 = vmatprep.subr.mxu0 0.0
    %2368 = vmatpush1.msra.mxu0 0.0
    %2369 = vmatprep.subr.mxu0 0.0
    %2370 = vmatpush1.msra.mxu0 0.0
    %2371 = vmatprep.subr.mxu0 0.0
    %2372 = vmatpush1.msra.mxu0 0.0
    %2373 = vmatprep.subr.mxu0 0.0
    %2374 = vmatpush1.msra.mxu0 0.0
    %2375 = vmatprep.subr.mxu0 0.0
    %2376 = vmatpush1.msra.mxu0 0.0
    %2377 = vmatprep.mubr.f32.mxu0 0.0
    %v2378 = vand.u32 %v584, 4294901760
    %v2379 = vsub.f32 %v584, %v2378
    %2380 = vmatmul.mubr.f32.gmra.mrb[0].mxu0 %v2379
    %v2381 = vpop.f32.mrb[0].mxu0
    %v2382 = vadd.f32 %v2298, %v2381
    %v2383 = vpop.f32.mrb[0].mxu0
    %2384 = vdwg.mxu0
    %2385 = vmatprep.subr.mxu0 0.0
    %v2386 = vand.u32 %v73, 4294901760
    %2387 = vmatpush1.msra.mxu0 %v2386
    %2388 = vmatprep.subr.mxu0 0.0
    %v2389 = vand.u32 %v74, 4294901760
    %2390 = vmatpush1.msra.mxu0 %v2389
    %2391 = vmatprep.subr.mxu0 0.0
    %v2392 = vand.u32 %v75, 4294901760
    %2393 = vmatpush1.msra.mxu0 %v2392
    %2394 = vmatprep.subr.mxu0 0.0
    %v2395 = vand.u32 %v76, 4294901760
    %2396 = vmatpush1.msra.mxu0 %v2395
    %2397 = vmatprep.subr.mxu0 0.0
    %v2398 = vand.u32 %v77, 4294901760
    %2399 = vmatpush1.msra.mxu0 %v2398
    %2400 = vmatprep.subr.mxu0 0.0
    %v2401 = vand.u32 %v78, 4294901760
    %2402 = vmatpush1.msra.mxu0 %v2401
    %2403 = vmatprep.subr.mxu0 0.0
    %2404 = vmatpush1.msra.mxu0 0.0
    %2405 = vmatprep.subr.mxu0 0.0
    %2406 = vmatpush1.msra.mxu0 0.0
    %2407 = vmatprep.subr.mxu0 0.0
    %2408 = vmatpush1.msra.mxu0 0.0
    %2409 = vmatprep.subr.mxu0 0.0
    %2410 = vmatpush1.msra.mxu0 0.0
    %2411 = vmatprep.subr.mxu0 0.0
    %2412 = vmatpush1.msra.mxu0 0.0
    %2413 = vmatprep.subr.mxu0 0.0
    %2414 = vmatpush1.msra.mxu0 0.0
    %2415 = vmatprep.subr.mxu0 0.0
    %2416 = vmatpush1.msra.mxu0 0.0
    %2417 = vmatprep.subr.mxu0 0.0
    %2418 = vmatpush1.msra.mxu0 0.0
    %2419 = vmatprep.subr.mxu0 0.0
    %2420 = vmatpush1.msra.mxu0 0.0
    %2421 = vmatprep.subr.mxu0 0.0
    %2422 = vmatpush1.msra.mxu0 0.0
    %2423 = vmatprep.subr.mxu0 0.0
    %2424 = vmatpush1.msra.mxu0 0.0
    %2425 = vmatprep.subr.mxu0 0.0
    %2426 = vmatpush1.msra.mxu0 0.0
    %2427 = vmatprep.subr.mxu0 0.0
    %2428 = vmatpush1.msra.mxu0 0.0
    %2429 = vmatprep.subr.mxu0 0.0
    %2430 = vmatpush1.msra.mxu0 0.0
    %2431 = vmatprep.subr.mxu0 0.0
    %2432 = vmatpush1.msra.mxu0 0.0
    %2433 = vmatprep.subr.mxu0 0.0
    %2434 = vmatpush1.msra.mxu0 0.0
    %2435 = vmatprep.subr.mxu0 0.0
    %2436 = vmatpush1.msra.mxu0 0.0
    %2437 = vmatprep.subr.mxu0 0.0
    %2438 = vmatpush1.msra.mxu0 0.0
    %2439 = vmatprep.subr.mxu0 0.0
    %2440 = vmatpush1.msra.mxu0 0.0
    %2441 = vmatprep.subr.mxu0 0.0
    %2442 = vmatpush1.msra.mxu0 0.0
    %2443 = vmatprep.subr.mxu0 0.0
    %2444 = vmatpush1.msra.mxu0 0.0
    %2445 = vmatprep.subr.mxu0 0.0
    %2446 = vmatpush1.msra.mxu0 0.0
    %2447 = vmatprep.subr.mxu0 0.0
    %2448 = vmatpush1.msra.mxu0 0.0
    %2449 = vmatprep.subr.mxu0 0.0
    %2450 = vmatpush1.msra.mxu0 0.0
    %2451 = vmatprep.subr.mxu0 0.0
    %2452 = vmatpush1.msra.mxu0 0.0
    %2453 = vmatprep.subr.mxu0 0.0
    %2454 = vmatpush1.msra.mxu0 0.0
    %2455 = vmatprep.mubr.f32.mxu0 0.0
    %v2456 = vand.u32 %v584, 4294901760
    %v2457 = vsub.f32 %v584, %v2456
    %v2458 = vand.u32 %v2457, 4294901760
    %2459 = vmatmul.mubr.f32.gmra.mrb[0].mxu0 %v2458
    %v2460 = vpop.f32.mrb[0].mxu0
    %v2461 = vadd.f32 %v2382, %v2460
    %v2462 = vpop.f32.mrb[0].mxu0
    %2463 = vdwg.mxu0
    %2464 = vmatprep.subr.mxu0 0.0
    %v2465 = vand.u32 %v73, 4294901760
    %v2466 = vsub.f32 %v73, %v2465
    %v2467 = vand.u32 %v2466, 4294901760
    %2468 = vmatpush1.msra.mxu0 %v2467
    %2469 = vmatprep.subr.mxu0 0.0
    %v2470 = vand.u32 %v74, 4294901760
    %v2471 = vsub.f32 %v74, %v2470
    %v2472 = vand.u32 %v2471, 4294901760
    %2473 = vmatpush1.msra.mxu0 %v2472
    %2474 = vmatprep.subr.mxu0 0.0
    %v2475 = vand.u32 %v75, 4294901760
    %v2476 = vsub.f32 %v75, %v2475
    %v2477 = vand.u32 %v2476, 4294901760
    %2478 = vmatpush1.msra.mxu0 %v2477
    %2479 = vmatprep.subr.mxu0 0.0
    %v2480 = vand.u32 %v76, 4294901760
    %v2481 = vsub.f32 %v76, %v2480
    %v2482 = vand.u32 %v2481, 4294901760
    %2483 = vmatpush1.msra.mxu0 %v2482
    %2484 = vmatprep.subr.mxu0 0.0
    %v2485 = vand.u32 %v77, 4294901760
    %v2486 = vsub.f32 %v77, %v2485
    %v2487 = vand.u32 %v2486, 4294901760
    %2488 = vmatpush1.msra.mxu0 %v2487
    %2489 = vmatprep.subr.mxu0 0.0
    %v2490 = vand.u32 %v78, 4294901760
    %v2491 = vsub.f32 %v78, %v2490
    %v2492 = vand.u32 %v2491, 4294901760
    %2493 = vmatpush1.msra.mxu0 %v2492
    %2494 = vmatprep.subr.mxu0 0.0
    %2495 = vmatpush1.msra.mxu0 0.0
    %2496 = vmatprep.subr.mxu0 0.0
    %2497 = vmatpush1.msra.mxu0 0.0
    %2498 = vmatprep.subr.mxu0 0.0
    %2499 = vmatpush1.msra.mxu0 0.0
    %2500 = vmatprep.subr.mxu0 0.0
    %2501 = vmatpush1.msra.mxu0 0.0
    %2502 = vmatprep.subr.mxu0 0.0
    %2503 = vmatpush1.msra.mxu0 0.0
    %2504 = vmatprep.subr.mxu0 0.0
    %2505 = vmatpush1.msra.mxu0 0.0
    %2506 = vmatprep.subr.mxu0 0.0
    %2507 = vmatpush1.msra.mxu0 0.0
    %2508 = vmatprep.subr.mxu0 0.0
    %2509 = vmatpush1.msra.mxu0 0.0
    %2510 = vmatprep.subr.mxu0 0.0
    %2511 = vmatpush1.msra.mxu0 0.0
    %2512 = vmatprep.subr.mxu0 0.0
    %2513 = vmatpush1.msra.mxu0 0.0
    %2514 = vmatprep.subr.mxu0 0.0
    %2515 = vmatpush1.msra.mxu0 0.0
    %2516 = vmatprep.subr.mxu0 0.0
    %2517 = vmatpush1.msra.mxu0 0.0
    %2518 = vmatprep.subr.mxu0 0.0
    %2519 = vmatpush1.msra.mxu0 0.0
    %2520 = vmatprep.subr.mxu0 0.0
    %2521 = vmatpush1.msra.mxu0 0.0
    %2522 = vmatprep.subr.mxu0 0.0
    %2523 = vmatpush1.msra.mxu0 0.0
    %2524 = vmatprep.subr.mxu0 0.0
    %2525 = vmatpush1.msra.mxu0 0.0
    %2526 = vmatprep.subr.mxu0 0.0
    %2527 = vmatpush1.msra.mxu0 0.0
    %2528 = vmatprep.subr.mxu0 0.0
    %2529 = vmatpush1.msra.mxu0 0.0
    %2530 = vmatprep.subr.mxu0 0.0
    %2531 = vmatpush1.msra.mxu0 0.0
    %2532 = vmatprep.subr.mxu0 0.0
    %2533 = vmatpush1.msra.mxu0 0.0
    %2534 = vmatprep.subr.mxu0 0.0
    %2535 = vmatpush1.msra.mxu0 0.0
    %2536 = vmatprep.subr.mxu0 0.0
    %2537 = vmatpush1.msra.mxu0 0.0
    %2538 = vmatprep.subr.mxu0 0.0
    %2539 = vmatpush1.msra.mxu0 0.0
    %2540 = vmatprep.subr.mxu0 0.0
    %2541 = vmatpush1.msra.mxu0 0.0
    %2542 = vmatprep.subr.mxu0 0.0
    %2543 = vmatpush1.msra.mxu0 0.0
    %2544 = vmatprep.subr.mxu0 0.0
    %2545 = vmatpush1.msra.mxu0 0.0
    %2546 = vmatprep.mubr.f32.mxu0 0.0
    %v2547 = vand.u32 %v584, 4294901760
    %2548 = vmatmul.mubr.f32.gmra.mrb[0].mxu0 %v2547
    %v2549 = vpop.f32.mrb[0].mxu0
    %v2550 = vadd.f32 %v2461, %v2549
    %v2551 = vpop.f32.mrb[0].mxu0
    %2552 = vdwg.mxu0
    %2553 = vmatprep.subr.mxu0 0.0
    %v2554 = vand.u32 %v73, 4294901760
    %2555 = vmatpush1.msra.mxu0 %v2554
    %2556 = vmatprep.subr.mxu0 0.0
    %v2557 = vand.u32 %v74, 4294901760
    %2558 = vmatpush1.msra.mxu0 %v2557
    %2559 = vmatprep.subr.mxu0 0.0
    %v2560 = vand.u32 %v75, 4294901760
    %2561 = vmatpush1.msra.mxu0 %v2560
    %2562 = vmatprep.subr.mxu0 0.0
    %v2563 = vand.u32 %v76, 4294901760
    %2564 = vmatpush1.msra.mxu0 %v2563
    %2565 = vmatprep.subr.mxu0 0.0
    %v2566 = vand.u32 %v77, 4294901760
    %2567 = vmatpush1.msra.mxu0 %v2566
    %2568 = vmatprep.subr.mxu0 0.0
    %v2569 = vand.u32 %v78, 4294901760
    %2570 = vmatpush1.msra.mxu0 %v2569
    %2571 = vmatprep.subr.mxu0 0.0
    %2572 = vmatpush1.msra.mxu0 0.0
    %2573 = vmatprep.subr.mxu0 0.0
    %2574 = vmatpush1.msra.mxu0 0.0
    %2575 = vmatprep.subr.mxu0 0.0
    %2576 = vmatpush1.msra.mxu0 0.0
    %2577 = vmatprep.subr.mxu0 0.0
    %2578 = vmatpush1.msra.mxu0 0.0
    %2579 = vmatprep.subr.mxu0 0.0
    %2580 = vmatpush1.msra.mxu0 0.0
    %2581 = vmatprep.subr.mxu0 0.0
    %2582 = vmatpush1.msra.mxu0 0.0
    %2583 = vmatprep.subr.mxu0 0.0
    %2584 = vmatpush1.msra.mxu0 0.0
    %2585 = vmatprep.subr.mxu0 0.0
    %2586 = vmatpush1.msra.mxu0 0.0
    %2587 = vmatprep.subr.mxu0 0.0
    %2588 = vmatpush1.msra.mxu0 0.0
    %2589 = vmatprep.subr.mxu0 0.0
    %2590 = vmatpush1.msra.mxu0 0.0
    %2591 = vmatprep.subr.mxu0 0.0
    %2592 = vmatpush1.msra.mxu0 0.0
    %2593 = vmatprep.subr.mxu0 0.0
    %2594 = vmatpush1.msra.mxu0 0.0
    %2595 = vmatprep.subr.mxu0 0.0
    %2596 = vmatpush1.msra.mxu0 0.0
    %2597 = vmatprep.subr.mxu0 0.0
    %2598 = vmatpush1.msra.mxu0 0.0
    %2599 = vmatprep.subr.mxu0 0.0
    %2600 = vmatpush1.msra.mxu0 0.0
    %2601 = vmatprep.subr.mxu0 0.0
    %2602 = vmatpush1.msra.mxu0 0.0
    %2603 = vmatprep.subr.mxu0 0.0
    %2604 = vmatpush1.msra.mxu0 0.0
    %2605 = vmatprep.subr.mxu0 0.0
    %2606 = vmatpush1.msra.mxu0 0.0
    %2607 = vmatprep.subr.mxu0 0.0
    %2608 = vmatpush1.msra.mxu0 0.0
    %2609 = vmatprep.subr.mxu0 0.0
    %2610 = vmatpush1.msra.mxu0 0.0
    %2611 = vmatprep.subr.mxu0 0.0
    %2612 = vmatpush1.msra.mxu0 0.0
    %2613 = vmatprep.subr.mxu0 0.0
    %2614 = vmatpush1.msra.mxu0 0.0
    %2615 = vmatprep.subr.mxu0 0.0
    %2616 = vmatpush1.msra.mxu0 0.0
    %2617 = vmatprep.subr.mxu0 0.0
    %2618 = vmatpush1.msra.mxu0 0.0
    %2619 = vmatprep.subr.mxu0 0.0
    %2620 = vmatpush1.msra.mxu0 0.0
    %2621 = vmatprep.subr.mxu0 0.0
    %2622 = vmatpush1.msra.mxu0 0.0
    %2623 = vmatprep.mubr.f32.mxu0 0.0
    %v2624 = vand.u32 %v584, 4294901760
    %2625 = vmatmul.mubr.f32.gmra.mrb[0].mxu0 %v2624
    %v2626 = vpop.f32.mrb[0].mxu0
    %v2627 = vadd.f32 %v2550, %v2626
    %v2628 = vpop.f32.mrb[0].mxu0
    %2629 = vdwg.mxu0
    %v2630 = vlaneseq
    %v2631 = vshrl.u32 %v2630, 7
    %v2632 = vsub.s32 3, %v2631
    %v2633 = vrot.slane %v58, %v2632
    %2634 = vmatprep.subr.mxu0 0.0
    %v2635 = vand.u32 %v89, 4294901760
    %2636 = vmatpush1.msra.mxu0 %v2635
    %2637 = vmatprep.subr.mxu0 0.0
    %v2638 = vand.u32 %v90, 4294901760
    %2639 = vmatpush1.msra.mxu0 %v2638
    %2640 = vmatprep.subr.mxu0 0.0
    %v2641 = vand.u32 %v91, 4294901760
    %2642 = vmatpush1.msra.mxu0 %v2641
    %2643 = vmatprep.subr.mxu0 0.0
    %v2644 = vand.u32 %v92, 4294901760
    %2645 = vmatpush1.msra.mxu0 %v2644
    %2646 = vmatprep.subr.mxu0 0.0
    %2647 = vmatpush1.msra.mxu0 0.0
    %2648 = vmatprep.subr.mxu0 0.0
    %2649 = vmatpush1.msra.mxu0 0.0
    %2650 = vmatprep.subr.mxu0 0.0
    %2651 = vmatpush1.msra.mxu0 0.0
    %2652 = vmatprep.subr.mxu0 0.0
    %2653 = vmatpush1.msra.mxu0 0.0
    %2654 = vmatprep.subr.mxu0 0.0
    %2655 = vmatpush1.msra.mxu0 0.0
    %2656 = vmatprep.subr.mxu0 0.0
    %2657 = vmatpush1.msra.mxu0 0.0
    %2658 = vmatprep.subr.mxu0 0.0
    %2659 = vmatpush1.msra.mxu0 0.0
    %2660 = vmatprep.subr.mxu0 0.0
    %2661 = vmatpush1.msra.mxu0 0.0
    %2662 = vmatprep.subr.mxu0 0.0
    %2663 = vmatpush1.msra.mxu0 0.0
    %2664 = vmatprep.subr.mxu0 0.0
    %2665 = vmatpush1.msra.mxu0 0.0
    %2666 = vmatprep.subr.mxu0 0.0
    %2667 = vmatpush1.msra.mxu0 0.0
    %2668 = vmatprep.subr.mxu0 0.0
    %2669 = vmatpush1.msra.mxu0 0.0
    %2670 = vmatprep.subr.mxu0 0.0
    %2671 = vmatpush1.msra.mxu0 0.0
    %2672 = vmatprep.subr.mxu0 0.0
    %2673 = vmatpush1.msra.mxu0 0.0
    %2674 = vmatprep.subr.mxu0 0.0
    %2675 = vmatpush1.msra.mxu0 0.0
    %2676 = vmatprep.subr.mxu0 0.0
    %2677 = vmatpush1.msra.mxu0 0.0
    %2678 = vmatprep.subr.mxu0 0.0
    %2679 = vmatpush1.msra.mxu0 0.0
    %2680 = vmatprep.subr.mxu0 0.0
    %2681 = vmatpush1.msra.mxu0 0.0
    %2682 = vmatprep.subr.mxu0 0.0
    %2683 = vmatpush1.msra.mxu0 0.0
    %2684 = vmatprep.subr.mxu0 0.0
    %2685 = vmatpush1.msra.mxu0 0.0
    %2686 = vmatprep.subr.mxu0 0.0
    %2687 = vmatpush1.msra.mxu0 0.0
    %2688 = vmatprep.subr.mxu0 0.0
    %2689 = vmatpush1.msra.mxu0 0.0
    %2690 = vmatprep.subr.mxu0 0.0
    %2691 = vmatpush1.msra.mxu0 0.0
    %2692 = vmatprep.subr.mxu0 0.0
    %2693 = vmatpush1.msra.mxu0 0.0
    %2694 = vmatprep.subr.mxu0 0.0
    %2695 = vmatpush1.msra.mxu0 0.0
    %2696 = vmatprep.subr.mxu0 0.0
    %2697 = vmatpush1.msra.mxu0 0.0
    %2698 = vmatprep.subr.mxu0 0.0
    %2699 = vmatpush1.msra.mxu0 0.0
    %2700 = vmatprep.subr.mxu0 0.0
    %2701 = vmatpush1.msra.mxu0 0.0
    %2702 = vmatprep.mubr.f32.mxu0 0.0
    %v2703 = vand.u32 %v95, 4294901760
    %v2704 = vsub.f32 %v95, %v2703
    %v2705 = vand.u32 %v2704, 4294901760
    %v2706 = vsub.f32 %v2704, %v2705
    %v2707 = vand.u32 %v2706, 4294901760
    %2708 = vmatmul.mubr.f32.gmra.mrb[0].mxu0 %v2707
    %v2709 = vpop.f32.mrb[0].mxu0
    %v2710 = vadd.f32 %v2633, %v2709
    %v2711 = vpop.f32.mrb[0].mxu0
    %2712 = vdwg.mxu0
    %2713 = vmatprep.subr.mxu0 0.0
    %v2714 = vand.u32 %v89, 4294901760
    %v2715 = vsub.f32 %v89, %v2714
    %v2716 = vand.u32 %v2715, 4294901760
    %v2717 = vsub.f32 %v2715, %v2716
    %v2718 = vand.u32 %v2717, 4294901760
    %2719 = vmatpush1.msra.mxu0 %v2718
    %2720 = vmatprep.subr.mxu0 0.0
    %v2721 = vand.u32 %v90, 4294901760
    %v2722 = vsub.f32 %v90, %v2721
    %v2723 = vand.u32 %v2722, 4294901760
    %v2724 = vsub.f32 %v2722, %v2723
    %v2725 = vand.u32 %v2724, 4294901760
    %2726 = vmatpush1.msra.mxu0 %v2725
    %2727 = vmatprep.subr.mxu0 0.0
    %v2728 = vand.u32 %v91, 4294901760
    %v2729 = vsub.f32 %v91, %v2728
    %v2730 = vand.u32 %v2729, 4294901760
    %v2731 = vsub.f32 %v2729, %v2730
    %v2732 = vand.u32 %v2731, 4294901760
    %2733 = vmatpush1.msra.mxu0 %v2732
    %2734 = vmatprep.subr.mxu0 0.0
    %v2735 = vand.u32 %v92, 4294901760
    %v2736 = vsub.f32 %v92, %v2735
    %v2737 = vand.u32 %v2736, 4294901760
    %v2738 = vsub.f32 %v2736, %v2737
    %v2739 = vand.u32 %v2738, 4294901760
    %2740 = vmatpush1.msra.mxu0 %v2739
    %2741 = vmatprep.subr.mxu0 0.0
    %2742 = vmatpush1.msra.mxu0 0.0
    %2743 = vmatprep.subr.mxu0 0.0
    %2744 = vmatpush1.msra.mxu0 0.0
    %2745 = vmatprep.subr.mxu0 0.0
    %2746 = vmatpush1.msra.mxu0 0.0
    %2747 = vmatprep.subr.mxu0 0.0
    %2748 = vmatpush1.msra.mxu0 0.0
    %2749 = vmatprep.subr.mxu0 0.0
    %2750 = vmatpush1.msra.mxu0 0.0
    %2751 = vmatprep.subr.mxu0 0.0
    %2752 = vmatpush1.msra.mxu0 0.0
    %2753 = vmatprep.subr.mxu0 0.0
    %2754 = vmatpush1.msra.mxu0 0.0
    %2755 = vmatprep.subr.mxu0 0.0
    %2756 = vmatpush1.msra.mxu0 0.0
    %2757 = vmatprep.subr.mxu0 0.0
    %2758 = vmatpush1.msra.mxu0 0.0
    %2759 = vmatprep.subr.mxu0 0.0
    %2760 = vmatpush1.msra.mxu0 0.0
    %2761 = vmatprep.subr.mxu0 0.0
    %2762 = vmatpush1.msra.mxu0 0.0
    %2763 = vmatprep.subr.mxu0 0.0
    %2764 = vmatpush1.msra.mxu0 0.0
    %2765 = vmatprep.subr.mxu0 0.0
    %2766 = vmatpush1.msra.mxu0 0.0
    %2767 = vmatprep.subr.mxu0 0.0
    %2768 = vmatpush1.msra.mxu0 0.0
    %2769 = vmatprep.subr.mxu0 0.0
    %2770 = vmatpush1.msra.mxu0 0.0
    %2771 = vmatprep.subr.mxu0 0.0
    %2772 = vmatpush1.msra.mxu0 0.0
    %2773 = vmatprep.subr.mxu0 0.0
    %2774 = vmatpush1.msra.mxu0 0.0
    %2775 = vmatprep.subr.mxu0 0.0
    %2776 = vmatpush1.msra.mxu0 0.0
    %2777 = vmatprep.subr.mxu0 0.0
    %2778 = vmatpush1.msra.mxu0 0.0
    %2779 = vmatprep.subr.mxu0 0.0
    %2780 = vmatpush1.msra.mxu0 0.0
    %2781 = vmatprep.subr.mxu0 0.0
    %2782 = vmatpush1.msra.mxu0 0.0
    %2783 = vmatprep.subr.mxu0 0.0
    %2784 = vmatpush1.msra.mxu0 0.0
    %2785 = vmatprep.subr.mxu0 0.0
    %2786 = vmatpush1.msra.mxu0 0.0
    %2787 = vmatprep.subr.mxu0 0.0
    %2788 = vmatpush1.msra.mxu0 0.0
    %2789 = vmatprep.subr.mxu0 0.0
    %2790 = vmatpush1.msra.mxu0 0.0
    %2791 = vmatprep.subr.mxu0 0.0
    %2792 = vmatpush1.msra.mxu0 0.0
    %2793 = vmatprep.subr.mxu0 0.0
    %2794 = vmatpush1.msra.mxu0 0.0
    %2795 = vmatprep.subr.mxu0 0.0
    %2796 = vmatpush1.msra.mxu0 0.0
    %2797 = vmatprep.mubr.f32.mxu0 0.0
    %v2798 = vand.u32 %v95, 4294901760
    %2799 = vmatmul.mubr.f32.gmra.mrb[0].mxu0 %v2798
    %v2800 = vpop.f32.mrb[0].mxu0
    %v2801 = vadd.f32 %v2710, %v2800
    %v2802 = vpop.f32.mrb[0].mxu0
    %2803 = vdwg.mxu0
    %2804 = vmatprep.subr.mxu0 0.0
    %v2805 = vand.u32 %v89, 4294901760
    %v2806 = vsub.f32 %v89, %v2805
    %2807 = vmatpush1.msra.mxu0 %v2806
    %2808 = vmatprep.subr.mxu0 0.0
    %v2809 = vand.u32 %v90, 4294901760
    %v2810 = vsub.f32 %v90, %v2809
    %2811 = vmatpush1.msra.mxu0 %v2810
    %2812 = vmatprep.subr.mxu0 0.0
    %v2813 = vand.u32 %v91, 4294901760
    %v2814 = vsub.f32 %v91, %v2813
    %2815 = vmatpush1.msra.mxu0 %v2814
    %2816 = vmatprep.subr.mxu0 0.0
    %v2817 = vand.u32 %v92, 4294901760
    %v2818 = vsub.f32 %v92, %v2817
    %2819 = vmatpush1.msra.mxu0 %v2818
    %2820 = vmatprep.subr.mxu0 0.0
    %2821 = vmatpush1.msra.mxu0 0.0
    %2822 = vmatprep.subr.mxu0 0.0
    %2823 = vmatpush1.msra.mxu0 0.0
    %2824 = vmatprep.subr.mxu0 0.0
    %2825 = vmatpush1.msra.mxu0 0.0
    %2826 = vmatprep.subr.mxu0 0.0
    %2827 = vmatpush1.msra.mxu0 0.0
    %2828 = vmatprep.subr.mxu0 0.0
    %2829 = vmatpush1.msra.mxu0 0.0
    %2830 = vmatprep.subr.mxu0 0.0
    %2831 = vmatpush1.msra.mxu0 0.0
    %2832 = vmatprep.subr.mxu0 0.0
    %2833 = vmatpush1.msra.mxu0 0.0
    %2834 = vmatprep.subr.mxu0 0.0
    %2835 = vmatpush1.msra.mxu0 0.0
    %2836 = vmatprep.subr.mxu0 0.0
    %2837 = vmatpush1.msra.mxu0 0.0
    %2838 = vmatprep.subr.mxu0 0.0
    %2839 = vmatpush1.msra.mxu0 0.0
    %2840 = vmatprep.subr.mxu0 0.0
    %2841 = vmatpush1.msra.mxu0 0.0
    %2842 = vmatprep.subr.mxu0 0.0
    %2843 = vmatpush1.msra.mxu0 0.0
    %2844 = vmatprep.subr.mxu0 0.0
    %2845 = vmatpush1.msra.mxu0 0.0
    %2846 = vmatprep.subr.mxu0 0.0
    %2847 = vmatpush1.msra.mxu0 0.0
    %2848 = vmatprep.subr.mxu0 0.0
    %2849 = vmatpush1.msra.mxu0 0.0
    %2850 = vmatprep.subr.mxu0 0.0
    %2851 = vmatpush1.msra.mxu0 0.0
    %2852 = vmatprep.subr.mxu0 0.0
    %2853 = vmatpush1.msra.mxu0 0.0
    %2854 = vmatprep.subr.mxu0 0.0
    %2855 = vmatpush1.msra.mxu0 0.0
    %2856 = vmatprep.subr.mxu0 0.0
    %2857 = vmatpush1.msra.mxu0 0.0
    %2858 = vmatprep.subr.mxu0 0.0
    %2859 = vmatpush1.msra.mxu0 0.0
    %2860 = vmatprep.subr.mxu0 0.0
    %2861 = vmatpush1.msra.mxu0 0.0
    %2862 = vmatprep.subr.mxu0 0.0
    %2863 = vmatpush1.msra.mxu0 0.0
    %2864 = vmatprep.subr.mxu0 0.0
    %2865 = vmatpush1.msra.mxu0 0.0
    %2866 = vmatprep.subr.mxu0 0.0
    %2867 = vmatpush1.msra.mxu0 0.0
    %2868 = vmatprep.subr.mxu0 0.0
    %2869 = vmatpush1.msra.mxu0 0.0
    %2870 = vmatprep.subr.mxu0 0.0
    %2871 = vmatpush1.msra.mxu0 0.0
    %2872 = vmatprep.subr.mxu0 0.0
    %2873 = vmatpush1.msra.mxu0 0.0
    %2874 = vmatprep.subr.mxu0 0.0
    %2875 = vmatpush1.msra.mxu0 0.0
    %2876 = vmatprep.mubr.f32.mxu0 0.0
    %v2877 = vand.u32 %v95, 4294901760
    %v2878 = vsub.f32 %v95, %v2877
    %2879 = vmatmul.mubr.f32.gmra.mrb[0].mxu0 %v2878
    %v2880 = vpop.f32.mrb[0].mxu0
    %v2881 = vadd.f32 %v2801, %v2880
    %v2882 = vpop.f32.mrb[0].mxu0
    %2883 = vdwg.mxu0
    %2884 = vmatprep.subr.mxu0 0.0
    %v2885 = vand.u32 %v89, 4294901760
    %2886 = vmatpush1.msra.mxu0 %v2885
    %2887 = vmatprep.subr.mxu0 0.0
    %v2888 = vand.u32 %v90, 4294901760
    %2889 = vmatpush1.msra.mxu0 %v2888
    %2890 = vmatprep.subr.mxu0 0.0
    %v2891 = vand.u32 %v91, 4294901760
    %2892 = vmatpush1.msra.mxu0 %v2891
    %2893 = vmatprep.subr.mxu0 0.0
    %v2894 = vand.u32 %v92, 4294901760
    %2895 = vmatpush1.msra.mxu0 %v2894
    %2896 = vmatprep.subr.mxu0 0.0
    %2897 = vmatpush1.msra.mxu0 0.0
    %2898 = vmatprep.subr.mxu0 0.0
    %2899 = vmatpush1.msra.mxu0 0.0
    %2900 = vmatprep.subr.mxu0 0.0
    %2901 = vmatpush1.msra.mxu0 0.0
    %2902 = vmatprep.subr.mxu0 0.0
    %2903 = vmatpush1.msra.mxu0 0.0
    %2904 = vmatprep.subr.mxu0 0.0
    %2905 = vmatpush1.msra.mxu0 0.0
    %2906 = vmatprep.subr.mxu0 0.0
    %2907 = vmatpush1.msra.mxu0 0.0
    %2908 = vmatprep.subr.mxu0 0.0
    %2909 = vmatpush1.msra.mxu0 0.0
    %2910 = vmatprep.subr.mxu0 0.0
    %2911 = vmatpush1.msra.mxu0 0.0
    %2912 = vmatprep.subr.mxu0 0.0
    %2913 = vmatpush1.msra.mxu0 0.0
    %2914 = vmatprep.subr.mxu0 0.0
    %2915 = vmatpush1.msra.mxu0 0.0
    %2916 = vmatprep.subr.mxu0 0.0
    %2917 = vmatpush1.msra.mxu0 0.0
    %2918 = vmatprep.subr.mxu0 0.0
    %2919 = vmatpush1.msra.mxu0 0.0
    %2920 = vmatprep.subr.mxu0 0.0
    %2921 = vmatpush1.msra.mxu0 0.0
    %2922 = vmatprep.subr.mxu0 0.0
    %2923 = vmatpush1.msra.mxu0 0.0
    %2924 = vmatprep.subr.mxu0 0.0
    %2925 = vmatpush1.msra.mxu0 0.0
    %2926 = vmatprep.subr.mxu0 0.0
    %2927 = vmatpush1.msra.mxu0 0.0
    %2928 = vmatprep.subr.mxu0 0.0
    %2929 = vmatpush1.msra.mxu0 0.0
    %2930 = vmatprep.subr.mxu0 0.0
    %2931 = vmatpush1.msra.mxu0 0.0
    %2932 = vmatprep.subr.mxu0 0.0
    %2933 = vmatpush1.msra.mxu0 0.0
    %2934 = vmatprep.subr.mxu0 0.0
    %2935 = vmatpush1.msra.mxu0 0.0
    %2936 = vmatprep.subr.mxu0 0.0
    %2937 = vmatpush1.msra.mxu0 0.0
    %2938 = vmatprep.subr.mxu0 0.0
    %2939 = vmatpush1.msra.mxu0 0.0
    %2940 = vmatprep.subr.mxu0 0.0
    %2941 = vmatpush1.msra.mxu0 0.0
    %2942 = vmatprep.subr.mxu0 0.0
    %2943 = vmatpush1.msra.mxu0 0.0
    %2944 = vmatprep.subr.mxu0 0.0
    %2945 = vmatpush1.msra.mxu0 0.0
    %2946 = vmatprep.subr.mxu0 0.0
    %2947 = vmatpush1.msra.mxu0 0.0
    %2948 = vmatprep.subr.mxu0 0.0
    %2949 = vmatpush1.msra.mxu0 0.0
    %2950 = vmatprep.subr.mxu0 0.0
    %2951 = vmatpush1.msra.mxu0 0.0
    %2952 = vmatprep.mubr.f32.mxu0 0.0
    %v2953 = vand.u32 %v95, 4294901760
    %v2954 = vsub.f32 %v95, %v2953
    %v2955 = vand.u32 %v2954, 4294901760
    %2956 = vmatmul.mubr.f32.gmra.mrb[0].mxu0 %v2955
    %v2957 = vpop.f32.mrb[0].mxu0
    %v2958 = vadd.f32 %v2881, %v2957
    %v2959 = vpop.f32.mrb[0].mxu0
    %2960 = vdwg.mxu0
    %2961 = vmatprep.subr.mxu0 0.0
    %v2962 = vand.u32 %v89, 4294901760
    %v2963 = vsub.f32 %v89, %v2962
    %v2964 = vand.u32 %v2963, 4294901760
    %2965 = vmatpush1.msra.mxu0 %v2964
    %2966 = vmatprep.subr.mxu0 0.0
    %v2967 = vand.u32 %v90, 4294901760
    %v2968 = vsub.f32 %v90, %v2967
    %v2969 = vand.u32 %v2968, 4294901760
    %2970 = vmatpush1.msra.mxu0 %v2969
    %2971 = vmatprep.subr.mxu0 0.0
    %v2972 = vand.u32 %v91, 4294901760
    %v2973 = vsub.f32 %v91, %v2972
    %v2974 = vand.u32 %v2973, 4294901760
    %2975 = vmatpush1.msra.mxu0 %v2974
    %2976 = vmatprep.subr.mxu0 0.0
    %v2977 = vand.u32 %v92, 4294901760
    %v2978 = vsub.f32 %v92, %v2977
    %v2979 = vand.u32 %v2978, 4294901760
    %2980 = vmatpush1.msra.mxu0 %v2979
    %2981 = vmatprep.subr.mxu0 0.0
    %2982 = vmatpush1.msra.mxu0 0.0
    %2983 = vmatprep.subr.mxu0 0.0
    %2984 = vmatpush1.msra.mxu0 0.0
    %2985 = vmatprep.subr.mxu0 0.0
    %2986 = vmatpush1.msra.mxu0 0.0
    %2987 = vmatprep.subr.mxu0 0.0
    %2988 = vmatpush1.msra.mxu0 0.0
    %2989 = vmatprep.subr.mxu0 0.0
    %2990 = vmatpush1.msra.mxu0 0.0
    %2991 = vmatprep.subr.mxu0 0.0
    %2992 = vmatpush1.msra.mxu0 0.0
    %2993 = vmatprep.subr.mxu0 0.0
    %2994 = vmatpush1.msra.mxu0 0.0
    %2995 = vmatprep.subr.mxu0 0.0
    %2996 = vmatpush1.msra.mxu0 0.0
    %2997 = vmatprep.subr.mxu0 0.0
    %2998 = vmatpush1.msra.mxu0 0.0
    %2999 = vmatprep.subr.mxu0 0.0
    %3000 = vmatpush1.msra.mxu0 0.0
    %3001 = vmatprep.subr.mxu0 0.0
    %3002 = vmatpush1.msra.mxu0 0.0
    %3003 = vmatprep.subr.mxu0 0.0
    %3004 = vmatpush1.msra.mxu0 0.0
    %3005 = vmatprep.subr.mxu0 0.0
    %3006 = vmatpush1.msra.mxu0 0.0
    %3007 = vmatprep.subr.mxu0 0.0
    %3008 = vmatpush1.msra.mxu0 0.0
    %3009 = vmatprep.subr.mxu0 0.0
    %3010 = vmatpush1.msra.mxu0 0.0
    %3011 = vmatprep.subr.mxu0 0.0
    %3012 = vmatpush1.msra.mxu0 0.0
    %3013 = vmatprep.subr.mxu0 0.0
    %3014 = vmatpush1.msra.mxu0 0.0
    %3015 = vmatprep.subr.mxu0 0.0
    %3016 = vmatpush1.msra.mxu0 0.0
    %3017 = vmatprep.subr.mxu0 0.0
    %3018 = vmatpush1.msra.mxu0 0.0
    %3019 = vmatprep.subr.mxu0 0.0
    %3020 = vmatpush1.msra.mxu0 0.0
    %3021 = vmatprep.subr.mxu0 0.0
    %3022 = vmatpush1.msra.mxu0 0.0
    %3023 = vmatprep.subr.mxu0 0.0
    %3024 = vmatpush1.msra.mxu0 0.0
    %3025 = vmatprep.subr.mxu0 0.0
    %3026 = vmatpush1.msra.mxu0 0.0
    %3027 = vmatprep.subr.mxu0 0.0
    %3028 = vmatpush1.msra.mxu0 0.0
    %3029 = vmatprep.subr.mxu0 0.0
    %3030 = vmatpush1.msra.mxu0 0.0
    %3031 = vmatprep.subr.mxu0 0.0
    %3032 = vmatpush1.msra.mxu0 0.0
    %3033 = vmatprep.subr.mxu0 0.0
    %3034 = vmatpush1.msra.mxu0 0.0
    %3035 = vmatprep.subr.mxu0 0.0
    %3036 = vmatpush1.msra.mxu0 0.0
    %3037 = vmatprep.mubr.f32.mxu0 0.0
    %v3038 = vand.u32 %v95, 4294901760
    %3039 = vmatmul.mubr.f32.gmra.mrb[0].mxu0 %v3038
    %v3040 = vpop.f32.mrb[0].mxu0
    %v3041 = vadd.f32 %v2958, %v3040
    %v3042 = vpop.f32.mrb[0].mxu0
    %3043 = vdwg.mxu0
    %3044 = vmatprep.subr.mxu0 0.0
    %v3045 = vand.u32 %v89, 4294901760
    %3046 = vmatpush1.msra.mxu0 %v3045
    %3047 = vmatprep.subr.mxu0 0.0
    %v3048 = vand.u32 %v90, 4294901760
    %3049 = vmatpush1.msra.mxu0 %v3048
    %3050 = vmatprep.subr.mxu0 0.0
    %v3051 = vand.u32 %v91, 4294901760
    %3052 = vmatpush1.msra.mxu0 %v3051
    %3053 = vmatprep.subr.mxu0 0.0
    %v3054 = vand.u32 %v92, 4294901760
    %3055 = vmatpush1.msra.mxu0 %v3054
    %3056 = vmatprep.subr.mxu0 0.0
    %3057 = vmatpush1.msra.mxu0 0.0
    %3058 = vmatprep.subr.mxu0 0.0
    %3059 = vmatpush1.msra.mxu0 0.0
    %3060 = vmatprep.subr.mxu0 0.0
    %3061 = vmatpush1.msra.mxu0 0.0
    %3062 = vmatprep.subr.mxu0 0.0
    %3063 = vmatpush1.msra.mxu0 0.0
    %3064 = vmatprep.subr.mxu0 0.0
    %3065 = vmatpush1.msra.mxu0 0.0
    %3066 = vmatprep.subr.mxu0 0.0
    %3067 = vmatpush1.msra.mxu0 0.0
    %3068 = vmatprep.subr.mxu0 0.0
    %3069 = vmatpush1.msra.mxu0 0.0
    %3070 = vmatprep.subr.mxu0 0.0
    %3071 = vmatpush1.msra.mxu0 0.0
    %3072 = vmatprep.subr.mxu0 0.0
    %3073 = vmatpush1.msra.mxu0 0.0
    %3074 = vmatprep.subr.mxu0 0.0
    %3075 = vmatpush1.msra.mxu0 0.0
    %3076 = vmatprep.subr.mxu0 0.0
    %3077 = vmatpush1.msra.mxu0 0.0
    %3078 = vmatprep.subr.mxu0 0.0
    %3079 = vmatpush1.msra.mxu0 0.0
    %3080 = vmatprep.subr.mxu0 0.0
    %3081 = vmatpush1.msra.mxu0 0.0
    %3082 = vmatprep.subr.mxu0 0.0
    %3083 = vmatpush1.msra.mxu0 0.0
    %3084 = vmatprep.subr.mxu0 0.0
    %3085 = vmatpush1.msra.mxu0 0.0
    %3086 = vmatprep.subr.mxu0 0.0
    %3087 = vmatpush1.msra.mxu0 0.0
    %3088 = vmatprep.subr.mxu0 0.0
    %3089 = vmatpush1.msra.mxu0 0.0
    %3090 = vmatprep.subr.mxu0 0.0
    %3091 = vmatpush1.msra.mxu0 0.0
    %3092 = vmatprep.subr.mxu0 0.0
    %3093 = vmatpush1.msra.mxu0 0.0
    %3094 = vmatprep.subr.mxu0 0.0
    %3095 = vmatpush1.msra.mxu0 0.0
    %3096 = vmatprep.subr.mxu0 0.0
    %3097 = vmatpush1.msra.mxu0 0.0
    %3098 = vmatprep.subr.mxu0 0.0
    %3099 = vmatpush1.msra.mxu0 0.0
    %3100 = vmatprep.subr.mxu0 0.0
    %3101 = vmatpush1.msra.mxu0 0.0
    %3102 = vmatprep.subr.mxu0 0.0
    %3103 = vmatpush1.msra.mxu0 0.0
    %3104 = vmatprep.subr.mxu0 0.0
    %3105 = vmatpush1.msra.mxu0 0.0
    %3106 = vmatprep.subr.mxu0 0.0
    %3107 = vmatpush1.msra.mxu0 0.0
    %3108 = vmatprep.subr.mxu0 0.0
    %3109 = vmatpush1.msra.mxu0 0.0
    %3110 = vmatprep.subr.mxu0 0.0
    %3111 = vmatpush1.msra.mxu0 0.0
    %3112 = vmatprep.mubr.f32.mxu0 0.0
    %v3113 = vand.u32 %v95, 4294901760
    %3114 = vmatmul.mubr.f32.gmra.mrb[0].mxu0 %v3113
    %v3115 = vpop.f32.mrb[0].mxu0
    %v3116 = vadd.f32 %v3041, %v3115
    %v3117 = vpop.f32.mrb[0].mxu0
    %3118 = vdwg.mxu0
    %v3119 = vmul.f32 %v1107, %v3116
    %v3120 = vadd.f32 %v2627, %v3119
    %v3121 = vtanh.pop %v3120
    %v3122 = vsub.f32 1.0, %v2114
    %v3123 = vmul.f32 %v3122, %v3121
    %v3124 = vmul.f32 %v2114, %v55
    %v3125 = vadd.f32 %v3123, %v3124
    %s3126 = scalar_lea.vmem [#allocation2], 96
    %v3127 = vld [vmem:[%s3126] sm:$0xff]
    %v3128 = vld [vmem:[%s3126 + $0x8] sm:$0xff]
    %v3129 = vld [vmem:[%s3126 + $0x10] sm:$0xff]
    %v3130 = vld [vmem:[%s3126 + $0x18] sm:$0xff]
    %s3131 = scalar_lea.vmem [#allocation2], 128
    %v3132 = vld [vmem:[%s3131] sm:$0xff]
    %v3133 = vld [vmem:[%s3131 + $0x8] sm:$0xff]
    %v3134 = vld [vmem:[%s3131 + $0x10] sm:$0xff]
    %v3135 = vld [vmem:[%s3131 + $0x18] sm:$0xff]
    %s3136 = scalar_lea.vmem [#allocation2], 160
    %v3137 = vld [vmem:[%s3136] sm:$0xff]
    %v3138 = vld [vmem:[%s3136 + $0x8] sm:$0xff]
    %v3139 = vld [vmem:[%s3136 + $0x10] sm:$0xff]
    %v3140 = vld [vmem:[%s3136 + $0x18] sm:$0xff]
    %s3141 = scalar_lea.vmem [#allocation2], 192
    %v3142 = vld [vmem:[%s3141] sm:$0xff]
    %v3143 = vld [vmem:[%s3141 + $0x8] sm:$0xff]
    %v3144 = vld [vmem:[%s3141 + $0x10] sm:$0xff]
    %v3145 = vld [vmem:[%s3141 + $0x18] sm:$0xff]
    %s3146 = scalar_lea.vmem [#allocation2], 224
    %v3147 = vld [vmem:[%s3146] sm:$0xff]
    %v3148 = vld [vmem:[%s3146 + $0x8] sm:$0xff]
    %v3149 = vld [vmem:[%s3146 + $0x10] sm:$0xff]
    %v3150 = vld [vmem:[%s3146 + $0x18] sm:$0xff]
    %s3151 = scalar_lea.vmem [#allocation2], 256
    %v3152 = vld [vmem:[%s3151] sm:$0xff]
    %v3153 = vld [vmem:[%s3151 + $0x8] sm:$0xff]
    %v3154 = vld [vmem:[%s3151 + $0x10] sm:$0xff]
    %v3155 = vld [vmem:[%s3151 + $0x18] sm:$0xff]
    %v3157 = vsel %vm93, %v57, 0
    %3159 = vmatprep.subr.mxu0 0.0
    %v3160 = vand.u32 %v3142, 4294901760
    %3161 = vmatpush1.msra.mxu0 %v3160
    %3162 = vmatprep.subr.mxu0 0.0
    %v3163 = vand.u32 %v3143, 4294901760
    %3164 = vmatpush1.msra.mxu0 %v3163
    %3165 = vmatprep.subr.mxu0 0.0
    %v3166 = vand.u32 %v3144, 4294901760
    %3167 = vmatpush1.msra.mxu0 %v3166
    %3168 = vmatprep.subr.mxu0 0.0
    %v3169 = vand.u32 %v3145, 4294901760
    %3170 = vmatpush1.msra.mxu0 %v3169
    %3171 = vmatprep.subr.mxu0 0.0
    %3172 = vmatpush1.msra.mxu0 0.0
    %3173 = vmatprep.subr.mxu0 0.0
    %3174 = vmatpush1.msra.mxu0 0.0
    %3175 = vmatprep.subr.mxu0 0.0
    %3176 = vmatpush1.msra.mxu0 0.0
    %3177 = vmatprep.subr.mxu0 0.0
    %3178 = vmatpush1.msra.mxu0 0.0
    %3179 = vmatprep.subr.mxu0 0.0
    %3180 = vmatpush1.msra.mxu0 0.0
    %3181 = vmatprep.subr.mxu0 0.0
    %3182 = vmatpush1.msra.mxu0 0.0
    %3183 = vmatprep.subr.mxu0 0.0
    %3184 = vmatpush1.msra.mxu0 0.0
    %3185 = vmatprep.subr.mxu0 0.0
    %3186 = vmatpush1.msra.mxu0 0.0
    %3187 = vmatprep.subr.mxu0 0.0
    %3188 = vmatpush1.msra.mxu0 0.0
    %3189 = vmatprep.subr.mxu0 0.0
    %3190 = vmatpush1.msra.mxu0 0.0
    %3191 = vmatprep.subr.mxu0 0.0
    %3192 = vmatpush1.msra.mxu0 0.0
    %3193 = vmatprep.subr.mxu0 0.0
    %3194 = vmatpush1.msra.mxu0 0.0
    %3195 = vmatprep.subr.mxu0 0.0
    %3196 = vmatpush1.msra.mxu0 0.0
    %3197 = vmatprep.subr.mxu0 0.0
    %3198 = vmatpush1.msra.mxu0 0.0
    %3199 = vmatprep.subr.mxu0 0.0
    %3200 = vmatpush1.msra.mxu0 0.0
    %3201 = vmatprep.subr.mxu0 0.0
    %3202 = vmatpush1.msra.mxu0 0.0
    %3203 = vmatprep.subr.mxu0 0.0
    %3204 = vmatpush1.msra.mxu0 0.0
    %3205 = vmatprep.subr.mxu0 0.0
    %3206 = vmatpush1.msra.mxu0 0.0
    %3207 = vmatprep.subr.mxu0 0.0
    %3208 = vmatpush1.msra.mxu0 0.0
    %3209 = vmatprep.subr.mxu0 0.0
    %3210 = vmatpush1.msra.mxu0 0.0
    %3211 = vmatprep.subr.mxu0 0.0
    %3212 = vmatpush1.msra.mxu0 0.0
    %3213 = vmatprep.subr.mxu0 0.0
    %3214 = vmatpush1.msra.mxu0 0.0
    %3215 = vmatprep.subr.mxu0 0.0
    %3216 = vmatpush1.msra.mxu0 0.0
    %3217 = vmatprep.subr.mxu0 0.0
    %3218 = vmatpush1.msra.mxu0 0.0
    %3219 = vmatprep.subr.mxu0 0.0
    %3220 = vmatpush1.msra.mxu0 0.0
    %3221 = vmatprep.subr.mxu0 0.0
    %3222 = vmatpush1.msra.mxu0 0.0
    %3223 = vmatprep.subr.mxu0 0.0
    %3224 = vmatpush1.msra.mxu0 0.0
    %3225 = vmatprep.subr.mxu0 0.0
    %3226 = vmatpush1.msra.mxu0 0.0
    %3227 = vmatprep.mubr.f32.mxu0 0.0
    %v3228 = vand.u32 %v3157, 4294901760
    %v3229 = vsub.f32 %v3157, %v3228
    %v3230 = vand.u32 %v3229, 4294901760
    %v3231 = vsub.f32 %v3229, %v3230
    %v3232 = vand.u32 %v3231, 4294901760
    %3233 = vmatmul.mubr.f32.gmra.mrb[0].mxu0 %v3232
    %v3234 = vpop.f32.mrb[0].mxu0
    %v3235 = vadd.f32 0.0, %v3234
    %v3236 = vpop.f32.mrb[0].mxu0
    %3237 = vdwg.mxu0
    %3238 = vmatprep.subr.mxu0 0.0
    %v3239 = vand.u32 %v3142, 4294901760
    %v3240 = vsub.f32 %v3142, %v3239
    %v3241 = vand.u32 %v3240, 4294901760
    %v3242 = vsub.f32 %v3240, %v3241
    %v3243 = vand.u32 %v3242, 4294901760
    %3244 = vmatpush1.msra.mxu0 %v3243
    %3245 = vmatprep.subr.mxu0 0.0
    %v3246 = vand.u32 %v3143, 4294901760
    %v3247 = vsub.f32 %v3143, %v3246
    %v3248 = vand.u32 %v3247, 4294901760
    %v3249 = vsub.f32 %v3247, %v3248
    %v3250 = vand.u32 %v3249, 4294901760
    %3251 = vmatpush1.msra.mxu0 %v3250
    %3252 = vmatprep.subr.mxu0 0.0
    %v3253 = vand.u32 %v3144, 4294901760
    %v3254 = vsub.f32 %v3144, %v3253
    %v3255 = vand.u32 %v3254, 4294901760
    %v3256 = vsub.f32 %v3254, %v3255
    %v3257 = vand.u32 %v3256, 4294901760
    %3258 = vmatpush1.msra.mxu0 %v3257
    %3259 = vmatprep.subr.mxu0 0.0
    %v3260 = vand.u32 %v3145, 4294901760
    %v3261 = vsub.f32 %v3145, %v3260
    %v3262 = vand.u32 %v3261, 4294901760
    %v3263 = vsub.f32 %v3261, %v3262
    %v3264 = vand.u32 %v3263, 4294901760
    %3265 = vmatpush1.msra.mxu0 %v3264
    %3266 = vmatprep.subr.mxu0 0.0
    %3267 = vmatpush1.msra.mxu0 0.0
    %3268 = vmatprep.subr.mxu0 0.0
    %3269 = vmatpush1.msra.mxu0 0.0
    %3270 = vmatprep.subr.mxu0 0.0
    %3271 = vmatpush1.msra.mxu0 0.0
    %3272 = vmatprep.subr.mxu0 0.0
    %3273 = vmatpush1.msra.mxu0 0.0
    %3274 = vmatprep.subr.mxu0 0.0
    %3275 = vmatpush1.msra.mxu0 0.0
    %3276 = vmatprep.subr.mxu0 0.0
    %3277 = vmatpush1.msra.mxu0 0.0
    %3278 = vmatprep.subr.mxu0 0.0
    %3279 = vmatpush1.msra.mxu0 0.0
    %3280 = vmatprep.subr.mxu0 0.0
    %3281 = vmatpush1.msra.mxu0 0.0
    %3282 = vmatprep.subr.mxu0 0.0
    %3283 = vmatpush1.msra.mxu0 0.0
    %3284 = vmatprep.subr.mxu0 0.0
    %3285 = vmatpush1.msra.mxu0 0.0
    %3286 = vmatprep.subr.mxu0 0.0
    %3287 = vmatpush1.msra.mxu0 0.0
    %3288 = vmatprep.subr.mxu0 0.0
    %3289 = vmatpush1.msra.mxu0 0.0
    %3290 = vmatprep.subr.mxu0 0.0
    %3291 = vmatpush1.msra.mxu0 0.0
    %3292 = vmatprep.subr.mxu0 0.0
    %3293 = vmatpush1.msra.mxu0 0.0
    %3294 = vmatprep.subr.mxu0 0.0
    %3295 = vmatpush1.msra.mxu0 0.0
    %3296 = vmatprep.subr.mxu0 0.0
    %3297 = vmatpush1.msra.mxu0 0.0
    %3298 = vmatprep.subr.mxu0 0.0
    %3299 = vmatpush1.msra.mxu0 0.0
    %3300 = vmatprep.subr.mxu0 0.0
    %3301 = vmatpush1.msra.mxu0 0.0
    %3302 = vmatprep.subr.mxu0 0.0
    %3303 = vmatpush1.msra.mxu0 0.0
    %3304 = vmatprep.subr.mxu0 0.0
    %3305 = vmatpush1.msra.mxu0 0.0
    %3306 = vmatprep.subr.mxu0 0.0
    %3307 = vmatpush1.msra.mxu0 0.0
    %3308 = vmatprep.subr.mxu0 0.0
    %3309 = vmatpush1.msra.mxu0 0.0
    %3310 = vmatprep.subr.mxu0 0.0
    %3311 = vmatpush1.msra.mxu0 0.0
    %3312 = vmatprep.subr.mxu0 0.0
    %3313 = vmatpush1.msra.mxu0 0.0
    %3314 = vmatprep.subr.mxu0 0.0
    %3315 = vmatpush1.msra.mxu0 0.0
    %3316 = vmatprep.subr.mxu0 0.0
    %3317 = vmatpush1.msra.mxu0 0.0
    %3318 = vmatprep.subr.mxu0 0.0
    %3319 = vmatpush1.msra.mxu0 0.0
    %3320 = vmatprep.subr.mxu0 0.0
    %3321 = vmatpush1.msra.mxu0 0.0
    %3322 = vmatprep.mubr.f32.mxu0 0.0
    %v3323 = vand.u32 %v3157, 4294901760
    %3324 = vmatmul.mubr.f32.gmra.mrb[0].mxu0 %v3323
    %v3325 = vpop.f32.mrb[0].mxu0
    %v3326 = vadd.f32 %v3235, %v3325
    %v3327 = vpop.f32.mrb[0].mxu0
    %3328 = vdwg.mxu0
    %3329 = vmatprep.subr.mxu0 0.0
    %v3330 = vand.u32 %v3142, 4294901760
    %v3331 = vsub.f32 %v3142, %v3330
    %3332 = vmatpush1.msra.mxu0 %v3331
    %3333 = vmatprep.subr.mxu0 0.0
    %v3334 = vand.u32 %v3143, 4294901760
    %v3335 = vsub.f32 %v3143, %v3334
    %3336 = vmatpush1.msra.mxu0 %v3335
    %3337 = vmatprep.subr.mxu0 0.0
    %v3338 = vand.u32 %v3144, 4294901760
    %v3339 = vsub.f32 %v3144, %v3338
    %3340 = vmatpush1.msra.mxu0 %v3339
    %3341 = vmatprep.subr.mxu0 0.0
    %v3342 = vand.u32 %v3145, 4294901760
    %v3343 = vsub.f32 %v3145, %v3342
    %3344 = vmatpush1.msra.mxu0 %v3343
    %3345 = vmatprep.subr.mxu0 0.0
    %3346 = vmatpush1.msra.mxu0 0.0
    %3347 = vmatprep.subr.mxu0 0.0
    %3348 = vmatpush1.msra.mxu0 0.0
    %3349 = vmatprep.subr.mxu0 0.0
    %3350 = vmatpush1.msra.mxu0 0.0
    %3351 = vmatprep.subr.mxu0 0.0
    %3352 = vmatpush1.msra.mxu0 0.0
    %3353 = vmatprep.subr.mxu0 0.0
    %3354 = vmatpush1.msra.mxu0 0.0
    %3355 = vmatprep.subr.mxu0 0.0
    %3356 = vmatpush1.msra.mxu0 0.0
    %3357 = vmatprep.subr.mxu0 0.0
    %3358 = vmatpush1.msra.mxu0 0.0
    %3359 = vmatprep.subr.mxu0 0.0
    %3360 = vmatpush1.msra.mxu0 0.0
    %3361 = vmatprep.subr.mxu0 0.0
    %3362 = vmatpush1.msra.mxu0 0.0
    %3363 = vmatprep.subr.mxu0 0.0
    %3364 = vmatpush1.msra.mxu0 0.0
    %3365 = vmatprep.subr.mxu0 0.0
    %3366 = vmatpush1.msra.mxu0 0.0
    %3367 = vmatprep.subr.mxu0 0.0
    %3368 = vmatpush1.msra.mxu0 0.0
    %3369 = vmatprep.subr.mxu0 0.0
    %3370 = vmatpush1.msra.mxu0 0.0
    %3371 = vmatprep.subr.mxu0 0.0
    %3372 = vmatpush1.msra.mxu0 0.0
    %3373 = vmatprep.subr.mxu0 0.0
    %3374 = vmatpush1.msra.mxu0 0.0
    %3375 = vmatprep.subr.mxu0 0.0
    %3376 = vmatpush1.msra.mxu0 0.0
    %3377 = vmatprep.subr.mxu0 0.0
    %3378 = vmatpush1.msra.mxu0 0.0
    %3379 = vmatprep.subr.mxu0 0.0
    %3380 = vmatpush1.msra.mxu0 0.0
    %3381 = vmatprep.subr.mxu0 0.0
    %3382 = vmatpush1.msra.mxu0 0.0
    %3383 = vmatprep.subr.mxu0 0.0
    %3384 = vmatpush1.msra.mxu0 0.0
    %3385 = vmatprep.subr.mxu0 0.0
    %3386 = vmatpush1.msra.mxu0 0.0
    %3387 = vmatprep.subr.mxu0 0.0
    %3388 = vmatpush1.msra.mxu0 0.0
    %3389 = vmatprep.subr.mxu0 0.0
    %3390 = vmatpush1.msra.mxu0 0.0
    %3391 = vmatprep.subr.mxu0 0.0
    %3392 = vmatpush1.msra.mxu0 0.0
    %3393 = vmatprep.subr.mxu0 0.0
    %3394 = vmatpush1.msra.mxu0 0.0
    %3395 = vmatprep.subr.mxu0 0.0
    %3396 = vmatpush1.msra.mxu0 0.0
    %3397 = vmatprep.subr.mxu0 0.0
    %3398 = vmatpush1.msra.mxu0 0.0
    %3399 = vmatprep.subr.mxu0 0.0
    %3400 = vmatpush1.msra.mxu0 0.0
    %3401 = vmatprep.mubr.f32.mxu0 0.0
    %v3402 = vand.u32 %v3157, 4294901760
    %v3403 = vsub.f32 %v3157, %v3402
    %3404 = vmatmul.mubr.f32.gmra.mrb[0].mxu0 %v3403
    %v3405 = vpop.f32.mrb[0].mxu0
    %v3406 = vadd.f32 %v3326, %v3405
    %v3407 = vpop.f32.mrb[0].mxu0
    %3408 = vdwg.mxu0
    %3409 = vmatprep.subr.mxu0 0.0
    %v3410 = vand.u32 %v3142, 4294901760
    %3411 = vmatpush1.msra.mxu0 %v3410
    %3412 = vmatprep.subr.mxu0 0.0
    %v3413 = vand.u32 %v3143, 4294901760
    %3414 = vmatpush1.msra.mxu0 %v3413
    %3415 = vmatprep.subr.mxu0 0.0
    %v3416 = vand.u32 %v3144, 4294901760
    %3417 = vmatpush1.msra.mxu0 %v3416
    %3418 = vmatprep.subr.mxu0 0.0
    %v3419 = vand.u32 %v3145, 4294901760
    %3420 = vmatpush1.msra.mxu0 %v3419
    %3421 = vmatprep.subr.mxu0 0.0
    %3422 = vmatpush1.msra.mxu0 0.0
    %3423 = vmatprep.subr.mxu0 0.0
    %3424 = vmatpush1.msra.mxu0 0.0
    %3425 = vmatprep.subr.mxu0 0.0
    %3426 = vmatpush1.msra.mxu0 0.0
    %3427 = vmatprep.subr.mxu0 0.0
    %3428 = vmatpush1.msra.mxu0 0.0
    %3429 = vmatprep.subr.mxu0 0.0
    %3430 = vmatpush1.msra.mxu0 0.0
    %3431 = vmatprep.subr.mxu0 0.0
    %3432 = vmatpush1.msra.mxu0 0.0
    %3433 = vmatprep.subr.mxu0 0.0
    %3434 = vmatpush1.msra.mxu0 0.0
    %3435 = vmatprep.subr.mxu0 0.0
    %3436 = vmatpush1.msra.mxu0 0.0
    %3437 = vmatprep.subr.mxu0 0.0
    %3438 = vmatpush1.msra.mxu0 0.0
    %3439 = vmatprep.subr.mxu0 0.0
    %3440 = vmatpush1.msra.mxu0 0.0
    %3441 = vmatprep.subr.mxu0 0.0
    %3442 = vmatpush1.msra.mxu0 0.0
    %3443 = vmatprep.subr.mxu0 0.0
    %3444 = vmatpush1.msra.mxu0 0.0
    %3445 = vmatprep.subr.mxu0 0.0
    %3446 = vmatpush1.msra.mxu0 0.0
    %3447 = vmatprep.subr.mxu0 0.0
    %3448 = vmatpush1.msra.mxu0 0.0
    %3449 = vmatprep.subr.mxu0 0.0
    %3450 = vmatpush1.msra.mxu0 0.0
    %3451 = vmatprep.subr.mxu0 0.0
    %3452 = vmatpush1.msra.mxu0 0.0
    %3453 = vmatprep.subr.mxu0 0.0
    %3454 = vmatpush1.msra.mxu0 0.0
    %3455 = vmatprep.subr.mxu0 0.0
    %3456 = vmatpush1.msra.mxu0 0.0
    %3457 = vmatprep.subr.mxu0 0.0
    %3458 = vmatpush1.msra.mxu0 0.0
    %3459 = vmatprep.subr.mxu0 0.0
    %3460 = vmatpush1.msra.mxu0 0.0
    %3461 = vmatprep.subr.mxu0 0.0
    %3462 = vmatpush1.msra.mxu0 0.0
    %3463 = vmatprep.subr.mxu0 0.0
    %3464 = vmatpush1.msra.mxu0 0.0
    %3465 = vmatprep.subr.mxu0 0.0
    %3466 = vmatpush1.msra.mxu0 0.0
    %3467 = vmatprep.subr.mxu0 0.0
    %3468 = vmatpush1.msra.mxu0 0.0
    %3469 = vmatprep.subr.mxu0 0.0
    %3470 = vmatpush1.msra.mxu0 0.0
    %3471 = vmatprep.subr.mxu0 0.0
    %3472 = vmatpush1.msra.mxu0 0.0
    %3473 = vmatprep.subr.mxu0 0.0
    %3474 = vmatpush1.msra.mxu0 0.0
    %3475 = vmatprep.subr.mxu0 0.0
    %3476 = vmatpush1.msra.mxu0 0.0
    %3477 = vmatprep.mubr.f32.mxu0 0.0
    %v3478 = vand.u32 %v3157, 4294901760
    %v3479 = vsub.f32 %v3157, %v3478
    %v3480 = vand.u32 %v3479, 4294901760
    %3481 = vmatmul.mubr.f32.gmra.mrb[0].mxu0 %v3480
    %v3482 = vpop.f32.mrb[0].mxu0
    %v3483 = vadd.f32 %v3406, %v3482
    %v3484 = vpop.f32.mrb[0].mxu0
    %3485 = vdwg.mxu0
    %3486 = vmatprep.subr.mxu0 0.0
    %v3487 = vand.u32 %v3142, 4294901760
    %v3488 = vsub.f32 %v3142, %v3487
    %v3489 = vand.u32 %v3488, 4294901760
    %3490 = vmatpush1.msra.mxu0 %v3489
    %3491 = vmatprep.subr.mxu0 0.0
    %v3492 = vand.u32 %v3143, 4294901760
    %v3493 = vsub.f32 %v3143, %v3492
    %v3494 = vand.u32 %v3493, 4294901760
    %3495 = vmatpush1.msra.mxu0 %v3494
    %3496 = vmatprep.subr.mxu0 0.0
    %v3497 = vand.u32 %v3144, 4294901760
    %v3498 = vsub.f32 %v3144, %v3497
    %v3499 = vand.u32 %v3498, 4294901760
    %3500 = vmatpush1.msra.mxu0 %v3499
    %3501 = vmatprep.subr.mxu0 0.0
    %v3502 = vand.u32 %v3145, 4294901760
    %v3503 = vsub.f32 %v3145, %v3502
    %v3504 = vand.u32 %v3503, 4294901760
    %3505 = vmatpush1.msra.mxu0 %v3504
    %3506 = vmatprep.subr.mxu0 0.0
    %3507 = vmatpush1.msra.mxu0 0.0
    %3508 = vmatprep.subr.mxu0 0.0
    %3509 = vmatpush1.msra.mxu0 0.0
    %3510 = vmatprep.subr.mxu0 0.0
    %3511 = vmatpush1.msra.mxu0 0.0
    %3512 = vmatprep.subr.mxu0 0.0
    %3513 = vmatpush1.msra.mxu0 0.0
    %3514 = vmatprep.subr.mxu0 0.0
    %3515 = vmatpush1.msra.mxu0 0.0
    %3516 = vmatprep.subr.mxu0 0.0
    %3517 = vmatpush1.msra.mxu0 0.0
    %3518 = vmatprep.subr.mxu0 0.0
    %3519 = vmatpush1.msra.mxu0 0.0
    %3520 = vmatprep.subr.mxu0 0.0
    %3521 = vmatpush1.msra.mxu0 0.0
    %3522 = vmatprep.subr.mxu0 0.0
    %3523 = vmatpush1.msra.mxu0 0.0
    %3524 = vmatprep.subr.mxu0 0.0
    %3525 = vmatpush1.msra.mxu0 0.0
    %3526 = vmatprep.subr.mxu0 0.0
    %3527 = vmatpush1.msra.mxu0 0.0
    %3528 = vmatprep.subr.mxu0 0.0
    %3529 = vmatpush1.msra.mxu0 0.0
    %3530 = vmatprep.subr.mxu0 0.0
    %3531 = vmatpush1.msra.mxu0 0.0
    %3532 = vmatprep.subr.mxu0 0.0
    %3533 = vmatpush1.msra.mxu0 0.0
    %3534 = vmatprep.subr.mxu0 0.0
    %3535 = vmatpush1.msra.mxu0 0.0
    %3536 = vmatprep.subr.mxu0 0.0
    %3537 = vmatpush1.msra.mxu0 0.0
    %3538 = vmatprep.subr.mxu0 0.0
    %3539 = vmatpush1.msra.mxu0 0.0
    %3540 = vmatprep.subr.mxu0 0.0
    %3541 = vmatpush1.msra.mxu0 0.0
    %3542 = vmatprep.subr.mxu0 0.0
    %3543 = vmatpush1.msra.mxu0 0.0
    %3544 = vmatprep.subr.mxu0 0.0
    %3545 = vmatpush1.msra.mxu0 0.0
    %3546 = vmatprep.subr.mxu0 0.0
    %3547 = vmatpush1.msra.mxu0 0.0
    %3548 = vmatprep.subr.mxu0 0.0
    %3549 = vmatpush1.msra.mxu0 0.0
    %3550 = vmatprep.subr.mxu0 0.0
    %3551 = vmatpush1.msra.mxu0 0.0
    %3552 = vmatprep.subr.mxu0 0.0
    %3553 = vmatpush1.msra.mxu0 0.0
    %3554 = vmatprep.subr.mxu0 0.0
    %3555 = vmatpush1.msra.mxu0 0.0
    %3556 = vmatprep.subr.mxu0 0.0
    %3557 = vmatpush1.msra.mxu0 0.0
    %3558 = vmatprep.subr.mxu0 0.0
    %3559 = vmatpush1.msra.mxu0 0.0
    %3560 = vmatprep.subr.mxu0 0.0
    %3561 = vmatpush1.msra.mxu0 0.0
    %3562 = vmatprep.mubr.f32.mxu0 0.0
    %v3563 = vand.u32 %v3157, 4294901760
    %3564 = vmatmul.mubr.f32.gmra.mrb[0].mxu0 %v3563
    %v3565 = vpop.f32.mrb[0].mxu0
    %v3566 = vadd.f32 %v3483, %v3565
    %v3567 = vpop.f32.mrb[0].mxu0
    %3568 = vdwg.mxu0
    %3569 = vmatprep.subr.mxu0 0.0
    %v3570 = vand.u32 %v3142, 4294901760
    %3571 = vmatpush1.msra.mxu0 %v3570
    %3572 = vmatprep.subr.mxu0 0.0
    %v3573 = vand.u32 %v3143, 4294901760
    %3574 = vmatpush1.msra.mxu0 %v3573
    %3575 = vmatprep.subr.mxu0 0.0
    %v3576 = vand.u32 %v3144, 4294901760
    %3577 = vmatpush1.msra.mxu0 %v3576
    %3578 = vmatprep.subr.mxu0 0.0
    %v3579 = vand.u32 %v3145, 4294901760
    %3580 = vmatpush1.msra.mxu0 %v3579
    %3581 = vmatprep.subr.mxu0 0.0
    %3582 = vmatpush1.msra.mxu0 0.0
    %3583 = vmatprep.subr.mxu0 0.0
    %3584 = vmatpush1.msra.mxu0 0.0
    %3585 = vmatprep.subr.mxu0 0.0
    %3586 = vmatpush1.msra.mxu0 0.0
    %3587 = vmatprep.subr.mxu0 0.0
    %3588 = vmatpush1.msra.mxu0 0.0
    %3589 = vmatprep.subr.mxu0 0.0
    %3590 = vmatpush1.msra.mxu0 0.0
    %3591 = vmatprep.subr.mxu0 0.0
    %3592 = vmatpush1.msra.mxu0 0.0
    %3593 = vmatprep.subr.mxu0 0.0
    %3594 = vmatpush1.msra.mxu0 0.0
    %3595 = vmatprep.subr.mxu0 0.0
    %3596 = vmatpush1.msra.mxu0 0.0
    %3597 = vmatprep.subr.mxu0 0.0
    %3598 = vmatpush1.msra.mxu0 0.0
    %3599 = vmatprep.subr.mxu0 0.0
    %3600 = vmatpush1.msra.mxu0 0.0
    %3601 = vmatprep.subr.mxu0 0.0
    %3602 = vmatpush1.msra.mxu0 0.0
    %3603 = vmatprep.subr.mxu0 0.0
    %3604 = vmatpush1.msra.mxu0 0.0
    %3605 = vmatprep.subr.mxu0 0.0
    %3606 = vmatpush1.msra.mxu0 0.0
    %3607 = vmatprep.subr.mxu0 0.0
    %3608 = vmatpush1.msra.mxu0 0.0
    %3609 = vmatprep.subr.mxu0 0.0
    %3610 = vmatpush1.msra.mxu0 0.0
    %3611 = vmatprep.subr.mxu0 0.0
    %3612 = vmatpush1.msra.mxu0 0.0
    %3613 = vmatprep.subr.mxu0 0.0
    %3614 = vmatpush1.msra.mxu0 0.0
    %3615 = vmatprep.subr.mxu0 0.0
    %3616 = vmatpush1.msra.mxu0 0.0
    %3617 = vmatprep.subr.mxu0 0.0
    %3618 = vmatpush1.msra.mxu0 0.0
    %3619 = vmatprep.subr.mxu0 0.0
    %3620 = vmatpush1.msra.mxu0 0.0
    %3621 = vmatprep.subr.mxu0 0.0
    %3622 = vmatpush1.msra.mxu0 0.0
    %3623 = vmatprep.subr.mxu0 0.0
    %3624 = vmatpush1.msra.mxu0 0.0
    %3625 = vmatprep.subr.mxu0 0.0
    %3626 = vmatpush1.msra.mxu0 0.0
    %3627 = vmatprep.subr.mxu0 0.0
    %3628 = vmatpush1.msra.mxu0 0.0
    %3629 = vmatprep.subr.mxu0 0.0
    %3630 = vmatpush1.msra.mxu0 0.0
    %3631 = vmatprep.subr.mxu0 0.0
    %3632 = vmatpush1.msra.mxu0 0.0
    %3633 = vmatprep.subr.mxu0 0.0
    %3634 = vmatpush1.msra.mxu0 0.0
    %3635 = vmatprep.subr.mxu0 0.0
    %3636 = vmatpush1.msra.mxu0 0.0
    %3637 = vmatprep.mubr.f32.mxu0 0.0
    %v3638 = vand.u32 %v3157, 4294901760
    %3639 = vmatmul.mubr.f32.gmra.mrb[0].mxu0 %v3638
    %v3640 = vpop.f32.mrb[0].mxu0
    %v3641 = vadd.f32 %v3566, %v3640
    %v3642 = vpop.f32.mrb[0].mxu0
    %3643 = vdwg.mxu0
    %v3645 = vsel %vm93, %v3125, 0
    %3647 = vmatprep.subr.mxu0 0.0
    %v3648 = vand.u32 %v3127, 4294901760
    %3649 = vmatpush1.msra.mxu0 %v3648
    %3650 = vmatprep.subr.mxu0 0.0
    %v3651 = vand.u32 %v3128, 4294901760
    %3652 = vmatpush1.msra.mxu0 %v3651
    %3653 = vmatprep.subr.mxu0 0.0
    %v3654 = vand.u32 %v3129, 4294901760
    %3655 = vmatpush1.msra.mxu0 %v3654
    %3656 = vmatprep.subr.mxu0 0.0
    %v3657 = vand.u32 %v3130, 4294901760
    %3658 = vmatpush1.msra.mxu0 %v3657
    %3659 = vmatprep.subr.mxu0 0.0
    %3660 = vmatpush1.msra.mxu0 0.0
    %3661 = vmatprep.subr.mxu0 0.0
    %3662 = vmatpush1.msra.mxu0 0.0
    %3663 = vmatprep.subr.mxu0 0.0
    %3664 = vmatpush1.msra.mxu0 0.0
    %3665 = vmatprep.subr.mxu0 0.0
    %3666 = vmatpush1.msra.mxu0 0.0
    %3667 = vmatprep.subr.mxu0 0.0
    %3668 = vmatpush1.msra.mxu0 0.0
    %3669 = vmatprep.subr.mxu0 0.0
    %3670 = vmatpush1.msra.mxu0 0.0
    %3671 = vmatprep.subr.mxu0 0.0
    %3672 = vmatpush1.msra.mxu0 0.0
    %3673 = vmatprep.subr.mxu0 0.0
    %3674 = vmatpush1.msra.mxu0 0.0
    %3675 = vmatprep.subr.mxu0 0.0
    %3676 = vmatpush1.msra.mxu0 0.0
    %3677 = vmatprep.subr.mxu0 0.0
    %3678 = vmatpush1.msra.mxu0 0.0
    %3679 = vmatprep.subr.mxu0 0.0
    %3680 = vmatpush1.msra.mxu0 0.0
    %3681 = vmatprep.subr.mxu0 0.0
    %3682 = vmatpush1.msra.mxu0 0.0
    %3683 = vmatprep.subr.mxu0 0.0
    %3684 = vmatpush1.msra.mxu0 0.0
    %3685 = vmatprep.subr.mxu0 0.0
    %3686 = vmatpush1.msra.mxu0 0.0
    %3687 = vmatprep.subr.mxu0 0.0
    %3688 = vmatpush1.msra.mxu0 0.0
    %3689 = vmatprep.subr.mxu0 0.0
    %3690 = vmatpush1.msra.mxu0 0.0
    %3691 = vmatprep.subr.mxu0 0.0
    %3692 = vmatpush1.msra.mxu0 0.0
    %3693 = vmatprep.subr.mxu0 0.0
    %3694 = vmatpush1.msra.mxu0 0.0
    %3695 = vmatprep.subr.mxu0 0.0
    %3696 = vmatpush1.msra.mxu0 0.0
    %3697 = vmatprep.subr.mxu0 0.0
    %3698 = vmatpush1.msra.mxu0 0.0
    %3699 = vmatprep.subr.mxu0 0.0
    %3700 = vmatpush1.msra.mxu0 0.0
    %3701 = vmatprep.subr.mxu0 0.0
    %3702 = vmatpush1.msra.mxu0 0.0
    %3703 = vmatprep.subr.mxu0 0.0
    %3704 = vmatpush1.msra.mxu0 0.0
    %3705 = vmatprep.subr.mxu0 0.0
    %3706 = vmatpush1.msra.mxu0 0.0
    %3707 = vmatprep.subr.mxu0 0.0
    %3708 = vmatpush1.msra.mxu0 0.0
    %3709 = vmatprep.subr.mxu0 0.0
    %3710 = vmatpush1.msra.mxu0 0.0
    %3711 = vmatprep.subr.mxu0 0.0
    %3712 = vmatpush1.msra.mxu0 0.0
    %3713 = vmatprep.subr.mxu0 0.0
    %3714 = vmatpush1.msra.mxu0 0.0
    %3715 = vmatprep.mubr.f32.mxu0 0.0
    %v3716 = vand.u32 %v3645, 4294901760
    %v3717 = vsub.f32 %v3645, %v3716
    %v3718 = vand.u32 %v3717, 4294901760
    %v3719 = vsub.f32 %v3717, %v3718
    %v3720 = vand.u32 %v3719, 4294901760
    %3721 = vmatmul.mubr.f32.gmra.mrb[0].mxu0 %v3720
    %v3722 = vpop.f32.mrb[0].mxu0
    %v3723 = vadd.f32 %v3641, %v3722
    %v3724 = vpop.f32.mrb[0].mxu0
    %3725 = vdwg.mxu0
    %3726 = vmatprep.subr.mxu0 0.0
    %v3727 = vand.u32 %v3127, 4294901760
    %v3728 = vsub.f32 %v3127, %v3727
    %v3729 = vand.u32 %v3728, 4294901760
    %v3730 = vsub.f32 %v3728, %v3729
    %v3731 = vand.u32 %v3730, 4294901760
    %3732 = vmatpush1.msra.mxu0 %v3731
    %3733 = vmatprep.subr.mxu0 0.0
    %v3734 = vand.u32 %v3128, 4294901760
    %v3735 = vsub.f32 %v3128, %v3734
    %v3736 = vand.u32 %v3735, 4294901760
    %v3737 = vsub.f32 %v3735, %v3736
    %v3738 = vand.u32 %v3737, 4294901760
    %3739 = vmatpush1.msra.mxu0 %v3738
    %3740 = vmatprep.subr.mxu0 0.0
    %v3741 = vand.u32 %v3129, 4294901760
    %v3742 = vsub.f32 %v3129, %v3741
    %v3743 = vand.u32 %v3742, 4294901760
    %v3744 = vsub.f32 %v3742, %v3743
    %v3745 = vand.u32 %v3744, 4294901760
    %3746 = vmatpush1.msra.mxu0 %v3745
    %3747 = vmatprep.subr.mxu0 0.0
    %v3748 = vand.u32 %v3130, 4294901760
    %v3749 = vsub.f32 %v3130, %v3748
    %v3750 = vand.u32 %v3749, 4294901760
    %v3751 = vsub.f32 %v3749, %v3750
    %v3752 = vand.u32 %v3751, 4294901760
    %3753 = vmatpush1.msra.mxu0 %v3752
    %3754 = vmatprep.subr.mxu0 0.0
    %3755 = vmatpush1.msra.mxu0 0.0
    %3756 = vmatprep.subr.mxu0 0.0
    %3757 = vmatpush1.msra.mxu0 0.0
    %3758 = vmatprep.subr.mxu0 0.0
    %3759 = vmatpush1.msra.mxu0 0.0
    %3760 = vmatprep.subr.mxu0 0.0
    %3761 = vmatpush1.msra.mxu0 0.0
    %3762 = vmatprep.subr.mxu0 0.0
    %3763 = vmatpush1.msra.mxu0 0.0
    %3764 = vmatprep.subr.mxu0 0.0
    %3765 = vmatpush1.msra.mxu0 0.0
    %3766 = vmatprep.subr.mxu0 0.0
    %3767 = vmatpush1.msra.mxu0 0.0
    %3768 = vmatprep.subr.mxu0 0.0
    %3769 = vmatpush1.msra.mxu0 0.0
    %3770 = vmatprep.subr.mxu0 0.0
    %3771 = vmatpush1.msra.mxu0 0.0
    %3772 = vmatprep.subr.mxu0 0.0
    %3773 = vmatpush1.msra.mxu0 0.0
    %3774 = vmatprep.subr.mxu0 0.0
    %3775 = vmatpush1.msra.mxu0 0.0
    %3776 = vmatprep.subr.mxu0 0.0
    %3777 = vmatpush1.msra.mxu0 0.0
    %3778 = vmatprep.subr.mxu0 0.0
    %3779 = vmatpush1.msra.mxu0 0.0
    %3780 = vmatprep.subr.mxu0 0.0
    %3781 = vmatpush1.msra.mxu0 0.0
    %3782 = vmatprep.subr.mxu0 0.0
    %3783 = vmatpush1.msra.mxu0 0.0
    %3784 = vmatprep.subr.mxu0 0.0
    %3785 = vmatpush1.msra.mxu0 0.0
    %3786 = vmatprep.subr.mxu0 0.0
    %3787 = vmatpush1.msra.mxu0 0.0
    %3788 = vmatprep.subr.mxu0 0.0
    %3789 = vmatpush1.msra.mxu0 0.0
    %3790 = vmatprep.subr.mxu0 0.0
    %3791 = vmatpush1.msra.mxu0 0.0
    %3792 = vmatprep.subr.mxu0 0.0
    %3793 = vmatpush1.msra.mxu0 0.0
    %3794 = vmatprep.subr.mxu0 0.0
    %3795 = vmatpush1.msra.mxu0 0.0
    %3796 = vmatprep.subr.mxu0 0.0
    %3797 = vmatpush1.msra.mxu0 0.0
    %3798 = vmatprep.subr.mxu0 0.0
    %3799 = vmatpush1.msra.mxu0 0.0
    %3800 = vmatprep.subr.mxu0 0.0
    %3801 = vmatpush1.msra.mxu0 0.0
    %3802 = vmatprep.subr.mxu0 0.0
    %3803 = vmatpush1.msra.mxu0 0.0
    %3804 = vmatprep.subr.mxu0 0.0
    %3805 = vmatpush1.msra.mxu0 0.0
    %3806 = vmatprep.subr.mxu0 0.0
    %3807 = vmatpush1.msra.mxu0 0.0
    %3808 = vmatprep.subr.mxu0 0.0
    %3809 = vmatpush1.msra.mxu0 0.0
    %3810 = vmatprep.mubr.f32.mxu0 0.0
    %v3811 = vand.u32 %v3645, 4294901760
    %3812 = vmatmul.mubr.f32.gmra.mrb[0].mxu0 %v3811
    %v3813 = vpop.f32.mrb[0].mxu0
    %v3814 = vadd.f32 %v3723, %v3813
    %v3815 = vpop.f32.mrb[0].mxu0
    %3816 = vdwg.mxu0
    %3817 = vmatprep.subr.mxu0 0.0
    %v3818 = vand.u32 %v3127, 4294901760
    %v3819 = vsub.f32 %v3127, %v3818
    %3820 = vmatpush1.msra.mxu0 %v3819
    %3821 = vmatprep.subr.mxu0 0.0
    %v3822 = vand.u32 %v3128, 4294901760
    %v3823 = vsub.f32 %v3128, %v3822
    %3824 = vmatpush1.msra.mxu0 %v3823
    %3825 = vmatprep.subr.mxu0 0.0
    %v3826 = vand.u32 %v3129, 4294901760
    %v3827 = vsub.f32 %v3129, %v3826
    %3828 = vmatpush1.msra.mxu0 %v3827
    %3829 = vmatprep.subr.mxu0 0.0
    %v3830 = vand.u32 %v3130, 4294901760
    %v3831 = vsub.f32 %v3130, %v3830
    %3832 = vmatpush1.msra.mxu0 %v3831
    %3833 = vmatprep.subr.mxu0 0.0
    %3834 = vmatpush1.msra.mxu0 0.0
    %3835 = vmatprep.subr.mxu0 0.0
    %3836 = vmatpush1.msra.mxu0 0.0
    %3837 = vmatprep.subr.mxu0 0.0
    %3838 = vmatpush1.msra.mxu0 0.0
    %3839 = vmatprep.subr.mxu0 0.0
    %3840 = vmatpush1.msra.mxu0 0.0
    %3841 = vmatprep.subr.mxu0 0.0
    %3842 = vmatpush1.msra.mxu0 0.0
    %3843 = vmatprep.subr.mxu0 0.0
    %3844 = vmatpush1.msra.mxu0 0.0
    %3845 = vmatprep.subr.mxu0 0.0
    %3846 = vmatpush1.msra.mxu0 0.0
    %3847 = vmatprep.subr.mxu0 0.0
    %3848 = vmatpush1.msra.mxu0 0.0
    %3849 = vmatprep.subr.mxu0 0.0
    %3850 = vmatpush1.msra.mxu0 0.0
    %3851 = vmatprep.subr.mxu0 0.0
    %3852 = vmatpush1.msra.mxu0 0.0
    %3853 = vmatprep.subr.mxu0 0.0
    %3854 = vmatpush1.msra.mxu0 0.0
    %3855 = vmatprep.subr.mxu0 0.0
    %3856 = vmatpush1.msra.mxu0 0.0
    %3857 = vmatprep.subr.mxu0 0.0
    %3858 = vmatpush1.msra.mxu0 0.0
    %3859 = vmatprep.subr.mxu0 0.0
    %3860 = vmatpush1.msra.mxu0 0.0
    %3861 = vmatprep.subr.mxu0 0.0
    %3862 = vmatpush1.msra.mxu0 0.0
    %3863 = vmatprep.subr.mxu0 0.0
    %3864 = vmatpush1.msra.mxu0 0.0
    %3865 = vmatprep.subr.mxu0 0.0
    %3866 = vmatpush1.msra.mxu0 0.0
    %3867 = vmatprep.subr.mxu0 0.0
    %3868 = vmatpush1.msra.mxu0 0.0
    %3869 = vmatprep.subr.mxu0 0.0
    %3870 = vmatpush1.msra.mxu0 0.0
    %3871 = vmatprep.subr.mxu0 0.0
    %3872 = vmatpush1.msra.mxu0 0.0
    %3873 = vmatprep.subr.mxu0 0.0
    %3874 = vmatpush1.msra.mxu0 0.0
    %3875 = vmatprep.subr.mxu0 0.0
    %3876 = vmatpush1.msra.mxu0 0.0
    %3877 = vmatprep.subr.mxu0 0.0
    %3878 = vmatpush1.msra.mxu0 0.0
    %3879 = vmatprep.subr.mxu0 0.0
    %3880 = vmatpush1.msra.mxu0 0.0
    %3881 = vmatprep.subr.mxu0 0.0
    %3882 = vmatpush1.msra.mxu0 0.0
    %3883 = vmatprep.subr.mxu0 0.0
    %3884 = vmatpush1.msra.mxu0 0.0
    %3885 = vmatprep.subr.mxu0 0.0
    %3886 = vmatpush1.msra.mxu0 0.0
    %3887 = vmatprep.subr.mxu0 0.0
    %3888 = vmatpush1.msra.mxu0 0.0
    %3889 = vmatprep.mubr.f32.mxu0 0.0
    %v3890 = vand.u32 %v3645, 4294901760
    %v3891 = vsub.f32 %v3645, %v3890
    %3892 = vmatmul.mubr.f32.gmra.mrb[0].mxu0 %v3891
    %v3893 = vpop.f32.mrb[0].mxu0
    %v3894 = vadd.f32 %v3814, %v3893
    %v3895 = vpop.f32.mrb[0].mxu0
    %3896 = vdwg.mxu0
    %3897 = vmatprep.subr.mxu0 0.0
    %v3898 = vand.u32 %v3127, 4294901760
    %3899 = vmatpush1.msra.mxu0 %v3898
    %3900 = vmatprep.subr.mxu0 0.0
    %v3901 = vand.u32 %v3128, 4294901760
    %3902 = vmatpush1.msra.mxu0 %v3901
    %3903 = vmatprep.subr.mxu0 0.0
    %v3904 = vand.u32 %v3129, 4294901760
    %3905 = vmatpush1.msra.mxu0 %v3904
    %3906 = vmatprep.subr.mxu0 0.0
    %v3907 = vand.u32 %v3130, 4294901760
    %3908 = vmatpush1.msra.mxu0 %v3907
    %3909 = vmatprep.subr.mxu0 0.0
    %3910 = vmatpush1.msra.mxu0 0.0
    %3911 = vmatprep.subr.mxu0 0.0
    %3912 = vmatpush1.msra.mxu0 0.0
    %3913 = vmatprep.subr.mxu0 0.0
    %3914 = vmatpush1.msra.mxu0 0.0
    %3915 = vmatprep.subr.mxu0 0.0
    %3916 = vmatpush1.msra.mxu0 0.0
    %3917 = vmatprep.subr.mxu0 0.0
    %3918 = vmatpush1.msra.mxu0 0.0
    %3919 = vmatprep.subr.mxu0 0.0
    %3920 = vmatpush1.msra.mxu0 0.0
    %3921 = vmatprep.subr.mxu0 0.0
    %3922 = vmatpush1.msra.mxu0 0.0
    %3923 = vmatprep.subr.mxu0 0.0
    %3924 = vmatpush1.msra.mxu0 0.0
    %3925 = vmatprep.subr.mxu0 0.0
    %3926 = vmatpush1.msra.mxu0 0.0
    %3927 = vmatprep.subr.mxu0 0.0
    %3928 = vmatpush1.msra.mxu0 0.0
    %3929 = vmatprep.subr.mxu0 0.0
    %3930 = vmatpush1.msra.mxu0 0.0
    %3931 = vmatprep.subr.mxu0 0.0
    %3932 = vmatpush1.msra.mxu0 0.0
    %3933 = vmatprep.subr.mxu0 0.0
    %3934 = vmatpush1.msra.mxu0 0.0
    %3935 = vmatprep.subr.mxu0 0.0
    %3936 = vmatpush1.msra.mxu0 0.0
    %3937 = vmatprep.subr.mxu0 0.0
    %3938 = vmatpush1.msra.mxu0 0.0
    %3939 = vmatprep.subr.mxu0 0.0
    %3940 = vmatpush1.msra.mxu0 0.0
    %3941 = vmatprep.subr.mxu0 0.0
    %3942 = vmatpush1.msra.mxu0 0.0
    %3943 = vmatprep.subr.mxu0 0.0
    %3944 = vmatpush1.msra.mxu0 0.0
    %3945 = vmatprep.subr.mxu0 0.0
    %3946 = vmatpush1.msra.mxu0 0.0
    %3947 = vmatprep.subr.mxu0 0.0
    %3948 = vmatpush1.msra.mxu0 0.0
    %3949 = vmatprep.subr.mxu0 0.0
    %3950 = vmatpush1.msra.mxu0 0.0
    %3951 = vmatprep.subr.mxu0 0.0
    %3952 = vmatpush1.msra.mxu0 0.0
    %3953 = vmatprep.subr.mxu0 0.0
    %3954 = vmatpush1.msra.mxu0 0.0
    %3955 = vmatprep.subr.mxu0 0.0
    %3956 = vmatpush1.msra.mxu0 0.0
    %3957 = vmatprep.subr.mxu0 0.0
    %3958 = vmatpush1.msra.mxu0 0.0
    %3959 = vmatprep.subr.mxu0 0.0
    %3960 = vmatpush1.msra.mxu0 0.0
    %3961 = vmatprep.subr.mxu0 0.0
    %3962 = vmatpush1.msra.mxu0 0.0
    %3963 = vmatprep.subr.mxu0 0.0
    %3964 = vmatpush1.msra.mxu0 0.0
    %3965 = vmatprep.mubr.f32.mxu0 0.0
    %v3966 = vand.u32 %v3645, 4294901760
    %v3967 = vsub.f32 %v3645, %v3966
    %v3968 = vand.u32 %v3967, 4294901760
    %3969 = vmatmul.mubr.f32.gmra.mrb[0].mxu0 %v3968
    %v3970 = vpop.f32.mrb[0].mxu0
    %v3971 = vadd.f32 %v3894, %v3970
    %v3972 = vpop.f32.mrb[0].mxu0
    %3973 = vdwg.mxu0
    %3974 = vmatprep.subr.mxu0 0.0
    %v3975 = vand.u32 %v3127, 4294901760
    %v3976 = vsub.f32 %v3127, %v3975
    %v3977 = vand.u32 %v3976, 4294901760
    %3978 = vmatpush1.msra.mxu0 %v3977
    %3979 = vmatprep.subr.mxu0 0.0
    %v3980 = vand.u32 %v3128, 4294901760
    %v3981 = vsub.f32 %v3128, %v3980
    %v3982 = vand.u32 %v3981, 4294901760
    %3983 = vmatpush1.msra.mxu0 %v3982
    %3984 = vmatprep.subr.mxu0 0.0
    %v3985 = vand.u32 %v3129, 4294901760
    %v3986 = vsub.f32 %v3129, %v3985
    %v3987 = vand.u32 %v3986, 4294901760
    %3988 = vmatpush1.msra.mxu0 %v3987
    %3989 = vmatprep.subr.mxu0 0.0
    %v3990 = vand.u32 %v3130, 4294901760
    %v3991 = vsub.f32 %v3130, %v3990
    %v3992 = vand.u32 %v3991, 4294901760
    %3993 = vmatpush1.msra.mxu0 %v3992
    %3994 = vmatprep.subr.mxu0 0.0
    %3995 = vmatpush1.msra.mxu0 0.0
    %3996 = vmatprep.subr.mxu0 0.0
    %3997 = vmatpush1.msra.mxu0 0.0
    %3998 = vmatprep.subr.mxu0 0.0
    %3999 = vmatpush1.msra.mxu0 0.0
    %4000 = vmatprep.subr.mxu0 0.0
    %4001 = vmatpush1.msra.mxu0 0.0
    %4002 = vmatprep.subr.mxu0 0.0
    %4003 = vmatpush1.msra.mxu0 0.0
    %4004 = vmatprep.subr.mxu0 0.0
    %4005 = vmatpush1.msra.mxu0 0.0
    %4006 = vmatprep.subr.mxu0 0.0
    %4007 = vmatpush1.msra.mxu0 0.0
    %4008 = vmatprep.subr.mxu0 0.0
    %4009 = vmatpush1.msra.mxu0 0.0
    %4010 = vmatprep.subr.mxu0 0.0
    %4011 = vmatpush1.msra.mxu0 0.0
    %4012 = vmatprep.subr.mxu0 0.0
    %4013 = vmatpush1.msra.mxu0 0.0
    %4014 = vmatprep.subr.mxu0 0.0
    %4015 = vmatpush1.msra.mxu0 0.0
    %4016 = vmatprep.subr.mxu0 0.0
    %4017 = vmatpush1.msra.mxu0 0.0
    %4018 = vmatprep.subr.mxu0 0.0
    %4019 = vmatpush1.msra.mxu0 0.0
    %4020 = vmatprep.subr.mxu0 0.0
    %4021 = vmatpush1.msra.mxu0 0.0
    %4022 = vmatprep.subr.mxu0 0.0
    %4023 = vmatpush1.msra.mxu0 0.0
    %4024 = vmatprep.subr.mxu0 0.0
    %4025 = vmatpush1.msra.mxu0 0.0
    %4026 = vmatprep.subr.mxu0 0.0
    %4027 = vmatpush1.msra.mxu0 0.0
    %4028 = vmatprep.subr.mxu0 0.0
    %4029 = vmatpush1.msra.mxu0 0.0
    %4030 = vmatprep.subr.mxu0 0.0
    %4031 = vmatpush1.msra.mxu0 0.0
    %4032 = vmatprep.subr.mxu0 0.0
    %4033 = vmatpush1.msra.mxu0 0.0
    %4034 = vmatprep.subr.mxu0 0.0
    %4035 = vmatpush1.msra.mxu0 0.0
    %4036 = vmatprep.subr.mxu0 0.0
    %4037 = vmatpush1.msra.mxu0 0.0
    %4038 = vmatprep.subr.mxu0 0.0
    %4039 = vmatpush1.msra.mxu0 0.0
    %4040 = vmatprep.subr.mxu0 0.0
    %4041 = vmatpush1.msra.mxu0 0.0
    %4042 = vmatprep.subr.mxu0 0.0
    %4043 = vmatpush1.msra.mxu0 0.0
    %4044 = vmatprep.subr.mxu0 0.0
    %4045 = vmatpush1.msra.mxu0 0.0
    %4046 = vmatprep.subr.mxu0 0.0
    %4047 = vmatpush1.msra.mxu0 0.0
    %4048 = vmatprep.subr.mxu0 0.0
    %4049 = vmatpush1.msra.mxu0 0.0
    %4050 = vmatprep.mubr.f32.mxu0 0.0
    %v4051 = vand.u32 %v3645, 4294901760
    %4052 = vmatmul.mubr.f32.gmra.mrb[0].mxu0 %v4051
    %v4053 = vpop.f32.mrb[0].mxu0
    %v4054 = vadd.f32 %v3971, %v4053
    %v4055 = vpop.f32.mrb[0].mxu0
    %4056 = vdwg.mxu0
    %4057 = vmatprep.subr.mxu0 0.0
    %v4058 = vand.u32 %v3127, 4294901760
    %4059 = vmatpush1.msra.mxu0 %v4058
    %4060 = vmatprep.subr.mxu0 0.0
    %v4061 = vand.u32 %v3128, 4294901760
    %4062 = vmatpush1.msra.mxu0 %v4061
    %4063 = vmatprep.subr.mxu0 0.0
    %v4064 = vand.u32 %v3129, 4294901760
    %4065 = vmatpush1.msra.mxu0 %v4064
    %4066 = vmatprep.subr.mxu0 0.0
    %v4067 = vand.u32 %v3130, 4294901760
    %4068 = vmatpush1.msra.mxu0 %v4067
    %4069 = vmatprep.subr.mxu0 0.0
    %4070 = vmatpush1.msra.mxu0 0.0
    %4071 = vmatprep.subr.mxu0 0.0
    %4072 = vmatpush1.msra.mxu0 0.0
    %4073 = vmatprep.subr.mxu0 0.0
    %4074 = vmatpush1.msra.mxu0 0.0
    %4075 = vmatprep.subr.mxu0 0.0
    %4076 = vmatpush1.msra.mxu0 0.0
    %4077 = vmatprep.subr.mxu0 0.0
    %4078 = vmatpush1.msra.mxu0 0.0
    %4079 = vmatprep.subr.mxu0 0.0
    %4080 = vmatpush1.msra.mxu0 0.0
    %4081 = vmatprep.subr.mxu0 0.0
    %4082 = vmatpush1.msra.mxu0 0.0
    %4083 = vmatprep.subr.mxu0 0.0
    %4084 = vmatpush1.msra.mxu0 0.0
    %4085 = vmatprep.subr.mxu0 0.0
    %4086 = vmatpush1.msra.mxu0 0.0
    %4087 = vmatprep.subr.mxu0 0.0
    %4088 = vmatpush1.msra.mxu0 0.0
    %4089 = vmatprep.subr.mxu0 0.0
    %4090 = vmatpush1.msra.mxu0 0.0
    %4091 = vmatprep.subr.mxu0 0.0
    %4092 = vmatpush1.msra.mxu0 0.0
    %4093 = vmatprep.subr.mxu0 0.0
    %4094 = vmatpush1.msra.mxu0 0.0
    %4095 = vmatprep.subr.mxu0 0.0
    %4096 = vmatpush1.msra.mxu0 0.0
    %4097 = vmatprep.subr.mxu0 0.0
    %4098 = vmatpush1.msra.mxu0 0.0
    %4099 = vmatprep.subr.mxu0 0.0
    %4100 = vmatpush1.msra.mxu0 0.0
    %4101 = vmatprep.subr.mxu0 0.0
    %4102 = vmatpush1.msra.mxu0 0.0
    %4103 = vmatprep.subr.mxu0 0.0
    %4104 = vmatpush1.msra.mxu0 0.0
    %4105 = vmatprep.subr.mxu0 0.0
    %4106 = vmatpush1.msra.mxu0 0.0
    %4107 = vmatprep.subr.mxu0 0.0
    %4108 = vmatpush1.msra.mxu0 0.0
    %4109 = vmatprep.subr.mxu0 0.0
    %4110 = vmatpush1.msra.mxu0 0.0
    %4111 = vmatprep.subr.mxu0 0.0
    %4112 = vmatpush1.msra.mxu0 0.0
    %4113 = vmatprep.subr.mxu0 0.0
    %4114 = vmatpush1.msra.mxu0 0.0
    %4115 = vmatprep.subr.mxu0 0.0
    %4116 = vmatpush1.msra.mxu0 0.0
    %4117 = vmatprep.subr.mxu0 0.0
    %4118 = vmatpush1.msra.mxu0 0.0
    %4119 = vmatprep.subr.mxu0 0.0
    %4120 = vmatpush1.msra.mxu0 0.0
    %4121 = vmatprep.subr.mxu0 0.0
    %4122 = vmatpush1.msra.mxu0 0.0
    %4123 = vmatprep.subr.mxu0 0.0
    %4124 = vmatpush1.msra.mxu0 0.0
    %4125 = vmatprep.mubr.f32.mxu0 0.0
    %v4126 = vand.u32 %v3645, 4294901760
    %4127 = vmatmul.mubr.f32.gmra.mrb[0].mxu0 %v4126
    %v4128 = vpop.f32.mrb[0].mxu0
    %v4129 = vadd.f32 %v4054, %v4128
    %v4130 = vpop.f32.mrb[0].mxu0
    %4131 = vdwg.mxu0
    %v4132 = vlaneseq
    %v4133 = vshrl.u32 %v4132, 7
    %v4134 = vsub.s32 4, %v4133
    %v4135 = vrot.slane %v58, %v4134
    %v4136 = vadd.f32 %v4129, %v4135
    %v4137 = vsub.f32 0.0, %v4136
    %v4138 = vmul.f32 %v4137, 1.442695
    %v4139 = vpow.pop %v4138
    %v4140 = vadd.f32 %v4139, 1.0
    %v4141 = vrcp.pop %v4140
    %v4142 = vmul.f32 1.0, %v4141
    %4143 = vmatprep.subr.mxu0 0.0
    %v4144 = vand.u32 %v3147, 4294901760
    %4145 = vmatpush1.msra.mxu0 %v4144
    %4146 = vmatprep.subr.mxu0 0.0
    %v4147 = vand.u32 %v3148, 4294901760
    %4148 = vmatpush1.msra.mxu0 %v4147
    %4149 = vmatprep.subr.mxu0 0.0
    %v4150 = vand.u32 %v3149, 4294901760
    %4151 = vmatpush1.msra.mxu0 %v4150
    %4152 = vmatprep.subr.mxu0 0.0
    %v4153 = vand.u32 %v3150, 4294901760
    %4154 = vmatpush1.msra.mxu0 %v4153
    %4155 = vmatprep.subr.mxu0 0.0
    %4156 = vmatpush1.msra.mxu0 0.0
    %4157 = vmatprep.subr.mxu0 0.0
    %4158 = vmatpush1.msra.mxu0 0.0
    %4159 = vmatprep.subr.mxu0 0.0
    %4160 = vmatpush1.msra.mxu0 0.0
    %4161 = vmatprep.subr.mxu0 0.0
    %4162 = vmatpush1.msra.mxu0 0.0
    %4163 = vmatprep.subr.mxu0 0.0
    %4164 = vmatpush1.msra.mxu0 0.0
    %4165 = vmatprep.subr.mxu0 0.0
    %4166 = vmatpush1.msra.mxu0 0.0
    %4167 = vmatprep.subr.mxu0 0.0
    %4168 = vmatpush1.msra.mxu0 0.0
    %4169 = vmatprep.subr.mxu0 0.0
    %4170 = vmatpush1.msra.mxu0 0.0
    %4171 = vmatprep.subr.mxu0 0.0
    %4172 = vmatpush1.msra.mxu0 0.0
    %4173 = vmatprep.subr.mxu0 0.0
    %4174 = vmatpush1.msra.mxu0 0.0
    %4175 = vmatprep.subr.mxu0 0.0
    %4176 = vmatpush1.msra.mxu0 0.0
    %4177 = vmatprep.subr.mxu0 0.0
    %4178 = vmatpush1.msra.mxu0 0.0
    %4179 = vmatprep.subr.mxu0 0.0
    %4180 = vmatpush1.msra.mxu0 0.0
    %4181 = vmatprep.subr.mxu0 0.0
    %4182 = vmatpush1.msra.mxu0 0.0
    %4183 = vmatprep.subr.mxu0 0.0
    %4184 = vmatpush1.msra.mxu0 0.0
    %4185 = vmatprep.subr.mxu0 0.0
    %4186 = vmatpush1.msra.mxu0 0.0
    %4187 = vmatprep.subr.mxu0 0.0
    %4188 = vmatpush1.msra.mxu0 0.0
    %4189 = vmatprep.subr.mxu0 0.0
    %4190 = vmatpush1.msra.mxu0 0.0
    %4191 = vmatprep.subr.mxu0 0.0
    %4192 = vmatpush1.msra.mxu0 0.0
    %4193 = vmatprep.subr.mxu0 0.0
    %4194 = vmatpush1.msra.mxu0 0.0
    %4195 = vmatprep.subr.mxu0 0.0
    %4196 = vmatpush1.msra.mxu0 0.0
    %4197 = vmatprep.subr.mxu0 0.0
    %4198 = vmatpush1.msra.mxu0 0.0
    %4199 = vmatprep.subr.mxu0 0.0
    %4200 = vmatpush1.msra.mxu0 0.0
    %4201 = vmatprep.subr.mxu0 0.0
    %4202 = vmatpush1.msra.mxu0 0.0
    %4203 = vmatprep.subr.mxu0 0.0
    %4204 = vmatpush1.msra.mxu0 0.0
    %4205 = vmatprep.subr.mxu0 0.0
    %4206 = vmatpush1.msra.mxu0 0.0
    %4207 = vmatprep.subr.mxu0 0.0
    %4208 = vmatpush1.msra.mxu0 0.0
    %4209 = vmatprep.subr.mxu0 0.0
    %4210 = vmatpush1.msra.mxu0 0.0
    %4211 = vmatprep.mubr.f32.mxu0 0.0
    %v4212 = vand.u32 %v3157, 4294901760
    %v4213 = vsub.f32 %v3157, %v4212
    %v4214 = vand.u32 %v4213, 4294901760
    %v4215 = vsub.f32 %v4213, %v4214
    %v4216 = vand.u32 %v4215, 4294901760
    %4217 = vmatmul.mubr.f32.gmra.mrb[0].mxu0 %v4216
    %v4218 = vpop.f32.mrb[0].mxu0
    %v4219 = vadd.f32 0.0, %v4218
    %v4220 = vpop.f32.mrb[0].mxu0
    %4221 = vdwg.mxu0
    %4222 = vmatprep.subr.mxu0 0.0
    %v4223 = vand.u32 %v3147, 4294901760
    %v4224 = vsub.f32 %v3147, %v4223
    %v4225 = vand.u32 %v4224, 4294901760
    %v4226 = vsub.f32 %v4224, %v4225
    %v4227 = vand.u32 %v4226, 4294901760
    %4228 = vmatpush1.msra.mxu0 %v4227
    %4229 = vmatprep.subr.mxu0 0.0
    %v4230 = vand.u32 %v3148, 4294901760
    %v4231 = vsub.f32 %v3148, %v4230
    %v4232 = vand.u32 %v4231, 4294901760
    %v4233 = vsub.f32 %v4231, %v4232
    %v4234 = vand.u32 %v4233, 4294901760
    %4235 = vmatpush1.msra.mxu0 %v4234
    %4236 = vmatprep.subr.mxu0 0.0
    %v4237 = vand.u32 %v3149, 4294901760
    %v4238 = vsub.f32 %v3149, %v4237
    %v4239 = vand.u32 %v4238, 4294901760
    %v4240 = vsub.f32 %v4238, %v4239
    %v4241 = vand.u32 %v4240, 4294901760
    %4242 = vmatpush1.msra.mxu0 %v4241
    %4243 = vmatprep.subr.mxu0 0.0
    %v4244 = vand.u32 %v3150, 4294901760
    %v4245 = vsub.f32 %v3150, %v4244
    %v4246 = vand.u32 %v4245, 4294901760
    %v4247 = vsub.f32 %v4245, %v4246
    %v4248 = vand.u32 %v4247, 4294901760
    %4249 = vmatpush1.msra.mxu0 %v4248
    %4250 = vmatprep.subr.mxu0 0.0
    %4251 = vmatpush1.msra.mxu0 0.0
    %4252 = vmatprep.subr.mxu0 0.0
    %4253 = vmatpush1.msra.mxu0 0.0
    %4254 = vmatprep.subr.mxu0 0.0
    %4255 = vmatpush1.msra.mxu0 0.0
    %4256 = vmatprep.subr.mxu0 0.0
    %4257 = vmatpush1.msra.mxu0 0.0
    %4258 = vmatprep.subr.mxu0 0.0
    %4259 = vmatpush1.msra.mxu0 0.0
    %4260 = vmatprep.subr.mxu0 0.0
    %4261 = vmatpush1.msra.mxu0 0.0
    %4262 = vmatprep.subr.mxu0 0.0
    %4263 = vmatpush1.msra.mxu0 0.0
    %4264 = vmatprep.subr.mxu0 0.0
    %4265 = vmatpush1.msra.mxu0 0.0
    %4266 = vmatprep.subr.mxu0 0.0
    %4267 = vmatpush1.msra.mxu0 0.0
    %4268 = vmatprep.subr.mxu0 0.0
    %4269 = vmatpush1.msra.mxu0 0.0
    %4270 = vmatprep.subr.mxu0 0.0
    %4271 = vmatpush1.msra.mxu0 0.0
    %4272 = vmatprep.subr.mxu0 0.0
    %4273 = vmatpush1.msra.mxu0 0.0
    %4274 = vmatprep.subr.mxu0 0.0
    %4275 = vmatpush1.msra.mxu0 0.0
    %4276 = vmatprep.subr.mxu0 0.0
    %4277 = vmatpush1.msra.mxu0 0.0
    %4278 = vmatprep.subr.mxu0 0.0
    %4279 = vmatpush1.msra.mxu0 0.0
    %4280 = vmatprep.subr.mxu0 0.0
    %4281 = vmatpush1.msra.mxu0 0.0
    %4282 = vmatprep.subr.mxu0 0.0
    %4283 = vmatpush1.msra.mxu0 0.0
    %4284 = vmatprep.subr.mxu0 0.0
    %4285 = vmatpush1.msra.mxu0 0.0
    %4286 = vmatprep.subr.mxu0 0.0
    %4287 = vmatpush1.msra.mxu0 0.0
    %4288 = vmatprep.subr.mxu0 0.0
    %4289 = vmatpush1.msra.mxu0 0.0
    %4290 = vmatprep.subr.mxu0 0.0
    %4291 = vmatpush1.msra.mxu0 0.0
    %4292 = vmatprep.subr.mxu0 0.0
    %4293 = vmatpush1.msra.mxu0 0.0
    %4294 = vmatprep.subr.mxu0 0.0
    %4295 = vmatpush1.msra.mxu0 0.0
    %4296 = vmatprep.subr.mxu0 0.0
    %4297 = vmatpush1.msra.mxu0 0.0
    %4298 = vmatprep.subr.mxu0 0.0
    %4299 = vmatpush1.msra.mxu0 0.0
    %4300 = vmatprep.subr.mxu0 0.0
    %4301 = vmatpush1.msra.mxu0 0.0
    %4302 = vmatprep.subr.mxu0 0.0
    %4303 = vmatpush1.msra.mxu0 0.0
    %4304 = vmatprep.subr.mxu0 0.0
    %4305 = vmatpush1.msra.mxu0 0.0
    %4306 = vmatprep.mubr.f32.mxu0 0.0
    %v4307 = vand.u32 %v3157, 4294901760
    %4308 = vmatmul.mubr.f32.gmra.mrb[0].mxu0 %v4307
    %v4309 = vpop.f32.mrb[0].mxu0
    %v4310 = vadd.f32 %v4219, %v4309
    %v4311 = vpop.f32.mrb[0].mxu0
    %4312 = vdwg.mxu0
    %4313 = vmatprep.subr.mxu0 0.0
    %v4314 = vand.u32 %v3147, 4294901760
    %v4315 = vsub.f32 %v3147, %v4314
    %4316 = vmatpush1.msra.mxu0 %v4315
    %4317 = vmatprep.subr.mxu0 0.0
    %v4318 = vand.u32 %v3148, 4294901760
    %v4319 = vsub.f32 %v3148, %v4318
    %4320 = vmatpush1.msra.mxu0 %v4319
    %4321 = vmatprep.subr.mxu0 0.0
    %v4322 = vand.u32 %v3149, 4294901760
    %v4323 = vsub.f32 %v3149, %v4322
    %4324 = vmatpush1.msra.mxu0 %v4323
    %4325 = vmatprep.subr.mxu0 0.0
    %v4326 = vand.u32 %v3150, 4294901760
    %v4327 = vsub.f32 %v3150, %v4326
    %4328 = vmatpush1.msra.mxu0 %v4327
    %4329 = vmatprep.subr.mxu0 0.0
    %4330 = vmatpush1.msra.mxu0 0.0
    %4331 = vmatprep.subr.mxu0 0.0
    %4332 = vmatpush1.msra.mxu0 0.0
    %4333 = vmatprep.subr.mxu0 0.0
    %4334 = vmatpush1.msra.mxu0 0.0
    %4335 = vmatprep.subr.mxu0 0.0
    %4336 = vmatpush1.msra.mxu0 0.0
    %4337 = vmatprep.subr.mxu0 0.0
    %4338 = vmatpush1.msra.mxu0 0.0
    %4339 = vmatprep.subr.mxu0 0.0
    %4340 = vmatpush1.msra.mxu0 0.0
    %4341 = vmatprep.subr.mxu0 0.0
    %4342 = vmatpush1.msra.mxu0 0.0
    %4343 = vmatprep.subr.mxu0 0.0
    %4344 = vmatpush1.msra.mxu0 0.0
    %4345 = vmatprep.subr.mxu0 0.0
    %4346 = vmatpush1.msra.mxu0 0.0
    %4347 = vmatprep.subr.mxu0 0.0
    %4348 = vmatpush1.msra.mxu0 0.0
    %4349 = vmatprep.subr.mxu0 0.0
    %4350 = vmatpush1.msra.mxu0 0.0
    %4351 = vmatprep.subr.mxu0 0.0
    %4352 = vmatpush1.msra.mxu0 0.0
    %4353 = vmatprep.subr.mxu0 0.0
    %4354 = vmatpush1.msra.mxu0 0.0
    %4355 = vmatprep.subr.mxu0 0.0
    %4356 = vmatpush1.msra.mxu0 0.0
    %4357 = vmatprep.subr.mxu0 0.0
    %4358 = vmatpush1.msra.mxu0 0.0
    %4359 = vmatprep.subr.mxu0 0.0
    %4360 = vmatpush1.msra.mxu0 0.0
    %4361 = vmatprep.subr.mxu0 0.0
    %4362 = vmatpush1.msra.mxu0 0.0
    %4363 = vmatprep.subr.mxu0 0.0
    %4364 = vmatpush1.msra.mxu0 0.0
    %4365 = vmatprep.subr.mxu0 0.0
    %4366 = vmatpush1.msra.mxu0 0.0
    %4367 = vmatprep.subr.mxu0 0.0
    %4368 = vmatpush1.msra.mxu0 0.0
    %4369 = vmatprep.subr.mxu0 0.0
    %4370 = vmatpush1.msra.mxu0 0.0
    %4371 = vmatprep.subr.mxu0 0.0
    %4372 = vmatpush1.msra.mxu0 0.0
    %4373 = vmatprep.subr.mxu0 0.0
    %4374 = vmatpush1.msra.mxu0 0.0
    %4375 = vmatprep.subr.mxu0 0.0
    %4376 = vmatpush1.msra.mxu0 0.0
    %4377 = vmatprep.subr.mxu0 0.0
    %4378 = vmatpush1.msra.mxu0 0.0
    %4379 = vmatprep.subr.mxu0 0.0
    %4380 = vmatpush1.msra.mxu0 0.0
    %4381 = vmatprep.subr.mxu0 0.0
    %4382 = vmatpush1.msra.mxu0 0.0
    %4383 = vmatprep.subr.mxu0 0.0
    %4384 = vmatpush1.msra.mxu0 0.0
    %4385 = vmatprep.mubr.f32.mxu0 0.0
    %v4386 = vand.u32 %v3157, 4294901760
    %v4387 = vsub.f32 %v3157, %v4386
    %4388 = vmatmul.mubr.f32.gmra.mrb[0].mxu0 %v4387
    %v4389 = vpop.f32.mrb[0].mxu0
    %v4390 = vadd.f32 %v4310, %v4389
    %v4391 = vpop.f32.mrb[0].mxu0
    %4392 = vdwg.mxu0
    %4393 = vmatprep.subr.mxu0 0.0
    %v4394 = vand.u32 %v3147, 4294901760
    %4395 = vmatpush1.msra.mxu0 %v4394
    %4396 = vmatprep.subr.mxu0 0.0
    %v4397 = vand.u32 %v3148, 4294901760
    %4398 = vmatpush1.msra.mxu0 %v4397
    %4399 = vmatprep.subr.mxu0 0.0
    %v4400 = vand.u32 %v3149, 4294901760
    %4401 = vmatpush1.msra.mxu0 %v4400
    %4402 = vmatprep.subr.mxu0 0.0
    %v4403 = vand.u32 %v3150, 4294901760
    %4404 = vmatpush1.msra.mxu0 %v4403
    %4405 = vmatprep.subr.mxu0 0.0
    %4406 = vmatpush1.msra.mxu0 0.0
    %4407 = vmatprep.subr.mxu0 0.0
    %4408 = vmatpush1.msra.mxu0 0.0
    %4409 = vmatprep.subr.mxu0 0.0
    %4410 = vmatpush1.msra.mxu0 0.0
    %4411 = vmatprep.subr.mxu0 0.0
    %4412 = vmatpush1.msra.mxu0 0.0
    %4413 = vmatprep.subr.mxu0 0.0
    %4414 = vmatpush1.msra.mxu0 0.0
    %4415 = vmatprep.subr.mxu0 0.0
    %4416 = vmatpush1.msra.mxu0 0.0
    %4417 = vmatprep.subr.mxu0 0.0
    %4418 = vmatpush1.msra.mxu0 0.0
    %4419 = vmatprep.subr.mxu0 0.0
    %4420 = vmatpush1.msra.mxu0 0.0
    %4421 = vmatprep.subr.mxu0 0.0
    %4422 = vmatpush1.msra.mxu0 0.0
    %4423 = vmatprep.subr.mxu0 0.0
    %4424 = vmatpush1.msra.mxu0 0.0
    %4425 = vmatprep.subr.mxu0 0.0
    %4426 = vmatpush1.msra.mxu0 0.0
    %4427 = vmatprep.subr.mxu0 0.0
    %4428 = vmatpush1.msra.mxu0 0.0
    %4429 = vmatprep.subr.mxu0 0.0
    %4430 = vmatpush1.msra.mxu0 0.0
    %4431 = vmatprep.subr.mxu0 0.0
    %4432 = vmatpush1.msra.mxu0 0.0
    %4433 = vmatprep.subr.mxu0 0.0
    %4434 = vmatpush1.msra.mxu0 0.0
    %4435 = vmatprep.subr.mxu0 0.0
    %4436 = vmatpush1.msra.mxu0 0.0
    %4437 = vmatprep.subr.mxu0 0.0
    %4438 = vmatpush1.msra.mxu0 0.0
    %4439 = vmatprep.subr.mxu0 0.0
    %4440 = vmatpush1.msra.mxu0 0.0
    %4441 = vmatprep.subr.mxu0 0.0
    %4442 = vmatpush1.msra.mxu0 0.0
    %4443 = vmatprep.subr.mxu0 0.0
    %4444 = vmatpush1.msra.mxu0 0.0
    %4445 = vmatprep.subr.mxu0 0.0
    %4446 = vmatpush1.msra.mxu0 0.0
    %4447 = vmatprep.subr.mxu0 0.0
    %4448 = vmatpush1.msra.mxu0 0.0
    %4449 = vmatprep.subr.mxu0 0.0
    %4450 = vmatpush1.msra.mxu0 0.0
    %4451 = vmatprep.subr.mxu0 0.0
    %4452 = vmatpush1.msra.mxu0 0.0
    %4453 = vmatprep.subr.mxu0 0.0
    %4454 = vmatpush1.msra.mxu0 0.0
    %4455 = vmatprep.subr.mxu0 0.0
    %4456 = vmatpush1.msra.mxu0 0.0
    %4457 = vmatprep.subr.mxu0 0.0
    %4458 = vmatpush1.msra.mxu0 0.0
    %4459 = vmatprep.subr.mxu0 0.0
    %4460 = vmatpush1.msra.mxu0 0.0
    %4461 = vmatprep.mubr.f32.mxu0 0.0
    %v4462 = vand.u32 %v3157, 4294901760
    %v4463 = vsub.f32 %v3157, %v4462
    %v4464 = vand.u32 %v4463, 4294901760
    %4465 = vmatmul.mubr.f32.gmra.mrb[0].mxu0 %v4464
    %v4466 = vpop.f32.mrb[0].mxu0
    %v4467 = vadd.f32 %v4390, %v4466
    %v4468 = vpop.f32.mrb[0].mxu0
    %4469 = vdwg.mxu0
    %4470 = vmatprep.subr.mxu0 0.0
    %v4471 = vand.u32 %v3147, 4294901760
    %v4472 = vsub.f32 %v3147, %v4471
    %v4473 = vand.u32 %v4472, 4294901760
    %4474 = vmatpush1.msra.mxu0 %v4473
    %4475 = vmatprep.subr.mxu0 0.0
    %v4476 = vand.u32 %v3148, 4294901760
    %v4477 = vsub.f32 %v3148, %v4476
    %v4478 = vand.u32 %v4477, 4294901760
    %4479 = vmatpush1.msra.mxu0 %v4478
    %4480 = vmatprep.subr.mxu0 0.0
    %v4481 = vand.u32 %v3149, 4294901760
    %v4482 = vsub.f32 %v3149, %v4481
    %v4483 = vand.u32 %v4482, 4294901760
    %4484 = vmatpush1.msra.mxu0 %v4483
    %4485 = vmatprep.subr.mxu0 0.0
    %v4486 = vand.u32 %v3150, 4294901760
    %v4487 = vsub.f32 %v3150, %v4486
    %v4488 = vand.u32 %v4487, 4294901760
    %4489 = vmatpush1.msra.mxu0 %v4488
    %4490 = vmatprep.subr.mxu0 0.0
    %4491 = vmatpush1.msra.mxu0 0.0
    %4492 = vmatprep.subr.mxu0 0.0
    %4493 = vmatpush1.msra.mxu0 0.0
    %4494 = vmatprep.subr.mxu0 0.0
    %4495 = vmatpush1.msra.mxu0 0.0
    %4496 = vmatprep.subr.mxu0 0.0
    %4497 = vmatpush1.msra.mxu0 0.0
    %4498 = vmatprep.subr.mxu0 0.0
    %4499 = vmatpush1.msra.mxu0 0.0
    %4500 = vmatprep.subr.mxu0 0.0
    %4501 = vmatpush1.msra.mxu0 0.0
    %4502 = vmatprep.subr.mxu0 0.0
    %4503 = vmatpush1.msra.mxu0 0.0
    %4504 = vmatprep.subr.mxu0 0.0
    %4505 = vmatpush1.msra.mxu0 0.0
    %4506 = vmatprep.subr.mxu0 0.0
    %4507 = vmatpush1.msra.mxu0 0.0
    %4508 = vmatprep.subr.mxu0 0.0
    %4509 = vmatpush1.msra.mxu0 0.0
    %4510 = vmatprep.subr.mxu0 0.0
    %4511 = vmatpush1.msra.mxu0 0.0
    %4512 = vmatprep.subr.mxu0 0.0
    %4513 = vmatpush1.msra.mxu0 0.0
    %4514 = vmatprep.subr.mxu0 0.0
    %4515 = vmatpush1.msra.mxu0 0.0
    %4516 = vmatprep.subr.mxu0 0.0
    %4517 = vmatpush1.msra.mxu0 0.0
    %4518 = vmatprep.subr.mxu0 0.0
    %4519 = vmatpush1.msra.mxu0 0.0
    %4520 = vmatprep.subr.mxu0 0.0
    %4521 = vmatpush1.msra.mxu0 0.0
    %4522 = vmatprep.subr.mxu0 0.0
    %4523 = vmatpush1.msra.mxu0 0.0
    %4524 = vmatprep.subr.mxu0 0.0
    %4525 = vmatpush1.msra.mxu0 0.0
    %4526 = vmatprep.subr.mxu0 0.0
    %4527 = vmatpush1.msra.mxu0 0.0
    %4528 = vmatprep.subr.mxu0 0.0
    %4529 = vmatpush1.msra.mxu0 0.0
    %4530 = vmatprep.subr.mxu0 0.0
    %4531 = vmatpush1.msra.mxu0 0.0
    %4532 = vmatprep.subr.mxu0 0.0
    %4533 = vmatpush1.msra.mxu0 0.0
    %4534 = vmatprep.subr.mxu0 0.0
    %4535 = vmatpush1.msra.mxu0 0.0
    %4536 = vmatprep.subr.mxu0 0.0
    %4537 = vmatpush1.msra.mxu0 0.0
    %4538 = vmatprep.subr.mxu0 0.0
    %4539 = vmatpush1.msra.mxu0 0.0
    %4540 = vmatprep.subr.mxu0 0.0
    %4541 = vmatpush1.msra.mxu0 0.0
    %4542 = vmatprep.subr.mxu0 0.0
    %4543 = vmatpush1.msra.mxu0 0.0
    %4544 = vmatprep.subr.mxu0 0.0
    %4545 = vmatpush1.msra.mxu0 0.0
    %4546 = vmatprep.mubr.f32.mxu0 0.0
    %v4547 = vand.u32 %v3157, 4294901760
    %4548 = vmatmul.mubr.f32.gmra.mrb[0].mxu0 %v4547
    %v4549 = vpop.f32.mrb[0].mxu0
    %v4550 = vadd.f32 %v4467, %v4549
    %v4551 = vpop.f32.mrb[0].mxu0
    %4552 = vdwg.mxu0
    %4553 = vmatprep.subr.mxu0 0.0
    %v4554 = vand.u32 %v3147, 4294901760
    %4555 = vmatpush1.msra.mxu0 %v4554
    %4556 = vmatprep.subr.mxu0 0.0
    %v4557 = vand.u32 %v3148, 4294901760
    %4558 = vmatpush1.msra.mxu0 %v4557
    %4559 = vmatprep.subr.mxu0 0.0
    %v4560 = vand.u32 %v3149, 4294901760
    %4561 = vmatpush1.msra.mxu0 %v4560
    %4562 = vmatprep.subr.mxu0 0.0
    %v4563 = vand.u32 %v3150, 4294901760
    %4564 = vmatpush1.msra.mxu0 %v4563
    %4565 = vmatprep.subr.mxu0 0.0
    %4566 = vmatpush1.msra.mxu0 0.0
    %4567 = vmatprep.subr.mxu0 0.0
    %4568 = vmatpush1.msra.mxu0 0.0
    %4569 = vmatprep.subr.mxu0 0.0
    %4570 = vmatpush1.msra.mxu0 0.0
    %4571 = vmatprep.subr.mxu0 0.0
    %4572 = vmatpush1.msra.mxu0 0.0
    %4573 = vmatprep.subr.mxu0 0.0
    %4574 = vmatpush1.msra.mxu0 0.0
    %4575 = vmatprep.subr.mxu0 0.0
    %4576 = vmatpush1.msra.mxu0 0.0
    %4577 = vmatprep.subr.mxu0 0.0
    %4578 = vmatpush1.msra.mxu0 0.0
    %4579 = vmatprep.subr.mxu0 0.0
    %4580 = vmatpush1.msra.mxu0 0.0
    %4581 = vmatprep.subr.mxu0 0.0
    %4582 = vmatpush1.msra.mxu0 0.0
    %4583 = vmatprep.subr.mxu0 0.0
    %4584 = vmatpush1.msra.mxu0 0.0
    %4585 = vmatprep.subr.mxu0 0.0
    %4586 = vmatpush1.msra.mxu0 0.0
    %4587 = vmatprep.subr.mxu0 0.0
    %4588 = vmatpush1.msra.mxu0 0.0
    %4589 = vmatprep.subr.mxu0 0.0
    %4590 = vmatpush1.msra.mxu0 0.0
    %4591 = vmatprep.subr.mxu0 0.0
    %4592 = vmatpush1.msra.mxu0 0.0
    %4593 = vmatprep.subr.mxu0 0.0
    %4594 = vmatpush1.msra.mxu0 0.0
    %4595 = vmatprep.subr.mxu0 0.0
    %4596 = vmatpush1.msra.mxu0 0.0
    %4597 = vmatprep.subr.mxu0 0.0
    %4598 = vmatpush1.msra.mxu0 0.0
    %4599 = vmatprep.subr.mxu0 0.0
    %4600 = vmatpush1.msra.mxu0 0.0
    %4601 = vmatprep.subr.mxu0 0.0
    %4602 = vmatpush1.msra.mxu0 0.0
    %4603 = vmatprep.subr.mxu0 0.0
    %4604 = vmatpush1.msra.mxu0 0.0
    %4605 = vmatprep.subr.mxu0 0.0
    %4606 = vmatpush1.msra.mxu0 0.0
    %4607 = vmatprep.subr.mxu0 0.0
    %4608 = vmatpush1.msra.mxu0 0.0
    %4609 = vmatprep.subr.mxu0 0.0
    %4610 = vmatpush1.msra.mxu0 0.0
    %4611 = vmatprep.subr.mxu0 0.0
    %4612 = vmatpush1.msra.mxu0 0.0
    %4613 = vmatprep.subr.mxu0 0.0
    %4614 = vmatpush1.msra.mxu0 0.0
    %4615 = vmatprep.subr.mxu0 0.0
    %4616 = vmatpush1.msra.mxu0 0.0
    %4617 = vmatprep.subr.mxu0 0.0
    %4618 = vmatpush1.msra.mxu0 0.0
    %4619 = vmatprep.subr.mxu0 0.0
    %4620 = vmatpush1.msra.mxu0 0.0
    %4621 = vmatprep.mubr.f32.mxu0 0.0
    %v4622 = vand.u32 %v3157, 4294901760
    %4623 = vmatmul.mubr.f32.gmra.mrb[0].mxu0 %v4622
    %v4624 = vpop.f32.mrb[0].mxu0
    %v4625 = vadd.f32 %v4550, %v4624
    %v4626 = vpop.f32.mrb[0].mxu0
    %4627 = vdwg.mxu0
    %4628 = vmatprep.subr.mxu0 0.0
    %v4629 = vand.u32 %v3132, 4294901760
    %4630 = vmatpush1.msra.mxu0 %v4629
    %4631 = vmatprep.subr.mxu0 0.0
    %v4632 = vand.u32 %v3133, 4294901760
    %4633 = vmatpush1.msra.mxu0 %v4632
    %4634 = vmatprep.subr.mxu0 0.0
    %v4635 = vand.u32 %v3134, 4294901760
    %4636 = vmatpush1.msra.mxu0 %v4635
    %4637 = vmatprep.subr.mxu0 0.0
    %v4638 = vand.u32 %v3135, 4294901760
    %4639 = vmatpush1.msra.mxu0 %v4638
    %4640 = vmatprep.subr.mxu0 0.0
    %4641 = vmatpush1.msra.mxu0 0.0
    %4642 = vmatprep.subr.mxu0 0.0
    %4643 = vmatpush1.msra.mxu0 0.0
    %4644 = vmatprep.subr.mxu0 0.0
    %4645 = vmatpush1.msra.mxu0 0.0
    %4646 = vmatprep.subr.mxu0 0.0
    %4647 = vmatpush1.msra.mxu0 0.0
    %4648 = vmatprep.subr.mxu0 0.0
    %4649 = vmatpush1.msra.mxu0 0.0
    %4650 = vmatprep.subr.mxu0 0.0
    %4651 = vmatpush1.msra.mxu0 0.0
    %4652 = vmatprep.subr.mxu0 0.0
    %4653 = vmatpush1.msra.mxu0 0.0
    %4654 = vmatprep.subr.mxu0 0.0
    %4655 = vmatpush1.msra.mxu0 0.0
    %4656 = vmatprep.subr.mxu0 0.0
    %4657 = vmatpush1.msra.mxu0 0.0
    %4658 = vmatprep.subr.mxu0 0.0
    %4659 = vmatpush1.msra.mxu0 0.0
    %4660 = vmatprep.subr.mxu0 0.0
    %4661 = vmatpush1.msra.mxu0 0.0
    %4662 = vmatprep.subr.mxu0 0.0
    %4663 = vmatpush1.msra.mxu0 0.0
    %4664 = vmatprep.subr.mxu0 0.0
    %4665 = vmatpush1.msra.mxu0 0.0
    %4666 = vmatprep.subr.mxu0 0.0
    %4667 = vmatpush1.msra.mxu0 0.0
    %4668 = vmatprep.subr.mxu0 0.0
    %4669 = vmatpush1.msra.mxu0 0.0
    %4670 = vmatprep.subr.mxu0 0.0
    %4671 = vmatpush1.msra.mxu0 0.0
    %4672 = vmatprep.subr.mxu0 0.0
    %4673 = vmatpush1.msra.mxu0 0.0
    %4674 = vmatprep.subr.mxu0 0.0
    %4675 = vmatpush1.msra.mxu0 0.0
    %4676 = vmatprep.subr.mxu0 0.0
    %4677 = vmatpush1.msra.mxu0 0.0
    %4678 = vmatprep.subr.mxu0 0.0
    %4679 = vmatpush1.msra.mxu0 0.0
    %4680 = vmatprep.subr.mxu0 0.0
    %4681 = vmatpush1.msra.mxu0 0.0
    %4682 = vmatprep.subr.mxu0 0.0
    %4683 = vmatpush1.msra.mxu0 0.0
    %4684 = vmatprep.subr.mxu0 0.0
    %4685 = vmatpush1.msra.mxu0 0.0
    %4686 = vmatprep.subr.mxu0 0.0
    %4687 = vmatpush1.msra.mxu0 0.0
    %4688 = vmatprep.subr.mxu0 0.0
    %4689 = vmatpush1.msra.mxu0 0.0
    %4690 = vmatprep.subr.mxu0 0.0
    %4691 = vmatpush1.msra.mxu0 0.0
    %4692 = vmatprep.subr.mxu0 0.0
    %4693 = vmatpush1.msra.mxu0 0.0
    %4694 = vmatprep.subr.mxu0 0.0
    %4695 = vmatpush1.msra.mxu0 0.0
    %4696 = vmatprep.mubr.f32.mxu0 0.0
    %v4697 = vand.u32 %v3645, 4294901760
    %v4698 = vsub.f32 %v3645, %v4697
    %v4699 = vand.u32 %v4698, 4294901760
    %v4700 = vsub.f32 %v4698, %v4699
    %v4701 = vand.u32 %v4700, 4294901760
    %4702 = vmatmul.mubr.f32.gmra.mrb[0].mxu0 %v4701
    %v4703 = vpop.f32.mrb[0].mxu0
    %v4704 = vadd.f32 %v4625, %v4703
    %v4705 = vpop.f32.mrb[0].mxu0
    %4706 = vdwg.mxu0
    %4707 = vmatprep.subr.mxu0 0.0
    %v4708 = vand.u32 %v3132, 4294901760
    %v4709 = vsub.f32 %v3132, %v4708
    %v4710 = vand.u32 %v4709, 4294901760
    %v4711 = vsub.f32 %v4709, %v4710
    %v4712 = vand.u32 %v4711, 4294901760
    %4713 = vmatpush1.msra.mxu0 %v4712
    %4714 = vmatprep.subr.mxu0 0.0
    %v4715 = vand.u32 %v3133, 4294901760
    %v4716 = vsub.f32 %v3133, %v4715
    %v4717 = vand.u32 %v4716, 4294901760
    %v4718 = vsub.f32 %v4716, %v4717
    %v4719 = vand.u32 %v4718, 4294901760
    %4720 = vmatpush1.msra.mxu0 %v4719
    %4721 = vmatprep.subr.mxu0 0.0
    %v4722 = vand.u32 %v3134, 4294901760
    %v4723 = vsub.f32 %v3134, %v4722
    %v4724 = vand.u32 %v4723, 4294901760
    %v4725 = vsub.f32 %v4723, %v4724
    %v4726 = vand.u32 %v4725, 4294901760
    %4727 = vmatpush1.msra.mxu0 %v4726
    %4728 = vmatprep.subr.mxu0 0.0
    %v4729 = vand.u32 %v3135, 4294901760
    %v4730 = vsub.f32 %v3135, %v4729
    %v4731 = vand.u32 %v4730, 4294901760
    %v4732 = vsub.f32 %v4730, %v4731
    %v4733 = vand.u32 %v4732, 4294901760
    %4734 = vmatpush1.msra.mxu0 %v4733
    %4735 = vmatprep.subr.mxu0 0.0
    %4736 = vmatpush1.msra.mxu0 0.0
    %4737 = vmatprep.subr.mxu0 0.0
    %4738 = vmatpush1.msra.mxu0 0.0
    %4739 = vmatprep.subr.mxu0 0.0
    %4740 = vmatpush1.msra.mxu0 0.0
    %4741 = vmatprep.subr.mxu0 0.0
    %4742 = vmatpush1.msra.mxu0 0.0
    %4743 = vmatprep.subr.mxu0 0.0
    %4744 = vmatpush1.msra.mxu0 0.0
    %4745 = vmatprep.subr.mxu0 0.0
    %4746 = vmatpush1.msra.mxu0 0.0
    %4747 = vmatprep.subr.mxu0 0.0
    %4748 = vmatpush1.msra.mxu0 0.0
    %4749 = vmatprep.subr.mxu0 0.0
    %4750 = vmatpush1.msra.mxu0 0.0
    %4751 = vmatprep.subr.mxu0 0.0
    %4752 = vmatpush1.msra.mxu0 0.0
    %4753 = vmatprep.subr.mxu0 0.0
    %4754 = vmatpush1.msra.mxu0 0.0
    %4755 = vmatprep.subr.mxu0 0.0
    %4756 = vmatpush1.msra.mxu0 0.0
    %4757 = vmatprep.subr.mxu0 0.0
    %4758 = vmatpush1.msra.mxu0 0.0
    %4759 = vmatprep.subr.mxu0 0.0
    %4760 = vmatpush1.msra.mxu0 0.0
    %4761 = vmatprep.subr.mxu0 0.0
    %4762 = vmatpush1.msra.mxu0 0.0
    %4763 = vmatprep.subr.mxu0 0.0
    %4764 = vmatpush1.msra.mxu0 0.0
    %4765 = vmatprep.subr.mxu0 0.0
    %4766 = vmatpush1.msra.mxu0 0.0
    %4767 = vmatprep.subr.mxu0 0.0
    %4768 = vmatpush1.msra.mxu0 0.0
    %4769 = vmatprep.subr.mxu0 0.0
    %4770 = vmatpush1.msra.mxu0 0.0
    %4771 = vmatprep.subr.mxu0 0.0
    %4772 = vmatpush1.msra.mxu0 0.0
    %4773 = vmatprep.subr.mxu0 0.0
    %4774 = vmatpush1.msra.mxu0 0.0
    %4775 = vmatprep.subr.mxu0 0.0
    %4776 = vmatpush1.msra.mxu0 0.0
    %4777 = vmatprep.subr.mxu0 0.0
    %4778 = vmatpush1.msra.mxu0 0.0
    %4779 = vmatprep.subr.mxu0 0.0
    %4780 = vmatpush1.msra.mxu0 0.0
    %4781 = vmatprep.subr.mxu0 0.0
    %4782 = vmatpush1.msra.mxu0 0.0
    %4783 = vmatprep.subr.mxu0 0.0
    %4784 = vmatpush1.msra.mxu0 0.0
    %4785 = vmatprep.subr.mxu0 0.0
    %4786 = vmatpush1.msra.mxu0 0.0
    %4787 = vmatprep.subr.mxu0 0.0
    %4788 = vmatpush1.msra.mxu0 0.0
    %4789 = vmatprep.subr.mxu0 0.0
    %4790 = vmatpush1.msra.mxu0 0.0
    %4791 = vmatprep.mubr.f32.mxu0 0.0
    %v4792 = vand.u32 %v3645, 4294901760
    %4793 = vmatmul.mubr.f32.gmra.mrb[0].mxu0 %v4792
    %v4794 = vpop.f32.mrb[0].mxu0
    %v4795 = vadd.f32 %v4704, %v4794
    %v4796 = vpop.f32.mrb[0].mxu0
    %4797 = vdwg.mxu0
    %4798 = vmatprep.subr.mxu0 0.0
    %v4799 = vand.u32 %v3132, 4294901760
    %v4800 = vsub.f32 %v3132, %v4799
    %4801 = vmatpush1.msra.mxu0 %v4800
    %4802 = vmatprep.subr.mxu0 0.0
    %v4803 = vand.u32 %v3133, 4294901760
    %v4804 = vsub.f32 %v3133, %v4803
    %4805 = vmatpush1.msra.mxu0 %v4804
    %4806 = vmatprep.subr.mxu0 0.0
    %v4807 = vand.u32 %v3134, 4294901760
    %v4808 = vsub.f32 %v3134, %v4807
    %4809 = vmatpush1.msra.mxu0 %v4808
    %4810 = vmatprep.subr.mxu0 0.0
    %v4811 = vand.u32 %v3135, 4294901760
    %v4812 = vsub.f32 %v3135, %v4811
    %4813 = vmatpush1.msra.mxu0 %v4812
    %4814 = vmatprep.subr.mxu0 0.0
    %4815 = vmatpush1.msra.mxu0 0.0
    %4816 = vmatprep.subr.mxu0 0.0
    %4817 = vmatpush1.msra.mxu0 0.0
    %4818 = vmatprep.subr.mxu0 0.0
    %4819 = vmatpush1.msra.mxu0 0.0
    %4820 = vmatprep.subr.mxu0 0.0
    %4821 = vmatpush1.msra.mxu0 0.0
    %4822 = vmatprep.subr.mxu0 0.0
    %4823 = vmatpush1.msra.mxu0 0.0
    %4824 = vmatprep.subr.mxu0 0.0
    %4825 = vmatpush1.msra.mxu0 0.0
    %4826 = vmatprep.subr.mxu0 0.0
    %4827 = vmatpush1.msra.mxu0 0.0
    %4828 = vmatprep.subr.mxu0 0.0
    %4829 = vmatpush1.msra.mxu0 0.0
    %4830 = vmatprep.subr.mxu0 0.0
    %4831 = vmatpush1.msra.mxu0 0.0
    %4832 = vmatprep.subr.mxu0 0.0
    %4833 = vmatpush1.msra.mxu0 0.0
    %4834 = vmatprep.subr.mxu0 0.0
    %4835 = vmatpush1.msra.mxu0 0.0
    %4836 = vmatprep.subr.mxu0 0.0
    %4837 = vmatpush1.msra.mxu0 0.0
    %4838 = vmatprep.subr.mxu0 0.0
    %4839 = vmatpush1.msra.mxu0 0.0
    %4840 = vmatprep.subr.mxu0 0.0
    %4841 = vmatpush1.msra.mxu0 0.0
    %4842 = vmatprep.subr.mxu0 0.0
    %4843 = vmatpush1.msra.mxu0 0.0
    %4844 = vmatprep.subr.mxu0 0.0
    %4845 = vmatpush1.msra.mxu0 0.0
    %4846 = vmatprep.subr.mxu0 0.0
    %4847 = vmatpush1.msra.mxu0 0.0
    %4848 = vmatprep.subr.mxu0 0.0
    %4849 = vmatpush1.msra.mxu0 0.0
    %4850 = vmatprep.subr.mxu0 0.0
    %4851 = vmatpush1.msra.mxu0 0.0
    %4852 = vmatprep.subr.mxu0 0.0
    %4853 = vmatpush1.msra.mxu0 0.0
    %4854 = vmatprep.subr.mxu0 0.0
    %4855 = vmatpush1.msra.mxu0 0.0
    %4856 = vmatprep.subr.mxu0 0.0
    %4857 = vmatpush1.msra.mxu0 0.0
    %4858 = vmatprep.subr.mxu0 0.0
    %4859 = vmatpush1.msra.mxu0 0.0
    %4860 = vmatprep.subr.mxu0 0.0
    %4861 = vmatpush1.msra.mxu0 0.0
    %4862 = vmatprep.subr.mxu0 0.0
    %4863 = vmatpush1.msra.mxu0 0.0
    %4864 = vmatprep.subr.mxu0 0.0
    %4865 = vmatpush1.msra.mxu0 0.0
    %4866 = vmatprep.subr.mxu0 0.0
    %4867 = vmatpush1.msra.mxu0 0.0
    %4868 = vmatprep.subr.mxu0 0.0
    %4869 = vmatpush1.msra.mxu0 0.0
    %4870 = vmatprep.mubr.f32.mxu0 0.0
    %v4871 = vand.u32 %v3645, 4294901760
    %v4872 = vsub.f32 %v3645, %v4871
    %4873 = vmatmul.mubr.f32.gmra.mrb[0].mxu0 %v4872
    %v4874 = vpop.f32.mrb[0].mxu0
    %v4875 = vadd.f32 %v4795, %v4874
    %v4876 = vpop.f32.mrb[0].mxu0
    %4877 = vdwg.mxu0
    %4878 = vmatprep.subr.mxu0 0.0
    %v4879 = vand.u32 %v3132, 4294901760
    %4880 = vmatpush1.msra.mxu0 %v4879
    %4881 = vmatprep.subr.mxu0 0.0
    %v4882 = vand.u32 %v3133, 4294901760
    %4883 = vmatpush1.msra.mxu0 %v4882
    %4884 = vmatprep.subr.mxu0 0.0
    %v4885 = vand.u32 %v3134, 4294901760
    %4886 = vmatpush1.msra.mxu0 %v4885
    %4887 = vmatprep.subr.mxu0 0.0
    %v4888 = vand.u32 %v3135, 4294901760
    %4889 = vmatpush1.msra.mxu0 %v4888
    %4890 = vmatprep.subr.mxu0 0.0
    %4891 = vmatpush1.msra.mxu0 0.0
    %4892 = vmatprep.subr.mxu0 0.0
    %4893 = vmatpush1.msra.mxu0 0.0
    %4894 = vmatprep.subr.mxu0 0.0
    %4895 = vmatpush1.msra.mxu0 0.0
    %4896 = vmatprep.subr.mxu0 0.0
    %4897 = vmatpush1.msra.mxu0 0.0
    %4898 = vmatprep.subr.mxu0 0.0
    %4899 = vmatpush1.msra.mxu0 0.0
    %4900 = vmatprep.subr.mxu0 0.0
    %4901 = vmatpush1.msra.mxu0 0.0
    %4902 = vmatprep.subr.mxu0 0.0
    %4903 = vmatpush1.msra.mxu0 0.0
    %4904 = vmatprep.subr.mxu0 0.0
    %4905 = vmatpush1.msra.mxu0 0.0
    %4906 = vmatprep.subr.mxu0 0.0
    %4907 = vmatpush1.msra.mxu0 0.0
    %4908 = vmatprep.subr.mxu0 0.0
    %4909 = vmatpush1.msra.mxu0 0.0
    %4910 = vmatprep.subr.mxu0 0.0
    %4911 = vmatpush1.msra.mxu0 0.0
    %4912 = vmatprep.subr.mxu0 0.0
    %4913 = vmatpush1.msra.mxu0 0.0
    %4914 = vmatprep.subr.mxu0 0.0
    %4915 = vmatpush1.msra.mxu0 0.0
    %4916 = vmatprep.subr.mxu0 0.0
    %4917 = vmatpush1.msra.mxu0 0.0
    %4918 = vmatprep.subr.mxu0 0.0
    %4919 = vmatpush1.msra.mxu0 0.0
    %4920 = vmatprep.subr.mxu0 0.0
    %4921 = vmatpush1.msra.mxu0 0.0
    %4922 = vmatprep.subr.mxu0 0.0
    %4923 = vmatpush1.msra.mxu0 0.0
    %4924 = vmatprep.subr.mxu0 0.0
    %4925 = vmatpush1.msra.mxu0 0.0
    %4926 = vmatprep.subr.mxu0 0.0
    %4927 = vmatpush1.msra.mxu0 0.0
    %4928 = vmatprep.subr.mxu0 0.0
    %4929 = vmatpush1.msra.mxu0 0.0
    %4930 = vmatprep.subr.mxu0 0.0
    %4931 = vmatpush1.msra.mxu0 0.0
    %4932 = vmatprep.subr.mxu0 0.0
    %4933 = vmatpush1.msra.mxu0 0.0
    %4934 = vmatprep.subr.mxu0 0.0
    %4935 = vmatpush1.msra.mxu0 0.0
    %4936 = vmatprep.subr.mxu0 0.0
    %4937 = vmatpush1.msra.mxu0 0.0
    %4938 = vmatprep.subr.mxu0 0.0
    %4939 = vmatpush1.msra.mxu0 0.0
    %4940 = vmatprep.subr.mxu0 0.0
    %4941 = vmatpush1.msra.mxu0 0.0
    %4942 = vmatprep.subr.mxu0 0.0
    %4943 = vmatpush1.msra.mxu0 0.0
    %4944 = vmatprep.subr.mxu0 0.0
    %4945 = vmatpush1.msra.mxu0 0.0
    %4946 = vmatprep.mubr.f32.mxu0 0.0
    %v4947 = vand.u32 %v3645, 4294901760
    %v4948 = vsub.f32 %v3645, %v4947
    %v4949 = vand.u32 %v4948, 4294901760
    %4950 = vmatmul.mubr.f32.gmra.mrb[0].mxu0 %v4949
    %v4951 = vpop.f32.mrb[0].mxu0
    %v4952 = vadd.f32 %v4875, %v4951
    %v4953 = vpop.f32.mrb[0].mxu0
    %4954 = vdwg.mxu0
    %4955 = vmatprep.subr.mxu0 0.0
    %v4956 = vand.u32 %v3132, 4294901760
    %v4957 = vsub.f32 %v3132, %v4956
    %v4958 = vand.u32 %v4957, 4294901760
    %4959 = vmatpush1.msra.mxu0 %v4958
    %4960 = vmatprep.subr.mxu0 0.0
    %v4961 = vand.u32 %v3133, 4294901760
    %v4962 = vsub.f32 %v3133, %v4961
    %v4963 = vand.u32 %v4962, 4294901760
    %4964 = vmatpush1.msra.mxu0 %v4963
    %4965 = vmatprep.subr.mxu0 0.0
    %v4966 = vand.u32 %v3134, 4294901760
    %v4967 = vsub.f32 %v3134, %v4966
    %v4968 = vand.u32 %v4967, 4294901760
    %4969 = vmatpush1.msra.mxu0 %v4968
    %4970 = vmatprep.subr.mxu0 0.0
    %v4971 = vand.u32 %v3135, 4294901760
    %v4972 = vsub.f32 %v3135, %v4971
    %v4973 = vand.u32 %v4972, 4294901760
    %4974 = vmatpush1.msra.mxu0 %v4973
    %4975 = vmatprep.subr.mxu0 0.0
    %4976 = vmatpush1.msra.mxu0 0.0
    %4977 = vmatprep.subr.mxu0 0.0
    %4978 = vmatpush1.msra.mxu0 0.0
    %4979 = vmatprep.subr.mxu0 0.0
    %4980 = vmatpush1.msra.mxu0 0.0
    %4981 = vmatprep.subr.mxu0 0.0
    %4982 = vmatpush1.msra.mxu0 0.0
    %4983 = vmatprep.subr.mxu0 0.0
    %4984 = vmatpush1.msra.mxu0 0.0
    %4985 = vmatprep.subr.mxu0 0.0
    %4986 = vmatpush1.msra.mxu0 0.0
    %4987 = vmatprep.subr.mxu0 0.0
    %4988 = vmatpush1.msra.mxu0 0.0
    %4989 = vmatprep.subr.mxu0 0.0
    %4990 = vmatpush1.msra.mxu0 0.0
    %4991 = vmatprep.subr.mxu0 0.0
    %4992 = vmatpush1.msra.mxu0 0.0
    %4993 = vmatprep.subr.mxu0 0.0
    %4994 = vmatpush1.msra.mxu0 0.0
    %4995 = vmatprep.subr.mxu0 0.0
    %4996 = vmatpush1.msra.mxu0 0.0
    %4997 = vmatprep.subr.mxu0 0.0
    %4998 = vmatpush1.msra.mxu0 0.0
    %4999 = vmatprep.subr.mxu0 0.0
    %5000 = vmatpush1.msra.mxu0 0.0
    %5001 = vmatprep.subr.mxu0 0.0
    %5002 = vmatpush1.msra.mxu0 0.0
    %5003 = vmatprep.subr.mxu0 0.0
    %5004 = vmatpush1.msra.mxu0 0.0
    %5005 = vmatprep.subr.mxu0 0.0
    %5006 = vmatpush1.msra.mxu0 0.0
    %5007 = vmatprep.subr.mxu0 0.0
    %5008 = vmatpush1.msra.mxu0 0.0
    %5009 = vmatprep.subr.mxu0 0.0
    %5010 = vmatpush1.msra.mxu0 0.0
    %5011 = vmatprep.subr.mxu0 0.0
    %5012 = vmatpush1.msra.mxu0 0.0
    %5013 = vmatprep.subr.mxu0 0.0
    %5014 = vmatpush1.msra.mxu0 0.0
    %5015 = vmatprep.subr.mxu0 0.0
    %5016 = vmatpush1.msra.mxu0 0.0
    %5017 = vmatprep.subr.mxu0 0.0
    %5018 = vmatpush1.msra.mxu0 0.0
    %5019 = vmatprep.subr.mxu0 0.0
    %5020 = vmatpush1.msra.mxu0 0.0
    %5021 = vmatprep.subr.mxu0 0.0
    %5022 = vmatpush1.msra.mxu0 0.0
    %5023 = vmatprep.subr.mxu0 0.0
    %5024 = vmatpush1.msra.mxu0 0.0
    %5025 = vmatprep.subr.mxu0 0.0
    %5026 = vmatpush1.msra.mxu0 0.0
    %5027 = vmatprep.subr.mxu0 0.0
    %5028 = vmatpush1.msra.mxu0 0.0
    %5029 = vmatprep.subr.mxu0 0.0
    %5030 = vmatpush1.msra.mxu0 0.0
    %5031 = vmatprep.mubr.f32.mxu0 0.0
    %v5032 = vand.u32 %v3645, 4294901760
    %5033 = vmatmul.mubr.f32.gmra.mrb[0].mxu0 %v5032
    %v5034 = vpop.f32.mrb[0].mxu0
    %v5035 = vadd.f32 %v4952, %v5034
    %v5036 = vpop.f32.mrb[0].mxu0
    %5037 = vdwg.mxu0
    %5038 = vmatprep.subr.mxu0 0.0
    %v5039 = vand.u32 %v3132, 4294901760
    %5040 = vmatpush1.msra.mxu0 %v5039
    %5041 = vmatprep.subr.mxu0 0.0
    %v5042 = vand.u32 %v3133, 4294901760
    %5043 = vmatpush1.msra.mxu0 %v5042
    %5044 = vmatprep.subr.mxu0 0.0
    %v5045 = vand.u32 %v3134, 4294901760
    %5046 = vmatpush1.msra.mxu0 %v5045
    %5047 = vmatprep.subr.mxu0 0.0
    %v5048 = vand.u32 %v3135, 4294901760
    %5049 = vmatpush1.msra.mxu0 %v5048
    %5050 = vmatprep.subr.mxu0 0.0
    %5051 = vmatpush1.msra.mxu0 0.0
    %5052 = vmatprep.subr.mxu0 0.0
    %5053 = vmatpush1.msra.mxu0 0.0
    %5054 = vmatprep.subr.mxu0 0.0
    %5055 = vmatpush1.msra.mxu0 0.0
    %5056 = vmatprep.subr.mxu0 0.0
    %5057 = vmatpush1.msra.mxu0 0.0
    %5058 = vmatprep.subr.mxu0 0.0
    %5059 = vmatpush1.msra.mxu0 0.0
    %5060 = vmatprep.subr.mxu0 0.0
    %5061 = vmatpush1.msra.mxu0 0.0
    %5062 = vmatprep.subr.mxu0 0.0
    %5063 = vmatpush1.msra.mxu0 0.0
    %5064 = vmatprep.subr.mxu0 0.0
    %5065 = vmatpush1.msra.mxu0 0.0
    %5066 = vmatprep.subr.mxu0 0.0
    %5067 = vmatpush1.msra.mxu0 0.0
    %5068 = vmatprep.subr.mxu0 0.0
    %5069 = vmatpush1.msra.mxu0 0.0
    %5070 = vmatprep.subr.mxu0 0.0
    %5071 = vmatpush1.msra.mxu0 0.0
    %5072 = vmatprep.subr.mxu0 0.0
    %5073 = vmatpush1.msra.mxu0 0.0
    %5074 = vmatprep.subr.mxu0 0.0
    %5075 = vmatpush1.msra.mxu0 0.0
    %5076 = vmatprep.subr.mxu0 0.0
    %5077 = vmatpush1.msra.mxu0 0.0
    %5078 = vmatprep.subr.mxu0 0.0
    %5079 = vmatpush1.msra.mxu0 0.0
    %5080 = vmatprep.subr.mxu0 0.0
    %5081 = vmatpush1.msra.mxu0 0.0
    %5082 = vmatprep.subr.mxu0 0.0
    %5083 = vmatpush1.msra.mxu0 0.0
    %5084 = vmatprep.subr.mxu0 0.0
    %5085 = vmatpush1.msra.mxu0 0.0
    %5086 = vmatprep.subr.mxu0 0.0
    %5087 = vmatpush1.msra.mxu0 0.0
    %5088 = vmatprep.subr.mxu0 0.0
    %5089 = vmatpush1.msra.mxu0 0.0
    %5090 = vmatprep.subr.mxu0 0.0
    %5091 = vmatpush1.msra.mxu0 0.0
    %5092 = vmatprep.subr.mxu0 0.0
    %5093 = vmatpush1.msra.mxu0 0.0
    %5094 = vmatprep.subr.mxu0 0.0
    %5095 = vmatpush1.msra.mxu0 0.0
    %5096 = vmatprep.subr.mxu0 0.0
    %5097 = vmatpush1.msra.mxu0 0.0
    %5098 = vmatprep.subr.mxu0 0.0
    %5099 = vmatpush1.msra.mxu0 0.0
    %5100 = vmatprep.subr.mxu0 0.0
    %5101 = vmatpush1.msra.mxu0 0.0
    %5102 = vmatprep.subr.mxu0 0.0
    %5103 = vmatpush1.msra.mxu0 0.0
    %5104 = vmatprep.subr.mxu0 0.0
    %5105 = vmatpush1.msra.mxu0 0.0
    %5106 = vmatprep.mubr.f32.mxu0 0.0
    %v5107 = vand.u32 %v3645, 4294901760
    %5108 = vmatmul.mubr.f32.gmra.mrb[0].mxu0 %v5107
    %v5109 = vpop.f32.mrb[0].mxu0
    %v5110 = vadd.f32 %v5035, %v5109
    %v5111 = vpop.f32.mrb[0].mxu0
    %5112 = vdwg.mxu0
    %v5113 = vlaneseq
    %v5114 = vshrl.u32 %v5113, 7
    %v5115 = vsub.s32 5, %v5114
    %v5116 = vrot.slane %v58, %v5115
    %v5117 = vadd.f32 %v5110, %v5116
    %v5118 = vsub.f32 0.0, %v5117
    %v5119 = vmul.f32 %v5118, 1.442695
    %v5120 = vpow.pop %v5119
    %v5121 = vadd.f32 %v5120, 1.0
    %v5122 = vrcp.pop %v5121
    %v5123 = vmul.f32 1.0, %v5122
    %v5124 = vlaneseq
    %v5125 = vshrl.u32 %v5124, 7
    %v5126 = vsub.s32 6, %v5125
    %v5127 = vrot.slane %v58, %v5126
    %5128 = vmatprep.subr.mxu0 0.0
    %v5129 = vand.u32 %v3137, 4294901760
    %5130 = vmatpush1.msra.mxu0 %v5129
    %5131 = vmatprep.subr.mxu0 0.0
    %v5132 = vand.u32 %v3138, 4294901760
    %5133 = vmatpush1.msra.mxu0 %v5132
    %5134 = vmatprep.subr.mxu0 0.0
    %v5135 = vand.u32 %v3139, 4294901760
    %5136 = vmatpush1.msra.mxu0 %v5135
    %5137 = vmatprep.subr.mxu0 0.0
    %v5138 = vand.u32 %v3140, 4294901760
    %5139 = vmatpush1.msra.mxu0 %v5138
    %5140 = vmatprep.subr.mxu0 0.0
    %5141 = vmatpush1.msra.mxu0 0.0
    %5142 = vmatprep.subr.mxu0 0.0
    %5143 = vmatpush1.msra.mxu0 0.0
    %5144 = vmatprep.subr.mxu0 0.0
    %5145 = vmatpush1.msra.mxu0 0.0
    %5146 = vmatprep.subr.mxu0 0.0
    %5147 = vmatpush1.msra.mxu0 0.0
    %5148 = vmatprep.subr.mxu0 0.0
    %5149 = vmatpush1.msra.mxu0 0.0
    %5150 = vmatprep.subr.mxu0 0.0
    %5151 = vmatpush1.msra.mxu0 0.0
    %5152 = vmatprep.subr.mxu0 0.0
    %5153 = vmatpush1.msra.mxu0 0.0
    %5154 = vmatprep.subr.mxu0 0.0
    %5155 = vmatpush1.msra.mxu0 0.0
    %5156 = vmatprep.subr.mxu0 0.0
    %5157 = vmatpush1.msra.mxu0 0.0
    %5158 = vmatprep.subr.mxu0 0.0
    %5159 = vmatpush1.msra.mxu0 0.0
    %5160 = vmatprep.subr.mxu0 0.0
    %5161 = vmatpush1.msra.mxu0 0.0
    %5162 = vmatprep.subr.mxu0 0.0
    %5163 = vmatpush1.msra.mxu0 0.0
    %5164 = vmatprep.subr.mxu0 0.0
    %5165 = vmatpush1.msra.mxu0 0.0
    %5166 = vmatprep.subr.mxu0 0.0
    %5167 = vmatpush1.msra.mxu0 0.0
    %5168 = vmatprep.subr.mxu0 0.0
    %5169 = vmatpush1.msra.mxu0 0.0
    %5170 = vmatprep.subr.mxu0 0.0
    %5171 = vmatpush1.msra.mxu0 0.0
    %5172 = vmatprep.subr.mxu0 0.0
    %5173 = vmatpush1.msra.mxu0 0.0
    %5174 = vmatprep.subr.mxu0 0.0
    %5175 = vmatpush1.msra.mxu0 0.0
    %5176 = vmatprep.subr.mxu0 0.0
    %5177 = vmatpush1.msra.mxu0 0.0
    %5178 = vmatprep.subr.mxu0 0.0
    %5179 = vmatpush1.msra.mxu0 0.0
    %5180 = vmatprep.subr.mxu0 0.0
    %5181 = vmatpush1.msra.mxu0 0.0
    %5182 = vmatprep.subr.mxu0 0.0
    %5183 = vmatpush1.msra.mxu0 0.0
    %5184 = vmatprep.subr.mxu0 0.0
    %5185 = vmatpush1.msra.mxu0 0.0
    %5186 = vmatprep.subr.mxu0 0.0
    %5187 = vmatpush1.msra.mxu0 0.0
    %5188 = vmatprep.subr.mxu0 0.0
    %5189 = vmatpush1.msra.mxu0 0.0
    %5190 = vmatprep.subr.mxu0 0.0
    %5191 = vmatpush1.msra.mxu0 0.0
    %5192 = vmatprep.subr.mxu0 0.0
    %5193 = vmatpush1.msra.mxu0 0.0
    %5194 = vmatprep.subr.mxu0 0.0
    %5195 = vmatpush1.msra.mxu0 0.0
    %5196 = vmatprep.mubr.f32.mxu0 0.0
    %v5197 = vand.u32 %v3645, 4294901760
    %v5198 = vsub.f32 %v3645, %v5197
    %v5199 = vand.u32 %v5198, 4294901760
    %v5200 = vsub.f32 %v5198, %v5199
    %v5201 = vand.u32 %v5200, 4294901760
    %5202 = vmatmul.mubr.f32.gmra.mrb[0].mxu0 %v5201
    %v5203 = vpop.f32.mrb[0].mxu0
    %v5204 = vadd.f32 %v5127, %v5203
    %v5205 = vpop.f32.mrb[0].mxu0
    %5206 = vdwg.mxu0
    %5207 = vmatprep.subr.mxu0 0.0
    %v5208 = vand.u32 %v3137, 4294901760
    %v5209 = vsub.f32 %v3137, %v5208
    %v5210 = vand.u32 %v5209, 4294901760
    %v5211 = vsub.f32 %v5209, %v5210
    %v5212 = vand.u32 %v5211, 4294901760
    %5213 = vmatpush1.msra.mxu0 %v5212
    %5214 = vmatprep.subr.mxu0 0.0
    %v5215 = vand.u32 %v3138, 4294901760
    %v5216 = vsub.f32 %v3138, %v5215
    %v5217 = vand.u32 %v5216, 4294901760
    %v5218 = vsub.f32 %v5216, %v5217
    %v5219 = vand.u32 %v5218, 4294901760
    %5220 = vmatpush1.msra.mxu0 %v5219
    %5221 = vmatprep.subr.mxu0 0.0
    %v5222 = vand.u32 %v3139, 4294901760
    %v5223 = vsub.f32 %v3139, %v5222
    %v5224 = vand.u32 %v5223, 4294901760
    %v5225 = vsub.f32 %v5223, %v5224
    %v5226 = vand.u32 %v5225, 4294901760
    %5227 = vmatpush1.msra.mxu0 %v5226
    %5228 = vmatprep.subr.mxu0 0.0
    %v5229 = vand.u32 %v3140, 4294901760
    %v5230 = vsub.f32 %v3140, %v5229
    %v5231 = vand.u32 %v5230, 4294901760
    %v5232 = vsub.f32 %v5230, %v5231
    %v5233 = vand.u32 %v5232, 4294901760
    %5234 = vmatpush1.msra.mxu0 %v5233
    %5235 = vmatprep.subr.mxu0 0.0
    %5236 = vmatpush1.msra.mxu0 0.0
    %5237 = vmatprep.subr.mxu0 0.0
    %5238 = vmatpush1.msra.mxu0 0.0
    %5239 = vmatprep.subr.mxu0 0.0
    %5240 = vmatpush1.msra.mxu0 0.0
    %5241 = vmatprep.subr.mxu0 0.0
    %5242 = vmatpush1.msra.mxu0 0.0
    %5243 = vmatprep.subr.mxu0 0.0
    %5244 = vmatpush1.msra.mxu0 0.0
    %5245 = vmatprep.subr.mxu0 0.0
    %5246 = vmatpush1.msra.mxu0 0.0
    %5247 = vmatprep.subr.mxu0 0.0
    %5248 = vmatpush1.msra.mxu0 0.0
    %5249 = vmatprep.subr.mxu0 0.0
    %5250 = vmatpush1.msra.mxu0 0.0
    %5251 = vmatprep.subr.mxu0 0.0
    %5252 = vmatpush1.msra.mxu0 0.0
    %5253 = vmatprep.subr.mxu0 0.0
    %5254 = vmatpush1.msra.mxu0 0.0
    %5255 = vmatprep.subr.mxu0 0.0
    %5256 = vmatpush1.msra.mxu0 0.0
    %5257 = vmatprep.subr.mxu0 0.0
    %5258 = vmatpush1.msra.mxu0 0.0
    %5259 = vmatprep.subr.mxu0 0.0
    %5260 = vmatpush1.msra.mxu0 0.0
    %5261 = vmatprep.subr.mxu0 0.0
    %5262 = vmatpush1.msra.mxu0 0.0
    %5263 = vmatprep.subr.mxu0 0.0
    %5264 = vmatpush1.msra.mxu0 0.0
    %5265 = vmatprep.subr.mxu0 0.0
    %5266 = vmatpush1.msra.mxu0 0.0
    %5267 = vmatprep.subr.mxu0 0.0
    %5268 = vmatpush1.msra.mxu0 0.0
    %5269 = vmatprep.subr.mxu0 0.0
    %5270 = vmatpush1.msra.mxu0 0.0
    %5271 = vmatprep.subr.mxu0 0.0
    %5272 = vmatpush1.msra.mxu0 0.0
    %5273 = vmatprep.subr.mxu0 0.0
    %5274 = vmatpush1.msra.mxu0 0.0
    %5275 = vmatprep.subr.mxu0 0.0
    %5276 = vmatpush1.msra.mxu0 0.0
    %5277 = vmatprep.subr.mxu0 0.0
    %5278 = vmatpush1.msra.mxu0 0.0
    %5279 = vmatprep.subr.mxu0 0.0
    %5280 = vmatpush1.msra.mxu0 0.0
    %5281 = vmatprep.subr.mxu0 0.0
    %5282 = vmatpush1.msra.mxu0 0.0
    %5283 = vmatprep.subr.mxu0 0.0
    %5284 = vmatpush1.msra.mxu0 0.0
    %5285 = vmatprep.subr.mxu0 0.0
    %5286 = vmatpush1.msra.mxu0 0.0
    %5287 = vmatprep.subr.mxu0 0.0
    %5288 = vmatpush1.msra.mxu0 0.0
    %5289 = vmatprep.subr.mxu0 0.0
    %5290 = vmatpush1.msra.mxu0 0.0
    %5291 = vmatprep.mubr.f32.mxu0 0.0
    %v5292 = vand.u32 %v3645, 4294901760
    %5293 = vmatmul.mubr.f32.gmra.mrb[0].mxu0 %v5292
    %v5294 = vpop.f32.mrb[0].mxu0
    %v5295 = vadd.f32 %v5204, %v5294
    %v5296 = vpop.f32.mrb[0].mxu0
    %5297 = vdwg.mxu0
    %5298 = vmatprep.subr.mxu0 0.0
    %v5299 = vand.u32 %v3137, 4294901760
    %v5300 = vsub.f32 %v3137, %v5299
    %5301 = vmatpush1.msra.mxu0 %v5300
    %5302 = vmatprep.subr.mxu0 0.0
    %v5303 = vand.u32 %v3138, 4294901760
    %v5304 = vsub.f32 %v3138, %v5303
    %5305 = vmatpush1.msra.mxu0 %v5304
    %5306 = vmatprep.subr.mxu0 0.0
    %v5307 = vand.u32 %v3139, 4294901760
    %v5308 = vsub.f32 %v3139, %v5307
    %5309 = vmatpush1.msra.mxu0 %v5308
    %5310 = vmatprep.subr.mxu0 0.0
    %v5311 = vand.u32 %v3140, 4294901760
    %v5312 = vsub.f32 %v3140, %v5311
    %5313 = vmatpush1.msra.mxu0 %v5312
    %5314 = vmatprep.subr.mxu0 0.0
    %5315 = vmatpush1.msra.mxu0 0.0
    %5316 = vmatprep.subr.mxu0 0.0
    %5317 = vmatpush1.msra.mxu0 0.0
    %5318 = vmatprep.subr.mxu0 0.0
    %5319 = vmatpush1.msra.mxu0 0.0
    %5320 = vmatprep.subr.mxu0 0.0
    %5321 = vmatpush1.msra.mxu0 0.0
    %5322 = vmatprep.subr.mxu0 0.0
    %5323 = vmatpush1.msra.mxu0 0.0
    %5324 = vmatprep.subr.mxu0 0.0
    %5325 = vmatpush1.msra.mxu0 0.0
    %5326 = vmatprep.subr.mxu0 0.0
    %5327 = vmatpush1.msra.mxu0 0.0
    %5328 = vmatprep.subr.mxu0 0.0
    %5329 = vmatpush1.msra.mxu0 0.0
    %5330 = vmatprep.subr.mxu0 0.0
    %5331 = vmatpush1.msra.mxu0 0.0
    %5332 = vmatprep.subr.mxu0 0.0
    %5333 = vmatpush1.msra.mxu0 0.0
    %5334 = vmatprep.subr.mxu0 0.0
    %5335 = vmatpush1.msra.mxu0 0.0
    %5336 = vmatprep.subr.mxu0 0.0
    %5337 = vmatpush1.msra.mxu0 0.0
    %5338 = vmatprep.subr.mxu0 0.0
    %5339 = vmatpush1.msra.mxu0 0.0
    %5340 = vmatprep.subr.mxu0 0.0
    %5341 = vmatpush1.msra.mxu0 0.0
    %5342 = vmatprep.subr.mxu0 0.0
    %5343 = vmatpush1.msra.mxu0 0.0
    %5344 = vmatprep.subr.mxu0 0.0
    %5345 = vmatpush1.msra.mxu0 0.0
    %5346 = vmatprep.subr.mxu0 0.0
    %5347 = vmatpush1.msra.mxu0 0.0
    %5348 = vmatprep.subr.mxu0 0.0
    %5349 = vmatpush1.msra.mxu0 0.0
    %5350 = vmatprep.subr.mxu0 0.0
    %5351 = vmatpush1.msra.mxu0 0.0
    %5352 = vmatprep.subr.mxu0 0.0
    %5353 = vmatpush1.msra.mxu0 0.0
    %5354 = vmatprep.subr.mxu0 0.0
    %5355 = vmatpush1.msra.mxu0 0.0
    %5356 = vmatprep.subr.mxu0 0.0
    %5357 = vmatpush1.msra.mxu0 0.0
    %5358 = vmatprep.subr.mxu0 0.0
    %5359 = vmatpush1.msra.mxu0 0.0
    %5360 = vmatprep.subr.mxu0 0.0
    %5361 = vmatpush1.msra.mxu0 0.0
    %5362 = vmatprep.subr.mxu0 0.0
    %5363 = vmatpush1.msra.mxu0 0.0
    %5364 = vmatprep.subr.mxu0 0.0
    %5365 = vmatpush1.msra.mxu0 0.0
    %5366 = vmatprep.subr.mxu0 0.0
    %5367 = vmatpush1.msra.mxu0 0.0
    %5368 = vmatprep.subr.mxu0 0.0
    %5369 = vmatpush1.msra.mxu0 0.0
    %5370 = vmatprep.mubr.f32.mxu0 0.0
    %v5371 = vand.u32 %v3645, 4294901760
    %v5372 = vsub.f32 %v3645, %v5371
    %5373 = vmatmul.mubr.f32.gmra.mrb[0].mxu0 %v5372
    %v5374 = vpop.f32.mrb[0].mxu0
    %v5375 = vadd.f32 %v5295, %v5374
    %v5376 = vpop.f32.mrb[0].mxu0
    %5377 = vdwg.mxu0
    %5378 = vmatprep.subr.mxu0 0.0
    %v5379 = vand.u32 %v3137, 4294901760
    %5380 = vmatpush1.msra.mxu0 %v5379
    %5381 = vmatprep.subr.mxu0 0.0
    %v5382 = vand.u32 %v3138, 4294901760
    %5383 = vmatpush1.msra.mxu0 %v5382
    %5384 = vmatprep.subr.mxu0 0.0
    %v5385 = vand.u32 %v3139, 4294901760
    %5386 = vmatpush1.msra.mxu0 %v5385
    %5387 = vmatprep.subr.mxu0 0.0
    %v5388 = vand.u32 %v3140, 4294901760
    %5389 = vmatpush1.msra.mxu0 %v5388
    %5390 = vmatprep.subr.mxu0 0.0
    %5391 = vmatpush1.msra.mxu0 0.0
    %5392 = vmatprep.subr.mxu0 0.0
    %5393 = vmatpush1.msra.mxu0 0.0
    %5394 = vmatprep.subr.mxu0 0.0
    %5395 = vmatpush1.msra.mxu0 0.0
    %5396 = vmatprep.subr.mxu0 0.0
    %5397 = vmatpush1.msra.mxu0 0.0
    %5398 = vmatprep.subr.mxu0 0.0
    %5399 = vmatpush1.msra.mxu0 0.0
    %5400 = vmatprep.subr.mxu0 0.0
    %5401 = vmatpush1.msra.mxu0 0.0
    %5402 = vmatprep.subr.mxu0 0.0
    %5403 = vmatpush1.msra.mxu0 0.0
    %5404 = vmatprep.subr.mxu0 0.0
    %5405 = vmatpush1.msra.mxu0 0.0
    %5406 = vmatprep.subr.mxu0 0.0
    %5407 = vmatpush1.msra.mxu0 0.0
    %5408 = vmatprep.subr.mxu0 0.0
    %5409 = vmatpush1.msra.mxu0 0.0
    %5410 = vmatprep.subr.mxu0 0.0
    %5411 = vmatpush1.msra.mxu0 0.0
    %5412 = vmatprep.subr.mxu0 0.0
    %5413 = vmatpush1.msra.mxu0 0.0
    %5414 = vmatprep.subr.mxu0 0.0
    %5415 = vmatpush1.msra.mxu0 0.0
    %5416 = vmatprep.subr.mxu0 0.0
    %5417 = vmatpush1.msra.mxu0 0.0
    %5418 = vmatprep.subr.mxu0 0.0
    %5419 = vmatpush1.msra.mxu0 0.0
    %5420 = vmatprep.subr.mxu0 0.0
    %5421 = vmatpush1.msra.mxu0 0.0
    %5422 = vmatprep.subr.mxu0 0.0
    %5423 = vmatpush1.msra.mxu0 0.0
    %5424 = vmatprep.subr.mxu0 0.0
    %5425 = vmatpush1.msra.mxu0 0.0
    %5426 = vmatprep.subr.mxu0 0.0
    %5427 = vmatpush1.msra.mxu0 0.0
    %5428 = vmatprep.subr.mxu0 0.0
    %5429 = vmatpush1.msra.mxu0 0.0
    %5430 = vmatprep.subr.mxu0 0.0
    %5431 = vmatpush1.msra.mxu0 0.0
    %5432 = vmatprep.subr.mxu0 0.0
    %5433 = vmatpush1.msra.mxu0 0.0
    %5434 = vmatprep.subr.mxu0 0.0
    %5435 = vmatpush1.msra.mxu0 0.0
    %5436 = vmatprep.subr.mxu0 0.0
    %5437 = vmatpush1.msra.mxu0 0.0
    %5438 = vmatprep.subr.mxu0 0.0
    %5439 = vmatpush1.msra.mxu0 0.0
    %5440 = vmatprep.subr.mxu0 0.0
    %5441 = vmatpush1.msra.mxu0 0.0
    %5442 = vmatprep.subr.mxu0 0.0
    %5443 = vmatpush1.msra.mxu0 0.0
    %5444 = vmatprep.subr.mxu0 0.0
    %5445 = vmatpush1.msra.mxu0 0.0
    %5446 = vmatprep.mubr.f32.mxu0 0.0
    %v5447 = vand.u32 %v3645, 4294901760
    %v5448 = vsub.f32 %v3645, %v5447
    %v5449 = vand.u32 %v5448, 4294901760
    %5450 = vmatmul.mubr.f32.gmra.mrb[0].mxu0 %v5449
    %v5451 = vpop.f32.mrb[0].mxu0
    %v5452 = vadd.f32 %v5375, %v5451
    %v5453 = vpop.f32.mrb[0].mxu0
    %5454 = vdwg.mxu0
    %5455 = vmatprep.subr.mxu0 0.0
    %v5456 = vand.u32 %v3137, 4294901760
    %v5457 = vsub.f32 %v3137, %v5456
    %v5458 = vand.u32 %v5457, 4294901760
    %5459 = vmatpush1.msra.mxu0 %v5458
    %5460 = vmatprep.subr.mxu0 0.0
    %v5461 = vand.u32 %v3138, 4294901760
    %v5462 = vsub.f32 %v3138, %v5461
    %v5463 = vand.u32 %v5462, 4294901760
    %5464 = vmatpush1.msra.mxu0 %v5463
    %5465 = vmatprep.subr.mxu0 0.0
    %v5466 = vand.u32 %v3139, 4294901760
    %v5467 = vsub.f32 %v3139, %v5466
    %v5468 = vand.u32 %v5467, 4294901760
    %5469 = vmatpush1.msra.mxu0 %v5468
    %5470 = vmatprep.subr.mxu0 0.0
    %v5471 = vand.u32 %v3140, 4294901760
    %v5472 = vsub.f32 %v3140, %v5471
    %v5473 = vand.u32 %v5472, 4294901760
    %5474 = vmatpush1.msra.mxu0 %v5473
    %5475 = vmatprep.subr.mxu0 0.0
    %5476 = vmatpush1.msra.mxu0 0.0
    %5477 = vmatprep.subr.mxu0 0.0
    %5478 = vmatpush1.msra.mxu0 0.0
    %5479 = vmatprep.subr.mxu0 0.0
    %5480 = vmatpush1.msra.mxu0 0.0
    %5481 = vmatprep.subr.mxu0 0.0
    %5482 = vmatpush1.msra.mxu0 0.0
    %5483 = vmatprep.subr.mxu0 0.0
    %5484 = vmatpush1.msra.mxu0 0.0
    %5485 = vmatprep.subr.mxu0 0.0
    %5486 = vmatpush1.msra.mxu0 0.0
    %5487 = vmatprep.subr.mxu0 0.0
    %5488 = vmatpush1.msra.mxu0 0.0
    %5489 = vmatprep.subr.mxu0 0.0
    %5490 = vmatpush1.msra.mxu0 0.0
    %5491 = vmatprep.subr.mxu0 0.0
    %5492 = vmatpush1.msra.mxu0 0.0
    %5493 = vmatprep.subr.mxu0 0.0
    %5494 = vmatpush1.msra.mxu0 0.0
    %5495 = vmatprep.subr.mxu0 0.0
    %5496 = vmatpush1.msra.mxu0 0.0
    %5497 = vmatprep.subr.mxu0 0.0
    %5498 = vmatpush1.msra.mxu0 0.0
    %5499 = vmatprep.subr.mxu0 0.0
    %5500 = vmatpush1.msra.mxu0 0.0
    %5501 = vmatprep.subr.mxu0 0.0
    %5502 = vmatpush1.msra.mxu0 0.0
    %5503 = vmatprep.subr.mxu0 0.0
    %5504 = vmatpush1.msra.mxu0 0.0
    %5505 = vmatprep.subr.mxu0 0.0
    %5506 = vmatpush1.msra.mxu0 0.0
    %5507 = vmatprep.subr.mxu0 0.0
    %5508 = vmatpush1.msra.mxu0 0.0
    %5509 = vmatprep.subr.mxu0 0.0
    %5510 = vmatpush1.msra.mxu0 0.0
    %5511 = vmatprep.subr.mxu0 0.0
    %5512 = vmatpush1.msra.mxu0 0.0
    %5513 = vmatprep.subr.mxu0 0.0
    %5514 = vmatpush1.msra.mxu0 0.0
    %5515 = vmatprep.subr.mxu0 0.0
    %5516 = vmatpush1.msra.mxu0 0.0
    %5517 = vmatprep.subr.mxu0 0.0
    %5518 = vmatpush1.msra.mxu0 0.0
    %5519 = vmatprep.subr.mxu0 0.0
    %5520 = vmatpush1.msra.mxu0 0.0
    %5521 = vmatprep.subr.mxu0 0.0
    %5522 = vmatpush1.msra.mxu0 0.0
    %5523 = vmatprep.subr.mxu0 0.0
    %5524 = vmatpush1.msra.mxu0 0.0
    %5525 = vmatprep.subr.mxu0 0.0
    %5526 = vmatpush1.msra.mxu0 0.0
    %5527 = vmatprep.subr.mxu0 0.0
    %5528 = vmatpush1.msra.mxu0 0.0
    %5529 = vmatprep.subr.mxu0 0.0
    %5530 = vmatpush1.msra.mxu0 0.0
    %5531 = vmatprep.mubr.f32.mxu0 0.0
    %v5532 = vand.u32 %v3645, 4294901760
    %5533 = vmatmul.mubr.f32.gmra.mrb[0].mxu0 %v5532
    %v5534 = vpop.f32.mrb[0].mxu0
    %v5535 = vadd.f32 %v5452, %v5534
    %v5536 = vpop.f32.mrb[0].mxu0
    %5537 = vdwg.mxu0
    %5538 = vmatprep.subr.mxu0 0.0
    %v5539 = vand.u32 %v3137, 4294901760
    %5540 = vmatpush1.msra.mxu0 %v5539
    %5541 = vmatprep.subr.mxu0 0.0
    %v5542 = vand.u32 %v3138, 4294901760
    %5543 = vmatpush1.msra.mxu0 %v5542
    %5544 = vmatprep.subr.mxu0 0.0
    %v5545 = vand.u32 %v3139, 4294901760
    %5546 = vmatpush1.msra.mxu0 %v5545
    %5547 = vmatprep.subr.mxu0 0.0
    %v5548 = vand.u32 %v3140, 4294901760
    %5549 = vmatpush1.msra.mxu0 %v5548
    %5550 = vmatprep.subr.mxu0 0.0
    %5551 = vmatpush1.msra.mxu0 0.0
    %5552 = vmatprep.subr.mxu0 0.0
    %5553 = vmatpush1.msra.mxu0 0.0
    %5554 = vmatprep.subr.mxu0 0.0
    %5555 = vmatpush1.msra.mxu0 0.0
    %5556 = vmatprep.subr.mxu0 0.0
    %5557 = vmatpush1.msra.mxu0 0.0
    %5558 = vmatprep.subr.mxu0 0.0
    %5559 = vmatpush1.msra.mxu0 0.0
    %5560 = vmatprep.subr.mxu0 0.0
    %5561 = vmatpush1.msra.mxu0 0.0
    %5562 = vmatprep.subr.mxu0 0.0
    %5563 = vmatpush1.msra.mxu0 0.0
    %5564 = vmatprep.subr.mxu0 0.0
    %5565 = vmatpush1.msra.mxu0 0.0
    %5566 = vmatprep.subr.mxu0 0.0
    %5567 = vmatpush1.msra.mxu0 0.0
    %5568 = vmatprep.subr.mxu0 0.0
    %5569 = vmatpush1.msra.mxu0 0.0
    %5570 = vmatprep.subr.mxu0 0.0
    %5571 = vmatpush1.msra.mxu0 0.0
    %5572 = vmatprep.subr.mxu0 0.0
    %5573 = vmatpush1.msra.mxu0 0.0
    %5574 = vmatprep.subr.mxu0 0.0
    %5575 = vmatpush1.msra.mxu0 0.0
    %5576 = vmatprep.subr.mxu0 0.0
    %5577 = vmatpush1.msra.mxu0 0.0
    %5578 = vmatprep.subr.mxu0 0.0
    %5579 = vmatpush1.msra.mxu0 0.0
    %5580 = vmatprep.subr.mxu0 0.0
    %5581 = vmatpush1.msra.mxu0 0.0
    %5582 = vmatprep.subr.mxu0 0.0
    %5583 = vmatpush1.msra.mxu0 0.0
    %5584 = vmatprep.subr.mxu0 0.0
    %5585 = vmatpush1.msra.mxu0 0.0
    %5586 = vmatprep.subr.mxu0 0.0
    %5587 = vmatpush1.msra.mxu0 0.0
    %5588 = vmatprep.subr.mxu0 0.0
    %5589 = vmatpush1.msra.mxu0 0.0
    %5590 = vmatprep.subr.mxu0 0.0
    %5591 = vmatpush1.msra.mxu0 0.0
    %5592 = vmatprep.subr.mxu0 0.0
    %5593 = vmatpush1.msra.mxu0 0.0
    %5594 = vmatprep.subr.mxu0 0.0
    %5595 = vmatpush1.msra.mxu0 0.0
    %5596 = vmatprep.subr.mxu0 0.0
    %5597 = vmatpush1.msra.mxu0 0.0
    %5598 = vmatprep.subr.mxu0 0.0
    %5599 = vmatpush1.msra.mxu0 0.0
    %5600 = vmatprep.subr.mxu0 0.0
    %5601 = vmatpush1.msra.mxu0 0.0
    %5602 = vmatprep.subr.mxu0 0.0
    %5603 = vmatpush1.msra.mxu0 0.0
    %5604 = vmatprep.subr.mxu0 0.0
    %5605 = vmatpush1.msra.mxu0 0.0
    %5606 = vmatprep.mubr.f32.mxu0 0.0
    %v5607 = vand.u32 %v3645, 4294901760
    %5608 = vmatmul.mubr.f32.gmra.mrb[0].mxu0 %v5607
    %v5609 = vpop.f32.mrb[0].mxu0
    %v5610 = vadd.f32 %v5535, %v5609
    %v5611 = vpop.f32.mrb[0].mxu0
    %5612 = vdwg.mxu0
    %v5613 = vlaneseq
    %v5614 = vshrl.u32 %v5613, 7
    %v5615 = vsub.s32 7, %v5614
    %v5616 = vrot.slane %v58, %v5615
    %5617 = vmatprep.subr.mxu0 0.0
    %v5618 = vand.u32 %v3152, 4294901760
    %5619 = vmatpush1.msra.mxu0 %v5618
    %5620 = vmatprep.subr.mxu0 0.0
    %v5621 = vand.u32 %v3153, 4294901760
    %5622 = vmatpush1.msra.mxu0 %v5621
    %5623 = vmatprep.subr.mxu0 0.0
    %v5624 = vand.u32 %v3154, 4294901760
    %5625 = vmatpush1.msra.mxu0 %v5624
    %5626 = vmatprep.subr.mxu0 0.0
    %v5627 = vand.u32 %v3155, 4294901760
    %5628 = vmatpush1.msra.mxu0 %v5627
    %5629 = vmatprep.subr.mxu0 0.0
    %5630 = vmatpush1.msra.mxu0 0.0
    %5631 = vmatprep.subr.mxu0 0.0
    %5632 = vmatpush1.msra.mxu0 0.0
    %5633 = vmatprep.subr.mxu0 0.0
    %5634 = vmatpush1.msra.mxu0 0.0
    %5635 = vmatprep.subr.mxu0 0.0
    %5636 = vmatpush1.msra.mxu0 0.0
    %5637 = vmatprep.subr.mxu0 0.0
    %5638 = vmatpush1.msra.mxu0 0.0
    %5639 = vmatprep.subr.mxu0 0.0
    %5640 = vmatpush1.msra.mxu0 0.0
    %5641 = vmatprep.subr.mxu0 0.0
    %5642 = vmatpush1.msra.mxu0 0.0
    %5643 = vmatprep.subr.mxu0 0.0
    %5644 = vmatpush1.msra.mxu0 0.0
    %5645 = vmatprep.subr.mxu0 0.0
    %5646 = vmatpush1.msra.mxu0 0.0
    %5647 = vmatprep.subr.mxu0 0.0
    %5648 = vmatpush1.msra.mxu0 0.0
    %5649 = vmatprep.subr.mxu0 0.0
    %5650 = vmatpush1.msra.mxu0 0.0
    %5651 = vmatprep.subr.mxu0 0.0
    %5652 = vmatpush1.msra.mxu0 0.0
    %5653 = vmatprep.subr.mxu0 0.0
    %5654 = vmatpush1.msra.mxu0 0.0
    %5655 = vmatprep.subr.mxu0 0.0
    %5656 = vmatpush1.msra.mxu0 0.0
    %5657 = vmatprep.subr.mxu0 0.0
    %5658 = vmatpush1.msra.mxu0 0.0
    %5659 = vmatprep.subr.mxu0 0.0
    %5660 = vmatpush1.msra.mxu0 0.0
    %5661 = vmatprep.subr.mxu0 0.0
    %5662 = vmatpush1.msra.mxu0 0.0
    %5663 = vmatprep.subr.mxu0 0.0
    %5664 = vmatpush1.msra.mxu0 0.0
    %5665 = vmatprep.subr.mxu0 0.0
    %5666 = vmatpush1.msra.mxu0 0.0
    %5667 = vmatprep.subr.mxu0 0.0
    %5668 = vmatpush1.msra.mxu0 0.0
    %5669 = vmatprep.subr.mxu0 0.0
    %5670 = vmatpush1.msra.mxu0 0.0
    %5671 = vmatprep.subr.mxu0 0.0
    %5672 = vmatpush1.msra.mxu0 0.0
    %5673 = vmatprep.subr.mxu0 0.0
    %5674 = vmatpush1.msra.mxu0 0.0
    %5675 = vmatprep.subr.mxu0 0.0
    %5676 = vmatpush1.msra.mxu0 0.0
    %5677 = vmatprep.subr.mxu0 0.0
    %5678 = vmatpush1.msra.mxu0 0.0
    %5679 = vmatprep.subr.mxu0 0.0
    %5680 = vmatpush1.msra.mxu0 0.0
    %5681 = vmatprep.subr.mxu0 0.0
    %5682 = vmatpush1.msra.mxu0 0.0
    %5683 = vmatprep.subr.mxu0 0.0
    %5684 = vmatpush1.msra.mxu0 0.0
    %5685 = vmatprep.mubr.f32.mxu0 0.0
    %v5686 = vand.u32 %v3157, 4294901760
    %v5687 = vsub.f32 %v3157, %v5686
    %v5688 = vand.u32 %v5687, 4294901760
    %v5689 = vsub.f32 %v5687, %v5688
    %v5690 = vand.u32 %v5689, 4294901760
    %5691 = vmatmul.mubr.f32.gmra.mrb[0].mxu0 %v5690
    %v5692 = vpop.f32.mrb[0].mxu0
    %v5693 = vadd.f32 %v5616, %v5692
    %v5694 = vpop.f32.mrb[0].mxu0
    %5695 = vdwg.mxu0
    %5696 = vmatprep.subr.mxu0 0.0
    %v5697 = vand.u32 %v3152, 4294901760
    %v5698 = vsub.f32 %v3152, %v5697
    %v5699 = vand.u32 %v5698, 4294901760
    %v5700 = vsub.f32 %v5698, %v5699
    %v5701 = vand.u32 %v5700, 4294901760
    %5702 = vmatpush1.msra.mxu0 %v5701
    %5703 = vmatprep.subr.mxu0 0.0
    %v5704 = vand.u32 %v3153, 4294901760
    %v5705 = vsub.f32 %v3153, %v5704
    %v5706 = vand.u32 %v5705, 4294901760
    %v5707 = vsub.f32 %v5705, %v5706
    %v5708 = vand.u32 %v5707, 4294901760
    %5709 = vmatpush1.msra.mxu0 %v5708
    %5710 = vmatprep.subr.mxu0 0.0
    %v5711 = vand.u32 %v3154, 4294901760
    %v5712 = vsub.f32 %v3154, %v5711
    %v5713 = vand.u32 %v5712, 4294901760
    %v5714 = vsub.f32 %v5712, %v5713
    %v5715 = vand.u32 %v5714, 4294901760
    %5716 = vmatpush1.msra.mxu0 %v5715
    %5717 = vmatprep.subr.mxu0 0.0
    %v5718 = vand.u32 %v3155, 4294901760
    %v5719 = vsub.f32 %v3155, %v5718
    %v5720 = vand.u32 %v5719, 4294901760
    %v5721 = vsub.f32 %v5719, %v5720
    %v5722 = vand.u32 %v5721, 4294901760
    %5723 = vmatpush1.msra.mxu0 %v5722
    %5724 = vmatprep.subr.mxu0 0.0
    %5725 = vmatpush1.msra.mxu0 0.0
    %5726 = vmatprep.subr.mxu0 0.0
    %5727 = vmatpush1.msra.mxu0 0.0
    %5728 = vmatprep.subr.mxu0 0.0
    %5729 = vmatpush1.msra.mxu0 0.0
    %5730 = vmatprep.subr.mxu0 0.0
    %5731 = vmatpush1.msra.mxu0 0.0
    %5732 = vmatprep.subr.mxu0 0.0
    %5733 = vmatpush1.msra.mxu0 0.0
    %5734 = vmatprep.subr.mxu0 0.0
    %5735 = vmatpush1.msra.mxu0 0.0
    %5736 = vmatprep.subr.mxu0 0.0
    %5737 = vmatpush1.msra.mxu0 0.0
    %5738 = vmatprep.subr.mxu0 0.0
    %5739 = vmatpush1.msra.mxu0 0.0
    %5740 = vmatprep.subr.mxu0 0.0
    %5741 = vmatpush1.msra.mxu0 0.0
    %5742 = vmatprep.subr.mxu0 0.0
    %5743 = vmatpush1.msra.mxu0 0.0
    %5744 = vmatprep.subr.mxu0 0.0
    %5745 = vmatpush1.msra.mxu0 0.0
    %5746 = vmatprep.subr.mxu0 0.0
    %5747 = vmatpush1.msra.mxu0 0.0
    %5748 = vmatprep.subr.mxu0 0.0
    %5749 = vmatpush1.msra.mxu0 0.0
    %5750 = vmatprep.subr.mxu0 0.0
    %5751 = vmatpush1.msra.mxu0 0.0
    %5752 = vmatprep.subr.mxu0 0.0
    %5753 = vmatpush1.msra.mxu0 0.0
    %5754 = vmatprep.subr.mxu0 0.0
    %5755 = vmatpush1.msra.mxu0 0.0
    %5756 = vmatprep.subr.mxu0 0.0
    %5757 = vmatpush1.msra.mxu0 0.0
    %5758 = vmatprep.subr.mxu0 0.0
    %5759 = vmatpush1.msra.mxu0 0.0
    %5760 = vmatprep.subr.mxu0 0.0
    %5761 = vmatpush1.msra.mxu0 0.0
    %5762 = vmatprep.subr.mxu0 0.0
    %5763 = vmatpush1.msra.mxu0 0.0
    %5764 = vmatprep.subr.mxu0 0.0
    %5765 = vmatpush1.msra.mxu0 0.0
    %5766 = vmatprep.subr.mxu0 0.0
    %5767 = vmatpush1.msra.mxu0 0.0
    %5768 = vmatprep.subr.mxu0 0.0
    %5769 = vmatpush1.msra.mxu0 0.0
    %5770 = vmatprep.subr.mxu0 0.0
    %5771 = vmatpush1.msra.mxu0 0.0
    %5772 = vmatprep.subr.mxu0 0.0
    %5773 = vmatpush1.msra.mxu0 0.0
    %5774 = vmatprep.subr.mxu0 0.0
    %5775 = vmatpush1.msra.mxu0 0.0
    %5776 = vmatprep.subr.mxu0 0.0
    %5777 = vmatpush1.msra.mxu0 0.0
    %5778 = vmatprep.subr.mxu0 0.0
    %5779 = vmatpush1.msra.mxu0 0.0
    %5780 = vmatprep.mubr.f32.mxu0 0.0
    %v5781 = vand.u32 %v3157, 4294901760
    %5782 = vmatmul.mubr.f32.gmra.mrb[0].mxu0 %v5781
    %v5783 = vpop.f32.mrb[0].mxu0
    %v5784 = vadd.f32 %v5693, %v5783
    %v5785 = vpop.f32.mrb[0].mxu0
    %5786 = vdwg.mxu0
    %5787 = vmatprep.subr.mxu0 0.0
    %v5788 = vand.u32 %v3152, 4294901760
    %v5789 = vsub.f32 %v3152, %v5788
    %5790 = vmatpush1.msra.mxu0 %v5789
    %5791 = vmatprep.subr.mxu0 0.0
    %v5792 = vand.u32 %v3153, 4294901760
    %v5793 = vsub.f32 %v3153, %v5792
    %5794 = vmatpush1.msra.mxu0 %v5793
    %5795 = vmatprep.subr.mxu0 0.0
    %v5796 = vand.u32 %v3154, 4294901760
    %v5797 = vsub.f32 %v3154, %v5796
    %5798 = vmatpush1.msra.mxu0 %v5797
    %5799 = vmatprep.subr.mxu0 0.0
    %v5800 = vand.u32 %v3155, 4294901760
    %v5801 = vsub.f32 %v3155, %v5800
    %5802 = vmatpush1.msra.mxu0 %v5801
    %5803 = vmatprep.subr.mxu0 0.0
    %5804 = vmatpush1.msra.mxu0 0.0
    %5805 = vmatprep.subr.mxu0 0.0
    %5806 = vmatpush1.msra.mxu0 0.0
    %5807 = vmatprep.subr.mxu0 0.0
    %5808 = vmatpush1.msra.mxu0 0.0
    %5809 = vmatprep.subr.mxu0 0.0
    %5810 = vmatpush1.msra.mxu0 0.0
    %5811 = vmatprep.subr.mxu0 0.0
    %5812 = vmatpush1.msra.mxu0 0.0
    %5813 = vmatprep.subr.mxu0 0.0
    %5814 = vmatpush1.msra.mxu0 0.0
    %5815 = vmatprep.subr.mxu0 0.0
    %5816 = vmatpush1.msra.mxu0 0.0
    %5817 = vmatprep.subr.mxu0 0.0
    %5818 = vmatpush1.msra.mxu0 0.0
    %5819 = vmatprep.subr.mxu0 0.0
    %5820 = vmatpush1.msra.mxu0 0.0
    %5821 = vmatprep.subr.mxu0 0.0
    %5822 = vmatpush1.msra.mxu0 0.0
    %5823 = vmatprep.subr.mxu0 0.0
    %5824 = vmatpush1.msra.mxu0 0.0
    %5825 = vmatprep.subr.mxu0 0.0
    %5826 = vmatpush1.msra.mxu0 0.0
    %5827 = vmatprep.subr.mxu0 0.0
    %5828 = vmatpush1.msra.mxu0 0.0
    %5829 = vmatprep.subr.mxu0 0.0
    %5830 = vmatpush1.msra.mxu0 0.0
    %5831 = vmatprep.subr.mxu0 0.0
    %5832 = vmatpush1.msra.mxu0 0.0
    %5833 = vmatprep.subr.mxu0 0.0
    %5834 = vmatpush1.msra.mxu0 0.0
    %5835 = vmatprep.subr.mxu0 0.0
    %5836 = vmatpush1.msra.mxu0 0.0
    %5837 = vmatprep.subr.mxu0 0.0
    %5838 = vmatpush1.msra.mxu0 0.0
    %5839 = vmatprep.subr.mxu0 0.0
    %5840 = vmatpush1.msra.mxu0 0.0
    %5841 = vmatprep.subr.mxu0 0.0
    %5842 = vmatpush1.msra.mxu0 0.0
    %5843 = vmatprep.subr.mxu0 0.0
    %5844 = vmatpush1.msra.mxu0 0.0
    %5845 = vmatprep.subr.mxu0 0.0
    %5846 = vmatpush1.msra.mxu0 0.0
    %5847 = vmatprep.subr.mxu0 0.0
    %5848 = vmatpush1.msra.mxu0 0.0
    %5849 = vmatprep.subr.mxu0 0.0
    %5850 = vmatpush1.msra.mxu0 0.0
    %5851 = vmatprep.subr.mxu0 0.0
    %5852 = vmatpush1.msra.mxu0 0.0
    %5853 = vmatprep.subr.mxu0 0.0
    %5854 = vmatpush1.msra.mxu0 0.0
    %5855 = vmatprep.subr.mxu0 0.0
    %5856 = vmatpush1.msra.mxu0 0.0
    %5857 = vmatprep.subr.mxu0 0.0
    %5858 = vmatpush1.msra.mxu0 0.0
    %5859 = vmatprep.mubr.f32.mxu0 0.0
    %v5860 = vand.u32 %v3157, 4294901760
    %v5861 = vsub.f32 %v3157, %v5860
    %5862 = vmatmul.mubr.f32.gmra.mrb[0].mxu0 %v5861
    %v5863 = vpop.f32.mrb[0].mxu0
    %v5864 = vadd.f32 %v5784, %v5863
    %v5865 = vpop.f32.mrb[0].mxu0
    %5866 = vdwg.mxu0
    %5867 = vmatprep.subr.mxu0 0.0
    %v5868 = vand.u32 %v3152, 4294901760
    %5869 = vmatpush1.msra.mxu0 %v5868
    %5870 = vmatprep.subr.mxu0 0.0
    %v5871 = vand.u32 %v3153, 4294901760
    %5872 = vmatpush1.msra.mxu0 %v5871
    %5873 = vmatprep.subr.mxu0 0.0
    %v5874 = vand.u32 %v3154, 4294901760
    %5875 = vmatpush1.msra.mxu0 %v5874
    %5876 = vmatprep.subr.mxu0 0.0
    %v5877 = vand.u32 %v3155, 4294901760
    %5878 = vmatpush1.msra.mxu0 %v5877
    %5879 = vmatprep.subr.mxu0 0.0
    %5880 = vmatpush1.msra.mxu0 0.0
    %5881 = vmatprep.subr.mxu0 0.0
    %5882 = vmatpush1.msra.mxu0 0.0
    %5883 = vmatprep.subr.mxu0 0.0
    %5884 = vmatpush1.msra.mxu0 0.0
    %5885 = vmatprep.subr.mxu0 0.0
    %5886 = vmatpush1.msra.mxu0 0.0
    %5887 = vmatprep.subr.mxu0 0.0
    %5888 = vmatpush1.msra.mxu0 0.0
    %5889 = vmatprep.subr.mxu0 0.0
    %5890 = vmatpush1.msra.mxu0 0.0
    %5891 = vmatprep.subr.mxu0 0.0
    %5892 = vmatpush1.msra.mxu0 0.0
    %5893 = vmatprep.subr.mxu0 0.0
    %5894 = vmatpush1.msra.mxu0 0.0
    %5895 = vmatprep.subr.mxu0 0.0
    %5896 = vmatpush1.msra.mxu0 0.0
    %5897 = vmatprep.subr.mxu0 0.0
    %5898 = vmatpush1.msra.mxu0 0.0
    %5899 = vmatprep.subr.mxu0 0.0
    %5900 = vmatpush1.msra.mxu0 0.0
    %5901 = vmatprep.subr.mxu0 0.0
    %5902 = vmatpush1.msra.mxu0 0.0
    %5903 = vmatprep.subr.mxu0 0.0
    %5904 = vmatpush1.msra.mxu0 0.0
    %5905 = vmatprep.subr.mxu0 0.0
    %5906 = vmatpush1.msra.mxu0 0.0
    %5907 = vmatprep.subr.mxu0 0.0
    %5908 = vmatpush1.msra.mxu0 0.0
    %5909 = vmatprep.subr.mxu0 0.0
    %5910 = vmatpush1.msra.mxu0 0.0
    %5911 = vmatprep.subr.mxu0 0.0
    %5912 = vmatpush1.msra.mxu0 0.0
    %5913 = vmatprep.subr.mxu0 0.0
    %5914 = vmatpush1.msra.mxu0 0.0
    %5915 = vmatprep.subr.mxu0 0.0
    %5916 = vmatpush1.msra.mxu0 0.0
    %5917 = vmatprep.subr.mxu0 0.0
    %5918 = vmatpush1.msra.mxu0 0.0
    %5919 = vmatprep.subr.mxu0 0.0
    %5920 = vmatpush1.msra.mxu0 0.0
    %5921 = vmatprep.subr.mxu0 0.0
    %5922 = vmatpush1.msra.mxu0 0.0
    %5923 = vmatprep.subr.mxu0 0.0
    %5924 = vmatpush1.msra.mxu0 0.0
    %5925 = vmatprep.subr.mxu0 0.0
    %5926 = vmatpush1.msra.mxu0 0.0
    %5927 = vmatprep.subr.mxu0 0.0
    %5928 = vmatpush1.msra.mxu0 0.0
    %5929 = vmatprep.subr.mxu0 0.0
    %5930 = vmatpush1.msra.mxu0 0.0
    %5931 = vmatprep.subr.mxu0 0.0
    %5932 = vmatpush1.msra.mxu0 0.0
    %5933 = vmatprep.subr.mxu0 0.0
    %5934 = vmatpush1.msra.mxu0 0.0
    %5935 = vmatprep.mubr.f32.mxu0 0.0
    %v5936 = vand.u32 %v3157, 4294901760
    %v5937 = vsub.f32 %v3157, %v5936
    %v5938 = vand.u32 %v5937, 4294901760
    %5939 = vmatmul.mubr.f32.gmra.mrb[0].mxu0 %v5938
    %v5940 = vpop.f32.mrb[0].mxu0
    %v5941 = vadd.f32 %v5864, %v5940
    %v5942 = vpop.f32.mrb[0].mxu0
    %5943 = vdwg.mxu0
    %5944 = vmatprep.subr.mxu0 0.0
    %v5945 = vand.u32 %v3152, 4294901760
    %v5946 = vsub.f32 %v3152, %v5945
    %v5947 = vand.u32 %v5946, 4294901760
    %5948 = vmatpush1.msra.mxu0 %v5947
    %5949 = vmatprep.subr.mxu0 0.0
    %v5950 = vand.u32 %v3153, 4294901760
    %v5951 = vsub.f32 %v3153, %v5950
    %v5952 = vand.u32 %v5951, 4294901760
    %5953 = vmatpush1.msra.mxu0 %v5952
    %5954 = vmatprep.subr.mxu0 0.0
    %v5955 = vand.u32 %v3154, 4294901760
    %v5956 = vsub.f32 %v3154, %v5955
    %v5957 = vand.u32 %v5956, 4294901760
    %5958 = vmatpush1.msra.mxu0 %v5957
    %5959 = vmatprep.subr.mxu0 0.0
    %v5960 = vand.u32 %v3155, 4294901760
    %v5961 = vsub.f32 %v3155, %v5960
    %v5962 = vand.u32 %v5961, 4294901760
    %5963 = vmatpush1.msra.mxu0 %v5962
    %5964 = vmatprep.subr.mxu0 0.0
    %5965 = vmatpush1.msra.mxu0 0.0
    %5966 = vmatprep.subr.mxu0 0.0
    %5967 = vmatpush1.msra.mxu0 0.0
    %5968 = vmatprep.subr.mxu0 0.0
    %5969 = vmatpush1.msra.mxu0 0.0
    %5970 = vmatprep.subr.mxu0 0.0
    %5971 = vmatpush1.msra.mxu0 0.0
    %5972 = vmatprep.subr.mxu0 0.0
    %5973 = vmatpush1.msra.mxu0 0.0
    %5974 = vmatprep.subr.mxu0 0.0
    %5975 = vmatpush1.msra.mxu0 0.0
    %5976 = vmatprep.subr.mxu0 0.0
    %5977 = vmatpush1.msra.mxu0 0.0
    %5978 = vmatprep.subr.mxu0 0.0
    %5979 = vmatpush1.msra.mxu0 0.0
    %5980 = vmatprep.subr.mxu0 0.0
    %5981 = vmatpush1.msra.mxu0 0.0
    %5982 = vmatprep.subr.mxu0 0.0
    %5983 = vmatpush1.msra.mxu0 0.0
    %5984 = vmatprep.subr.mxu0 0.0
    %5985 = vmatpush1.msra.mxu0 0.0
    %5986 = vmatprep.subr.mxu0 0.0
    %5987 = vmatpush1.msra.mxu0 0.0
    %5988 = vmatprep.subr.mxu0 0.0
    %5989 = vmatpush1.msra.mxu0 0.0
    %5990 = vmatprep.subr.mxu0 0.0
    %5991 = vmatpush1.msra.mxu0 0.0
    %5992 = vmatprep.subr.mxu0 0.0
    %5993 = vmatpush1.msra.mxu0 0.0
    %5994 = vmatprep.subr.mxu0 0.0
    %5995 = vmatpush1.msra.mxu0 0.0
    %5996 = vmatprep.subr.mxu0 0.0
    %5997 = vmatpush1.msra.mxu0 0.0
    %5998 = vmatprep.subr.mxu0 0.0
    %5999 = vmatpush1.msra.mxu0 0.0
    %6000 = vmatprep.subr.mxu0 0.0
    %6001 = vmatpush1.msra.mxu0 0.0
    %6002 = vmatprep.subr.mxu0 0.0
    %6003 = vmatpush1.msra.mxu0 0.0
    %6004 = vmatprep.subr.mxu0 0.0
    %6005 = vmatpush1.msra.mxu0 0.0
    %6006 = vmatprep.subr.mxu0 0.0
    %6007 = vmatpush1.msra.mxu0 0.0
    %6008 = vmatprep.subr.mxu0 0.0
    %6009 = vmatpush1.msra.mxu0 0.0
    %6010 = vmatprep.subr.mxu0 0.0
    %6011 = vmatpush1.msra.mxu0 0.0
    %6012 = vmatprep.subr.mxu0 0.0
    %6013 = vmatpush1.msra.mxu0 0.0
    %6014 = vmatprep.subr.mxu0 0.0
    %6015 = vmatpush1.msra.mxu0 0.0
    %6016 = vmatprep.subr.mxu0 0.0
    %6017 = vmatpush1.msra.mxu0 0.0
    %6018 = vmatprep.subr.mxu0 0.0
    %6019 = vmatpush1.msra.mxu0 0.0
    %6020 = vmatprep.mubr.f32.mxu0 0.0
    %v6021 = vand.u32 %v3157, 4294901760
    %6022 = vmatmul.mubr.f32.gmra.mrb[0].mxu0 %v6021
    %v6023 = vpop.f32.mrb[0].mxu0
    %v6024 = vadd.f32 %v5941, %v6023
    %v6025 = vpop.f32.mrb[0].mxu0
    %6026 = vdwg.mxu0
    %6027 = vmatprep.subr.mxu0 0.0
    %v6028 = vand.u32 %v3152, 4294901760
    %6029 = vmatpush1.msra.mxu0 %v6028
    %6030 = vmatprep.subr.mxu0 0.0
    %v6031 = vand.u32 %v3153, 4294901760
    %6032 = vmatpush1.msra.mxu0 %v6031
    %6033 = vmatprep.subr.mxu0 0.0
    %v6034 = vand.u32 %v3154, 4294901760
    %6035 = vmatpush1.msra.mxu0 %v6034
    %6036 = vmatprep.subr.mxu0 0.0
    %v6037 = vand.u32 %v3155, 4294901760
    %6038 = vmatpush1.msra.mxu0 %v6037
    %6039 = vmatprep.subr.mxu0 0.0
    %6040 = vmatpush1.msra.mxu0 0.0
    %6041 = vmatprep.subr.mxu0 0.0
    %6042 = vmatpush1.msra.mxu0 0.0
    %6043 = vmatprep.subr.mxu0 0.0
    %6044 = vmatpush1.msra.mxu0 0.0
    %6045 = vmatprep.subr.mxu0 0.0
    %6046 = vmatpush1.msra.mxu0 0.0
    %6047 = vmatprep.subr.mxu0 0.0
    %6048 = vmatpush1.msra.mxu0 0.0
    %6049 = vmatprep.subr.mxu0 0.0
    %6050 = vmatpush1.msra.mxu0 0.0
    %6051 = vmatprep.subr.mxu0 0.0
    %6052 = vmatpush1.msra.mxu0 0.0
    %6053 = vmatprep.subr.mxu0 0.0
    %6054 = vmatpush1.msra.mxu0 0.0
    %6055 = vmatprep.subr.mxu0 0.0
    %6056 = vmatpush1.msra.mxu0 0.0
    %6057 = vmatprep.subr.mxu0 0.0
    %6058 = vmatpush1.msra.mxu0 0.0
    %6059 = vmatprep.subr.mxu0 0.0
    %6060 = vmatpush1.msra.mxu0 0.0
    %6061 = vmatprep.subr.mxu0 0.0
    %6062 = vmatpush1.msra.mxu0 0.0
    %6063 = vmatprep.subr.mxu0 0.0
    %6064 = vmatpush1.msra.mxu0 0.0
    %6065 = vmatprep.subr.mxu0 0.0
    %6066 = vmatpush1.msra.mxu0 0.0
    %6067 = vmatprep.subr.mxu0 0.0
    %6068 = vmatpush1.msra.mxu0 0.0
    %6069 = vmatprep.subr.mxu0 0.0
    %6070 = vmatpush1.msra.mxu0 0.0
    %6071 = vmatprep.subr.mxu0 0.0
    %6072 = vmatpush1.msra.mxu0 0.0
    %6073 = vmatprep.subr.mxu0 0.0
    %6074 = vmatpush1.msra.mxu0 0.0
    %6075 = vmatprep.subr.mxu0 0.0
    %6076 = vmatpush1.msra.mxu0 0.0
    %6077 = vmatprep.subr.mxu0 0.0
    %6078 = vmatpush1.msra.mxu0 0.0
    %6079 = vmatprep.subr.mxu0 0.0
    %6080 = vmatpush1.msra.mxu0 0.0
    %6081 = vmatprep.subr.mxu0 0.0
    %6082 = vmatpush1.msra.mxu0 0.0
    %6083 = vmatprep.subr.mxu0 0.0
    %6084 = vmatpush1.msra.mxu0 0.0
    %6085 = vmatprep.subr.mxu0 0.0
    %6086 = vmatpush1.msra.mxu0 0.0
    %6087 = vmatprep.subr.mxu0 0.0
    %6088 = vmatpush1.msra.mxu0 0.0
    %6089 = vmatprep.subr.mxu0 0.0
    %6090 = vmatpush1.msra.mxu0 0.0
    %6091 = vmatprep.subr.mxu0 0.0
    %6092 = vmatpush1.msra.mxu0 0.0
    %6093 = vmatprep.subr.mxu0 0.0
    %6094 = vmatpush1.msra.mxu0 0.0
    %6095 = vmatprep.mubr.f32.mxu0 0.0
    %v6096 = vand.u32 %v3157, 4294901760
    %6097 = vmatmul.mubr.f32.gmra.mrb[0].mxu0 %v6096
    %v6098 = vpop.f32.mrb[0].mxu0
    %v6099 = vadd.f32 %v6024, %v6098
    %v6100 = vpop.f32.mrb[0].mxu0
    %6101 = vdwg.mxu0
    %v6102 = vmul.f32 %v4142, %v6099
    %v6103 = vadd.f32 %v5610, %v6102
    %v6104 = vtanh.pop %v6103
    %v6105 = vsub.f32 1.0, %v5123
    %v6106 = vmul.f32 %v6105, %v6104
    %v6107 = vmul.f32 %v5123, %v57
    %v6108 = vadd.f32 %v6106, %v6107
    %vm6109 = vcmask 254976
    %6110 = vst.msk [vmem:[#allocation5] sm:$0x3] %vm6109, %v3125
    %s6111 = scalar_lea.vmem [#allocation5], 2
    %6112 = vst.msk [vmem:[%s6111] sm:$0x3] %vm6109, %v6108
    %v6113 = vld [vmem:[%s2] sm:$0x3]
    %v6114 = vld [vmem:[%s2 + $0x2] sm:$0x3]
    %v6115 = vld [vmem:[%s2 + $0x4] sm:$0x3]
    %v6116 = vld [vmem:[%s2 + $0x6] sm:$0x3]
    %v6117 = vld [vmem:[%s2 + $0x8] sm:$0x3]
    %v6118 = vld [vmem:[%s2 + $0xa] sm:$0x3]
    %v6119 = vld [vmem:[%s2 + $0xc] sm:$0x3]
    %v6120 = vld [vmem:[%s2 + $0xe] sm:$0x3]
    %v6121 = vld [vmem:[%s7] sm:$0x3]
    %v6122 = vld [vmem:[%s6] sm:$0xff]
    %v6123 = vld [vmem:[%s6 + $0x8] sm:$0xff]
    %v6124 = vld [vmem:[%s6 + $0x10] sm:$0xff]
    %v6125 = vld [vmem:[%s6 + $0x18] sm:$0xff]
    %v6127 = vsel %vm93, %v6108, 0
    %6129 = vmatprep.subr.mxu0 0.0
    %v6130 = vand.u32 %v6122, 4294901760
    %6131 = vmatpush1.msra.mxu0 %v6130
    %6132 = vmatprep.subr.mxu0 0.0
    %v6133 = vand.u32 %v6123, 4294901760
    %6134 = vmatpush1.msra.mxu0 %v6133
    %6135 = vmatprep.subr.mxu0 0.0
    %v6136 = vand.u32 %v6124, 4294901760
    %6137 = vmatpush1.msra.mxu0 %v6136
    %6138 = vmatprep.subr.mxu0 0.0
    %v6139 = vand.u32 %v6125, 4294901760
    %6140 = vmatpush1.msra.mxu0 %v6139
    %6141 = vmatprep.subr.mxu0 0.0
    %6142 = vmatpush1.msra.mxu0 0.0
    %6143 = vmatprep.subr.mxu0 0.0
    %6144 = vmatpush1.msra.mxu0 0.0
    %6145 = vmatprep.subr.mxu0 0.0
    %6146 = vmatpush1.msra.mxu0 0.0
    %6147 = vmatprep.subr.mxu0 0.0
    %6148 = vmatpush1.msra.mxu0 0.0
    %6149 = vmatprep.subr.mxu0 0.0
    %6150 = vmatpush1.msra.mxu0 0.0
    %6151 = vmatprep.subr.mxu0 0.0
    %6152 = vmatpush1.msra.mxu0 0.0
    %6153 = vmatprep.subr.mxu0 0.0
    %6154 = vmatpush1.msra.mxu0 0.0
    %6155 = vmatprep.subr.mxu0 0.0
    %6156 = vmatpush1.msra.mxu0 0.0
    %6157 = vmatprep.subr.mxu0 0.0
    %6158 = vmatpush1.msra.mxu0 0.0
    %6159 = vmatprep.subr.mxu0 0.0
    %6160 = vmatpush1.msra.mxu0 0.0
    %6161 = vmatprep.subr.mxu0 0.0
    %6162 = vmatpush1.msra.mxu0 0.0
    %6163 = vmatprep.subr.mxu0 0.0
    %6164 = vmatpush1.msra.mxu0 0.0
    %6165 = vmatprep.subr.mxu0 0.0
    %6166 = vmatpush1.msra.mxu0 0.0
    %6167 = vmatprep.subr.mxu0 0.0
    %6168 = vmatpush1.msra.mxu0 0.0
    %6169 = vmatprep.subr.mxu0 0.0
    %6170 = vmatpush1.msra.mxu0 0.0
    %6171 = vmatprep.subr.mxu0 0.0
    %6172 = vmatpush1.msra.mxu0 0.0
    %6173 = vmatprep.subr.mxu0 0.0
    %6174 = vmatpush1.msra.mxu0 0.0
    %6175 = vmatprep.subr.mxu0 0.0
    %6176 = vmatpush1.msra.mxu0 0.0
    %6177 = vmatprep.subr.mxu0 0.0
    %6178 = vmatpush1.msra.mxu0 0.0
    %6179 = vmatprep.subr.mxu0 0.0
    %6180 = vmatpush1.msra.mxu0 0.0
    %6181 = vmatprep.subr.mxu0 0.0
    %6182 = vmatpush1.msra.mxu0 0.0
    %6183 = vmatprep.subr.mxu0 0.0
    %6184 = vmatpush1.msra.mxu0 0.0
    %6185 = vmatprep.subr.mxu0 0.0
    %6186 = vmatpush1.msra.mxu0 0.0
    %6187 = vmatprep.subr.mxu0 0.0
    %6188 = vmatpush1.msra.mxu0 0.0
    %6189 = vmatprep.subr.mxu0 0.0
    %6190 = vmatpush1.msra.mxu0 0.0
    %6191 = vmatprep.subr.mxu0 0.0
    %6192 = vmatpush1.msra.mxu0 0.0
    %6193 = vmatprep.subr.mxu0 0.0
    %6194 = vmatpush1.msra.mxu0 0.0
    %6195 = vmatprep.subr.mxu0 0.0
    %6196 = vmatpush1.msra.mxu0 0.0
    %6197 = vmatprep.mubr.f32.mxu0 0.0
    %v6198 = vand.u32 %v6127, 4294901760
    %v6199 = vsub.f32 %v6127, %v6198
    %v6200 = vand.u32 %v6199, 4294901760
    %v6201 = vsub.f32 %v6199, %v6200
    %v6202 = vand.u32 %v6201, 4294901760
    %6203 = vmatmul.mubr.f32.gmra.mrb[0].mxu0 %v6202
    %v6204 = vpop.f32.mrb[0].mxu0
    %v6205 = vadd.f32 0.0, %v6204
    %v6206 = vpop.f32.mrb[0].mxu0
    %6207 = vdwg.mxu0
    %6208 = vmatprep.subr.mxu0 0.0
    %v6209 = vand.u32 %v6122, 4294901760
    %v6210 = vsub.f32 %v6122, %v6209
    %v6211 = vand.u32 %v6210, 4294901760
    %v6212 = vsub.f32 %v6210, %v6211
    %v6213 = vand.u32 %v6212, 4294901760
    %6214 = vmatpush1.msra.mxu0 %v6213
    %6215 = vmatprep.subr.mxu0 0.0
    %v6216 = vand.u32 %v6123, 4294901760
    %v6217 = vsub.f32 %v6123, %v6216
    %v6218 = vand.u32 %v6217, 4294901760
    %v6219 = vsub.f32 %v6217, %v6218
    %v6220 = vand.u32 %v6219, 4294901760
    %6221 = vmatpush1.msra.mxu0 %v6220
    %6222 = vmatprep.subr.mxu0 0.0
    %v6223 = vand.u32 %v6124, 4294901760
    %v6224 = vsub.f32 %v6124, %v6223
    %v6225 = vand.u32 %v6224, 4294901760
    %v6226 = vsub.f32 %v6224, %v6225
    %v6227 = vand.u32 %v6226, 4294901760
    %6228 = vmatpush1.msra.mxu0 %v6227
    %6229 = vmatprep.subr.mxu0 0.0
    %v6230 = vand.u32 %v6125, 4294901760
    %v6231 = vsub.f32 %v6125, %v6230
    %v6232 = vand.u32 %v6231, 4294901760
    %v6233 = vsub.f32 %v6231, %v6232
    %v6234 = vand.u32 %v6233, 4294901760
    %6235 = vmatpush1.msra.mxu0 %v6234
    %6236 = vmatprep.subr.mxu0 0.0
    %6237 = vmatpush1.msra.mxu0 0.0
    %6238 = vmatprep.subr.mxu0 0.0
    %6239 = vmatpush1.msra.mxu0 0.0
    %6240 = vmatprep.subr.mxu0 0.0
    %6241 = vmatpush1.msra.mxu0 0.0
    %6242 = vmatprep.subr.mxu0 0.0
    %6243 = vmatpush1.msra.mxu0 0.0
    %6244 = vmatprep.subr.mxu0 0.0
    %6245 = vmatpush1.msra.mxu0 0.0
    %6246 = vmatprep.subr.mxu0 0.0
    %6247 = vmatpush1.msra.mxu0 0.0
    %6248 = vmatprep.subr.mxu0 0.0
    %6249 = vmatpush1.msra.mxu0 0.0
    %6250 = vmatprep.subr.mxu0 0.0
    %6251 = vmatpush1.msra.mxu0 0.0
    %6252 = vmatprep.subr.mxu0 0.0
    %6253 = vmatpush1.msra.mxu0 0.0
    %6254 = vmatprep.subr.mxu0 0.0
    %6255 = vmatpush1.msra.mxu0 0.0
    %6256 = vmatprep.subr.mxu0 0.0
    %6257 = vmatpush1.msra.mxu0 0.0
    %6258 = vmatprep.subr.mxu0 0.0
    %6259 = vmatpush1.msra.mxu0 0.0
    %6260 = vmatprep.subr.mxu0 0.0
    %6261 = vmatpush1.msra.mxu0 0.0
    %6262 = vmatprep.subr.mxu0 0.0
    %6263 = vmatpush1.msra.mxu0 0.0
    %6264 = vmatprep.subr.mxu0 0.0
    %6265 = vmatpush1.msra.mxu0 0.0
    %6266 = vmatprep.subr.mxu0 0.0
    %6267 = vmatpush1.msra.mxu0 0.0
    %6268 = vmatprep.subr.mxu0 0.0
    %6269 = vmatpush1.msra.mxu0 0.0
    %6270 = vmatprep.subr.mxu0 0.0
    %6271 = vmatpush1.msra.mxu0 0.0
    %6272 = vmatprep.subr.mxu0 0.0
    %6273 = vmatpush1.msra.mxu0 0.0
    %6274 = vmatprep.subr.mxu0 0.0
    %6275 = vmatpush1.msra.mxu0 0.0
    %6276 = vmatprep.subr.mxu0 0.0
    %6277 = vmatpush1.msra.mxu0 0.0
    %6278 = vmatprep.subr.mxu0 0.0
    %6279 = vmatpush1.msra.mxu0 0.0
    %6280 = vmatprep.subr.mxu0 0.0
    %6281 = vmatpush1.msra.mxu0 0.0
    %6282 = vmatprep.subr.mxu0 0.0
    %6283 = vmatpush1.msra.mxu0 0.0
    %6284 = vmatprep.subr.mxu0 0.0
    %6285 = vmatpush1.msra.mxu0 0.0
    %6286 = vmatprep.subr.mxu0 0.0
    %6287 = vmatpush1.msra.mxu0 0.0
    %6288 = vmatprep.subr.mxu0 0.0
    %6289 = vmatpush1.msra.mxu0 0.0
    %6290 = vmatprep.subr.mxu0 0.0
    %6291 = vmatpush1.msra.mxu0 0.0
    %6292 = vmatprep.mubr.f32.mxu0 0.0
    %v6293 = vand.u32 %v6127, 4294901760
    %6294 = vmatmul.mubr.f32.gmra.mrb[0].mxu0 %v6293
    %v6295 = vpop.f32.mrb[0].mxu0
    %v6296 = vadd.f32 %v6205, %v6295
    %v6297 = vpop.f32.mrb[0].mxu0
    %6298 = vdwg.mxu0
    %6299 = vmatprep.subr.mxu0 0.0
    %v6300 = vand.u32 %v6122, 4294901760
    %v6301 = vsub.f32 %v6122, %v6300
    %6302 = vmatpush1.msra.mxu0 %v6301
    %6303 = vmatprep.subr.mxu0 0.0
    %v6304 = vand.u32 %v6123, 4294901760
    %v6305 = vsub.f32 %v6123, %v6304
    %6306 = vmatpush1.msra.mxu0 %v6305
    %6307 = vmatprep.subr.mxu0 0.0
    %v6308 = vand.u32 %v6124, 4294901760
    %v6309 = vsub.f32 %v6124, %v6308
    %6310 = vmatpush1.msra.mxu0 %v6309
    %6311 = vmatprep.subr.mxu0 0.0
    %v6312 = vand.u32 %v6125, 4294901760
    %v6313 = vsub.f32 %v6125, %v6312
    %6314 = vmatpush1.msra.mxu0 %v6313
    %6315 = vmatprep.subr.mxu0 0.0
    %6316 = vmatpush1.msra.mxu0 0.0
    %6317 = vmatprep.subr.mxu0 0.0
    %6318 = vmatpush1.msra.mxu0 0.0
    %6319 = vmatprep.subr.mxu0 0.0
    %6320 = vmatpush1.msra.mxu0 0.0
    %6321 = vmatprep.subr.mxu0 0.0
    %6322 = vmatpush1.msra.mxu0 0.0
    %6323 = vmatprep.subr.mxu0 0.0
    %6324 = vmatpush1.msra.mxu0 0.0
    %6325 = vmatprep.subr.mxu0 0.0
    %6326 = vmatpush1.msra.mxu0 0.0
    %6327 = vmatprep.subr.mxu0 0.0
    %6328 = vmatpush1.msra.mxu0 0.0
    %6329 = vmatprep.subr.mxu0 0.0
    %6330 = vmatpush1.msra.mxu0 0.0
    %6331 = vmatprep.subr.mxu0 0.0
    %6332 = vmatpush1.msra.mxu0 0.0
    %6333 = vmatprep.subr.mxu0 0.0
    %6334 = vmatpush1.msra.mxu0 0.0
    %6335 = vmatprep.subr.mxu0 0.0
    %6336 = vmatpush1.msra.mxu0 0.0
    %6337 = vmatprep.subr.mxu0 0.0
    %6338 = vmatpush1.msra.mxu0 0.0
    %6339 = vmatprep.subr.mxu0 0.0
    %6340 = vmatpush1.msra.mxu0 0.0
    %6341 = vmatprep.subr.mxu0 0.0
    %6342 = vmatpush1.msra.mxu0 0.0
    %6343 = vmatprep.subr.mxu0 0.0
    %6344 = vmatpush1.msra.mxu0 0.0
    %6345 = vmatprep.subr.mxu0 0.0
    %6346 = vmatpush1.msra.mxu0 0.0
    %6347 = vmatprep.subr.mxu0 0.0
    %6348 = vmatpush1.msra.mxu0 0.0
    %6349 = vmatprep.subr.mxu0 0.0
    %6350 = vmatpush1.msra.mxu0 0.0
    %6351 = vmatprep.subr.mxu0 0.0
    %6352 = vmatpush1.msra.mxu0 0.0
    %6353 = vmatprep.subr.mxu0 0.0
    %6354 = vmatpush1.msra.mxu0 0.0
    %6355 = vmatprep.subr.mxu0 0.0
    %6356 = vmatpush1.msra.mxu0 0.0
    %6357 = vmatprep.subr.mxu0 0.0
    %6358 = vmatpush1.msra.mxu0 0.0
    %6359 = vmatprep.subr.mxu0 0.0
    %6360 = vmatpush1.msra.mxu0 0.0
    %6361 = vmatprep.subr.mxu0 0.0
    %6362 = vmatpush1.msra.mxu0 0.0
    %6363 = vmatprep.subr.mxu0 0.0
    %6364 = vmatpush1.msra.mxu0 0.0
    %6365 = vmatprep.subr.mxu0 0.0
    %6366 = vmatpush1.msra.mxu0 0.0
    %6367 = vmatprep.subr.mxu0 0.0
    %6368 = vmatpush1.msra.mxu0 0.0
    %6369 = vmatprep.subr.mxu0 0.0
    %6370 = vmatpush1.msra.mxu0 0.0
    %6371 = vmatprep.mubr.f32.mxu0 0.0
    %v6372 = vand.u32 %v6127, 4294901760
    %v6373 = vsub.f32 %v6127, %v6372
    %6374 = vmatmul.mubr.f32.gmra.mrb[0].mxu0 %v6373
    %v6375 = vpop.f32.mrb[0].mxu0
    %v6376 = vadd.f32 %v6296, %v6375
    %v6377 = vpop.f32.mrb[0].mxu0
    %6378 = vdwg.mxu0
    %6379 = vmatprep.subr.mxu0 0.0
    %v6380 = vand.u32 %v6122, 4294901760
    %6381 = vmatpush1.msra.mxu0 %v6380
    %6382 = vmatprep.subr.mxu0 0.0
    %v6383 = vand.u32 %v6123, 4294901760
    %6384 = vmatpush1.msra.mxu0 %v6383
    %6385 = vmatprep.subr.mxu0 0.0
    %v6386 = vand.u32 %v6124, 4294901760
    %6387 = vmatpush1.msra.mxu0 %v6386
    %6388 = vmatprep.subr.mxu0 0.0
    %v6389 = vand.u32 %v6125, 4294901760
    %6390 = vmatpush1.msra.mxu0 %v6389
    %6391 = vmatprep.subr.mxu0 0.0
    %6392 = vmatpush1.msra.mxu0 0.0
    %6393 = vmatprep.subr.mxu0 0.0
    %6394 = vmatpush1.msra.mxu0 0.0
    %6395 = vmatprep.subr.mxu0 0.0
    %6396 = vmatpush1.msra.mxu0 0.0
    %6397 = vmatprep.subr.mxu0 0.0
    %6398 = vmatpush1.msra.mxu0 0.0
    %6399 = vmatprep.subr.mxu0 0.0
    %6400 = vmatpush1.msra.mxu0 0.0
    %6401 = vmatprep.subr.mxu0 0.0
    %6402 = vmatpush1.msra.mxu0 0.0
    %6403 = vmatprep.subr.mxu0 0.0
    %6404 = vmatpush1.msra.mxu0 0.0
    %6405 = vmatprep.subr.mxu0 0.0
    %6406 = vmatpush1.msra.mxu0 0.0
    %6407 = vmatprep.subr.mxu0 0.0
    %6408 = vmatpush1.msra.mxu0 0.0
    %6409 = vmatprep.subr.mxu0 0.0
    %6410 = vmatpush1.msra.mxu0 0.0
    %6411 = vmatprep.subr.mxu0 0.0
    %6412 = vmatpush1.msra.mxu0 0.0
    %6413 = vmatprep.subr.mxu0 0.0
    %6414 = vmatpush1.msra.mxu0 0.0
    %6415 = vmatprep.subr.mxu0 0.0
    %6416 = vmatpush1.msra.mxu0 0.0
    %6417 = vmatprep.subr.mxu0 0.0
    %6418 = vmatpush1.msra.mxu0 0.0
    %6419 = vmatprep.subr.mxu0 0.0
    %6420 = vmatpush1.msra.mxu0 0.0
    %6421 = vmatprep.subr.mxu0 0.0
    %6422 = vmatpush1.msra.mxu0 0.0
    %6423 = vmatprep.subr.mxu0 0.0
    %6424 = vmatpush1.msra.mxu0 0.0
    %6425 = vmatprep.subr.mxu0 0.0
    %6426 = vmatpush1.msra.mxu0 0.0
    %6427 = vmatprep.subr.mxu0 0.0
    %6428 = vmatpush1.msra.mxu0 0.0
    %6429 = vmatprep.subr.mxu0 0.0
    %6430 = vmatpush1.msra.mxu0 0.0
    %6431 = vmatprep.subr.mxu0 0.0
    %6432 = vmatpush1.msra.mxu0 0.0
    %6433 = vmatprep.subr.mxu0 0.0
    %6434 = vmatpush1.msra.mxu0 0.0
    %6435 = vmatprep.subr.mxu0 0.0
    %6436 = vmatpush1.msra.mxu0 0.0
    %6437 = vmatprep.subr.mxu0 0.0
    %6438 = vmatpush1.msra.mxu0 0.0
    %6439 = vmatprep.subr.mxu0 0.0
    %6440 = vmatpush1.msra.mxu0 0.0
    %6441 = vmatprep.subr.mxu0 0.0
    %6442 = vmatpush1.msra.mxu0 0.0
    %6443 = vmatprep.subr.mxu0 0.0
    %6444 = vmatpush1.msra.mxu0 0.0
    %6445 = vmatprep.subr.mxu0 0.0
    %6446 = vmatpush1.msra.mxu0 0.0
    %6447 = vmatprep.mubr.f32.mxu0 0.0
    %v6448 = vand.u32 %v6127, 4294901760
    %v6449 = vsub.f32 %v6127, %v6448
    %v6450 = vand.u32 %v6449, 4294901760
    %6451 = vmatmul.mubr.f32.gmra.mrb[0].mxu0 %v6450
    %v6452 = vpop.f32.mrb[0].mxu0
    %v6453 = vadd.f32 %v6376, %v6452
    %v6454 = vpop.f32.mrb[0].mxu0
    %6455 = vdwg.mxu0
    %6456 = vmatprep.subr.mxu0 0.0
    %v6457 = vand.u32 %v6122, 4294901760
    %v6458 = vsub.f32 %v6122, %v6457
    %v6459 = vand.u32 %v6458, 4294901760
    %6460 = vmatpush1.msra.mxu0 %v6459
    %6461 = vmatprep.subr.mxu0 0.0
    %v6462 = vand.u32 %v6123, 4294901760
    %v6463 = vsub.f32 %v6123, %v6462
    %v6464 = vand.u32 %v6463, 4294901760
    %6465 = vmatpush1.msra.mxu0 %v6464
    %6466 = vmatprep.subr.mxu0 0.0
    %v6467 = vand.u32 %v6124, 4294901760
    %v6468 = vsub.f32 %v6124, %v6467
    %v6469 = vand.u32 %v6468, 4294901760
    %6470 = vmatpush1.msra.mxu0 %v6469
    %6471 = vmatprep.subr.mxu0 0.0
    %v6472 = vand.u32 %v6125, 4294901760
    %v6473 = vsub.f32 %v6125, %v6472
    %v6474 = vand.u32 %v6473, 4294901760
    %6475 = vmatpush1.msra.mxu0 %v6474
    %6476 = vmatprep.subr.mxu0 0.0
    %6477 = vmatpush1.msra.mxu0 0.0
    %6478 = vmatprep.subr.mxu0 0.0
    %6479 = vmatpush1.msra.mxu0 0.0
    %6480 = vmatprep.subr.mxu0 0.0
    %6481 = vmatpush1.msra.mxu0 0.0
    %6482 = vmatprep.subr.mxu0 0.0
    %6483 = vmatpush1.msra.mxu0 0.0
    %6484 = vmatprep.subr.mxu0 0.0
    %6485 = vmatpush1.msra.mxu0 0.0
    %6486 = vmatprep.subr.mxu0 0.0
    %6487 = vmatpush1.msra.mxu0 0.0
    %6488 = vmatprep.subr.mxu0 0.0
    %6489 = vmatpush1.msra.mxu0 0.0
    %6490 = vmatprep.subr.mxu0 0.0
    %6491 = vmatpush1.msra.mxu0 0.0
    %6492 = vmatprep.subr.mxu0 0.0
    %6493 = vmatpush1.msra.mxu0 0.0
    %6494 = vmatprep.subr.mxu0 0.0
    %6495 = vmatpush1.msra.mxu0 0.0
    %6496 = vmatprep.subr.mxu0 0.0
    %6497 = vmatpush1.msra.mxu0 0.0
    %6498 = vmatprep.subr.mxu0 0.0
    %6499 = vmatpush1.msra.mxu0 0.0
    %6500 = vmatprep.subr.mxu0 0.0
    %6501 = vmatpush1.msra.mxu0 0.0
    %6502 = vmatprep.subr.mxu0 0.0
    %6503 = vmatpush1.msra.mxu0 0.0
    %6504 = vmatprep.subr.mxu0 0.0
    %6505 = vmatpush1.msra.mxu0 0.0
    %6506 = vmatprep.subr.mxu0 0.0
    %6507 = vmatpush1.msra.mxu0 0.0
    %6508 = vmatprep.subr.mxu0 0.0
    %6509 = vmatpush1.msra.mxu0 0.0
    %6510 = vmatprep.subr.mxu0 0.0
    %6511 = vmatpush1.msra.mxu0 0.0
    %6512 = vmatprep.subr.mxu0 0.0
    %6513 = vmatpush1.msra.mxu0 0.0
    %6514 = vmatprep.subr.mxu0 0.0
    %6515 = vmatpush1.msra.mxu0 0.0
    %6516 = vmatprep.subr.mxu0 0.0
    %6517 = vmatpush1.msra.mxu0 0.0
    %6518 = vmatprep.subr.mxu0 0.0
    %6519 = vmatpush1.msra.mxu0 0.0
    %6520 = vmatprep.subr.mxu0 0.0
    %6521 = vmatpush1.msra.mxu0 0.0
    %6522 = vmatprep.subr.mxu0 0.0
    %6523 = vmatpush1.msra.mxu0 0.0
    %6524 = vmatprep.subr.mxu0 0.0
    %6525 = vmatpush1.msra.mxu0 0.0
    %6526 = vmatprep.subr.mxu0 0.0
    %6527 = vmatpush1.msra.mxu0 0.0
    %6528 = vmatprep.subr.mxu0 0.0
    %6529 = vmatpush1.msra.mxu0 0.0
    %6530 = vmatprep.subr.mxu0 0.0
    %6531 = vmatpush1.msra.mxu0 0.0
    %6532 = vmatprep.mubr.f32.mxu0 0.0
    %v6533 = vand.u32 %v6127, 4294901760
    %6534 = vmatmul.mubr.f32.gmra.mrb[0].mxu0 %v6533
    %v6535 = vpop.f32.mrb[0].mxu0
    %v6536 = vadd.f32 %v6453, %v6535
    %v6537 = vpop.f32.mrb[0].mxu0
    %6538 = vdwg.mxu0
    %6539 = vmatprep.subr.mxu0 0.0
    %v6540 = vand.u32 %v6122, 4294901760
    %6541 = vmatpush1.msra.mxu0 %v6540
    %6542 = vmatprep.subr.mxu0 0.0
    %v6543 = vand.u32 %v6123, 4294901760
    %6544 = vmatpush1.msra.mxu0 %v6543
    %6545 = vmatprep.subr.mxu0 0.0
    %v6546 = vand.u32 %v6124, 4294901760
    %6547 = vmatpush1.msra.mxu0 %v6546
    %6548 = vmatprep.subr.mxu0 0.0
    %v6549 = vand.u32 %v6125, 4294901760
    %6550 = vmatpush1.msra.mxu0 %v6549
    %6551 = vmatprep.subr.mxu0 0.0
    %6552 = vmatpush1.msra.mxu0 0.0
    %6553 = vmatprep.subr.mxu0 0.0
    %6554 = vmatpush1.msra.mxu0 0.0
    %6555 = vmatprep.subr.mxu0 0.0
    %6556 = vmatpush1.msra.mxu0 0.0
    %6557 = vmatprep.subr.mxu0 0.0
    %6558 = vmatpush1.msra.mxu0 0.0
    %6559 = vmatprep.subr.mxu0 0.0
    %6560 = vmatpush1.msra.mxu0 0.0
    %6561 = vmatprep.subr.mxu0 0.0
    %6562 = vmatpush1.msra.mxu0 0.0
    %6563 = vmatprep.subr.mxu0 0.0
    %6564 = vmatpush1.msra.mxu0 0.0
    %6565 = vmatprep.subr.mxu0 0.0
    %6566 = vmatpush1.msra.mxu0 0.0
    %6567 = vmatprep.subr.mxu0 0.0
    %6568 = vmatpush1.msra.mxu0 0.0
    %6569 = vmatprep.subr.mxu0 0.0
    %6570 = vmatpush1.msra.mxu0 0.0
    %6571 = vmatprep.subr.mxu0 0.0
    %6572 = vmatpush1.msra.mxu0 0.0
    %6573 = vmatprep.subr.mxu0 0.0
    %6574 = vmatpush1.msra.mxu0 0.0
    %6575 = vmatprep.subr.mxu0 0.0
    %6576 = vmatpush1.msra.mxu0 0.0
    %6577 = vmatprep.subr.mxu0 0.0
    %6578 = vmatpush1.msra.mxu0 0.0
    %6579 = vmatprep.subr.mxu0 0.0
    %6580 = vmatpush1.msra.mxu0 0.0
    %6581 = vmatprep.subr.mxu0 0.0
    %6582 = vmatpush1.msra.mxu0 0.0
    %6583 = vmatprep.subr.mxu0 0.0
    %6584 = vmatpush1.msra.mxu0 0.0
    %6585 = vmatprep.subr.mxu0 0.0
    %6586 = vmatpush1.msra.mxu0 0.0
    %6587 = vmatprep.subr.mxu0 0.0
    %6588 = vmatpush1.msra.mxu0 0.0
    %6589 = vmatprep.subr.mxu0 0.0
    %6590 = vmatpush1.msra.mxu0 0.0
    %6591 = vmatprep.subr.mxu0 0.0
    %6592 = vmatpush1.msra.mxu0 0.0
    %6593 = vmatprep.subr.mxu0 0.0
    %6594 = vmatpush1.msra.mxu0 0.0
    %6595 = vmatprep.subr.mxu0 0.0
    %6596 = vmatpush1.msra.mxu0 0.0
    %6597 = vmatprep.subr.mxu0 0.0
    %6598 = vmatpush1.msra.mxu0 0.0
    %6599 = vmatprep.subr.mxu0 0.0
    %6600 = vmatpush1.msra.mxu0 0.0
    %6601 = vmatprep.subr.mxu0 0.0
    %6602 = vmatpush1.msra.mxu0 0.0
    %6603 = vmatprep.subr.mxu0 0.0
    %6604 = vmatpush1.msra.mxu0 0.0
    %6605 = vmatprep.subr.mxu0 0.0
    %6606 = vmatpush1.msra.mxu0 0.0
    %6607 = vmatprep.mubr.f32.mxu0 0.0
    %v6608 = vand.u32 %v6127, 4294901760
    %6609 = vmatmul.mubr.f32.gmra.mrb[0].mxu0 %v6608
    %v6610 = vpop.f32.mrb[0].mxu0
    %v6611 = vadd.f32 %v6536, %v6610
    %v6612 = vpop.f32.mrb[0].mxu0
    %6613 = vdwg.mxu0
    %v6614 = vlaneseq
    %v6615 = vshrl.u32 %v6614, 7
    %v6616 = vsub.s32 0, %v6615
    %v6617 = vrot.slane %v6121, %v6616
    %v6618 = vmul.f32 %v6108, %v6617
    %v6619 = vsel %vm6109, %v6618, 0.0
    %6620 = vadd.xlane.f32.xlu0 %v6619
    %v6621 = vpop.xlane.xlu0 %6620
    %v6622 = vmul.f32 %v6113, %v6611
    %v6623 = vmul.f32 %v6114, %v6611
    %v6624 = vmul.f32 %v6115, %v6611
    %v6625 = vmul.f32 %v6116, %v6611
    %v6626 = vmul.f32 %v6117, %v6611
    %v6627 = vmul.f32 %v6118, %v6611
    %v6628 = vmul.f32 %v6119, %v6611
    %v6629 = vmul.f32 %v6120, %v6611
    %v6630 = vsel %vm6109, %v6622, 0.0
    %6631 = vadd.xlane.f32.xlu0 %v6630
    %v6632 = vpop.xlane.xlu0 %6631
    %v6633 = vsel %vm6109, %v6623, 0.0
    %6634 = vadd.xlane.f32.xlu0 %v6633
    %v6635 = vpop.xlane.xlu0 %6634
    %v6636 = vsel %vm6109, %v6624, 0.0
    %6637 = vadd.xlane.f32.xlu0 %v6636
    %v6638 = vpop.xlane.xlu0 %6637
    %v6639 = vsel %vm6109, %v6625, 0.0
    %6640 = vadd.xlane.f32.xlu0 %v6639
    %v6641 = vpop.xlane.xlu0 %6640
    %v6642 = vsel %vm6109, %v6626, 0.0
    %6643 = vadd.xlane.f32.xlu0 %v6642
    %v6644 = vpop.xlane.xlu0 %6643
    %v6645 = vsel %vm6109, %v6627, 0.0
    %6646 = vadd.xlane.f32.xlu0 %v6645
    %v6647 = vpop.xlane.xlu0 %6646
    %v6648 = vsel %vm6109, %v6628, 0.0
    %6649 = vadd.xlane.f32.xlu0 %v6648
    %v6650 = vpop.xlane.xlu0 %6649
    %v6651 = vsel %vm6109, %v6629, 0.0
    %6652 = vadd.xlane.f32.xlu0 %v6651
    %v6653 = vpop.xlane.xlu0 %6652
    %v6662 = vlaneseq
    %v6663 = vand.u32 %v6662, 127
    %v6664 = vlaneseq
    %v6665 = vshrl.u32 %v6664, 7
    %v6666 = vsub.s32 %v6663, %v6665
    %v6667 = vrot.slane %v6632, %v6666
    %v6668 = vlaneseq
    %v6669 = vshrl.u32 %v6668, 7
    %v6670 = vsub.s32 %v6663, %v6669
    %v6671 = vrot.slane %v6635, %v6670
    %v6672 = vlaneseq
    %v6673 = vshrl.u32 %v6672, 7
    %v6674 = vsub.s32 %v6663, %v6673
    %v6675 = vrot.slane %v6638, %v6674
    %v6676 = vlaneseq
    %v6677 = vshrl.u32 %v6676, 7
    %v6678 = vsub.s32 %v6663, %v6677
    %v6679 = vrot.slane %v6641, %v6678
    %v6680 = vlaneseq
    %v6681 = vshrl.u32 %v6680, 7
    %v6682 = vsub.s32 %v6663, %v6681
    %v6683 = vrot.slane %v6644, %v6682
    %v6684 = vlaneseq
    %v6685 = vshrl.u32 %v6684, 7
    %v6686 = vsub.s32 %v6663, %v6685
    %v6687 = vrot.slane %v6647, %v6686
    %v6688 = vlaneseq
    %v6689 = vshrl.u32 %v6688, 7
    %v6690 = vsub.s32 %v6663, %v6689
    %v6691 = vrot.slane %v6650, %v6690
    %v6692 = vlaneseq
    %v6693 = vshrl.u32 %v6692, 7
    %v6694 = vsub.s32 %v6663, %v6693
    %v6695 = vrot.slane %v6653, %v6694
    %vm6696 = vcmask 1041409
    %v6697 = vsel %vm6696, %v6671, %v6667
    %vm6698 = vcmask 1042434
    %v6699 = vsel %vm6698, %v6675, %v6697
    %vm6700 = vcmask 1043459
    %v6701 = vsel %vm6700, %v6679, %v6699
    %vm6702 = vcmask 1044484
    %v6703 = vsel %vm6702, %v6683, %v6701
    %vm6704 = vcmask 1045509
    %v6705 = vsel %vm6704, %v6687, %v6703
    %vm6706 = vcmask 1046534
    %v6707 = vsel %vm6706, %v6691, %v6705
    %vm6708 = vcmask 1047559
    %v6709 = vsel %vm6708, %v6695, %v6707
    %6711 = vxpose.xlu0.b32.start [1/16] %v6709, 128
    %6712 = vxpose.xlu0.b32.cont [2/16] 0.0, 128
    %6713 = vxpose.xlu0.b32.cont [3/16] 0.0, 128
    %6714 = vxpose.xlu0.b32.cont [4/16] 0.0, 128
    %6715 = vxpose.xlu0.b32.cont [5/16] 0.0, 128
    %6716 = vxpose.xlu0.b32.cont [6/16] 0.0, 128
    %6717 = vxpose.xlu0.b32.cont [7/16] 0.0, 128
    %6718 = vxpose.xlu0.b32.cont [8/16] 0.0, 128
    %6719 = vxpose.xlu0.b32.cont [9/16] 0.0, 128
    %6720 = vxpose.xlu0.b32.cont [10/16] 0.0, 128
    %6721 = vxpose.xlu0.b32.cont [11/16] 0.0, 128
    %6722 = vxpose.xlu0.b32.cont [12/16] 0.0, 128
    %6723 = vxpose.xlu0.b32.cont [13/16] 0.0, 128
    %6724 = vxpose.xlu0.b32.cont [14/16] 0.0, 128
    %6725 = vxpose.xlu0.b32.cont [15/16] 0.0, 128
    %6726 = vxpose.xlu0.b32.end [16/16] 0.0, 128
    %v6727 = vpop.trf.xlu0
    %v6728 = vpop.trf.xlu0
    %v6729 = vpop.trf.xlu0
    %v6730 = vpop.trf.xlu0
    %v6731 = vpop.trf.xlu0
    %v6732 = vpop.trf.xlu0
    %v6733 = vpop.trf.xlu0
    %v6734 = vpop.trf.xlu0
    %v6735 = vpop.trf.xlu0
    %v6736 = vpop.trf.xlu0
    %v6737 = vpop.trf.xlu0
    %v6738 = vpop.trf.xlu0
    %v6739 = vpop.trf.xlu0
    %v6740 = vpop.trf.xlu0
    %v6741 = vpop.trf.xlu0
    %v6742 = vpop.trf.xlu0
    %v6743 = vadd.f32 %v6727, %v6621
    %vm6744 = vcmp.ne.f32.partialorder %v6743, 0.0
    %v6745 = vsel %vm6744, 1, 0
    %v6746 = vcvt.s32.f32 %v6745
    %vm6747 = vcmask 58368
    %v6748 = vsel %vm6747, %v6743, -inf
    %6749 = vmax.xlane.f32.xlu0 %v6748
    %v6750 = vpop.xlane.xlu0 %6749
    %v6751 = vsub.f32 %v6743, %v6750
    %v6752 = vmul.f32 %v6751, 1.442695
    %v6753 = vpow.pop %v6752
    %v6754 = vmul.f32 %v6753, %v6746
    %v6755 = vsel %vm6747, %v6754, 0.0
    %6756 = vadd.xlane.f32.xlu0 %v6755
    %v6757 = vpop.xlane.xlu0 %6756
    %v6758 = vrcp.pop %v6757
    %v6759 = vmul.f32 %v6754, %v6758
    %6760 = vst.msk [vmem:[#allocation8] sm:$0x3] %vm6747, %v6759
    %6761 = vxpose.xlu0.b32.start [1/16] %v6759, 128
    %6762 = vxpose.xlu0.b32.cont [2/16] 0.0, 128
    %6763 = vxpose.xlu0.b32.cont [3/16] 0.0, 128
    %6764 = vxpose.xlu0.b32.cont [4/16] 0.0, 128
    %6765 = vxpose.xlu0.b32.cont [5/16] 0.0, 128
    %6766 = vxpose.xlu0.b32.cont [6/16] 0.0, 128
    %6767 = vxpose.xlu0.b32.cont [7/16] 0.0, 128
    %6768 = vxpose.xlu0.b32.cont [8/16] 0.0, 128
    %6769 = vxpose.xlu0.b32.cont [9/16] 0.0, 128
    %6770 = vxpose.xlu0.b32.cont [10/16] 0.0, 128
    %6771 = vxpose.xlu0.b32.cont [11/16] 0.0, 128
    %6772 = vxpose.xlu0.b32.cont [12/16] 0.0, 128
    %6773 = vxpose.xlu0.b32.cont [13/16] 0.0, 128
    %6774 = vxpose.xlu0.b32.cont [14/16] 0.0, 128
    %6775 = vxpose.xlu0.b32.cont [15/16] 0.0, 128
    %6776 = vxpose.xlu0.b32.end [16/16] 0.0, 128
    %v6777 = vpop.trf.xlu0
    %v6778 = vpop.trf.xlu0
    %v6779 = vpop.trf.xlu0
    %v6780 = vpop.trf.xlu0
    %v6781 = vpop.trf.xlu0
    %v6782 = vpop.trf.xlu0
    %v6783 = vpop.trf.xlu0
    %v6784 = vpop.trf.xlu0
    %v6785 = vpop.trf.xlu0
    %v6786 = vpop.trf.xlu0
    %v6787 = vpop.trf.xlu0
    %v6788 = vpop.trf.xlu0
    %v6789 = vpop.trf.xlu0
    %v6790 = vpop.trf.xlu0
    %v6791 = vpop.trf.xlu0
    %v6792 = vpop.trf.xlu0
    %v6793 = vlaneseq
    %v6794 = vshrl.u32 %v6793, 7
    %v6795 = vsub.s32 0, %v6794
    %v6796 = vrot.slane %v6777, %v6795
    %6798 = vbcast.lane.b32.xlu0 %v6796, 256
    %v6799 = vpop.permute.xlu0 %6798
    %v6800 = vlaneseq
    %v6801 = vshrl.u32 %v6800, 7
    %v6802 = vsub.s32 1, %v6801
    %v6803 = vrot.slane %v6777, %v6802
    %6805 = vbcast.lane.b32.xlu0 %v6803, 256
    %v6806 = vpop.permute.xlu0 %6805
    %v6807 = vlaneseq
    %v6808 = vshrl.u32 %v6807, 7
    %v6809 = vsub.s32 2, %v6808
    %v6810 = vrot.slane %v6777, %v6809
    %6812 = vbcast.lane.b32.xlu0 %v6810, 256
    %v6813 = vpop.permute.xlu0 %6812
    %v6814 = vlaneseq
    %v6815 = vshrl.u32 %v6814, 7
    %v6816 = vsub.s32 3, %v6815
    %v6817 = vrot.slane %v6777, %v6816
    %6819 = vbcast.lane.b32.xlu0 %v6817, 256
    %v6820 = vpop.permute.xlu0 %6819
    %v6821 = vlaneseq
    %v6822 = vshrl.u32 %v6821, 7
    %v6823 = vsub.s32 4, %v6822
    %v6824 = vrot.slane %v6777, %v6823
    %6826 = vbcast.lane.b32.xlu0 %v6824, 256
    %v6827 = vpop.permute.xlu0 %6826
    %v6828 = vlaneseq
    %v6829 = vshrl.u32 %v6828, 7
    %v6830 = vsub.s32 5, %v6829
    %v6831 = vrot.slane %v6777, %v6830
    %6833 = vbcast.lane.b32.xlu0 %v6831, 256
    %v6834 = vpop.permute.xlu0 %6833
    %v6835 = vlaneseq
    %v6836 = vshrl.u32 %v6835, 7
    %v6837 = vsub.s32 6, %v6836
    %v6838 = vrot.slane %v6777, %v6837
    %6840 = vbcast.lane.b32.xlu0 %v6838, 256
    %v6841 = vpop.permute.xlu0 %6840
    %v6842 = vlaneseq
    %v6843 = vshrl.u32 %v6842, 7
    %v6844 = vsub.s32 7, %v6843
    %v6845 = vrot.slane %v6777, %v6844
    %6847 = vbcast.lane.b32.xlu0 %v6845, 256
    %v6848 = vpop.permute.xlu0 %6847
    %v6849 = vmul.f32 %v6113, %v6799
    %v6850 = vmul.f32 %v6114, %v6806
    %v6851 = vmul.f32 %v6115, %v6813
    %v6852 = vmul.f32 %v6116, %v6820
    %v6853 = vmul.f32 %v6117, %v6827
    %v6854 = vmul.f32 %v6118, %v6834
    %v6855 = vmul.f32 %v6119, %v6841
    %v6856 = vmul.f32 %v6120, %v6848
    %v6857 = vsel %vm6109, %v6849, 0.0
    %v6858 = vsel %vm6109, %v6850, 0.0
    %v6859 = vadd.f32 %v6857, %v6858
    %v6860 = vsel %vm6109, %v6851, 0.0
    %v6861 = vadd.f32 %v6859, %v6860
    %v6862 = vsel %vm6109, %v6852, 0.0
    %v6863 = vadd.f32 %v6861, %v6862
    %v6864 = vsel %vm6109, %v6853, 0.0
    %v6865 = vadd.f32 %v6863, %v6864
    %v6866 = vsel %vm6109, %v6854, 0.0
    %v6867 = vadd.f32 %v6865, %v6866
    %v6868 = vsel %vm6109, %v6855, 0.0
    %v6869 = vadd.f32 %v6867, %v6868
    %v6870 = vsel %vm6109, %v6856, 0.0
    %v6871 = vadd.f32 %v6869, %v6870
    %s6872 = scalar_lea.vmem %s6, 32
    %v6873 = vld [vmem:[%s6872] sm:$0xff]
    %v6874 = vld [vmem:[%s6872 + $0x8] sm:$0xff]
    %v6875 = vld [vmem:[%s6872 + $0x10] sm:$0xff]
    %v6876 = vld [vmem:[%s6872 + $0x18] sm:$0xff]
    %s6877 = scalar_lea.vmem %s6, 64
    %v6878 = vld [vmem:[%s6877] sm:$0xff]
    %v6879 = vld [vmem:[%s6877 + $0x8] sm:$0xff]
    %v6880 = vld [vmem:[%s6877 + $0x10] sm:$0xff]
    %v6881 = vld [vmem:[%s6877 + $0x18] sm:$0xff]
    %6882 = vmatprep.subr.mxu0 0.0
    %v6883 = vand.u32 %v6878, 4294901760
    %6884 = vmatpush1.msra.mxu0 %v6883
    %6885 = vmatprep.subr.mxu0 0.0
    %v6886 = vand.u32 %v6879, 4294901760
    %6887 = vmatpush1.msra.mxu0 %v6886
    %6888 = vmatprep.subr.mxu0 0.0
    %v6889 = vand.u32 %v6880, 4294901760
    %6890 = vmatpush1.msra.mxu0 %v6889
    %6891 = vmatprep.subr.mxu0 0.0
    %v6892 = vand.u32 %v6881, 4294901760
    %6893 = vmatpush1.msra.mxu0 %v6892
    %6894 = vmatprep.subr.mxu0 0.0
    %6895 = vmatpush1.msra.mxu0 0.0
    %6896 = vmatprep.subr.mxu0 0.0
    %6897 = vmatpush1.msra.mxu0 0.0
    %6898 = vmatprep.subr.mxu0 0.0
    %6899 = vmatpush1.msra.mxu0 0.0
    %6900 = vmatprep.subr.mxu0 0.0
    %6901 = vmatpush1.msra.mxu0 0.0
    %6902 = vmatprep.subr.mxu0 0.0
    %6903 = vmatpush1.msra.mxu0 0.0
    %6904 = vmatprep.subr.mxu0 0.0
    %6905 = vmatpush1.msra.mxu0 0.0
    %6906 = vmatprep.subr.mxu0 0.0
    %6907 = vmatpush1.msra.mxu0 0.0
    %6908 = vmatprep.subr.mxu0 0.0
    %6909 = vmatpush1.msra.mxu0 0.0
    %6910 = vmatprep.subr.mxu0 0.0
    %6911 = vmatpush1.msra.mxu0 0.0
    %6912 = vmatprep.subr.mxu0 0.0
    %6913 = vmatpush1.msra.mxu0 0.0
    %6914 = vmatprep.subr.mxu0 0.0
    %6915 = vmatpush1.msra.mxu0 0.0
    %6916 = vmatprep.subr.mxu0 0.0
    %6917 = vmatpush1.msra.mxu0 0.0
    %6918 = vmatprep.subr.mxu0 0.0
    %6919 = vmatpush1.msra.mxu0 0.0
    %6920 = vmatprep.subr.mxu0 0.0
    %6921 = vmatpush1.msra.mxu0 0.0
    %6922 = vmatprep.subr.mxu0 0.0
    %6923 = vmatpush1.msra.mxu0 0.0
    %6924 = vmatprep.subr.mxu0 0.0
    %6925 = vmatpush1.msra.mxu0 0.0
    %6926 = vmatprep.subr.mxu0 0.0
    %6927 = vmatpush1.msra.mxu0 0.0
    %6928 = vmatprep.subr.mxu0 0.0
    %6929 = vmatpush1.msra.mxu0 0.0
    %6930 = vmatprep.subr.mxu0 0.0
    %6931 = vmatpush1.msra.mxu0 0.0
    %6932 = vmatprep.subr.mxu0 0.0
    %6933 = vmatpush1.msra.mxu0 0.0
    %6934 = vmatprep.subr.mxu0 0.0
    %6935 = vmatpush1.msra.mxu0 0.0
    %6936 = vmatprep.subr.mxu0 0.0
    %6937 = vmatpush1.msra.mxu0 0.0
    %6938 = vmatprep.subr.mxu0 0.0
    %6939 = vmatpush1.msra.mxu0 0.0
    %6940 = vmatprep.subr.mxu0 0.0
    %6941 = vmatpush1.msra.mxu0 0.0
    %6942 = vmatprep.subr.mxu0 0.0
    %6943 = vmatpush1.msra.mxu0 0.0
    %6944 = vmatprep.subr.mxu0 0.0
    %6945 = vmatpush1.msra.mxu0 0.0
    %6946 = vmatprep.subr.mxu0 0.0
    %6947 = vmatpush1.msra.mxu0 0.0
    %6948 = vmatprep.subr.mxu0 0.0
    %6949 = vmatpush1.msra.mxu0 0.0
    %6950 = vmatprep.mubr.f32.mxu0 0.0
    %v6951 = vand.u32 %v6127, 4294901760
    %v6952 = vsub.f32 %v6127, %v6951
    %v6953 = vand.u32 %v6952, 4294901760
    %v6954 = vsub.f32 %v6952, %v6953
    %v6955 = vand.u32 %v6954, 4294901760
    %6956 = vmatmul.mubr.f32.gmra.mrb[0].mxu0 %v6955
    %v6957 = vpop.f32.mrb[0].mxu0
    %v6958 = vadd.f32 0.0, %v6957
    %v6959 = vpop.f32.mrb[0].mxu0
    %6960 = vdwg.mxu0
    %6961 = vmatprep.subr.mxu0 0.0
    %v6962 = vand.u32 %v6878, 4294901760
    %v6963 = vsub.f32 %v6878, %v6962
    %v6964 = vand.u32 %v6963, 4294901760
    %v6965 = vsub.f32 %v6963, %v6964
    %v6966 = vand.u32 %v6965, 4294901760
    %6967 = vmatpush1.msra.mxu0 %v6966
    %6968 = vmatprep.subr.mxu0 0.0
    %v6969 = vand.u32 %v6879, 4294901760
    %v6970 = vsub.f32 %v6879, %v6969
    %v6971 = vand.u32 %v6970, 4294901760
    %v6972 = vsub.f32 %v6970, %v6971
    %v6973 = vand.u32 %v6972, 4294901760
    %6974 = vmatpush1.msra.mxu0 %v6973
    %6975 = vmatprep.subr.mxu0 0.0
    %v6976 = vand.u32 %v6880, 4294901760
    %v6977 = vsub.f32 %v6880, %v6976
    %v6978 = vand.u32 %v6977, 4294901760
    %v6979 = vsub.f32 %v6977, %v6978
    %v6980 = vand.u32 %v6979, 4294901760
    %6981 = vmatpush1.msra.mxu0 %v6980
    %6982 = vmatprep.subr.mxu0 0.0
    %v6983 = vand.u32 %v6881, 4294901760
    %v6984 = vsub.f32 %v6881, %v6983
    %v6985 = vand.u32 %v6984, 4294901760
    %v6986 = vsub.f32 %v6984, %v6985
    %v6987 = vand.u32 %v6986, 4294901760
    %6988 = vmatpush1.msra.mxu0 %v6987
    %6989 = vmatprep.subr.mxu0 0.0
    %6990 = vmatpush1.msra.mxu0 0.0
    %6991 = vmatprep.subr.mxu0 0.0
    %6992 = vmatpush1.msra.mxu0 0.0
    %6993 = vmatprep.subr.mxu0 0.0
    %6994 = vmatpush1.msra.mxu0 0.0
    %6995 = vmatprep.subr.mxu0 0.0
    %6996 = vmatpush1.msra.mxu0 0.0
    %6997 = vmatprep.subr.mxu0 0.0
    %6998 = vmatpush1.msra.mxu0 0.0
    %6999 = vmatprep.subr.mxu0 0.0
    %7000 = vmatpush1.msra.mxu0 0.0
    %7001 = vmatprep.subr.mxu0 0.0
    %7002 = vmatpush1.msra.mxu0 0.0
    %7003 = vmatprep.subr.mxu0 0.0
    %7004 = vmatpush1.msra.mxu0 0.0
    %7005 = vmatprep.subr.mxu0 0.0
    %7006 = vmatpush1.msra.mxu0 0.0
    %7007 = vmatprep.subr.mxu0 0.0
    %7008 = vmatpush1.msra.mxu0 0.0
    %7009 = vmatprep.subr.mxu0 0.0
    %7010 = vmatpush1.msra.mxu0 0.0
    %7011 = vmatprep.subr.mxu0 0.0
    %7012 = vmatpush1.msra.mxu0 0.0
    %7013 = vmatprep.subr.mxu0 0.0
    %7014 = vmatpush1.msra.mxu0 0.0
    %7015 = vmatprep.subr.mxu0 0.0
    %7016 = vmatpush1.msra.mxu0 0.0
    %7017 = vmatprep.subr.mxu0 0.0
    %7018 = vmatpush1.msra.mxu0 0.0
    %7019 = vmatprep.subr.mxu0 0.0
    %7020 = vmatpush1.msra.mxu0 0.0
    %7021 = vmatprep.subr.mxu0 0.0
    %7022 = vmatpush1.msra.mxu0 0.0
    %7023 = vmatprep.subr.mxu0 0.0
    %7024 = vmatpush1.msra.mxu0 0.0
    %7025 = vmatprep.subr.mxu0 0.0
    %7026 = vmatpush1.msra.mxu0 0.0
    %7027 = vmatprep.subr.mxu0 0.0
    %7028 = vmatpush1.msra.mxu0 0.0
    %7029 = vmatprep.subr.mxu0 0.0
    %7030 = vmatpush1.msra.mxu0 0.0
    %7031 = vmatprep.subr.mxu0 0.0
    %7032 = vmatpush1.msra.mxu0 0.0
    %7033 = vmatprep.subr.mxu0 0.0
    %7034 = vmatpush1.msra.mxu0 0.0
    %7035 = vmatprep.subr.mxu0 0.0
    %7036 = vmatpush1.msra.mxu0 0.0
    %7037 = vmatprep.subr.mxu0 0.0
    %7038 = vmatpush1.msra.mxu0 0.0
    %7039 = vmatprep.subr.mxu0 0.0
    %7040 = vmatpush1.msra.mxu0 0.0
    %7041 = vmatprep.subr.mxu0 0.0
    %7042 = vmatpush1.msra.mxu0 0.0
    %7043 = vmatprep.subr.mxu0 0.0
    %7044 = vmatpush1.msra.mxu0 0.0
    %7045 = vmatprep.mubr.f32.mxu0 0.0
    %v7046 = vand.u32 %v6127, 4294901760
    %7047 = vmatmul.mubr.f32.gmra.mrb[0].mxu0 %v7046
    %v7048 = vpop.f32.mrb[0].mxu0
    %v7049 = vadd.f32 %v6958, %v7048
    %v7050 = vpop.f32.mrb[0].mxu0
    %7051 = vdwg.mxu0
    %7052 = vmatprep.subr.mxu0 0.0
    %v7053 = vand.u32 %v6878, 4294901760
    %v7054 = vsub.f32 %v6878, %v7053
    %7055 = vmatpush1.msra.mxu0 %v7054
    %7056 = vmatprep.subr.mxu0 0.0
    %v7057 = vand.u32 %v6879, 4294901760
    %v7058 = vsub.f32 %v6879, %v7057
    %7059 = vmatpush1.msra.mxu0 %v7058
    %7060 = vmatprep.subr.mxu0 0.0
    %v7061 = vand.u32 %v6880, 4294901760
    %v7062 = vsub.f32 %v6880, %v7061
    %7063 = vmatpush1.msra.mxu0 %v7062
    %7064 = vmatprep.subr.mxu0 0.0
    %v7065 = vand.u32 %v6881, 4294901760
    %v7066 = vsub.f32 %v6881, %v7065
    %7067 = vmatpush1.msra.mxu0 %v7066
    %7068 = vmatprep.subr.mxu0 0.0
    %7069 = vmatpush1.msra.mxu0 0.0
    %7070 = vmatprep.subr.mxu0 0.0
    %7071 = vmatpush1.msra.mxu0 0.0
    %7072 = vmatprep.subr.mxu0 0.0
    %7073 = vmatpush1.msra.mxu0 0.0
    %7074 = vmatprep.subr.mxu0 0.0
    %7075 = vmatpush1.msra.mxu0 0.0
    %7076 = vmatprep.subr.mxu0 0.0
    %7077 = vmatpush1.msra.mxu0 0.0
    %7078 = vmatprep.subr.mxu0 0.0
    %7079 = vmatpush1.msra.mxu0 0.0
    %7080 = vmatprep.subr.mxu0 0.0
    %7081 = vmatpush1.msra.mxu0 0.0
    %7082 = vmatprep.subr.mxu0 0.0
    %7083 = vmatpush1.msra.mxu0 0.0
    %7084 = vmatprep.subr.mxu0 0.0
    %7085 = vmatpush1.msra.mxu0 0.0
    %7086 = vmatprep.subr.mxu0 0.0
    %7087 = vmatpush1.msra.mxu0 0.0
    %7088 = vmatprep.subr.mxu0 0.0
    %7089 = vmatpush1.msra.mxu0 0.0
    %7090 = vmatprep.subr.mxu0 0.0
    %7091 = vmatpush1.msra.mxu0 0.0
    %7092 = vmatprep.subr.mxu0 0.0
    %7093 = vmatpush1.msra.mxu0 0.0
    %7094 = vmatprep.subr.mxu0 0.0
    %7095 = vmatpush1.msra.mxu0 0.0
    %7096 = vmatprep.subr.mxu0 0.0
    %7097 = vmatpush1.msra.mxu0 0.0
    %7098 = vmatprep.subr.mxu0 0.0
    %7099 = vmatpush1.msra.mxu0 0.0
    %7100 = vmatprep.subr.mxu0 0.0
    %7101 = vmatpush1.msra.mxu0 0.0
    %7102 = vmatprep.subr.mxu0 0.0
    %7103 = vmatpush1.msra.mxu0 0.0
    %7104 = vmatprep.subr.mxu0 0.0
    %7105 = vmatpush1.msra.mxu0 0.0
    %7106 = vmatprep.subr.mxu0 0.0
    %7107 = vmatpush1.msra.mxu0 0.0
    %7108 = vmatprep.subr.mxu0 0.0
    %7109 = vmatpush1.msra.mxu0 0.0
    %7110 = vmatprep.subr.mxu0 0.0
    %7111 = vmatpush1.msra.mxu0 0.0
    %7112 = vmatprep.subr.mxu0 0.0
    %7113 = vmatpush1.msra.mxu0 0.0
    %7114 = vmatprep.subr.mxu0 0.0
    %7115 = vmatpush1.msra.mxu0 0.0
    %7116 = vmatprep.subr.mxu0 0.0
    %7117 = vmatpush1.msra.mxu0 0.0
    %7118 = vmatprep.subr.mxu0 0.0
    %7119 = vmatpush1.msra.mxu0 0.0
    %7120 = vmatprep.subr.mxu0 0.0
    %7121 = vmatpush1.msra.mxu0 0.0
    %7122 = vmatprep.subr.mxu0 0.0
    %7123 = vmatpush1.msra.mxu0 0.0
    %7124 = vmatprep.mubr.f32.mxu0 0.0
    %v7125 = vand.u32 %v6127, 4294901760
    %v7126 = vsub.f32 %v6127, %v7125
    %7127 = vmatmul.mubr.f32.gmra.mrb[0].mxu0 %v7126
    %v7128 = vpop.f32.mrb[0].mxu0
    %v7129 = vadd.f32 %v7049, %v7128
    %v7130 = vpop.f32.mrb[0].mxu0
    %7131 = vdwg.mxu0
    %7132 = vmatprep.subr.mxu0 0.0
    %v7133 = vand.u32 %v6878, 4294901760
    %7134 = vmatpush1.msra.mxu0 %v7133
    %7135 = vmatprep.subr.mxu0 0.0
    %v7136 = vand.u32 %v6879, 4294901760
    %7137 = vmatpush1.msra.mxu0 %v7136
    %7138 = vmatprep.subr.mxu0 0.0
    %v7139 = vand.u32 %v6880, 4294901760
    %7140 = vmatpush1.msra.mxu0 %v7139
    %7141 = vmatprep.subr.mxu0 0.0
    %v7142 = vand.u32 %v6881, 4294901760
    %7143 = vmatpush1.msra.mxu0 %v7142
    %7144 = vmatprep.subr.mxu0 0.0
    %7145 = vmatpush1.msra.mxu0 0.0
    %7146 = vmatprep.subr.mxu0 0.0
    %7147 = vmatpush1.msra.mxu0 0.0
    %7148 = vmatprep.subr.mxu0 0.0
    %7149 = vmatpush1.msra.mxu0 0.0
    %7150 = vmatprep.subr.mxu0 0.0
    %7151 = vmatpush1.msra.mxu0 0.0
    %7152 = vmatprep.subr.mxu0 0.0
    %7153 = vmatpush1.msra.mxu0 0.0
    %7154 = vmatprep.subr.mxu0 0.0
    %7155 = vmatpush1.msra.mxu0 0.0
    %7156 = vmatprep.subr.mxu0 0.0
    %7157 = vmatpush1.msra.mxu0 0.0
    %7158 = vmatprep.subr.mxu0 0.0
    %7159 = vmatpush1.msra.mxu0 0.0
    %7160 = vmatprep.subr.mxu0 0.0
    %7161 = vmatpush1.msra.mxu0 0.0
    %7162 = vmatprep.subr.mxu0 0.0
    %7163 = vmatpush1.msra.mxu0 0.0
    %7164 = vmatprep.subr.mxu0 0.0
    %7165 = vmatpush1.msra.mxu0 0.0
    %7166 = vmatprep.subr.mxu0 0.0
    %7167 = vmatpush1.msra.mxu0 0.0
    %7168 = vmatprep.subr.mxu0 0.0
    %7169 = vmatpush1.msra.mxu0 0.0
    %7170 = vmatprep.subr.mxu0 0.0
    %7171 = vmatpush1.msra.mxu0 0.0
    %7172 = vmatprep.subr.mxu0 0.0
    %7173 = vmatpush1.msra.mxu0 0.0
    %7174 = vmatprep.subr.mxu0 0.0
    %7175 = vmatpush1.msra.mxu0 0.0
    %7176 = vmatprep.subr.mxu0 0.0
    %7177 = vmatpush1.msra.mxu0 0.0
    %7178 = vmatprep.subr.mxu0 0.0
    %7179 = vmatpush1.msra.mxu0 0.0
    %7180 = vmatprep.subr.mxu0 0.0
    %7181 = vmatpush1.msra.mxu0 0.0
    %7182 = vmatprep.subr.mxu0 0.0
    %7183 = vmatpush1.msra.mxu0 0.0
    %7184 = vmatprep.subr.mxu0 0.0
    %7185 = vmatpush1.msra.mxu0 0.0
    %7186 = vmatprep.subr.mxu0 0.0
    %7187 = vmatpush1.msra.mxu0 0.0
    %7188 = vmatprep.subr.mxu0 0.0
    %7189 = vmatpush1.msra.mxu0 0.0
    %7190 = vmatprep.subr.mxu0 0.0
    %7191 = vmatpush1.msra.mxu0 0.0
    %7192 = vmatprep.subr.mxu0 0.0
    %7193 = vmatpush1.msra.mxu0 0.0
    %7194 = vmatprep.subr.mxu0 0.0
    %7195 = vmatpush1.msra.mxu0 0.0
    %7196 = vmatprep.subr.mxu0 0.0
    %7197 = vmatpush1.msra.mxu0 0.0
    %7198 = vmatprep.subr.mxu0 0.0
    %7199 = vmatpush1.msra.mxu0 0.0
    %7200 = vmatprep.mubr.f32.mxu0 0.0
    %v7201 = vand.u32 %v6127, 4294901760
    %v7202 = vsub.f32 %v6127, %v7201
    %v7203 = vand.u32 %v7202, 4294901760
    %7204 = vmatmul.mubr.f32.gmra.mrb[0].mxu0 %v7203
    %v7205 = vpop.f32.mrb[0].mxu0
    %v7206 = vadd.f32 %v7129, %v7205
    %v7207 = vpop.f32.mrb[0].mxu0
    %7208 = vdwg.mxu0
    %7209 = vmatprep.subr.mxu0 0.0
    %v7210 = vand.u32 %v6878, 4294901760
    %v7211 = vsub.f32 %v6878, %v7210
    %v7212 = vand.u32 %v7211, 4294901760
    %7213 = vmatpush1.msra.mxu0 %v7212
    %7214 = vmatprep.subr.mxu0 0.0
    %v7215 = vand.u32 %v6879, 4294901760
    %v7216 = vsub.f32 %v6879, %v7215
    %v7217 = vand.u32 %v7216, 4294901760
    %7218 = vmatpush1.msra.mxu0 %v7217
    %7219 = vmatprep.subr.mxu0 0.0
    %v7220 = vand.u32 %v6880, 4294901760
    %v7221 = vsub.f32 %v6880, %v7220
    %v7222 = vand.u32 %v7221, 4294901760
    %7223 = vmatpush1.msra.mxu0 %v7222
    %7224 = vmatprep.subr.mxu0 0.0
    %v7225 = vand.u32 %v6881, 4294901760
    %v7226 = vsub.f32 %v6881, %v7225
    %v7227 = vand.u32 %v7226, 4294901760
    %7228 = vmatpush1.msra.mxu0 %v7227
    %7229 = vmatprep.subr.mxu0 0.0
    %7230 = vmatpush1.msra.mxu0 0.0
    %7231 = vmatprep.subr.mxu0 0.0
    %7232 = vmatpush1.msra.mxu0 0.0
    %7233 = vmatprep.subr.mxu0 0.0
    %7234 = vmatpush1.msra.mxu0 0.0
    %7235 = vmatprep.subr.mxu0 0.0
    %7236 = vmatpush1.msra.mxu0 0.0
    %7237 = vmatprep.subr.mxu0 0.0
    %7238 = vmatpush1.msra.mxu0 0.0
    %7239 = vmatprep.subr.mxu0 0.0
    %7240 = vmatpush1.msra.mxu0 0.0
    %7241 = vmatprep.subr.mxu0 0.0
    %7242 = vmatpush1.msra.mxu0 0.0
    %7243 = vmatprep.subr.mxu0 0.0
    %7244 = vmatpush1.msra.mxu0 0.0
    %7245 = vmatprep.subr.mxu0 0.0
    %7246 = vmatpush1.msra.mxu0 0.0
    %7247 = vmatprep.subr.mxu0 0.0
    %7248 = vmatpush1.msra.mxu0 0.0
    %7249 = vmatprep.subr.mxu0 0.0
    %7250 = vmatpush1.msra.mxu0 0.0
    %7251 = vmatprep.subr.mxu0 0.0
    %7252 = vmatpush1.msra.mxu0 0.0
    %7253 = vmatprep.subr.mxu0 0.0
    %7254 = vmatpush1.msra.mxu0 0.0
    %7255 = vmatprep.subr.mxu0 0.0
    %7256 = vmatpush1.msra.mxu0 0.0
    %7257 = vmatprep.subr.mxu0 0.0
    %7258 = vmatpush1.msra.mxu0 0.0
    %7259 = vmatprep.subr.mxu0 0.0
    %7260 = vmatpush1.msra.mxu0 0.0
    %7261 = vmatprep.subr.mxu0 0.0
    %7262 = vmatpush1.msra.mxu0 0.0
    %7263 = vmatprep.subr.mxu0 0.0
    %7264 = vmatpush1.msra.mxu0 0.0
    %7265 = vmatprep.subr.mxu0 0.0
    %7266 = vmatpush1.msra.mxu0 0.0
    %7267 = vmatprep.subr.mxu0 0.0
    %7268 = vmatpush1.msra.mxu0 0.0
    %7269 = vmatprep.subr.mxu0 0.0
    %7270 = vmatpush1.msra.mxu0 0.0
    %7271 = vmatprep.subr.mxu0 0.0
    %7272 = vmatpush1.msra.mxu0 0.0
    %7273 = vmatprep.subr.mxu0 0.0
    %7274 = vmatpush1.msra.mxu0 0.0
    %7275 = vmatprep.subr.mxu0 0.0
    %7276 = vmatpush1.msra.mxu0 0.0
    %7277 = vmatprep.subr.mxu0 0.0
    %7278 = vmatpush1.msra.mxu0 0.0
    %7279 = vmatprep.subr.mxu0 0.0
    %7280 = vmatpush1.msra.mxu0 0.0
    %7281 = vmatprep.subr.mxu0 0.0
    %7282 = vmatpush1.msra.mxu0 0.0
    %7283 = vmatprep.subr.mxu0 0.0
    %7284 = vmatpush1.msra.mxu0 0.0
    %7285 = vmatprep.mubr.f32.mxu0 0.0
    %v7286 = vand.u32 %v6127, 4294901760
    %7287 = vmatmul.mubr.f32.gmra.mrb[0].mxu0 %v7286
    %v7288 = vpop.f32.mrb[0].mxu0
    %v7289 = vadd.f32 %v7206, %v7288
    %v7290 = vpop.f32.mrb[0].mxu0
    %7291 = vdwg.mxu0
    %7292 = vmatprep.subr.mxu0 0.0
    %v7293 = vand.u32 %v6878, 4294901760
    %7294 = vmatpush1.msra.mxu0 %v7293
    %7295 = vmatprep.subr.mxu0 0.0
    %v7296 = vand.u32 %v6879, 4294901760
    %7297 = vmatpush1.msra.mxu0 %v7296
    %7298 = vmatprep.subr.mxu0 0.0
    %v7299 = vand.u32 %v6880, 4294901760
    %7300 = vmatpush1.msra.mxu0 %v7299
    %7301 = vmatprep.subr.mxu0 0.0
    %v7302 = vand.u32 %v6881, 4294901760
    %7303 = vmatpush1.msra.mxu0 %v7302
    %7304 = vmatprep.subr.mxu0 0.0
    %7305 = vmatpush1.msra.mxu0 0.0
    %7306 = vmatprep.subr.mxu0 0.0
    %7307 = vmatpush1.msra.mxu0 0.0
    %7308 = vmatprep.subr.mxu0 0.0
    %7309 = vmatpush1.msra.mxu0 0.0
    %7310 = vmatprep.subr.mxu0 0.0
    %7311 = vmatpush1.msra.mxu0 0.0
    %7312 = vmatprep.subr.mxu0 0.0
    %7313 = vmatpush1.msra.mxu0 0.0
    %7314 = vmatprep.subr.mxu0 0.0
    %7315 = vmatpush1.msra.mxu0 0.0
    %7316 = vmatprep.subr.mxu0 0.0
    %7317 = vmatpush1.msra.mxu0 0.0
    %7318 = vmatprep.subr.mxu0 0.0
    %7319 = vmatpush1.msra.mxu0 0.0
    %7320 = vmatprep.subr.mxu0 0.0
    %7321 = vmatpush1.msra.mxu0 0.0
    %7322 = vmatprep.subr.mxu0 0.0
    %7323 = vmatpush1.msra.mxu0 0.0
    %7324 = vmatprep.subr.mxu0 0.0
    %7325 = vmatpush1.msra.mxu0 0.0
    %7326 = vmatprep.subr.mxu0 0.0
    %7327 = vmatpush1.msra.mxu0 0.0
    %7328 = vmatprep.subr.mxu0 0.0
    %7329 = vmatpush1.msra.mxu0 0.0
    %7330 = vmatprep.subr.mxu0 0.0
    %7331 = vmatpush1.msra.mxu0 0.0
    %7332 = vmatprep.subr.mxu0 0.0
    %7333 = vmatpush1.msra.mxu0 0.0
    %7334 = vmatprep.subr.mxu0 0.0
    %7335 = vmatpush1.msra.mxu0 0.0
    %7336 = vmatprep.subr.mxu0 0.0
    %7337 = vmatpush1.msra.mxu0 0.0
    %7338 = vmatprep.subr.mxu0 0.0
    %7339 = vmatpush1.msra.mxu0 0.0
    %7340 = vmatprep.subr.mxu0 0.0
    %7341 = vmatpush1.msra.mxu0 0.0
    %7342 = vmatprep.subr.mxu0 0.0
    %7343 = vmatpush1.msra.mxu0 0.0
    %7344 = vmatprep.subr.mxu0 0.0
    %7345 = vmatpush1.msra.mxu0 0.0
    %7346 = vmatprep.subr.mxu0 0.0
    %7347 = vmatpush1.msra.mxu0 0.0
    %7348 = vmatprep.subr.mxu0 0.0
    %7349 = vmatpush1.msra.mxu0 0.0
    %7350 = vmatprep.subr.mxu0 0.0
    %7351 = vmatpush1.msra.mxu0 0.0
    %7352 = vmatprep.subr.mxu0 0.0
    %7353 = vmatpush1.msra.mxu0 0.0
    %7354 = vmatprep.subr.mxu0 0.0
    %7355 = vmatpush1.msra.mxu0 0.0
    %7356 = vmatprep.subr.mxu0 0.0
    %7357 = vmatpush1.msra.mxu0 0.0
    %7358 = vmatprep.subr.mxu0 0.0
    %7359 = vmatpush1.msra.mxu0 0.0
    %7360 = vmatprep.mubr.f32.mxu0 0.0
    %v7361 = vand.u32 %v6127, 4294901760
    %7362 = vmatmul.mubr.f32.gmra.mrb[0].mxu0 %v7361
    %v7363 = vpop.f32.mrb[0].mxu0
    %v7364 = vadd.f32 %v7289, %v7363
    %v7365 = vpop.f32.mrb[0].mxu0
    %7366 = vdwg.mxu0
    %v7368 = vsel %vm93, %v6871, 0
    %7370 = vmatprep.subr.mxu0 0.0
    %v7371 = vand.u32 %v6873, 4294901760
    %7372 = vmatpush1.msra.mxu0 %v7371
    %7373 = vmatprep.subr.mxu0 0.0
    %v7374 = vand.u32 %v6874, 4294901760
    %7375 = vmatpush1.msra.mxu0 %v7374
    %7376 = vmatprep.subr.mxu0 0.0
    %v7377 = vand.u32 %v6875, 4294901760
    %7378 = vmatpush1.msra.mxu0 %v7377
    %7379 = vmatprep.subr.mxu0 0.0
    %v7380 = vand.u32 %v6876, 4294901760
    %7381 = vmatpush1.msra.mxu0 %v7380
    %7382 = vmatprep.subr.mxu0 0.0
    %7383 = vmatpush1.msra.mxu0 0.0
    %7384 = vmatprep.subr.mxu0 0.0
    %7385 = vmatpush1.msra.mxu0 0.0
    %7386 = vmatprep.subr.mxu0 0.0
    %7387 = vmatpush1.msra.mxu0 0.0
    %7388 = vmatprep.subr.mxu0 0.0
    %7389 = vmatpush1.msra.mxu0 0.0
    %7390 = vmatprep.subr.mxu0 0.0
    %7391 = vmatpush1.msra.mxu0 0.0
    %7392 = vmatprep.subr.mxu0 0.0
    %7393 = vmatpush1.msra.mxu0 0.0
    %7394 = vmatprep.subr.mxu0 0.0
    %7395 = vmatpush1.msra.mxu0 0.0
    %7396 = vmatprep.subr.mxu0 0.0
    %7397 = vmatpush1.msra.mxu0 0.0
    %7398 = vmatprep.subr.mxu0 0.0
    %7399 = vmatpush1.msra.mxu0 0.0
    %7400 = vmatprep.subr.mxu0 0.0
    %7401 = vmatpush1.msra.mxu0 0.0
    %7402 = vmatprep.subr.mxu0 0.0
    %7403 = vmatpush1.msra.mxu0 0.0
    %7404 = vmatprep.subr.mxu0 0.0
    %7405 = vmatpush1.msra.mxu0 0.0
    %7406 = vmatprep.subr.mxu0 0.0
    %7407 = vmatpush1.msra.mxu0 0.0
    %7408 = vmatprep.subr.mxu0 0.0
    %7409 = vmatpush1.msra.mxu0 0.0
    %7410 = vmatprep.subr.mxu0 0.0
    %7411 = vmatpush1.msra.mxu0 0.0
    %7412 = vmatprep.subr.mxu0 0.0
    %7413 = vmatpush1.msra.mxu0 0.0
    %7414 = vmatprep.subr.mxu0 0.0
    %7415 = vmatpush1.msra.mxu0 0.0
    %7416 = vmatprep.subr.mxu0 0.0
    %7417 = vmatpush1.msra.mxu0 0.0
    %7418 = vmatprep.subr.mxu0 0.0
    %7419 = vmatpush1.msra.mxu0 0.0
    %7420 = vmatprep.subr.mxu0 0.0
    %7421 = vmatpush1.msra.mxu0 0.0
    %7422 = vmatprep.subr.mxu0 0.0
    %7423 = vmatpush1.msra.mxu0 0.0
    %7424 = vmatprep.subr.mxu0 0.0
    %7425 = vmatpush1.msra.mxu0 0.0
    %7426 = vmatprep.subr.mxu0 0.0
    %7427 = vmatpush1.msra.mxu0 0.0
    %7428 = vmatprep.subr.mxu0 0.0
    %7429 = vmatpush1.msra.mxu0 0.0
    %7430 = vmatprep.subr.mxu0 0.0
    %7431 = vmatpush1.msra.mxu0 0.0
    %7432 = vmatprep.subr.mxu0 0.0
    %7433 = vmatpush1.msra.mxu0 0.0
    %7434 = vmatprep.subr.mxu0 0.0
    %7435 = vmatpush1.msra.mxu0 0.0
    %7436 = vmatprep.subr.mxu0 0.0
    %7437 = vmatpush1.msra.mxu0 0.0
    %7438 = vmatprep.mubr.f32.mxu0 0.0
    %v7439 = vand.u32 %v7368, 4294901760
    %v7440 = vsub.f32 %v7368, %v7439
    %v7441 = vand.u32 %v7440, 4294901760
    %v7442 = vsub.f32 %v7440, %v7441
    %v7443 = vand.u32 %v7442, 4294901760
    %7444 = vmatmul.mubr.f32.gmra.mrb[0].mxu0 %v7443
    %v7445 = vpop.f32.mrb[0].mxu0
    %v7446 = vadd.f32 %v7364, %v7445
    %v7447 = vpop.f32.mrb[0].mxu0
    %7448 = vdwg.mxu0
    %7449 = vmatprep.subr.mxu0 0.0
    %v7450 = vand.u32 %v6873, 4294901760
    %v7451 = vsub.f32 %v6873, %v7450
    %v7452 = vand.u32 %v7451, 4294901760
    %v7453 = vsub.f32 %v7451, %v7452
    %v7454 = vand.u32 %v7453, 4294901760
    %7455 = vmatpush1.msra.mxu0 %v7454
    %7456 = vmatprep.subr.mxu0 0.0
    %v7457 = vand.u32 %v6874, 4294901760
    %v7458 = vsub.f32 %v6874, %v7457
    %v7459 = vand.u32 %v7458, 4294901760
    %v7460 = vsub.f32 %v7458, %v7459
    %v7461 = vand.u32 %v7460, 4294901760
    %7462 = vmatpush1.msra.mxu0 %v7461
    %7463 = vmatprep.subr.mxu0 0.0
    %v7464 = vand.u32 %v6875, 4294901760
    %v7465 = vsub.f32 %v6875, %v7464
    %v7466 = vand.u32 %v7465, 4294901760
    %v7467 = vsub.f32 %v7465, %v7466
    %v7468 = vand.u32 %v7467, 4294901760
    %7469 = vmatpush1.msra.mxu0 %v7468
    %7470 = vmatprep.subr.mxu0 0.0
    %v7471 = vand.u32 %v6876, 4294901760
    %v7472 = vsub.f32 %v6876, %v7471
    %v7473 = vand.u32 %v7472, 4294901760
    %v7474 = vsub.f32 %v7472, %v7473
    %v7475 = vand.u32 %v7474, 4294901760
    %7476 = vmatpush1.msra.mxu0 %v7475
    %7477 = vmatprep.subr.mxu0 0.0
    %7478 = vmatpush1.msra.mxu0 0.0
    %7479 = vmatprep.subr.mxu0 0.0
    %7480 = vmatpush1.msra.mxu0 0.0
    %7481 = vmatprep.subr.mxu0 0.0
    %7482 = vmatpush1.msra.mxu0 0.0
    %7483 = vmatprep.subr.mxu0 0.0
    %7484 = vmatpush1.msra.mxu0 0.0
    %7485 = vmatprep.subr.mxu0 0.0
    %7486 = vmatpush1.msra.mxu0 0.0
    %7487 = vmatprep.subr.mxu0 0.0
    %7488 = vmatpush1.msra.mxu0 0.0
    %7489 = vmatprep.subr.mxu0 0.0
    %7490 = vmatpush1.msra.mxu0 0.0
    %7491 = vmatprep.subr.mxu0 0.0
    %7492 = vmatpush1.msra.mxu0 0.0
    %7493 = vmatprep.subr.mxu0 0.0
    %7494 = vmatpush1.msra.mxu0 0.0
    %7495 = vmatprep.subr.mxu0 0.0
    %7496 = vmatpush1.msra.mxu0 0.0
    %7497 = vmatprep.subr.mxu0 0.0
    %7498 = vmatpush1.msra.mxu0 0.0
    %7499 = vmatprep.subr.mxu0 0.0
    %7500 = vmatpush1.msra.mxu0 0.0
    %7501 = vmatprep.subr.mxu0 0.0
    %7502 = vmatpush1.msra.mxu0 0.0
    %7503 = vmatprep.subr.mxu0 0.0
    %7504 = vmatpush1.msra.mxu0 0.0
    %7505 = vmatprep.subr.mxu0 0.0
    %7506 = vmatpush1.msra.mxu0 0.0
    %7507 = vmatprep.subr.mxu0 0.0
    %7508 = vmatpush1.msra.mxu0 0.0
    %7509 = vmatprep.subr.mxu0 0.0
    %7510 = vmatpush1.msra.mxu0 0.0
    %7511 = vmatprep.subr.mxu0 0.0
    %7512 = vmatpush1.msra.mxu0 0.0
    %7513 = vmatprep.subr.mxu0 0.0
    %7514 = vmatpush1.msra.mxu0 0.0
    %7515 = vmatprep.subr.mxu0 0.0
    %7516 = vmatpush1.msra.mxu0 0.0
    %7517 = vmatprep.subr.mxu0 0.0
    %7518 = vmatpush1.msra.mxu0 0.0
    %7519 = vmatprep.subr.mxu0 0.0
    %7520 = vmatpush1.msra.mxu0 0.0
    %7521 = vmatprep.subr.mxu0 0.0
    %7522 = vmatpush1.msra.mxu0 0.0
    %7523 = vmatprep.subr.mxu0 0.0
    %7524 = vmatpush1.msra.mxu0 0.0
    %7525 = vmatprep.subr.mxu0 0.0
    %7526 = vmatpush1.msra.mxu0 0.0
    %7527 = vmatprep.subr.mxu0 0.0
    %7528 = vmatpush1.msra.mxu0 0.0
    %7529 = vmatprep.subr.mxu0 0.0
    %7530 = vmatpush1.msra.mxu0 0.0
    %7531 = vmatprep.subr.mxu0 0.0
    %7532 = vmatpush1.msra.mxu0 0.0
    %7533 = vmatprep.mubr.f32.mxu0 0.0
    %v7534 = vand.u32 %v7368, 4294901760
    %7535 = vmatmul.mubr.f32.gmra.mrb[0].mxu0 %v7534
    %v7536 = vpop.f32.mrb[0].mxu0
    %v7537 = vadd.f32 %v7446, %v7536
    %v7538 = vpop.f32.mrb[0].mxu0
    %7539 = vdwg.mxu0
    %7540 = vmatprep.subr.mxu0 0.0
    %v7541 = vand.u32 %v6873, 4294901760
    %v7542 = vsub.f32 %v6873, %v7541
    %7543 = vmatpush1.msra.mxu0 %v7542
    %7544 = vmatprep.subr.mxu0 0.0
    %v7545 = vand.u32 %v6874, 4294901760
    %v7546 = vsub.f32 %v6874, %v7545
    %7547 = vmatpush1.msra.mxu0 %v7546
    %7548 = vmatprep.subr.mxu0 0.0
    %v7549 = vand.u32 %v6875, 4294901760
    %v7550 = vsub.f32 %v6875, %v7549
    %7551 = vmatpush1.msra.mxu0 %v7550
    %7552 = vmatprep.subr.mxu0 0.0
    %v7553 = vand.u32 %v6876, 4294901760
    %v7554 = vsub.f32 %v6876, %v7553
    %7555 = vmatpush1.msra.mxu0 %v7554
    %7556 = vmatprep.subr.mxu0 0.0
    %7557 = vmatpush1.msra.mxu0 0.0
    %7558 = vmatprep.subr.mxu0 0.0
    %7559 = vmatpush1.msra.mxu0 0.0
    %7560 = vmatprep.subr.mxu0 0.0
    %7561 = vmatpush1.msra.mxu0 0.0
    %7562 = vmatprep.subr.mxu0 0.0
    %7563 = vmatpush1.msra.mxu0 0.0
    %7564 = vmatprep.subr.mxu0 0.0
    %7565 = vmatpush1.msra.mxu0 0.0
    %7566 = vmatprep.subr.mxu0 0.0
    %7567 = vmatpush1.msra.mxu0 0.0
    %7568 = vmatprep.subr.mxu0 0.0
    %7569 = vmatpush1.msra.mxu0 0.0
    %7570 = vmatprep.subr.mxu0 0.0
    %7571 = vmatpush1.msra.mxu0 0.0
    %7572 = vmatprep.subr.mxu0 0.0
    %7573 = vmatpush1.msra.mxu0 0.0
    %7574 = vmatprep.subr.mxu0 0.0
    %7575 = vmatpush1.msra.mxu0 0.0
    %7576 = vmatprep.subr.mxu0 0.0
    %7577 = vmatpush1.msra.mxu0 0.0
    %7578 = vmatprep.subr.mxu0 0.0
    %7579 = vmatpush1.msra.mxu0 0.0
    %7580 = vmatprep.subr.mxu0 0.0
    %7581 = vmatpush1.msra.mxu0 0.0
    %7582 = vmatprep.subr.mxu0 0.0
    %7583 = vmatpush1.msra.mxu0 0.0
    %7584 = vmatprep.subr.mxu0 0.0
    %7585 = vmatpush1.msra.mxu0 0.0
    %7586 = vmatprep.subr.mxu0 0.0
    %7587 = vmatpush1.msra.mxu0 0.0
    %7588 = vmatprep.subr.mxu0 0.0
    %7589 = vmatpush1.msra.mxu0 0.0
    %7590 = vmatprep.subr.mxu0 0.0
    %7591 = vmatpush1.msra.mxu0 0.0
    %7592 = vmatprep.subr.mxu0 0.0
    %7593 = vmatpush1.msra.mxu0 0.0
    %7594 = vmatprep.subr.mxu0 0.0
    %7595 = vmatpush1.msra.mxu0 0.0
    %7596 = vmatprep.subr.mxu0 0.0
    %7597 = vmatpush1.msra.mxu0 0.0
    %7598 = vmatprep.subr.mxu0 0.0
    %7599 = vmatpush1.msra.mxu0 0.0
    %7600 = vmatprep.subr.mxu0 0.0
    %7601 = vmatpush1.msra.mxu0 0.0
    %7602 = vmatprep.subr.mxu0 0.0
    %7603 = vmatpush1.msra.mxu0 0.0
    %7604 = vmatprep.subr.mxu0 0.0
    %7605 = vmatpush1.msra.mxu0 0.0
    %7606 = vmatprep.subr.mxu0 0.0
    %7607 = vmatpush1.msra.mxu0 0.0
    %7608 = vmatprep.subr.mxu0 0.0
    %7609 = vmatpush1.msra.mxu0 0.0
    %7610 = vmatprep.subr.mxu0 0.0
    %7611 = vmatpush1.msra.mxu0 0.0
    %7612 = vmatprep.mubr.f32.mxu0 0.0
    %v7613 = vand.u32 %v7368, 4294901760
    %v7614 = vsub.f32 %v7368, %v7613
    %7615 = vmatmul.mubr.f32.gmra.mrb[0].mxu0 %v7614
    %v7616 = vpop.f32.mrb[0].mxu0
    %v7617 = vadd.f32 %v7537, %v7616
    %v7618 = vpop.f32.mrb[0].mxu0
    %7619 = vdwg.mxu0
    %7620 = vmatprep.subr.mxu0 0.0
    %v7621 = vand.u32 %v6873, 4294901760
    %7622 = vmatpush1.msra.mxu0 %v7621
    %7623 = vmatprep.subr.mxu0 0.0
    %v7624 = vand.u32 %v6874, 4294901760
    %7625 = vmatpush1.msra.mxu0 %v7624
    %7626 = vmatprep.subr.mxu0 0.0
    %v7627 = vand.u32 %v6875, 4294901760
    %7628 = vmatpush1.msra.mxu0 %v7627
    %7629 = vmatprep.subr.mxu0 0.0
    %v7630 = vand.u32 %v6876, 4294901760
    %7631 = vmatpush1.msra.mxu0 %v7630
    %7632 = vmatprep.subr.mxu0 0.0
    %7633 = vmatpush1.msra.mxu0 0.0
    %7634 = vmatprep.subr.mxu0 0.0
    %7635 = vmatpush1.msra.mxu0 0.0
    %7636 = vmatprep.subr.mxu0 0.0
    %7637 = vmatpush1.msra.mxu0 0.0
    %7638 = vmatprep.subr.mxu0 0.0
    %7639 = vmatpush1.msra.mxu0 0.0
    %7640 = vmatprep.subr.mxu0 0.0
    %7641 = vmatpush1.msra.mxu0 0.0
    %7642 = vmatprep.subr.mxu0 0.0
    %7643 = vmatpush1.msra.mxu0 0.0
    %7644 = vmatprep.subr.mxu0 0.0
    %7645 = vmatpush1.msra.mxu0 0.0
    %7646 = vmatprep.subr.mxu0 0.0
    %7647 = vmatpush1.msra.mxu0 0.0
    %7648 = vmatprep.subr.mxu0 0.0
    %7649 = vmatpush1.msra.mxu0 0.0
    %7650 = vmatprep.subr.mxu0 0.0
    %7651 = vmatpush1.msra.mxu0 0.0
    %7652 = vmatprep.subr.mxu0 0.0
    %7653 = vmatpush1.msra.mxu0 0.0
    %7654 = vmatprep.subr.mxu0 0.0
    %7655 = vmatpush1.msra.mxu0 0.0
    %7656 = vmatprep.subr.mxu0 0.0
    %7657 = vmatpush1.msra.mxu0 0.0
    %7658 = vmatprep.subr.mxu0 0.0
    %7659 = vmatpush1.msra.mxu0 0.0
    %7660 = vmatprep.subr.mxu0 0.0
    %7661 = vmatpush1.msra.mxu0 0.0
    %7662 = vmatprep.subr.mxu0 0.0
    %7663 = vmatpush1.msra.mxu0 0.0
    %7664 = vmatprep.subr.mxu0 0.0
    %7665 = vmatpush1.msra.mxu0 0.0
    %7666 = vmatprep.subr.mxu0 0.0
    %7667 = vmatpush1.msra.mxu0 0.0
    %7668 = vmatprep.subr.mxu0 0.0
    %7669 = vmatpush1.msra.mxu0 0.0
    %7670 = vmatprep.subr.mxu0 0.0
    %7671 = vmatpush1.msra.mxu0 0.0
    %7672 = vmatprep.subr.mxu0 0.0
    %7673 = vmatpush1.msra.mxu0 0.0
    %7674 = vmatprep.subr.mxu0 0.0
    %7675 = vmatpush1.msra.mxu0 0.0
    %7676 = vmatprep.subr.mxu0 0.0
    %7677 = vmatpush1.msra.mxu0 0.0
    %7678 = vmatprep.subr.mxu0 0.0
    %7679 = vmatpush1.msra.mxu0 0.0
    %7680 = vmatprep.subr.mxu0 0.0
    %7681 = vmatpush1.msra.mxu0 0.0
    %7682 = vmatprep.subr.mxu0 0.0
    %7683 = vmatpush1.msra.mxu0 0.0
    %7684 = vmatprep.subr.mxu0 0.0
    %7685 = vmatpush1.msra.mxu0 0.0
    %7686 = vmatprep.subr.mxu0 0.0
    %7687 = vmatpush1.msra.mxu0 0.0
    %7688 = vmatprep.mubr.f32.mxu0 0.0
    %v7689 = vand.u32 %v7368, 4294901760
    %v7690 = vsub.f32 %v7368, %v7689
    %v7691 = vand.u32 %v7690, 4294901760
    %7692 = vmatmul.mubr.f32.gmra.mrb[0].mxu0 %v7691
    %v7693 = vpop.f32.mrb[0].mxu0
    %v7694 = vadd.f32 %v7617, %v7693
    %v7695 = vpop.f32.mrb[0].mxu0
    %7696 = vdwg.mxu0
    %7697 = vmatprep.subr.mxu0 0.0
    %v7698 = vand.u32 %v6873, 4294901760
    %v7699 = vsub.f32 %v6873, %v7698
    %v7700 = vand.u32 %v7699, 4294901760
    %7701 = vmatpush1.msra.mxu0 %v7700
    %7702 = vmatprep.subr.mxu0 0.0
    %v7703 = vand.u32 %v6874, 4294901760
    %v7704 = vsub.f32 %v6874, %v7703
    %v7705 = vand.u32 %v7704, 4294901760
    %7706 = vmatpush1.msra.mxu0 %v7705
    %7707 = vmatprep.subr.mxu0 0.0
    %v7708 = vand.u32 %v6875, 4294901760
    %v7709 = vsub.f32 %v6875, %v7708
    %v7710 = vand.u32 %v7709, 4294901760
    %7711 = vmatpush1.msra.mxu0 %v7710
    %7712 = vmatprep.subr.mxu0 0.0
    %v7713 = vand.u32 %v6876, 4294901760
    %v7714 = vsub.f32 %v6876, %v7713
    %v7715 = vand.u32 %v7714, 4294901760
    %7716 = vmatpush1.msra.mxu0 %v7715
    %7717 = vmatprep.subr.mxu0 0.0
    %7718 = vmatpush1.msra.mxu0 0.0
    %7719 = vmatprep.subr.mxu0 0.0
    %7720 = vmatpush1.msra.mxu0 0.0
    %7721 = vmatprep.subr.mxu0 0.0
    %7722 = vmatpush1.msra.mxu0 0.0
    %7723 = vmatprep.subr.mxu0 0.0
    %7724 = vmatpush1.msra.mxu0 0.0
    %7725 = vmatprep.subr.mxu0 0.0
    %7726 = vmatpush1.msra.mxu0 0.0
    %7727 = vmatprep.subr.mxu0 0.0
    %7728 = vmatpush1.msra.mxu0 0.0
    %7729 = vmatprep.subr.mxu0 0.0
    %7730 = vmatpush1.msra.mxu0 0.0
    %7731 = vmatprep.subr.mxu0 0.0
    %7732 = vmatpush1.msra.mxu0 0.0
    %7733 = vmatprep.subr.mxu0 0.0
    %7734 = vmatpush1.msra.mxu0 0.0
    %7735 = vmatprep.subr.mxu0 0.0
    %7736 = vmatpush1.msra.mxu0 0.0
    %7737 = vmatprep.subr.mxu0 0.0
    %7738 = vmatpush1.msra.mxu0 0.0
    %7739 = vmatprep.subr.mxu0 0.0
    %7740 = vmatpush1.msra.mxu0 0.0
    %7741 = vmatprep.subr.mxu0 0.0
    %7742 = vmatpush1.msra.mxu0 0.0
    %7743 = vmatprep.subr.mxu0 0.0
    %7744 = vmatpush1.msra.mxu0 0.0
    %7745 = vmatprep.subr.mxu0 0.0
    %7746 = vmatpush1.msra.mxu0 0.0
    %7747 = vmatprep.subr.mxu0 0.0
    %7748 = vmatpush1.msra.mxu0 0.0
    %7749 = vmatprep.subr.mxu0 0.0
    %7750 = vmatpush1.msra.mxu0 0.0
    %7751 = vmatprep.subr.mxu0 0.0
    %7752 = vmatpush1.msra.mxu0 0.0
    %7753 = vmatprep.subr.mxu0 0.0
    %7754 = vmatpush1.msra.mxu0 0.0
    %7755 = vmatprep.subr.mxu0 0.0
    %7756 = vmatpush1.msra.mxu0 0.0
    %7757 = vmatprep.subr.mxu0 0.0
    %7758 = vmatpush1.msra.mxu0 0.0
    %7759 = vmatprep.subr.mxu0 0.0
    %7760 = vmatpush1.msra.mxu0 0.0
    %7761 = vmatprep.subr.mxu0 0.0
    %7762 = vmatpush1.msra.mxu0 0.0
    %7763 = vmatprep.subr.mxu0 0.0
    %7764 = vmatpush1.msra.mxu0 0.0
    %7765 = vmatprep.subr.mxu0 0.0
    %7766 = vmatpush1.msra.mxu0 0.0
    %7767 = vmatprep.subr.mxu0 0.0
    %7768 = vmatpush1.msra.mxu0 0.0
    %7769 = vmatprep.subr.mxu0 0.0
    %7770 = vmatpush1.msra.mxu0 0.0
    %7771 = vmatprep.subr.mxu0 0.0
    %7772 = vmatpush1.msra.mxu0 0.0
    %7773 = vmatprep.mubr.f32.mxu0 0.0
    %v7774 = vand.u32 %v7368, 4294901760
    %7775 = vmatmul.mubr.f32.gmra.mrb[0].mxu0 %v7774
    %v7776 = vpop.f32.mrb[0].mxu0
    %v7777 = vadd.f32 %v7694, %v7776
    %v7778 = vpop.f32.mrb[0].mxu0
    %7779 = vdwg.mxu0
    %7780 = vmatprep.subr.mxu0 0.0
    %v7781 = vand.u32 %v6873, 4294901760
    %7782 = vmatpush1.msra.mxu0 %v7781
    %7783 = vmatprep.subr.mxu0 0.0
    %v7784 = vand.u32 %v6874, 4294901760
    %7785 = vmatpush1.msra.mxu0 %v7784
    %7786 = vmatprep.subr.mxu0 0.0
    %v7787 = vand.u32 %v6875, 4294901760
    %7788 = vmatpush1.msra.mxu0 %v7787
    %7789 = vmatprep.subr.mxu0 0.0
    %v7790 = vand.u32 %v6876, 4294901760
    %7791 = vmatpush1.msra.mxu0 %v7790
    %7792 = vmatprep.subr.mxu0 0.0
    %7793 = vmatpush1.msra.mxu0 0.0
    %7794 = vmatprep.subr.mxu0 0.0
    %7795 = vmatpush1.msra.mxu0 0.0
    %7796 = vmatprep.subr.mxu0 0.0
    %7797 = vmatpush1.msra.mxu0 0.0
    %7798 = vmatprep.subr.mxu0 0.0
    %7799 = vmatpush1.msra.mxu0 0.0
    %7800 = vmatprep.subr.mxu0 0.0
    %7801 = vmatpush1.msra.mxu0 0.0
    %7802 = vmatprep.subr.mxu0 0.0
    %7803 = vmatpush1.msra.mxu0 0.0
    %7804 = vmatprep.subr.mxu0 0.0
    %7805 = vmatpush1.msra.mxu0 0.0
    %7806 = vmatprep.subr.mxu0 0.0
    %7807 = vmatpush1.msra.mxu0 0.0
    %7808 = vmatprep.subr.mxu0 0.0
    %7809 = vmatpush1.msra.mxu0 0.0
    %7810 = vmatprep.subr.mxu0 0.0
    %7811 = vmatpush1.msra.mxu0 0.0
    %7812 = vmatprep.subr.mxu0 0.0
    %7813 = vmatpush1.msra.mxu0 0.0
    %7814 = vmatprep.subr.mxu0 0.0
    %7815 = vmatpush1.msra.mxu0 0.0
    %7816 = vmatprep.subr.mxu0 0.0
    %7817 = vmatpush1.msra.mxu0 0.0
    %7818 = vmatprep.subr.mxu0 0.0
    %7819 = vmatpush1.msra.mxu0 0.0
    %7820 = vmatprep.subr.mxu0 0.0
    %7821 = vmatpush1.msra.mxu0 0.0
    %7822 = vmatprep.subr.mxu0 0.0
    %7823 = vmatpush1.msra.mxu0 0.0
    %7824 = vmatprep.subr.mxu0 0.0
    %7825 = vmatpush1.msra.mxu0 0.0
    %7826 = vmatprep.subr.mxu0 0.0
    %7827 = vmatpush1.msra.mxu0 0.0
    %7828 = vmatprep.subr.mxu0 0.0
    %7829 = vmatpush1.msra.mxu0 0.0
    %7830 = vmatprep.subr.mxu0 0.0
    %7831 = vmatpush1.msra.mxu0 0.0
    %7832 = vmatprep.subr.mxu0 0.0
    %7833 = vmatpush1.msra.mxu0 0.0
    %7834 = vmatprep.subr.mxu0 0.0
    %7835 = vmatpush1.msra.mxu0 0.0
    %7836 = vmatprep.subr.mxu0 0.0
    %7837 = vmatpush1.msra.mxu0 0.0
    %7838 = vmatprep.subr.mxu0 0.0
    %7839 = vmatpush1.msra.mxu0 0.0
    %7840 = vmatprep.subr.mxu0 0.0
    %7841 = vmatpush1.msra.mxu0 0.0
    %7842 = vmatprep.subr.mxu0 0.0
    %7843 = vmatpush1.msra.mxu0 0.0
    %7844 = vmatprep.subr.mxu0 0.0
    %7845 = vmatpush1.msra.mxu0 0.0
    %7846 = vmatprep.subr.mxu0 0.0
    %7847 = vmatpush1.msra.mxu0 0.0
    %7848 = vmatprep.mubr.f32.mxu0 0.0
    %v7849 = vand.u32 %v7368, 4294901760
    %7850 = vmatmul.mubr.f32.gmra.mrb[0].mxu0 %v7849
    %v7851 = vpop.f32.mrb[0].mxu0
    %v7852 = vadd.f32 %v7777, %v7851
    %v7853 = vpop.f32.mrb[0].mxu0
    %7854 = vdwg.mxu0
    %v7855 = vlaneseq
    %v7856 = vshrl.u32 %v7855, 7
    %v7857 = vsub.s32 1, %v7856
    %v7858 = vrot.slane %v6121, %v7857
    %v7859 = vadd.f32 %v7852, %v7858
    %v7860 = vtanh.pop %v7859
    %v7861 = vld [vmem:[%s8] sm:$0xff]
    %v7862 = vld [vmem:[%s8 + $0x8] sm:$0xff]
    %v7863 = vld [vmem:[%s8 + $0x10] sm:$0xff]
    %v7864 = vld [vmem:[%s8 + $0x18] sm:$0xff]
    %v7865 = vld [vmem:[%s9] sm:$0x1]
    %v7867 = vlaneseq
    %v7868 = vshrl.u32 %v7867, 7
    %v7869 = vsub.s32 0, %v7868
    %v7870 = vrot.slane %v7865, %v7869
    %v7873 = vsel %vm93, %v7860, 0
    %7875 = vmatprep.subr.mxu0 0.0
    %v7876 = vand.u32 %v7861, 4294901760
    %7877 = vmatpush1.msra.mxu0 %v7876
    %7878 = vmatprep.subr.mxu0 0.0
    %v7879 = vand.u32 %v7862, 4294901760
    %7880 = vmatpush1.msra.mxu0 %v7879
    %7881 = vmatprep.subr.mxu0 0.0
    %v7882 = vand.u32 %v7863, 4294901760
    %7883 = vmatpush1.msra.mxu0 %v7882
    %7884 = vmatprep.subr.mxu0 0.0
    %v7885 = vand.u32 %v7864, 4294901760
    %7886 = vmatpush1.msra.mxu0 %v7885
    %7887 = vmatprep.subr.mxu0 0.0
    %7888 = vmatpush1.msra.mxu0 0.0
    %7889 = vmatprep.subr.mxu0 0.0
    %7890 = vmatpush1.msra.mxu0 0.0
    %7891 = vmatprep.subr.mxu0 0.0
    %7892 = vmatpush1.msra.mxu0 0.0
    %7893 = vmatprep.subr.mxu0 0.0
    %7894 = vmatpush1.msra.mxu0 0.0
    %7895 = vmatprep.subr.mxu0 0.0
    %7896 = vmatpush1.msra.mxu0 0.0
    %7897 = vmatprep.subr.mxu0 0.0
    %7898 = vmatpush1.msra.mxu0 0.0
    %7899 = vmatprep.subr.mxu0 0.0
    %7900 = vmatpush1.msra.mxu0 0.0
    %7901 = vmatprep.subr.mxu0 0.0
    %7902 = vmatpush1.msra.mxu0 0.0
    %7903 = vmatprep.subr.mxu0 0.0
    %7904 = vmatpush1.msra.mxu0 0.0
    %7905 = vmatprep.subr.mxu0 0.0
    %7906 = vmatpush1.msra.mxu0 0.0
    %7907 = vmatprep.subr.mxu0 0.0
    %7908 = vmatpush1.msra.mxu0 0.0
    %7909 = vmatprep.subr.mxu0 0.0
    %7910 = vmatpush1.msra.mxu0 0.0
    %7911 = vmatprep.subr.mxu0 0.0
    %7912 = vmatpush1.msra.mxu0 0.0
    %7913 = vmatprep.subr.mxu0 0.0
    %7914 = vmatpush1.msra.mxu0 0.0
    %7915 = vmatprep.subr.mxu0 0.0
    %7916 = vmatpush1.msra.mxu0 0.0
    %7917 = vmatprep.subr.mxu0 0.0
    %7918 = vmatpush1.msra.mxu0 0.0
    %7919 = vmatprep.subr.mxu0 0.0
    %7920 = vmatpush1.msra.mxu0 0.0
    %7921 = vmatprep.subr.mxu0 0.0
    %7922 = vmatpush1.msra.mxu0 0.0
    %7923 = vmatprep.subr.mxu0 0.0
    %7924 = vmatpush1.msra.mxu0 0.0
    %7925 = vmatprep.subr.mxu0 0.0
    %7926 = vmatpush1.msra.mxu0 0.0
    %7927 = vmatprep.subr.mxu0 0.0
    %7928 = vmatpush1.msra.mxu0 0.0
    %7929 = vmatprep.subr.mxu0 0.0
    %7930 = vmatpush1.msra.mxu0 0.0
    %7931 = vmatprep.subr.mxu0 0.0
    %7932 = vmatpush1.msra.mxu0 0.0
    %7933 = vmatprep.subr.mxu0 0.0
    %7934 = vmatpush1.msra.mxu0 0.0
    %7935 = vmatprep.subr.mxu0 0.0
    %7936 = vmatpush1.msra.mxu0 0.0
    %7937 = vmatprep.subr.mxu0 0.0
    %7938 = vmatpush1.msra.mxu0 0.0
    %7939 = vmatprep.subr.mxu0 0.0
    %7940 = vmatpush1.msra.mxu0 0.0
    %7941 = vmatprep.subr.mxu0 0.0
    %7942 = vmatpush1.msra.mxu0 0.0
    %7943 = vmatprep.mubr.f32.mxu0 0.0
    %v7944 = vand.u32 %v7873, 4294901760
    %v7945 = vsub.f32 %v7873, %v7944
    %v7946 = vand.u32 %v7945, 4294901760
    %v7947 = vsub.f32 %v7945, %v7946
    %v7948 = vand.u32 %v7947, 4294901760
    %7949 = vmatmul.mubr.f32.gmra.mrb[0].mxu0 %v7948
    %v7950 = vpop.f32.mrb[0].mxu0
    %v7951 = vadd.f32 %v7870, %v7950
    %v7952 = vpop.f32.mrb[0].mxu0
    %7953 = vdwg.mxu0
    %7954 = vmatprep.subr.mxu0 0.0
    %v7955 = vand.u32 %v7861, 4294901760
    %v7956 = vsub.f32 %v7861, %v7955
    %v7957 = vand.u32 %v7956, 4294901760
    %v7958 = vsub.f32 %v7956, %v7957
    %v7959 = vand.u32 %v7958, 4294901760
    %7960 = vmatpush1.msra.mxu0 %v7959
    %7961 = vmatprep.subr.mxu0 0.0
    %v7962 = vand.u32 %v7862, 4294901760
    %v7963 = vsub.f32 %v7862, %v7962
    %v7964 = vand.u32 %v7963, 4294901760
    %v7965 = vsub.f32 %v7963, %v7964
    %v7966 = vand.u32 %v7965, 4294901760
    %7967 = vmatpush1.msra.mxu0 %v7966
    %7968 = vmatprep.subr.mxu0 0.0
    %v7969 = vand.u32 %v7863, 4294901760
    %v7970 = vsub.f32 %v7863, %v7969
    %v7971 = vand.u32 %v7970, 4294901760
    %v7972 = vsub.f32 %v7970, %v7971
    %v7973 = vand.u32 %v7972, 4294901760
    %7974 = vmatpush1.msra.mxu0 %v7973
    %7975 = vmatprep.subr.mxu0 0.0
    %v7976 = vand.u32 %v7864, 4294901760
    %v7977 = vsub.f32 %v7864, %v7976
    %v7978 = vand.u32 %v7977, 4294901760
    %v7979 = vsub.f32 %v7977, %v7978
    %v7980 = vand.u32 %v7979, 4294901760
    %7981 = vmatpush1.msra.mxu0 %v7980
    %7982 = vmatprep.subr.mxu0 0.0
    %7983 = vmatpush1.msra.mxu0 0.0
    %7984 = vmatprep.subr.mxu0 0.0
    %7985 = vmatpush1.msra.mxu0 0.0
    %7986 = vmatprep.subr.mxu0 0.0
    %7987 = vmatpush1.msra.mxu0 0.0
    %7988 = vmatprep.subr.mxu0 0.0
    %7989 = vmatpush1.msra.mxu0 0.0
    %7990 = vmatprep.subr.mxu0 0.0
    %7991 = vmatpush1.msra.mxu0 0.0
    %7992 = vmatprep.subr.mxu0 0.0
    %7993 = vmatpush1.msra.mxu0 0.0
    %7994 = vmatprep.subr.mxu0 0.0
    %7995 = vmatpush1.msra.mxu0 0.0
    %7996 = vmatprep.subr.mxu0 0.0
    %7997 = vmatpush1.msra.mxu0 0.0
    %7998 = vmatprep.subr.mxu0 0.0
    %7999 = vmatpush1.msra.mxu0 0.0
    %8000 = vmatprep.subr.mxu0 0.0
    %8001 = vmatpush1.msra.mxu0 0.0
    %8002 = vmatprep.subr.mxu0 0.0
    %8003 = vmatpush1.msra.mxu0 0.0
    %8004 = vmatprep.subr.mxu0 0.0
    %8005 = vmatpush1.msra.mxu0 0.0
    %8006 = vmatprep.subr.mxu0 0.0
    %8007 = vmatpush1.msra.mxu0 0.0
    %8008 = vmatprep.subr.mxu0 0.0
    %8009 = vmatpush1.msra.mxu0 0.0
    %8010 = vmatprep.subr.mxu0 0.0
    %8011 = vmatpush1.msra.mxu0 0.0
    %8012 = vmatprep.subr.mxu0 0.0
    %8013 = vmatpush1.msra.mxu0 0.0
    %8014 = vmatprep.subr.mxu0 0.0
    %8015 = vmatpush1.msra.mxu0 0.0
    %8016 = vmatprep.subr.mxu0 0.0
    %8017 = vmatpush1.msra.mxu0 0.0
    %8018 = vmatprep.subr.mxu0 0.0
    %8019 = vmatpush1.msra.mxu0 0.0
    %8020 = vmatprep.subr.mxu0 0.0
    %8021 = vmatpush1.msra.mxu0 0.0
    %8022 = vmatprep.subr.mxu0 0.0
    %8023 = vmatpush1.msra.mxu0 0.0
    %8024 = vmatprep.subr.mxu0 0.0
    %8025 = vmatpush1.msra.mxu0 0.0
    %8026 = vmatprep.subr.mxu0 0.0
    %8027 = vmatpush1.msra.mxu0 0.0
    %8028 = vmatprep.subr.mxu0 0.0
    %8029 = vmatpush1.msra.mxu0 0.0
    %8030 = vmatprep.subr.mxu0 0.0
    %8031 = vmatpush1.msra.mxu0 0.0
    %8032 = vmatprep.subr.mxu0 0.0
    %8033 = vmatpush1.msra.mxu0 0.0
    %8034 = vmatprep.subr.mxu0 0.0
    %8035 = vmatpush1.msra.mxu0 0.0
    %8036 = vmatprep.subr.mxu0 0.0
    %8037 = vmatpush1.msra.mxu0 0.0
    %8038 = vmatprep.mubr.f32.mxu0 0.0
    %v8039 = vand.u32 %v7873, 4294901760
    %8040 = vmatmul.mubr.f32.gmra.mrb[0].mxu0 %v8039
    %v8041 = vpop.f32.mrb[0].mxu0
    %v8042 = vadd.f32 %v7951, %v8041
    %v8043 = vpop.f32.mrb[0].mxu0
    %8044 = vdwg.mxu0
    %8045 = vmatprep.subr.mxu0 0.0
    %v8046 = vand.u32 %v7861, 4294901760
    %v8047 = vsub.f32 %v7861, %v8046
    %8048 = vmatpush1.msra.mxu0 %v8047
    %8049 = vmatprep.subr.mxu0 0.0
    %v8050 = vand.u32 %v7862, 4294901760
    %v8051 = vsub.f32 %v7862, %v8050
    %8052 = vmatpush1.msra.mxu0 %v8051
    %8053 = vmatprep.subr.mxu0 0.0
    %v8054 = vand.u32 %v7863, 4294901760
    %v8055 = vsub.f32 %v7863, %v8054
    %8056 = vmatpush1.msra.mxu0 %v8055
    %8057 = vmatprep.subr.mxu0 0.0
    %v8058 = vand.u32 %v7864, 4294901760
    %v8059 = vsub.f32 %v7864, %v8058
    %8060 = vmatpush1.msra.mxu0 %v8059
    %8061 = vmatprep.subr.mxu0 0.0
    %8062 = vmatpush1.msra.mxu0 0.0
    %8063 = vmatprep.subr.mxu0 0.0
    %8064 = vmatpush1.msra.mxu0 0.0
    %8065 = vmatprep.subr.mxu0 0.0
    %8066 = vmatpush1.msra.mxu0 0.0
    %8067 = vmatprep.subr.mxu0 0.0
    %8068 = vmatpush1.msra.mxu0 0.0
    %8069 = vmatprep.subr.mxu0 0.0
    %8070 = vmatpush1.msra.mxu0 0.0
    %8071 = vmatprep.subr.mxu0 0.0
    %8072 = vmatpush1.msra.mxu0 0.0
    %8073 = vmatprep.subr.mxu0 0.0
    %8074 = vmatpush1.msra.mxu0 0.0
    %8075 = vmatprep.subr.mxu0 0.0
    %8076 = vmatpush1.msra.mxu0 0.0
    %8077 = vmatprep.subr.mxu0 0.0
    %8078 = vmatpush1.msra.mxu0 0.0
    %8079 = vmatprep.subr.mxu0 0.0
    %8080 = vmatpush1.msra.mxu0 0.0
    %8081 = vmatprep.subr.mxu0 0.0
    %8082 = vmatpush1.msra.mxu0 0.0
    %8083 = vmatprep.subr.mxu0 0.0
    %8084 = vmatpush1.msra.mxu0 0.0
    %8085 = vmatprep.subr.mxu0 0.0
    %8086 = vmatpush1.msra.mxu0 0.0
    %8087 = vmatprep.subr.mxu0 0.0
    %8088 = vmatpush1.msra.mxu0 0.0
    %8089 = vmatprep.subr.mxu0 0.0
    %8090 = vmatpush1.msra.mxu0 0.0
    %8091 = vmatprep.subr.mxu0 0.0
    %8092 = vmatpush1.msra.mxu0 0.0
    %8093 = vmatprep.subr.mxu0 0.0
    %8094 = vmatpush1.msra.mxu0 0.0
    %8095 = vmatprep.subr.mxu0 0.0
    %8096 = vmatpush1.msra.mxu0 0.0
    %8097 = vmatprep.subr.mxu0 0.0
    %8098 = vmatpush1.msra.mxu0 0.0
    %8099 = vmatprep.subr.mxu0 0.0
    %8100 = vmatpush1.msra.mxu0 0.0
    %8101 = vmatprep.subr.mxu0 0.0
    %8102 = vmatpush1.msra.mxu0 0.0
    %8103 = vmatprep.subr.mxu0 0.0
    %8104 = vmatpush1.msra.mxu0 0.0
    %8105 = vmatprep.subr.mxu0 0.0
    %8106 = vmatpush1.msra.mxu0 0.0
    %8107 = vmatprep.subr.mxu0 0.0
    %8108 = vmatpush1.msra.mxu0 0.0
    %8109 = vmatprep.subr.mxu0 0.0
    %8110 = vmatpush1.msra.mxu0 0.0
    %8111 = vmatprep.subr.mxu0 0.0
    %8112 = vmatpush1.msra.mxu0 0.0
    %8113 = vmatprep.subr.mxu0 0.0
    %8114 = vmatpush1.msra.mxu0 0.0
    %8115 = vmatprep.subr.mxu0 0.0
    %8116 = vmatpush1.msra.mxu0 0.0
    %8117 = vmatprep.mubr.f32.mxu0 0.0
    %v8118 = vand.u32 %v7873, 4294901760
    %v8119 = vsub.f32 %v7873, %v8118
    %8120 = vmatmul.mubr.f32.gmra.mrb[0].mxu0 %v8119
    %v8121 = vpop.f32.mrb[0].mxu0
    %v8122 = vadd.f32 %v8042, %v8121
    %v8123 = vpop.f32.mrb[0].mxu0
    %8124 = vdwg.mxu0
    %8125 = vmatprep.subr.mxu0 0.0
    %v8126 = vand.u32 %v7861, 4294901760
    %8127 = vmatpush1.msra.mxu0 %v8126
    %8128 = vmatprep.subr.mxu0 0.0
    %v8129 = vand.u32 %v7862, 4294901760
    %8130 = vmatpush1.msra.mxu0 %v8129
    %8131 = vmatprep.subr.mxu0 0.0
    %v8132 = vand.u32 %v7863, 4294901760
    %8133 = vmatpush1.msra.mxu0 %v8132
    %8134 = vmatprep.subr.mxu0 0.0
    %v8135 = vand.u32 %v7864, 4294901760
    %8136 = vmatpush1.msra.mxu0 %v8135
    %8137 = vmatprep.subr.mxu0 0.0
    %8138 = vmatpush1.msra.mxu0 0.0
    %8139 = vmatprep.subr.mxu0 0.0
    %8140 = vmatpush1.msra.mxu0 0.0
    %8141 = vmatprep.subr.mxu0 0.0
    %8142 = vmatpush1.msra.mxu0 0.0
    %8143 = vmatprep.subr.mxu0 0.0
    %8144 = vmatpush1.msra.mxu0 0.0
    %8145 = vmatprep.subr.mxu0 0.0
    %8146 = vmatpush1.msra.mxu0 0.0
    %8147 = vmatprep.subr.mxu0 0.0
    %8148 = vmatpush1.msra.mxu0 0.0
    %8149 = vmatprep.subr.mxu0 0.0
    %8150 = vmatpush1.msra.mxu0 0.0
    %8151 = vmatprep.subr.mxu0 0.0
    %8152 = vmatpush1.msra.mxu0 0.0
    %8153 = vmatprep.subr.mxu0 0.0
    %8154 = vmatpush1.msra.mxu0 0.0
    %8155 = vmatprep.subr.mxu0 0.0
    %8156 = vmatpush1.msra.mxu0 0.0
    %8157 = vmatprep.subr.mxu0 0.0
    %8158 = vmatpush1.msra.mxu0 0.0
    %8159 = vmatprep.subr.mxu0 0.0
    %8160 = vmatpush1.msra.mxu0 0.0
    %8161 = vmatprep.subr.mxu0 0.0
    %8162 = vmatpush1.msra.mxu0 0.0
    %8163 = vmatprep.subr.mxu0 0.0
    %8164 = vmatpush1.msra.mxu0 0.0
    %8165 = vmatprep.subr.mxu0 0.0
    %8166 = vmatpush1.msra.mxu0 0.0
    %8167 = vmatprep.subr.mxu0 0.0
    %8168 = vmatpush1.msra.mxu0 0.0
    %8169 = vmatprep.subr.mxu0 0.0
    %8170 = vmatpush1.msra.mxu0 0.0
    %8171 = vmatprep.subr.mxu0 0.0
    %8172 = vmatpush1.msra.mxu0 0.0
    %8173 = vmatprep.subr.mxu0 0.0
    %8174 = vmatpush1.msra.mxu0 0.0
    %8175 = vmatprep.subr.mxu0 0.0
    %8176 = vmatpush1.msra.mxu0 0.0
    %8177 = vmatprep.subr.mxu0 0.0
    %8178 = vmatpush1.msra.mxu0 0.0
    %8179 = vmatprep.subr.mxu0 0.0
    %8180 = vmatpush1.msra.mxu0 0.0
    %8181 = vmatprep.subr.mxu0 0.0
    %8182 = vmatpush1.msra.mxu0 0.0
    %8183 = vmatprep.subr.mxu0 0.0
    %8184 = vmatpush1.msra.mxu0 0.0
    %8185 = vmatprep.subr.mxu0 0.0
    %8186 = vmatpush1.msra.mxu0 0.0
    %8187 = vmatprep.subr.mxu0 0.0
    %8188 = vmatpush1.msra.mxu0 0.0
    %8189 = vmatprep.subr.mxu0 0.0
    %8190 = vmatpush1.msra.mxu0 0.0
    %8191 = vmatprep.subr.mxu0 0.0
    %8192 = vmatpush1.msra.mxu0 0.0
    %8193 = vmatprep.mubr.f32.mxu0 0.0
    %v8194 = vand.u32 %v7873, 4294901760
    %v8195 = vsub.f32 %v7873, %v8194
    %v8196 = vand.u32 %v8195, 4294901760
    %8197 = vmatmul.mubr.f32.gmra.mrb[0].mxu0 %v8196
    %v8198 = vpop.f32.mrb[0].mxu0
    %v8199 = vadd.f32 %v8122, %v8198
    %v8200 = vpop.f32.mrb[0].mxu0
    %8201 = vdwg.mxu0
    %8202 = vmatprep.subr.mxu0 0.0
    %v8203 = vand.u32 %v7861, 4294901760
    %v8204 = vsub.f32 %v7861, %v8203
    %v8205 = vand.u32 %v8204, 4294901760
    %8206 = vmatpush1.msra.mxu0 %v8205
    %8207 = vmatprep.subr.mxu0 0.0
    %v8208 = vand.u32 %v7862, 4294901760
    %v8209 = vsub.f32 %v7862, %v8208
    %v8210 = vand.u32 %v8209, 4294901760
    %8211 = vmatpush1.msra.mxu0 %v8210
    %8212 = vmatprep.subr.mxu0 0.0
    %v8213 = vand.u32 %v7863, 4294901760
    %v8214 = vsub.f32 %v7863, %v8213
    %v8215 = vand.u32 %v8214, 4294901760
    %8216 = vmatpush1.msra.mxu0 %v8215
    %8217 = vmatprep.subr.mxu0 0.0
    %v8218 = vand.u32 %v7864, 4294901760
    %v8219 = vsub.f32 %v7864, %v8218
    %v8220 = vand.u32 %v8219, 4294901760
    %8221 = vmatpush1.msra.mxu0 %v8220
    %8222 = vmatprep.subr.mxu0 0.0
    %8223 = vmatpush1.msra.mxu0 0.0
    %8224 = vmatprep.subr.mxu0 0.0
    %8225 = vmatpush1.msra.mxu0 0.0
    %8226 = vmatprep.subr.mxu0 0.0
    %8227 = vmatpush1.msra.mxu0 0.0
    %8228 = vmatprep.subr.mxu0 0.0
    %8229 = vmatpush1.msra.mxu0 0.0
    %8230 = vmatprep.subr.mxu0 0.0
    %8231 = vmatpush1.msra.mxu0 0.0
    %8232 = vmatprep.subr.mxu0 0.0
    %8233 = vmatpush1.msra.mxu0 0.0
    %8234 = vmatprep.subr.mxu0 0.0
    %8235 = vmatpush1.msra.mxu0 0.0
    %8236 = vmatprep.subr.mxu0 0.0
    %8237 = vmatpush1.msra.mxu0 0.0
    %8238 = vmatprep.subr.mxu0 0.0
    %8239 = vmatpush1.msra.mxu0 0.0
    %8240 = vmatprep.subr.mxu0 0.0
    %8241 = vmatpush1.msra.mxu0 0.0
    %8242 = vmatprep.subr.mxu0 0.0
    %8243 = vmatpush1.msra.mxu0 0.0
    %8244 = vmatprep.subr.mxu0 0.0
    %8245 = vmatpush1.msra.mxu0 0.0
    %8246 = vmatprep.subr.mxu0 0.0
    %8247 = vmatpush1.msra.mxu0 0.0
    %8248 = vmatprep.subr.mxu0 0.0
    %8249 = vmatpush1.msra.mxu0 0.0
    %8250 = vmatprep.subr.mxu0 0.0
    %8251 = vmatpush1.msra.mxu0 0.0
    %8252 = vmatprep.subr.mxu0 0.0
    %8253 = vmatpush1.msra.mxu0 0.0
    %8254 = vmatprep.subr.mxu0 0.0
    %8255 = vmatpush1.msra.mxu0 0.0
    %8256 = vmatprep.subr.mxu0 0.0
    %8257 = vmatpush1.msra.mxu0 0.0
    %8258 = vmatprep.subr.mxu0 0.0
    %8259 = vmatpush1.msra.mxu0 0.0
    %8260 = vmatprep.subr.mxu0 0.0
    %8261 = vmatpush1.msra.mxu0 0.0
    %8262 = vmatprep.subr.mxu0 0.0
    %8263 = vmatpush1.msra.mxu0 0.0
    %8264 = vmatprep.subr.mxu0 0.0
    %8265 = vmatpush1.msra.mxu0 0.0
    %8266 = vmatprep.subr.mxu0 0.0
    %8267 = vmatpush1.msra.mxu0 0.0
    %8268 = vmatprep.subr.mxu0 0.0
    %8269 = vmatpush1.msra.mxu0 0.0
    %8270 = vmatprep.subr.mxu0 0.0
    %8271 = vmatpush1.msra.mxu0 0.0
    %8272 = vmatprep.subr.mxu0 0.0
    %8273 = vmatpush1.msra.mxu0 0.0
    %8274 = vmatprep.subr.mxu0 0.0
    %8275 = vmatpush1.msra.mxu0 0.0
    %8276 = vmatprep.subr.mxu0 0.0
    %8277 = vmatpush1.msra.mxu0 0.0
    %8278 = vmatprep.mubr.f32.mxu0 0.0
    %v8279 = vand.u32 %v7873, 4294901760
    %8280 = vmatmul.mubr.f32.gmra.mrb[0].mxu0 %v8279
    %v8281 = vpop.f32.mrb[0].mxu0
    %v8282 = vadd.f32 %v8199, %v8281
    %v8283 = vpop.f32.mrb[0].mxu0
    %8284 = vdwg.mxu0
    %8285 = vmatprep.subr.mxu0 0.0
    %v8286 = vand.u32 %v7861, 4294901760
    %8287 = vmatpush1.msra.mxu0 %v8286
    %8288 = vmatprep.subr.mxu0 0.0
    %v8289 = vand.u32 %v7862, 4294901760
    %8290 = vmatpush1.msra.mxu0 %v8289
    %8291 = vmatprep.subr.mxu0 0.0
    %v8292 = vand.u32 %v7863, 4294901760
    %8293 = vmatpush1.msra.mxu0 %v8292
    %8294 = vmatprep.subr.mxu0 0.0
    %v8295 = vand.u32 %v7864, 4294901760
    %8296 = vmatpush1.msra.mxu0 %v8295
    %8297 = vmatprep.subr.mxu0 0.0
    %8298 = vmatpush1.msra.mxu0 0.0
    %8299 = vmatprep.subr.mxu0 0.0
    %8300 = vmatpush1.msra.mxu0 0.0
    %8301 = vmatprep.subr.mxu0 0.0
    %8302 = vmatpush1.msra.mxu0 0.0
    %8303 = vmatprep.subr.mxu0 0.0
    %8304 = vmatpush1.msra.mxu0 0.0
    %8305 = vmatprep.subr.mxu0 0.0
    %8306 = vmatpush1.msra.mxu0 0.0
    %8307 = vmatprep.subr.mxu0 0.0
    %8308 = vmatpush1.msra.mxu0 0.0
    %8309 = vmatprep.subr.mxu0 0.0
    %8310 = vmatpush1.msra.mxu0 0.0
    %8311 = vmatprep.subr.mxu0 0.0
    %8312 = vmatpush1.msra.mxu0 0.0
    %8313 = vmatprep.subr.mxu0 0.0
    %8314 = vmatpush1.msra.mxu0 0.0
    %8315 = vmatprep.subr.mxu0 0.0
    %8316 = vmatpush1.msra.mxu0 0.0
    %8317 = vmatprep.subr.mxu0 0.0
    %8318 = vmatpush1.msra.mxu0 0.0
    %8319 = vmatprep.subr.mxu0 0.0
    %8320 = vmatpush1.msra.mxu0 0.0
    %8321 = vmatprep.subr.mxu0 0.0
    %8322 = vmatpush1.msra.mxu0 0.0
    %8323 = vmatprep.subr.mxu0 0.0
    %8324 = vmatpush1.msra.mxu0 0.0
    %8325 = vmatprep.subr.mxu0 0.0
    %8326 = vmatpush1.msra.mxu0 0.0
    %8327 = vmatprep.subr.mxu0 0.0
    %8328 = vmatpush1.msra.mxu0 0.0
    %8329 = vmatprep.subr.mxu0 0.0
    %8330 = vmatpush1.msra.mxu0 0.0
    %8331 = vmatprep.subr.mxu0 0.0
    %8332 = vmatpush1.msra.mxu0 0.0
    %8333 = vmatprep.subr.mxu0 0.0
    %8334 = vmatpush1.msra.mxu0 0.0
    %8335 = vmatprep.subr.mxu0 0.0
    %8336 = vmatpush1.msra.mxu0 0.0
    %8337 = vmatprep.subr.mxu0 0.0
    %8338 = vmatpush1.msra.mxu0 0.0
    %8339 = vmatprep.subr.mxu0 0.0
    %8340 = vmatpush1.msra.mxu0 0.0
    %8341 = vmatprep.subr.mxu0 0.0
    %8342 = vmatpush1.msra.mxu0 0.0
    %8343 = vmatprep.subr.mxu0 0.0
    %8344 = vmatpush1.msra.mxu0 0.0
    %8345 = vmatprep.subr.mxu0 0.0
    %8346 = vmatpush1.msra.mxu0 0.0
    %8347 = vmatprep.subr.mxu0 0.0
    %8348 = vmatpush1.msra.mxu0 0.0
    %8349 = vmatprep.subr.mxu0 0.0
    %8350 = vmatpush1.msra.mxu0 0.0
    %8351 = vmatprep.subr.mxu0 0.0
    %8352 = vmatpush1.msra.mxu0 0.0
    %8353 = vmatprep.mubr.f32.mxu0 0.0
    %v8354 = vand.u32 %v7873, 4294901760
    %8355 = vmatmul.mubr.f32.gmra.mrb[0].mxu0 %v8354
    %v8356 = vpop.f32.mrb[0].mxu0
    %v8357 = vadd.f32 %v8282, %v8356
    %v8358 = vpop.f32.mrb[0].mxu0
    %8359 = vdwg.mxu0
    %vm8360 = vcmask 517120
    %8361 = vst.msk [vmem:[#allocation6] sm:$0x3] %vm8360, %v8357
    // Predicated region
    $region46: #{tpu_custom_call.1} parent=1 // pred_check
      _
    $region47: #{tpu_custom_call.1} parent=1 // pred_check_branch
      %8363 = sbr.rel (0) target = $region49
    $region48: #{tpu_custom_call.1} parent=1 // pred_region
      %s8365 = ssub.s32 64, 64
      %8366 = vsyncadd [#allocation4], %s8365
      %s8367 = sshll.u32 [#allocation5], 4
      %s8368 = int_to_ptr.vmem [resolvable:$true] %s8367
      %8373 = dma.vmem_to_hbm [thread:$0]  %s8368, 64, %s10, [#allocation4], 32, 32, 2
    $region49: #{tpu_custom_call.1} parent=1 // pred_fallthru
      _
    // Predicated region
    $region50: #{tpu_custom_call.1} parent=1 // pred_check
      _
    $region51: #{tpu_custom_call.1} parent=1 // pred_check_branch
      %8375 = sbr.rel (0) target = $region53
    $region52: #{tpu_custom_call.1} parent=1 // pred_region
      %s8377 = ssub.s32 32, 32
      %8378 = vsyncadd [#allocation7], %s8377
      %s8380 = sshll.u32 [#allocation6], 4
      %s8381 = int_to_ptr.vmem [resolvable:$true] %s8380
      %8383 = dma.vmem_to_hbm [thread:$0]  %s8381, 32, %s11, [#allocation7]
    $region53: #{tpu_custom_call.1} parent=1 // pred_fallthru
      _
    // Predicated region
    $region54: #{tpu_custom_call.1} parent=1 // pred_check
      _
    $region55: #{tpu_custom_call.1} parent=1 // pred_check_branch
      %8385 = sbr.rel (0) target = $region57
    $region56: #{tpu_custom_call.1} parent=1 // pred_region
      %s8387 = ssub.s32 32, 32
      %8388 = vsyncadd [#allocation7], %s8387
      %s8390 = sshll.u32 [#allocation8], 4
      %s8391 = int_to_ptr.vmem [resolvable:$true] %s8390
      %8393 = dma.vmem_to_hbm [thread:$0]  %s8391, 32, %s12, [#allocation7]
    $region57: #{tpu_custom_call.1} parent=1 // pred_fallthru
      _
    // Predicated region
    $region58: #{tpu_custom_call.1} parent=1 // pred_check
      _
    $region59: #{tpu_custom_call.1} parent=1 // pred_check_branch
      %8395 = sbr.rel (0) target = $region61
    $region60: #{tpu_custom_call.1} parent=1 // pred_region
      %8396 = dma.done [#allocation4], 64
    $region61: #{tpu_custom_call.1} parent=1 // pred_fallthru
      _
    // Predicated region
    $region62: #{tpu_custom_call.1} parent=1 // pred_check
      _
    $region63: #{tpu_custom_call.1} parent=1 // pred_check_branch
      %8398 = sbr.rel (0) target = $region65
    $region64: #{tpu_custom_call.1} parent=1 // pred_region
      %8399 = dma.done [#allocation7], 32
    $region65: #{tpu_custom_call.1} parent=1 // pred_fallthru
      _
    // Predicated region
    $region66: #{tpu_custom_call.1} parent=1 // pred_check
      _
    $region67: #{tpu_custom_call.1} parent=1 // pred_check_branch
      %8401 = sbr.rel (0) target = $region69
    $region68: #{tpu_custom_call.1} parent=1 // pred_region
      %8402 = dma.done [#allocation7], 32
    $region69: #{tpu_custom_call.1} parent=1 // pred_fallthru
      _
    %8403 = vsyncpa [#allocation3], 1
    %8404 = vsyncpa [#allocation4], 1
    %8405 = vsyncpa [#allocation7], 1

</llo_original>
